<compile_context>
chip_gen: v7x
topology: tpu7x:2x2x1
jax: 0.10.0
libtpu: 0.0.40
codegen_flags: <defaults>
</compile_context>

<pallas_src>
import functools

import jax
import jax.numpy as jnp
from jax.experimental import pallas as pl
from jax.experimental.pallas import tpu as pltpu

WIDTH = 8                  # real ResNet34 uses 64
_BLOCKS = (3, 4, 6, 3)     # BasicBlock counts per layer (ResNet34)
_STRIDES = (1, 2, 2, 2)
_BN_EPS = 1e-5
_VMEM_LIMIT = 32 * 1024 * 1024   # safe on v5e/v6e (128 MiB) and v7x (64 MiB)


# ---------------------------------------------------------------------------
# Tiled matmul kernel with fused bias (folded BN) / residual / ReLU epilogue
# ---------------------------------------------------------------------------
def _round_up(v, m):
  return (v + m - 1) // m * m


def _pick_tile(dim, align, cap):
  """Return (tile, padded_dim): tile is a multiple of `align`, <= cap, and
  divides padded_dim (padded_dim is dim rounded up to a multiple of align)."""
  padded = _round_up(dim, align)
  if padded <= cap:
    return padded, padded
  tile = cap - (cap % align)
  while padded % tile:
    tile -= align
  return tile, padded


def _matmul_bias_act_kernel(a_ref, b_ref, bias_ref, *rest, relu, has_residual):
  if has_residual:
    res_ref, o_ref, acc_ref = rest
  else:
    o_ref, acc_ref = rest
  kk = pl.program_id(2)

  @pl.when(kk == 0)
  def _():
    acc_ref[...] = jnp.zeros_like(acc_ref)

  acc_ref[...] += jnp.dot(a_ref[...], b_ref[...],
                          preferred_element_type=jnp.float32)

  @pl.when(kk == pl.num_programs(2) - 1)
  def _():
    out = acc_ref[...] + bias_ref[...]
    if has_residual:
      out = out + res_ref[...].astype(jnp.float32)
    if relu:
      out = jnp.maximum(out, 0.0)
    o_ref[...] = out.astype(o_ref.dtype)


def matmul_bias_act(a, b, bias, residual=None, relu=True,
                    out_dtype=jnp.bfloat16):
  """out = act((a @ b) + bias [+ residual]) with bf16 MXU inputs, f32 acc."""
  m, k = a.shape
  kb, n = b.shape
  assert k == kb
  tm, mp = _pick_tile(m, 8, 256)
  tn, np_ = _pick_tile(n, 128, 256)   # lane-dense output (>=128, x128)
  tk, kp = _pick_tile(k, 128, 512)

  a_p = jnp.pad(a.astype(jnp.bfloat16), ((0, mp - m), (0, kp - k)))
  b_p = jnp.pad(b.astype(jnp.bfloat16), ((0, kp - k), (0, np_ - n)))
  bias_p = jnp.pad(bias.astype(jnp.float32).reshape(1, n),
                   ((0, 0), (0, np_ - n)))

  in_specs = [
      pl.BlockSpec((tm, tk), lambda i, j, kk: (i, kk)),
      pl.BlockSpec((tk, tn), lambda i, j, kk: (kk, j)),
      pl.BlockSpec((1, tn), lambda i, j, kk: (0, j)),
  ]
  operands = [a_p, b_p, bias_p]
  has_res = residual is not None
  if has_res:
    res_p = jnp.pad(residual.astype(jnp.bfloat16),
                    ((0, mp - m), (0, np_ - n)))
    in_specs.append(pl.BlockSpec((tm, tn), lambda i, j, kk: (i, j)))
    operands.append(res_p)

  kernel = functools.partial(_matmul_bias_act_kernel, relu=relu,
                             has_residual=has_res)
  out = pl.pallas_call(
      kernel,
      grid=(mp // tm, np_ // tn, kp // tk),
      in_specs=in_specs,
      out_specs=pl.BlockSpec((tm, tn), lambda i, j, kk: (i, j)),
      out_shape=jax.ShapeDtypeStruct((mp, np_), out_dtype),
      scratch_shapes=[pltpu.VMEM((tm, tn), jnp.float32)],
      compiler_params=pltpu.CompilerParams(
          dimension_semantics=("parallel", "parallel", "arbitrary"),
          vmem_limit_bytes=_VMEM_LIMIT),
  )(*operands)
  return out[:m, :n]


# ---------------------------------------------------------------------------
# Conv (im2col + fused matmul) wrapper
# ---------------------------------------------------------------------------
def _im2col(x, kh, kw, stride, pad):
  n, h, w, c = x.shape
  if pad:
    x = jnp.pad(x, ((0, 0), (pad, pad), (pad, pad), (0, 0)))
  ho = (h + 2 * pad - kh) // stride + 1
  wo = (w + 2 * pad - kw) // stride + 1
  cols = []
  for i in range(kh):
    for j in range(kw):
      cols.append(x[:, i:i + stride * ho:stride, j:j + stride * wo:stride, :])
  patches = jnp.concatenate(cols, axis=-1)            # (n, ho, wo, kh*kw*c)
  return patches.reshape(n * ho * wo, kh * kw * c), (n, ho, wo)


def conv_bn(x, w, bias, stride, pad, relu, residual=None):
  """Conv with BN folded into (w, bias); optional fused residual + ReLU."""
  kh, kw, cin, cout = w.shape
  patches, (n, ho, wo) = _im2col(x, kh, kw, stride, pad)
  w2 = w.reshape(kh * kw * cin, cout)
  res2 = None
  if residual is not None:
    res2 = residual.reshape(n * ho * wo, cout)
  out = matmul_bias_act(patches, w2, bias, residual=res2, relu=relu)
  return out.reshape(n, ho, wo, cout)


# ---------------------------------------------------------------------------
# MaxPool 3x3 stride 2 pad 1 — 4-phase decomposition, in-kernel 9-tap max
# ---------------------------------------------------------------------------
def _maxpool_kernel(ee_ref, eo_ref, oe_ref, oo_ref, o_ref):
  ee = ee_ref[0]                     # (ho+1, wo+1, c)
  eo = eo_ref[0]                     # (ho+1, wo,   c)
  oe = oe_ref[0]                     # (ho,   wo+1, c)
  oo = oo_ref[0]                     # (ho,   wo,   c)
  ho, wo, _ = oo.shape
  m = oo
  for a in range(2):
    for b in range(2):
      m = jnp.maximum(m, ee[a:a + ho, b:b + wo, :])
  for a in range(2):
    m = jnp.maximum(m, eo[a:a + ho, :, :])
  for b in range(2):
    m = jnp.maximum(m, oe[:, b:b + wo, :])
  o_ref[0] = m


def maxpool_3x3_s2(x):
  # MaxPool2d(kernel_size=3, stride=2, padding=1), even H/W.
  n, h, w, c = x.shape
  ho, wo = h // 2, w // 2
  neg = jnp.asarray(-jnp.inf, x.dtype)
  xp = jnp.pad(x, ((0, 0), (1, 1), (1, 1), (0, 0)), constant_values=neg)
  # Parity phases (~1x the input bytes, instead of a 9x stacked tensor).
  ee = xp[:, 0::2, 0::2, :][:, :ho + 1, :wo + 1, :]
  eo = xp[:, 0::2, 1::2, :][:, :ho + 1, :wo, :]
  oe = xp[:, 1::2, 0::2, :][:, :ho, :wo + 1, :]
  oo = xp[:, 1::2, 1::2, :][:, :ho, :wo, :]
  return pl.pallas_call(
      _maxpool_kernel,
      grid=(n,),
      in_specs=[
          pl.BlockSpec((1, ho + 1, wo + 1, c), lambda i: (i, 0, 0, 0)),
          pl.BlockSpec((1, ho + 1, wo, c), lambda i: (i, 0, 0, 0)),
          pl.BlockSpec((1, ho, wo + 1, c), lambda i: (i, 0, 0, 0)),
          pl.BlockSpec((1, ho, wo, c), lambda i: (i, 0, 0, 0)),
      ],
      out_specs=pl.BlockSpec((1, ho, wo, c), lambda i: (i, 0, 0, 0)),
      out_shape=jax.ShapeDtypeStruct((n, ho, wo, c), x.dtype),
      compiler_params=pltpu.CompilerParams(
          dimension_semantics=("parallel",),
          vmem_limit_bytes=_VMEM_LIMIT),
  )(ee, eo, oe, oo)


# ---------------------------------------------------------------------------
# Global average pool (AdaptiveAvgPool2d((1,1)) + flatten), tiled over batch
# ---------------------------------------------------------------------------
def _avgpool_kernel(x_ref, o_ref):
  o_ref[...] = jnp.mean(x_ref[...].astype(jnp.float32), axis=1, keepdims=True)


def global_avgpool(x):
  n, h, w, c = x.shape
  xr = x.reshape(n, h * w, c)
  out = pl.pallas_call(
      _avgpool_kernel,
      grid=(n,),
      in_specs=[pl.BlockSpec((1, h * w, c), lambda i: (i, 0, 0))],
      out_specs=pl.BlockSpec((1, 1, c), lambda i: (i, 0, 0)),
      out_shape=jax.ShapeDtypeStruct((n, 1, c), jnp.float32),
      compiler_params=pltpu.CompilerParams(
          dimension_semantics=("parallel",),
          vmem_limit_bytes=_VMEM_LIMIT),
  )(xr)
  return out.reshape(n, c)


# ---------------------------------------------------------------------------
# Deterministic parameter init (synthetic; BN folded into weights at init)
# ---------------------------------------------------------------------------
def _conv_init(key, shape):
  fan_in = shape[0] * shape[1] * shape[2]
  return jax.random.normal(key, shape, jnp.float32) * jnp.sqrt(2.0 / fan_in)


def _bn_fold(key, c):
  k1, k2, k3, k4 = jax.random.split(key, 4)
  gamma = 1.0 + 0.1 * jax.random.normal(k1, (c,), jnp.float32)
  beta = 0.1 * jax.random.normal(k2, (c,), jnp.float32)
  mean = 0.1 * jax.random.normal(k3, (c,), jnp.float32)
  var = jnp.abs(1.0 + 0.1 * jax.random.normal(k4, (c,), jnp.float32))
  scale = gamma / jnp.sqrt(var + _BN_EPS)
  shift = beta - mean * scale
  return scale, shift


def _conv_bn_params(w_key, bn_key, shape):
  w = _conv_init(w_key, shape)
  scale, shift = _bn_fold(bn_key, shape[-1])
  w_folded = (w * scale).astype(jnp.bfloat16)          # BN scale folded in
  bias = shift.reshape(1, -1).astype(jnp.float32)      # BN shift -> bias
  return w_folded, bias


def init_params(key, width=WIDTH):
  keys = iter(jax.random.split(key, 512))
  cw, cb = _conv_bn_params(next(keys), next(keys), (7, 7, 3, width))
  params = {"conv1_w": cw, "conv1_b": cb, "layers": []}
  inplanes = width
  planes_per_layer = (width, 2 * width, 4 * width, 8 * width)
  for planes, nblocks, lstride in zip(planes_per_layer, _BLOCKS, _STRIDES):
    blocks = []
    for b in range(nblocks):
      s = lstride if b == 0 else 1
      w1, b1 = _conv_bn_params(next(keys), next(keys),
                               (3, 3, inplanes, planes))
      w2, b2 = _conv_bn_params(next(keys), next(keys),
                               (3, 3, planes, planes))
      blk = {"conv1_w": w1, "conv1_b": b1, "conv2_w": w2, "conv2_b": b2}
      if s != 1 or inplanes != planes:
        wd, bd = _conv_bn_params(next(keys), next(keys),
                                 (1, 1, inplanes, planes))
        blk["down_w"] = wd
        blk["down_b"] = bd
      blocks.append(blk)
      inplanes = planes
    params["layers"].append(blocks)
  return params


# ---------------------------------------------------------------------------
# Forward pass (mirrors ResNet34Fc.forward)
# ---------------------------------------------------------------------------
def _basic_block(x, blk, stride):
  identity = x
  if "down_w" in blk:
    identity = conv_bn(x, blk["down_w"], blk["down_b"], stride=stride,
                       pad=0, relu=False)
  h = conv_bn(x, blk["conv1_w"], blk["conv1_b"], stride=stride, pad=1,
              relu=True)
  # Second conv: residual add + ReLU fused into the matmul epilogue.
  return conv_bn(h, blk["conv2_w"], blk["conv2_b"], stride=1, pad=1,
                 relu=True, residual=identity)


def resnet34fc_forward(params, x_nchw):
  # Accepts NCHW like the PyTorch module; works internally in NHWC / bf16.
  x = jnp.transpose(x_nchw, (0, 2, 3, 1)).astype(jnp.bfloat16)
  x = conv_bn(x, params["conv1_w"], params["conv1_b"], stride=2, pad=3,
              relu=True)
  x = maxpool_3x3_s2(x)
  for blocks, lstride in zip(params["layers"], _STRIDES):
    for bidx, blk in enumerate(blocks):
      x = _basic_block(x, blk, lstride if bidx == 0 else 1)
  feats = global_avgpool(x)          # == avgpool + x.view(x.size(0), -1)
  return feats


if __name__ == "__main__":
  key = jax.random.PRNGKey(0)
  pkey, xkey = jax.random.split(key)
  params = init_params(pkey, WIDTH)
  # Small NCHW input consistent with the module (batch=2, C=3, 32x32 spatial).
  x = jax.random.normal(xkey, (2, 3, 32, 32), jnp.float32)

  feats = jax.jit(resnet34fc_forward)(params, x)
  feats = jax.block_until_ready(feats)

  expected_features = 8 * WIDTH        # output_num() analogue (512 full-width)
  assert feats.shape == (2, expected_features), feats.shape
  assert bool(jnp.all(jnp.isfinite(feats)))
  print("KERNEL_OK")
</pallas_src>

<mosaic_0001>
module attributes {stable_mosaic.version = 11 : i64} {
  func.func @_matmul_bias_act_kernel(%arg0: i32, %arg1: i32, %arg2: i32, %arg3: memref<256x256xbf16, #tpu.memory_space<vmem>>, %arg4: memref<256x128xbf16, #tpu.memory_space<vmem>>, %arg5: memref<1x128xf32, #tpu.memory_space<vmem>>, %arg6: memref<256x128xbf16, #tpu.memory_space<vmem>>, %arg7: memref<256x128xf32, #tpu.memory_space<vmem>>) attributes {dimension_semantics = [#tpu.dimension_semantics<parallel>, #tpu.dimension_semantics<parallel>, #tpu.dimension_semantics<arbitrary>], iteration_bounds = array<i64: 2, 1, 1>, scalar_prefetch = 0 : i64, scratch_operands = 1 : i64, tpu.core_type = #tpu.core_type<tc>, window_params = [{transform_indices = @transform_0, window_bounds = array<i64: 256, 256>}, {transform_indices = @transform_1, window_bounds = array<i64: 256, 128>}, {transform_indices = @transform_2, window_bounds = array<i64: 1, 128>}, {transform_indices = @transform_3, window_bounds = array<i64: 256, 128>}]} {
    %c0_i32 = arith.constant 0 : i32
    %0 = arith.cmpi eq, %arg2, %c0_i32 : i32
    %1 = arith.extui %0 : i1 to i32
    %c0_i32_0 = arith.constant 0 : i32
    %2 = arith.cmpi ne, %1, %c0_i32_0 : i32
    scf.if %2 {
      %cst_10 = arith.constant 0.000000e+00 : f32
      %12 = vector.broadcast %cst_10 : f32 to vector<256x128xf32>
      %c0_11 = arith.constant 0 : index
      %c0_12 = arith.constant 0 : index
      %13 = vector.load %arg7[%c0_11, %c0_12] : memref<256x128xf32, #tpu.memory_space<vmem>>, vector<256x128xf32>
      tpu.vector_store %arg7[%c0_11, %c0_12], %12 {strides = array<i32>} : memref<256x128xf32, #tpu.memory_space<vmem>>, vector<256x128xf32>,
    } else {
    }
    %c0 = arith.constant 0 : index
    %c0_1 = arith.constant 0 : index
    %3 = vector.load %arg7[%c0, %c0_1] : memref<256x128xf32, #tpu.memory_space<vmem>>, vector<256x128xf32>
    %c0_2 = arith.constant 0 : index
    %c0_3 = arith.constant 0 : index
    %4 = vector.load %arg3[%c0_2, %c0_3] : memref<256x256xbf16, #tpu.memory_space<vmem>>, vector<256x256xbf16>
    %c0_4 = arith.constant 0 : index
    %c0_5 = arith.constant 0 : index
    %5 = vector.load %arg4[%c0_4, %c0_5] : memref<256x128xbf16, #tpu.memory_space<vmem>>, vector<256x128xbf16>
    %cst = arith.constant dense<0.000000e+00> : vector<256x128xf32>
    %6 = tpu.matmul %4, %5, %cst {dimension_numbers = #tpu.dot_dimension_numbers<[1], [0], [0], [1], [0, 0, 1, 1], [], []>} : vector<256x256xbf16>, vector<256x128xbf16>, vector<256x128xf32> -> vector<256x128xf32>
    %7 = arith.addf %3, %6 : vector<256x128xf32>
    %c0_6 = arith.constant 0 : index
    %c0_7 = arith.constant 0 : index
    %8 = vector.load %arg7[%c0_6, %c0_7] : memref<256x128xf32, #tpu.memory_space<vmem>>, vector<256x128xf32>
    tpu.vector_store %arg7[%c0_6, %c0_7], %7 {strides = array<i32>} : memref<256x128xf32, #tpu.memory_space<vmem>>, vector<256x128xf32>,
    %c0_i32_8 = arith.constant 0 : i32
    %9 = arith.cmpi eq, %arg2, %c0_i32_8 : i32
    %10 = arith.extui %9 : i1 to i32
    %c0_i32_9 = arith.constant 0 : i32
    %11 = arith.cmpi ne, %10, %c0_i32_9 : i32
    scf.if %11 {
      %c0_10 = arith.constant 0 : index
      %c0_11 = arith.constant 0 : index
      %12 = vector.load %arg7[%c0_10, %c0_11] : memref<256x128xf32, #tpu.memory_space<vmem>>, vector<256x128xf32>
      %c0_12 = arith.constant 0 : index
      %c0_13 = arith.constant 0 : index
      %13 = vector.load %arg5[%c0_12, %c0_13] : memref<1x128xf32, #tpu.memory_space<vmem>>, vector<1x128xf32>
      %14 = vector.broadcast %13 : vector<1x128xf32> to vector<256x128xf32>
      %15 = arith.addf %12, %14 : vector<256x128xf32>
      %cst_14 = arith.constant 0.000000e+00 : f32
      %16 = vector.broadcast %cst_14 : f32 to vector<256x128xf32>
      %17 = arith.maximumf %15, %16 : vector<256x128xf32>
      %18 = arith.truncf %17 : vector<256x128xf32> to vector<256x128xbf16>
      %c0_15 = arith.constant 0 : index
      %c0_16 = arith.constant 0 : index
      %19 = vector.load %arg6[%c0_15, %c0_16] : memref<256x128xbf16, #tpu.memory_space<vmem>>, vector<256x128xbf16>
      tpu.vector_store %arg6[%c0_15, %c0_16], %18 {strides = array<i32>} : memref<256x128xbf16, #tpu.memory_space<vmem>>, vector<256x128xbf16>,
    } else {
    }
    return
  }
  func.func @transform_0(%arg0: i32, %arg1: i32, %arg2: i32) -> (i32, i32) {
    %c0_i32 = arith.constant 0 : i32
    return %arg0, %arg2 : i32, i32
  }
  func.func @transform_1(%arg0: i32, %arg1: i32, %arg2: i32) -> (i32, i32) {
    %c0_i32 = arith.constant 0 : i32
    return %arg2, %arg1 : i32, i32
  }
  func.func @transform_2(%arg0: i32, %arg1: i32, %arg2: i32) -> (i32, i32) {
    %c0_i32 = arith.constant 0 : i32
    %c0_i32_0 = arith.constant 0 : i32
    return %c0_i32, %arg1 : i32, i32
  }
  func.func @transform_3(%arg0: i32, %arg1: i32, %arg2: i32) -> (i32, i32) {
    %c0_i32 = arith.constant 0 : i32
    return %arg0, %arg1 : i32, i32
  }
}

module attributes {stable_mosaic.version = 11 : i64} {
  func.func @_maxpool_kernel(%arg0: i32, %arg1: memref<1x9x9x8xbf16, #tpu.memory_space<vmem>>, %arg2: memref<1x9x8x8xbf16, #tpu.memory_space<vmem>>, %arg3: memref<1x8x9x8xbf16, #tpu.memory_space<vmem>>, %arg4: memref<1x8x8x8xbf16, #tpu.memory_space<vmem>>, %arg5: memref<1x8x8x8xbf16, #tpu.memory_space<vmem>>) attributes {dimension_semantics = [#tpu.dimension_semantics<parallel>], iteration_bounds = array<i64: 2>, scalar_prefetch = 0 : i64, scratch_operands = 0 : i64, tpu.core_type = #tpu.core_type<tc>, window_params = [{transform_indices = @transform_0, window_bounds = array<i64: 1, 9, 9, 8>}, {transform_indices = @transform_1, window_bounds = array<i64: 1, 9, 8, 8>}, {transform_indices = @transform_2, window_bounds = array<i64: 1, 8, 9, 8>}, {transform_indices = @transform_3, window_bounds = array<i64: 1, 8, 8, 8>}, {transform_indices = @transform_4, window_bounds = array<i64: 1, 8, 8, 8>}]} {
    %c0 = arith.constant 0 : index
    %c0_0 = arith.constant 0 : index
    %c0_1 = arith.constant 0 : index
    %c0_2 = arith.constant 0 : index
    %0 = vector.load %arg1[%c0, %c0_0, %c0_1, %c0_2] : memref<1x9x9x8xbf16, #tpu.memory_space<vmem>>, vector<1x9x9x8xbf16>
    %1 = vector.shape_cast %0 : vector<1x9x9x8xbf16> to vector<9x9x8xbf16>
    %c0_3 = arith.constant 0 : index
    %c0_4 = arith.constant 0 : index
    %c0_5 = arith.constant 0 : index
    %c0_6 = arith.constant 0 : index
    %2 = vector.load %arg2[%c0_3, %c0_4, %c0_5, %c0_6] : memref<1x9x8x8xbf16, #tpu.memory_space<vmem>>, vector<1x9x8x8xbf16>
    %3 = vector.shape_cast %2 : vector<1x9x8x8xbf16> to vector<9x8x8xbf16>
    %c0_7 = arith.constant 0 : index
    %c0_8 = arith.constant 0 : index
    %c0_9 = arith.constant 0 : index
    %c0_10 = arith.constant 0 : index
    %4 = vector.load %arg3[%c0_7, %c0_8, %c0_9, %c0_10] : memref<1x8x9x8xbf16, #tpu.memory_space<vmem>>, vector<1x8x9x8xbf16>
    %5 = vector.shape_cast %4 : vector<1x8x9x8xbf16> to vector<8x9x8xbf16>
    %c0_11 = arith.constant 0 : index
    %c0_12 = arith.constant 0 : index
    %c0_13 = arith.constant 0 : index
    %c0_14 = arith.constant 0 : index
    %6 = vector.load %arg4[%c0_11, %c0_12, %c0_13, %c0_14] : memref<1x8x8x8xbf16, #tpu.memory_space<vmem>>, vector<1x8x8x8xbf16>
    %7 = vector.shape_cast %6 : vector<1x8x8x8xbf16> to vector<8x8x8xbf16>
    %8 = vector.extract_strided_slice %1 {offsets = [0, 0, 0], sizes = [8, 8, 8], strides = [1, 1, 1]} : vector<9x9x8xbf16> to vector<8x8x8xbf16>
    %9 = arith.maximumf %7, %8 : vector<8x8x8xbf16>
    %10 = vector.extract_strided_slice %1 {offsets = [0, 1, 0], sizes = [8, 8, 8], strides = [1, 1, 1]} : vector<9x9x8xbf16> to vector<8x8x8xbf16>
    %11 = arith.maximumf %9, %10 : vector<8x8x8xbf16>
    %12 = vector.extract_strided_slice %1 {offsets = [1, 0, 0], sizes = [8, 8, 8], strides = [1, 1, 1]} : vector<9x9x8xbf16> to vector<8x8x8xbf16>
    %13 = arith.maximumf %11, %12 : vector<8x8x8xbf16>
    %14 = vector.extract_strided_slice %1 {offsets = [1, 1, 0], sizes = [8, 8, 8], strides = [1, 1, 1]} : vector<9x9x8xbf16> to vector<8x8x8xbf16>
    %15 = arith.maximumf %13, %14 : vector<8x8x8xbf16>
    %16 = vector.extract_strided_slice %3 {offsets = [0, 0, 0], sizes = [8, 8, 8], strides = [1, 1, 1]} : vector<9x8x8xbf16> to vector<8x8x8xbf16>
    %17 = arith.maximumf %15, %16 : vector<8x8x8xbf16>
    %18 = vector.extract_strided_slice %3 {offsets = [1, 0, 0], sizes = [8, 8, 8], strides = [1, 1, 1]} : vector<9x8x8xbf16> to vector<8x8x8xbf16>
    %19 = arith.maximumf %17, %18 : vector<8x8x8xbf16>
    %20 = vector.extract_strided_slice %5 {offsets = [0, 0, 0], sizes = [8, 8, 8], strides = [1, 1, 1]} : vector<8x9x8xbf16> to vector<8x8x8xbf16>
    %21 = arith.maximumf %19, %20 : vector<8x8x8xbf16>
    %22 = vector.extract_strided_slice %5 {offsets = [0, 1, 0], sizes = [8, 8, 8], strides = [1, 1, 1]} : vector<8x9x8xbf16> to vector<8x8x8xbf16>
    %23 = arith.maximumf %21, %22 : vector<8x8x8xbf16>
    %c0_15 = arith.constant 0 : index
    %c0_16 = arith.constant 0 : index
    %c0_17 = arith.constant 0 : index
    %c0_18 = arith.constant 0 : index
    %24 = vector.load %arg5[%c0_15, %c0_16, %c0_17, %c0_18] : memref<1x8x8x8xbf16, #tpu.memory_space<vmem>>, vector<1x8x8x8xbf16>
    %25 = vector.shape_cast %24 : vector<1x8x8x8xbf16> to vector<8x8x8xbf16>
    %26 = vector.shape_cast %23 : vector<8x8x8xbf16> to vector<1x8x8x8xbf16>
    tpu.vector_store %arg5[%c0_15, %c0_16, %c0_17, %c0_18], %26 {strides = array<i32>} : memref<1x8x8x8xbf16, #tpu.memory_space<vmem>>, vector<1x8x8x8xbf16>,
    return
  }
  func.func @transform_0(%arg0: i32) -> (i32, i32, i32, i32) {
    %c0_i32 = arith.constant 0 : i32
    %c0_i32_0 = arith.constant 0 : i32
    %c0_i32_1 = arith.constant 0 : i32
    %c0_i32_2 = arith.constant 0 : i32
    return %arg0, %c0_i32, %c0_i32_0, %c0_i32_1 : i32, i32, i32, i32
  }
  func.func @transform_1(%arg0: i32) -> (i32, i32, i32, i32) {
    %c0_i32 = arith.constant 0 : i32
    %c0_i32_0 = arith.constant 0 : i32
    %c0_i32_1 = arith.constant 0 : i32
    %c0_i32_2 = arith.constant 0 : i32
    return %arg0, %c0_i32, %c0_i32_0, %c0_i32_1 : i32, i32, i32, i32
  }
  func.func @transform_2(%arg0: i32) -> (i32, i32, i32, i32) {
    %c0_i32 = arith.constant 0 : i32
    %c0_i32_0 = arith.constant 0 : i32
    %c0_i32_1 = arith.constant 0 : i32
    %c0_i32_2 = arith.constant 0 : i32
    return %arg0, %c0_i32, %c0_i32_0, %c0_i32_1 : i32, i32, i32, i32
  }
  func.func @transform_3(%arg0: i32) -> (i32, i32, i32, i32) {
    %c0_i32 = arith.constant 0 : i32
    %c0_i32_0 = arith.constant 0 : i32
    %c0_i32_1 = arith.constant 0 : i32
    %c0_i32_2 = arith.constant 0 : i32
    return %arg0, %c0_i32, %c0_i32_0, %c0_i32_1 : i32, i32, i32, i32
  }
  func.func @transform_4(%arg0: i32) -> (i32, i32, i32, i32) {
    %c0_i32 = arith.constant 0 : i32
    %c0_i32_0 = arith.constant 0 : i32
    %c0_i32_1 = arith.constant 0 : i32
    %c0_i32_2 = arith.constant 0 : i32
    return %arg0, %c0_i32, %c0_i32_0, %c0_i32_1 : i32, i32, i32, i32
  }
}

module attributes {stable_mosaic.version = 11 : i64} {
  func.func @_matmul_bias_act_kernel(%arg0: i32, %arg1: i32, %arg2: i32, %arg3: memref<128x128xbf16, #tpu.memory_space<vmem>>, %arg4: memref<128x128xbf16, #tpu.memory_space<vmem>>, %arg5: memref<1x128xf32, #tpu.memory_space<vmem>>, %arg6: memref<128x128xbf16, #tpu.memory_space<vmem>>, %arg7: memref<128x128xf32, #tpu.memory_space<vmem>>) attributes {dimension_semantics = [#tpu.dimension_semantics<parallel>, #tpu.dimension_semantics<parallel>, #tpu.dimension_semantics<arbitrary>], iteration_bounds = array<i64: 1, 1, 1>, scalar_prefetch = 0 : i64, scratch_operands = 1 : i64, tpu.core_type = #tpu.core_type<tc>, window_params = [{transform_indices = @transform_0, window_bounds = array<i64: 128, 128>}, {transform_indices = @transform_1, window_bounds = array<i64: 128, 128>}, {transform_indices = @transform_2, window_bounds = array<i64: 1, 128>}, {transform_indices = @transform_3, window_bounds = array<i64: 128, 128>}]} {
    %c0_i32 = arith.constant 0 : i32
    %0 = arith.cmpi eq, %arg2, %c0_i32 : i32
    %1 = arith.extui %0 : i1 to i32
    %c0_i32_0 = arith.constant 0 : i32
    %2 = arith.cmpi ne, %1, %c0_i32_0 : i32
    scf.if %2 {
      %cst_10 = arith.constant 0.000000e+00 : f32
      %12 = vector.broadcast %cst_10 : f32 to vector<128x128xf32>
      %c0_11 = arith.constant 0 : index
      %c0_12 = arith.constant 0 : index
      %13 = vector.load %arg7[%c0_11, %c0_12] : memref<128x128xf32, #tpu.memory_space<vmem>>, vector<128x128xf32>
      tpu.vector_store %arg7[%c0_11, %c0_12], %12 {strides = array<i32>} : memref<128x128xf32, #tpu.memory_space<vmem>>, vector<128x128xf32>,
    } else {
    }
    %c0 = arith.constant 0 : index
    %c0_1 = arith.constant 0 : index
    %3 = vector.load %arg7[%c0, %c0_1] : memref<128x128xf32, #tpu.memory_space<vmem>>, vector<128x128xf32>
    %c0_2 = arith.constant 0 : index
    %c0_3 = arith.constant 0 : index
    %4 = vector.load %arg3[%c0_2, %c0_3] : memref<128x128xbf16, #tpu.memory_space<vmem>>, vector<128x128xbf16>
    %c0_4 = arith.constant 0 : index
    %c0_5 = arith.constant 0 : index
    %5 = vector.load %arg4[%c0_4, %c0_5] : memref<128x128xbf16, #tpu.memory_space<vmem>>, vector<128x128xbf16>
    %cst = arith.constant dense<0.000000e+00> : vector<128x128xf32>
    %6 = tpu.matmul %4, %5, %cst {dimension_numbers = #tpu.dot_dimension_numbers<[1], [0], [0], [1], [0, 0, 1, 1], [], []>} : vector<128x128xbf16>, vector<128x128xbf16>, vector<128x128xf32> -> vector<128x128xf32>
    %7 = arith.addf %3, %6 : vector<128x128xf32>
    %c0_6 = arith.constant 0 : index
    %c0_7 = arith.constant 0 : index
    %8 = vector.load %arg7[%c0_6, %c0_7] : memref<128x128xf32, #tpu.memory_space<vmem>>, vector<128x128xf32>
    tpu.vector_store %arg7[%c0_6, %c0_7], %7 {strides = array<i32>} : memref<128x128xf32, #tpu.memory_space<vmem>>, vector<128x128xf32>,
    %c0_i32_8 = arith.constant 0 : i32
    %9 = arith.cmpi eq, %arg2, %c0_i32_8 : i32
    %10 = arith.extui %9 : i1 to i32
    %c0_i32_9 = arith.constant 0 : i32
    %11 = arith.cmpi ne, %10, %c0_i32_9 : i32
    scf.if %11 {
      %c0_10 = arith.constant 0 : index
      %c0_11 = arith.constant 0 : index
      %12 = vector.load %arg7[%c0_10, %c0_11] : memref<128x128xf32, #tpu.memory_space<vmem>>, vector<128x128xf32>
      %c0_12 = arith.constant 0 : index
      %c0_13 = arith.constant 0 : index
      %13 = vector.load %arg5[%c0_12, %c0_13] : memref<1x128xf32, #tpu.memory_space<vmem>>, vector<1x128xf32>
      %14 = vector.broadcast %13 : vector<1x128xf32> to vector<128x128xf32>
      %15 = arith.addf %12, %14 : vector<128x128xf32>
      %cst_14 = arith.constant 0.000000e+00 : f32
      %16 = vector.broadcast %cst_14 : f32 to vector<128x128xf32>
      %17 = arith.maximumf %15, %16 : vector<128x128xf32>
      %18 = arith.truncf %17 : vector<128x128xf32> to vector<128x128xbf16>
      %c0_15 = arith.constant 0 : index
      %c0_16 = arith.constant 0 : index
      %19 = vector.load %arg6[%c0_15, %c0_16] : memref<128x128xbf16, #tpu.memory_space<vmem>>, vector<128x128xbf16>
      tpu.vector_store %arg6[%c0_15, %c0_16], %18 {strides = array<i32>} : memref<128x128xbf16, #tpu.memory_space<vmem>>, vector<128x128xbf16>,
    } else {
    }
    return
  }
  func.func @transform_0(%arg0: i32, %arg1: i32, %arg2: i32) -> (i32, i32) {
    %c0_i32 = arith.constant 0 : i32
    return %arg0, %arg2 : i32, i32
  }
  func.func @transform_1(%arg0: i32, %arg1: i32, %arg2: i32) -> (i32, i32) {
    %c0_i32 = arith.constant 0 : i32
    return %arg2, %arg1 : i32, i32
  }
  func.func @transform_2(%arg0: i32, %arg1: i32, %arg2: i32) -> (i32, i32) {
    %c0_i32 = arith.constant 0 : i32
    %c0_i32_0 = arith.constant 0 : i32
    return %c0_i32, %arg1 : i32, i32
  }
  func.func @transform_3(%arg0: i32, %arg1: i32, %arg2: i32) -> (i32, i32) {
    %c0_i32 = arith.constant 0 : i32
    return %arg0, %arg1 : i32, i32
  }
}

module attributes {stable_mosaic.version = 11 : i64} {
  func.func @_matmul_bias_act_kernel(%arg0: i32, %arg1: i32, %arg2: i32, %arg3: memref<128x128xbf16, #tpu.memory_space<vmem>>, %arg4: memref<128x128xbf16, #tpu.memory_space<vmem>>, %arg5: memref<1x128xf32, #tpu.memory_space<vmem>>, %arg6: memref<128x128xbf16, #tpu.memory_space<vmem>>, %arg7: memref<128x128xbf16, #tpu.memory_space<vmem>>, %arg8: memref<128x128xf32, #tpu.memory_space<vmem>>) attributes {dimension_semantics = [#tpu.dimension_semantics<parallel>, #tpu.dimension_semantics<parallel>, #tpu.dimension_semantics<arbitrary>], iteration_bounds = array<i64: 1, 1, 1>, scalar_prefetch = 0 : i64, scratch_operands = 1 : i64, tpu.core_type = #tpu.core_type<tc>, window_params = [{transform_indices = @transform_0, window_bounds = array<i64: 128, 128>}, {transform_indices = @transform_1, window_bounds = array<i64: 128, 128>}, {transform_indices = @transform_2, window_bounds = array<i64: 1, 128>}, {transform_indices = @transform_3, window_bounds = array<i64: 128, 128>}, {transform_indices = @transform_4, window_bounds = array<i64: 128, 128>}]} {
    %c0_i32 = arith.constant 0 : i32
    %0 = arith.cmpi eq, %arg2, %c0_i32 : i32
    %1 = arith.extui %0 : i1 to i32
    %c0_i32_0 = arith.constant 0 : i32
    %2 = arith.cmpi ne, %1, %c0_i32_0 : i32
    scf.if %2 {
      %cst_10 = arith.constant 0.000000e+00 : f32
      %12 = vector.broadcast %cst_10 : f32 to vector<128x128xf32>
      %c0_11 = arith.constant 0 : index
      %c0_12 = arith.constant 0 : index
      %13 = vector.load %arg8[%c0_11, %c0_12] : memref<128x128xf32, #tpu.memory_space<vmem>>, vector<128x128xf32>
      tpu.vector_store %arg8[%c0_11, %c0_12], %12 {strides = array<i32>} : memref<128x128xf32, #tpu.memory_space<vmem>>, vector<128x128xf32>,
    } else {
    }
    %c0 = arith.constant 0 : index
    %c0_1 = arith.constant 0 : index
    %3 = vector.load %arg8[%c0, %c0_1] : memref<128x128xf32, #tpu.memory_space<vmem>>, vector<128x128xf32>
    %c0_2 = arith.constant 0 : index
    %c0_3 = arith.constant 0 : index
    %4 = vector.load %arg3[%c0_2, %c0_3] : memref<128x128xbf16, #tpu.memory_space<vmem>>, vector<128x128xbf16>
    %c0_4 = arith.constant 0 : index
    %c0_5 = arith.constant 0 : index
    %5 = vector.load %arg4[%c0_4, %c0_5] : memref<128x128xbf16, #tpu.memory_space<vmem>>, vector<128x128xbf16>
    %cst = arith.constant dense<0.000000e+00> : vector<128x128xf32>
    %6 = tpu.matmul %4, %5, %cst {dimension_numbers = #tpu.dot_dimension_numbers<[1], [0], [0], [1], [0, 0, 1, 1], [], []>} : vector<128x128xbf16>, vector<128x128xbf16>, vector<128x128xf32> -> vector<128x128xf32>
    %7 = arith.addf %3, %6 : vector<128x128xf32>
    %c0_6 = arith.constant 0 : index
    %c0_7 = arith.constant 0 : index
    %8 = vector.load %arg8[%c0_6, %c0_7] : memref<128x128xf32, #tpu.memory_space<vmem>>, vector<128x128xf32>
    tpu.vector_store %arg8[%c0_6, %c0_7], %7 {strides = array<i32>} : memref<128x128xf32, #tpu.memory_space<vmem>>, vector<128x128xf32>,
    %c0_i32_8 = arith.constant 0 : i32
    %9 = arith.cmpi eq, %arg2, %c0_i32_8 : i32
    %10 = arith.extui %9 : i1 to i32
    %c0_i32_9 = arith.constant 0 : i32
    %11 = arith.cmpi ne, %10, %c0_i32_9 : i32
    scf.if %11 {
      %c0_10 = arith.constant 0 : index
      %c0_11 = arith.constant 0 : index
      %12 = vector.load %arg8[%c0_10, %c0_11] : memref<128x128xf32, #tpu.memory_space<vmem>>, vector<128x128xf32>
      %c0_12 = arith.constant 0 : index
      %c0_13 = arith.constant 0 : index
      %13 = vector.load %arg5[%c0_12, %c0_13] : memref<1x128xf32, #tpu.memory_space<vmem>>, vector<1x128xf32>
      %14 = vector.broadcast %13 : vector<1x128xf32> to vector<128x128xf32>
      %15 = arith.addf %12, %14 : vector<128x128xf32>
      %c0_14 = arith.constant 0 : index
      %c0_15 = arith.constant 0 : index
      %16 = vector.load %arg6[%c0_14, %c0_15] : memref<128x128xbf16, #tpu.memory_space<vmem>>, vector<128x128xbf16>
      %17 = arith.extf %16 : vector<128x128xbf16> to vector<128x128xf32>
      %18 = arith.addf %15, %17 : vector<128x128xf32>
      %cst_16 = arith.constant 0.000000e+00 : f32
      %19 = vector.broadcast %cst_16 : f32 to vector<128x128xf32>
      %20 = arith.maximumf %18, %19 : vector<128x128xf32>
      %21 = arith.truncf %20 : vector<128x128xf32> to vector<128x128xbf16>
      %c0_17 = arith.constant 0 : index
      %c0_18 = arith.constant 0 : index
      %22 = vector.load %arg7[%c0_17, %c0_18] : memref<128x128xbf16, #tpu.memory_space<vmem>>, vector<128x128xbf16>
      tpu.vector_store %arg7[%c0_17, %c0_18], %21 {strides = array<i32>} : memref<128x128xbf16, #tpu.memory_space<vmem>>, vector<128x128xbf16>,
    } else {
    }
    return
  }
  func.func @transform_0(%arg0: i32, %arg1: i32, %arg2: i32) -> (i32, i32) {
    %c0_i32 = arith.constant 0 : i32
    return %arg0, %arg2 : i32, i32
  }
  func.func @transform_1(%arg0: i32, %arg1: i32, %arg2: i32) -> (i32, i32) {
    %c0_i32 = arith.constant 0 : i32
    return %arg2, %arg1 : i32, i32
  }
  func.func @transform_2(%arg0: i32, %arg1: i32, %arg2: i32) -> (i32, i32) {
    %c0_i32 = arith.constant 0 : i32
    %c0_i32_0 = arith.constant 0 : i32
    return %c0_i32, %arg1 : i32, i32
  }
  func.func @transform_3(%arg0: i32, %arg1: i32, %arg2: i32) -> (i32, i32) {
    %c0_i32 = arith.constant 0 : i32
    return %arg0, %arg1 : i32, i32
  }
  func.func @transform_4(%arg0: i32, %arg1: i32, %arg2: i32) -> (i32, i32) {
    %c0_i32 = arith.constant 0 : i32
    return %arg0, %arg1 : i32, i32
  }
}

module attributes {stable_mosaic.version = 11 : i64} {
  func.func @_matmul_bias_act_kernel(%arg0: i32, %arg1: i32, %arg2: i32, %arg3: memref<32x128xbf16, #tpu.memory_space<vmem>>, %arg4: memref<128x128xbf16, #tpu.memory_space<vmem>>, %arg5: memref<1x128xf32, #tpu.memory_space<vmem>>, %arg6: memref<32x128xbf16, #tpu.memory_space<vmem>>, %arg7: memref<32x128xf32, #tpu.memory_space<vmem>>) attributes {dimension_semantics = [#tpu.dimension_semantics<parallel>, #tpu.dimension_semantics<parallel>, #tpu.dimension_semantics<arbitrary>], iteration_bounds = array<i64: 1, 1, 1>, scalar_prefetch = 0 : i64, scratch_operands = 1 : i64, tpu.core_type = #tpu.core_type<tc>, window_params = [{transform_indices = @transform_0, window_bounds = array<i64: 32, 128>}, {transform_indices = @transform_1, window_bounds = array<i64: 128, 128>}, {transform_indices = @transform_2, window_bounds = array<i64: 1, 128>}, {transform_indices = @transform_3, window_bounds = array<i64: 32, 128>}]} {
    %c0_i32 = arith.constant 0 : i32
    %0 = arith.cmpi eq, %arg2, %c0_i32 : i32
    %1 = arith.extui %0 : i1 to i32
    %c0_i32_0 = arith.constant 0 : i32
    %2 = arith.cmpi ne, %1, %c0_i32_0 : i32
    scf.if %2 {
      %cst_10 = arith.constant 0.000000e+00 : f32
      %12 = vector.broadcast %cst_10 : f32 to vector<32x128xf32>
      %c0_11 = arith.constant 0 : index
      %c0_12 = arith.constant 0 : index
      %13 = vector.load %arg7[%c0_11, %c0_12] : memref<32x128xf32, #tpu.memory_space<vmem>>, vector<32x128xf32>
      tpu.vector_store %arg7[%c0_11, %c0_12], %12 {strides = array<i32>} : memref<32x128xf32, #tpu.memory_space<vmem>>, vector<32x128xf32>,
    } else {
    }
    %c0 = arith.constant 0 : index
    %c0_1 = arith.constant 0 : index
    %3 = vector.load %arg7[%c0, %c0_1] : memref<32x128xf32, #tpu.memory_space<vmem>>, vector<32x128xf32>
    %c0_2 = arith.constant 0 : index
    %c0_3 = arith.constant 0 : index
    %4 = vector.load %arg3[%c0_2, %c0_3] : memref<32x128xbf16, #tpu.memory_space<vmem>>, vector<32x128xbf16>
    %c0_4 = arith.constant 0 : index
    %c0_5 = arith.constant 0 : index
    %5 = vector.load %arg4[%c0_4, %c0_5] : memref<128x128xbf16, #tpu.memory_space<vmem>>, vector<128x128xbf16>
    %cst = arith.constant dense<0.000000e+00> : vector<32x128xf32>
    %6 = tpu.matmul %4, %5, %cst {dimension_numbers = #tpu.dot_dimension_numbers<[1], [0], [0], [1], [0, 0, 1, 1], [], []>} : vector<32x128xbf16>, vector<128x128xbf16>, vector<32x128xf32> -> vector<32x128xf32>
    %7 = arith.addf %3, %6 : vector<32x128xf32>
    %c0_6 = arith.constant 0 : index
    %c0_7 = arith.constant 0 : index
    %8 = vector.load %arg7[%c0_6, %c0_7] : memref<32x128xf32, #tpu.memory_space<vmem>>, vector<32x128xf32>
    tpu.vector_store %arg7[%c0_6, %c0_7], %7 {strides = array<i32>} : memref<32x128xf32, #tpu.memory_space<vmem>>, vector<32x128xf32>,
    %c0_i32_8 = arith.constant 0 : i32
    %9 = arith.cmpi eq, %arg2, %c0_i32_8 : i32
    %10 = arith.extui %9 : i1 to i32
    %c0_i32_9 = arith.constant 0 : i32
    %11 = arith.cmpi ne, %10, %c0_i32_9 : i32
    scf.if %11 {
      %c0_10 = arith.constant 0 : index
      %c0_11 = arith.constant 0 : index
      %12 = vector.load %arg7[%c0_10, %c0_11] : memref<32x128xf32, #tpu.memory_space<vmem>>, vector<32x128xf32>
      %c0_12 = arith.constant 0 : index
      %c0_13 = arith.constant 0 : index
      %13 = vector.load %arg5[%c0_12, %c0_13] : memref<1x128xf32, #tpu.memory_space<vmem>>, vector<1x128xf32>
      %14 = vector.broadcast %13 : vector<1x128xf32> to vector<32x128xf32>
      %15 = arith.addf %12, %14 : vector<32x128xf32>
      %cst_14 = arith.constant 0.000000e+00 : f32
      %16 = vector.broadcast %cst_14 : f32 to vector<32x128xf32>
      %17 = arith.maximumf %15, %16 : vector<32x128xf32>
      %18 = arith.truncf %17 : vector<32x128xf32> to vector<32x128xbf16>
      %c0_15 = arith.constant 0 : index
      %c0_16 = arith.constant 0 : index
      %19 = vector.load %arg6[%c0_15, %c0_16] : memref<32x128xbf16, #tpu.memory_space<vmem>>, vector<32x128xbf16>
      tpu.vector_store %arg6[%c0_15, %c0_16], %18 {strides = array<i32>} : memref<32x128xbf16, #tpu.memory_space<vmem>>, vector<32x128xbf16>,
    } else {
    }
    return
  }
  func.func @transform_0(%arg0: i32, %arg1: i32, %arg2: i32) -> (i32, i32) {
    %c0_i32 = arith.constant 0 : i32
    return %arg0, %arg2 : i32, i32
  }
  func.func @transform_1(%arg0: i32, %arg1: i32, %arg2: i32) -> (i32, i32) {
    %c0_i32 = arith.constant 0 : i32
    return %arg2, %arg1 : i32, i32
  }
  func.func @transform_2(%arg0: i32, %arg1: i32, %arg2: i32) -> (i32, i32) {
    %c0_i32 = arith.constant 0 : i32
    %c0_i32_0 = arith.constant 0 : i32
    return %c0_i32, %arg1 : i32, i32
  }
  func.func @transform_3(%arg0: i32, %arg1: i32, %arg2: i32) -> (i32, i32) {
    %c0_i32 = arith.constant 0 : i32
    return %arg0, %arg1 : i32, i32
  }
}

module attributes {stable_mosaic.version = 11 : i64} {
  func.func @_matmul_bias_act_kernel(%arg0: i32, %arg1: i32, %arg2: i32, %arg3: memref<32x128xbf16, #tpu.memory_space<vmem>>, %arg4: memref<128x128xbf16, #tpu.memory_space<vmem>>, %arg5: memref<1x128xf32, #tpu.memory_space<vmem>>, %arg6: memref<32x128xbf16, #tpu.memory_space<vmem>>, %arg7: memref<32x128xf32, #tpu.memory_space<vmem>>) attributes {dimension_semantics = [#tpu.dimension_semantics<parallel>, #tpu.dimension_semantics<parallel>, #tpu.dimension_semantics<arbitrary>], iteration_bounds = array<i64: 1, 1, 1>, scalar_prefetch = 0 : i64, scratch_operands = 1 : i64, tpu.core_type = #tpu.core_type<tc>, window_params = [{transform_indices = @transform_0, window_bounds = array<i64: 32, 128>}, {transform_indices = @transform_1, window_bounds = array<i64: 128, 128>}, {transform_indices = @transform_2, window_bounds = array<i64: 1, 128>}, {transform_indices = @transform_3, window_bounds = array<i64: 32, 128>}]} {
    %c0_i32 = arith.constant 0 : i32
    %0 = arith.cmpi eq, %arg2, %c0_i32 : i32
    %1 = arith.extui %0 : i1 to i32
    %c0_i32_0 = arith.constant 0 : i32
    %2 = arith.cmpi ne, %1, %c0_i32_0 : i32
    scf.if %2 {
      %cst_10 = arith.constant 0.000000e+00 : f32
      %12 = vector.broadcast %cst_10 : f32 to vector<32x128xf32>
      %c0_11 = arith.constant 0 : index
      %c0_12 = arith.constant 0 : index
      %13 = vector.load %arg7[%c0_11, %c0_12] : memref<32x128xf32, #tpu.memory_space<vmem>>, vector<32x128xf32>
      tpu.vector_store %arg7[%c0_11, %c0_12], %12 {strides = array<i32>} : memref<32x128xf32, #tpu.memory_space<vmem>>, vector<32x128xf32>,
    } else {
    }
    %c0 = arith.constant 0 : index
    %c0_1 = arith.constant 0 : index
    %3 = vector.load %arg7[%c0, %c0_1] : memref<32x128xf32, #tpu.memory_space<vmem>>, vector<32x128xf32>
    %c0_2 = arith.constant 0 : index
    %c0_3 = arith.constant 0 : index
    %4 = vector.load %arg3[%c0_2, %c0_3] : memref<32x128xbf16, #tpu.memory_space<vmem>>, vector<32x128xbf16>
    %c0_4 = arith.constant 0 : index
    %c0_5 = arith.constant 0 : index
    %5 = vector.load %arg4[%c0_4, %c0_5] : memref<128x128xbf16, #tpu.memory_space<vmem>>, vector<128x128xbf16>
    %cst = arith.constant dense<0.000000e+00> : vector<32x128xf32>
    %6 = tpu.matmul %4, %5, %cst {dimension_numbers = #tpu.dot_dimension_numbers<[1], [0], [0], [1], [0, 0, 1, 1], [], []>} : vector<32x128xbf16>, vector<128x128xbf16>, vector<32x128xf32> -> vector<32x128xf32>
    %7 = arith.addf %3, %6 : vector<32x128xf32>
    %c0_6 = arith.constant 0 : index
    %c0_7 = arith.constant 0 : index
    %8 = vector.load %arg7[%c0_6, %c0_7] : memref<32x128xf32, #tpu.memory_space<vmem>>, vector<32x128xf32>
    tpu.vector_store %arg7[%c0_6, %c0_7], %7 {strides = array<i32>} : memref<32x128xf32, #tpu.memory_space<vmem>>, vector<32x128xf32>,
    %c0_i32_8 = arith.constant 0 : i32
    %9 = arith.cmpi eq, %arg2, %c0_i32_8 : i32
    %10 = arith.extui %9 : i1 to i32
    %c0_i32_9 = arith.constant 0 : i32
    %11 = arith.cmpi ne, %10, %c0_i32_9 : i32
    scf.if %11 {
      %c0_10 = arith.constant 0 : index
      %c0_11 = arith.constant 0 : index
      %12 = vector.load %arg7[%c0_10, %c0_11] : memref<32x128xf32, #tpu.memory_space<vmem>>, vector<32x128xf32>
      %c0_12 = arith.constant 0 : index
      %c0_13 = arith.constant 0 : index
      %13 = vector.load %arg5[%c0_12, %c0_13] : memref<1x128xf32, #tpu.memory_space<vmem>>, vector<1x128xf32>
      %14 = vector.broadcast %13 : vector<1x128xf32> to vector<32x128xf32>
      %15 = arith.addf %12, %14 : vector<32x128xf32>
      %16 = arith.truncf %15 : vector<32x128xf32> to vector<32x128xbf16>
      %c0_14 = arith.constant 0 : index
      %c0_15 = arith.constant 0 : index
      %17 = vector.load %arg6[%c0_14, %c0_15] : memref<32x128xbf16, #tpu.memory_space<vmem>>, vector<32x128xbf16>
      tpu.vector_store %arg6[%c0_14, %c0_15], %16 {strides = array<i32>} : memref<32x128xbf16, #tpu.memory_space<vmem>>, vector<32x128xbf16>,
    } else {
    }
    return
  }
  func.func @transform_0(%arg0: i32, %arg1: i32, %arg2: i32) -> (i32, i32) {
    %c0_i32 = arith.constant 0 : i32
    return %arg0, %arg2 : i32, i32
  }
  func.func @transform_1(%arg0: i32, %arg1: i32, %arg2: i32) -> (i32, i32) {
    %c0_i32 = arith.constant 0 : i32
    return %arg2, %arg1 : i32, i32
  }
  func.func @transform_2(%arg0: i32, %arg1: i32, %arg2: i32) -> (i32, i32) {
    %c0_i32 = arith.constant 0 : i32
    %c0_i32_0 = arith.constant 0 : i32
    return %c0_i32, %arg1 : i32, i32
  }
  func.func @transform_3(%arg0: i32, %arg1: i32, %arg2: i32) -> (i32, i32) {
    %c0_i32 = arith.constant 0 : i32
    return %arg0, %arg1 : i32, i32
  }
}

module attributes {stable_mosaic.version = 11 : i64} {
  func.func @_matmul_bias_act_kernel(%arg0: i32, %arg1: i32, %arg2: i32, %arg3: memref<32x256xbf16, #tpu.memory_space<vmem>>, %arg4: memref<256x128xbf16, #tpu.memory_space<vmem>>, %arg5: memref<1x128xf32, #tpu.memory_space<vmem>>, %arg6: memref<32x128xbf16, #tpu.memory_space<vmem>>, %arg7: memref<32x128xbf16, #tpu.memory_space<vmem>>, %arg8: memref<32x128xf32, #tpu.memory_space<vmem>>) attributes {dimension_semantics = [#tpu.dimension_semantics<parallel>, #tpu.dimension_semantics<parallel>, #tpu.dimension_semantics<arbitrary>], iteration_bounds = array<i64: 1, 1, 1>, scalar_prefetch = 0 : i64, scratch_operands = 1 : i64, tpu.core_type = #tpu.core_type<tc>, window_params = [{transform_indices = @transform_0, window_bounds = array<i64: 32, 256>}, {transform_indices = @transform_1, window_bounds = array<i64: 256, 128>}, {transform_indices = @transform_2, window_bounds = array<i64: 1, 128>}, {transform_indices = @transform_3, window_bounds = array<i64: 32, 128>}, {transform_indices = @transform_4, window_bounds = array<i64: 32, 128>}]} {
    %c0_i32 = arith.constant 0 : i32
    %0 = arith.cmpi eq, %arg2, %c0_i32 : i32
    %1 = arith.extui %0 : i1 to i32
    %c0_i32_0 = arith.constant 0 : i32
    %2 = arith.cmpi ne, %1, %c0_i32_0 : i32
    scf.if %2 {
      %cst_10 = arith.constant 0.000000e+00 : f32
      %12 = vector.broadcast %cst_10 : f32 to vector<32x128xf32>
      %c0_11 = arith.constant 0 : index
      %c0_12 = arith.constant 0 : index
      %13 = vector.load %arg8[%c0_11, %c0_12] : memref<32x128xf32, #tpu.memory_space<vmem>>, vector<32x128xf32>
      tpu.vector_store %arg8[%c0_11, %c0_12], %12 {strides = array<i32>} : memref<32x128xf32, #tpu.memory_space<vmem>>, vector<32x128xf32>,
    } else {
    }
    %c0 = arith.constant 0 : index
    %c0_1 = arith.constant 0 : index
    %3 = vector.load %arg8[%c0, %c0_1] : memref<32x128xf32, #tpu.memory_space<vmem>>, vector<32x128xf32>
    %c0_2 = arith.constant 0 : index
    %c0_3 = arith.constant 0 : index
    %4 = vector.load %arg3[%c0_2, %c0_3] : memref<32x256xbf16, #tpu.memory_space<vmem>>, vector<32x256xbf16>
    %c0_4 = arith.constant 0 : index
    %c0_5 = arith.constant 0 : index
    %5 = vector.load %arg4[%c0_4, %c0_5] : memref<256x128xbf16, #tpu.memory_space<vmem>>, vector<256x128xbf16>
    %cst = arith.constant dense<0.000000e+00> : vector<32x128xf32>
    %6 = tpu.matmul %4, %5, %cst {dimension_numbers = #tpu.dot_dimension_numbers<[1], [0], [0], [1], [0, 0, 1, 1], [], []>} : vector<32x256xbf16>, vector<256x128xbf16>, vector<32x128xf32> -> vector<32x128xf32>
    %7 = arith.addf %3, %6 : vector<32x128xf32>
    %c0_6 = arith.constant 0 : index
    %c0_7 = arith.constant 0 : index
    %8 = vector.load %arg8[%c0_6, %c0_7] : memref<32x128xf32, #tpu.memory_space<vmem>>, vector<32x128xf32>
    tpu.vector_store %arg8[%c0_6, %c0_7], %7 {strides = array<i32>} : memref<32x128xf32, #tpu.memory_space<vmem>>, vector<32x128xf32>,
    %c0_i32_8 = arith.constant 0 : i32
    %9 = arith.cmpi eq, %arg2, %c0_i32_8 : i32
    %10 = arith.extui %9 : i1 to i32
    %c0_i32_9 = arith.constant 0 : i32
    %11 = arith.cmpi ne, %10, %c0_i32_9 : i32
    scf.if %11 {
      %c0_10 = arith.constant 0 : index
      %c0_11 = arith.constant 0 : index
      %12 = vector.load %arg8[%c0_10, %c0_11] : memref<32x128xf32, #tpu.memory_space<vmem>>, vector<32x128xf32>
      %c0_12 = arith.constant 0 : index
      %c0_13 = arith.constant 0 : index
      %13 = vector.load %arg5[%c0_12, %c0_13] : memref<1x128xf32, #tpu.memory_space<vmem>>, vector<1x128xf32>
      %14 = vector.broadcast %13 : vector<1x128xf32> to vector<32x128xf32>
      %15 = arith.addf %12, %14 : vector<32x128xf32>
      %c0_14 = arith.constant 0 : index
      %c0_15 = arith.constant 0 : index
      %16 = vector.load %arg6[%c0_14, %c0_15] : memref<32x128xbf16, #tpu.memory_space<vmem>>, vector<32x128xbf16>
      %17 = arith.extf %16 : vector<32x128xbf16> to vector<32x128xf32>
      %18 = arith.addf %15, %17 : vector<32x128xf32>
      %cst_16 = arith.constant 0.000000e+00 : f32
      %19 = vector.broadcast %cst_16 : f32 to vector<32x128xf32>
      %20 = arith.maximumf %18, %19 : vector<32x128xf32>
      %21 = arith.truncf %20 : vector<32x128xf32> to vector<32x128xbf16>
      %c0_17 = arith.constant 0 : index
      %c0_18 = arith.constant 0 : index
      %22 = vector.load %arg7[%c0_17, %c0_18] : memref<32x128xbf16, #tpu.memory_space<vmem>>, vector<32x128xbf16>
      tpu.vector_store %arg7[%c0_17, %c0_18], %21 {strides = array<i32>} : memref<32x128xbf16, #tpu.memory_space<vmem>>, vector<32x128xbf16>,
    } else {
    }
    return
  }
  func.func @transform_0(%arg0: i32, %arg1: i32, %arg2: i32) -> (i32, i32) {
    %c0_i32 = arith.constant 0 : i32
    return %arg0, %arg2 : i32, i32
  }
  func.func @transform_1(%arg0: i32, %arg1: i32, %arg2: i32) -> (i32, i32) {
    %c0_i32 = arith.constant 0 : i32
    return %arg2, %arg1 : i32, i32
  }
  func.func @transform_2(%arg0: i32, %arg1: i32, %arg2: i32) -> (i32, i32) {
    %c0_i32 = arith.constant 0 : i32
    %c0_i32_0 = arith.constant 0 : i32
    return %c0_i32, %arg1 : i32, i32
  }
  func.func @transform_3(%arg0: i32, %arg1: i32, %arg2: i32) -> (i32, i32) {
    %c0_i32 = arith.constant 0 : i32
    return %arg0, %arg1 : i32, i32
  }
  func.func @transform_4(%arg0: i32, %arg1: i32, %arg2: i32) -> (i32, i32) {
    %c0_i32 = arith.constant 0 : i32
    return %arg0, %arg1 : i32, i32
  }
}

module attributes {stable_mosaic.version = 11 : i64} {
  func.func @_matmul_bias_act_kernel(%arg0: i32, %arg1: i32, %arg2: i32, %arg3: memref<32x256xbf16, #tpu.memory_space<vmem>>, %arg4: memref<256x128xbf16, #tpu.memory_space<vmem>>, %arg5: memref<1x128xf32, #tpu.memory_space<vmem>>, %arg6: memref<32x128xbf16, #tpu.memory_space<vmem>>, %arg7: memref<32x128xf32, #tpu.memory_space<vmem>>) attributes {dimension_semantics = [#tpu.dimension_semantics<parallel>, #tpu.dimension_semantics<parallel>, #tpu.dimension_semantics<arbitrary>], iteration_bounds = array<i64: 1, 1, 1>, scalar_prefetch = 0 : i64, scratch_operands = 1 : i64, tpu.core_type = #tpu.core_type<tc>, window_params = [{transform_indices = @transform_0, window_bounds = array<i64: 32, 256>}, {transform_indices = @transform_1, window_bounds = array<i64: 256, 128>}, {transform_indices = @transform_2, window_bounds = array<i64: 1, 128>}, {transform_indices = @transform_3, window_bounds = array<i64: 32, 128>}]} {
    %c0_i32 = arith.constant 0 : i32
    %0 = arith.cmpi eq, %arg2, %c0_i32 : i32
    %1 = arith.extui %0 : i1 to i32
    %c0_i32_0 = arith.constant 0 : i32
    %2 = arith.cmpi ne, %1, %c0_i32_0 : i32
    scf.if %2 {
      %cst_10 = arith.constant 0.000000e+00 : f32
      %12 = vector.broadcast %cst_10 : f32 to vector<32x128xf32>
      %c0_11 = arith.constant 0 : index
      %c0_12 = arith.constant 0 : index
      %13 = vector.load %arg7[%c0_11, %c0_12] : memref<32x128xf32, #tpu.memory_space<vmem>>, vector<32x128xf32>
      tpu.vector_store %arg7[%c0_11, %c0_12], %12 {strides = array<i32>} : memref<32x128xf32, #tpu.memory_space<vmem>>, vector<32x128xf32>,
    } else {
    }
    %c0 = arith.constant 0 : index
    %c0_1 = arith.constant 0 : index
    %3 = vector.load %arg7[%c0, %c0_1] : memref<32x128xf32, #tpu.memory_space<vmem>>, vector<32x128xf32>
    %c0_2 = arith.constant 0 : index
    %c0_3 = arith.constant 0 : index
    %4 = vector.load %arg3[%c0_2, %c0_3] : memref<32x256xbf16, #tpu.memory_space<vmem>>, vector<32x256xbf16>
    %c0_4 = arith.constant 0 : index
    %c0_5 = arith.constant 0 : index
    %5 = vector.load %arg4[%c0_4, %c0_5] : memref<256x128xbf16, #tpu.memory_space<vmem>>, vector<256x128xbf16>
    %cst = arith.constant dense<0.000000e+00> : vector<32x128xf32>
    %6 = tpu.matmul %4, %5, %cst {dimension_numbers = #tpu.dot_dimension_numbers<[1], [0], [0], [1], [0, 0, 1, 1], [], []>} : vector<32x256xbf16>, vector<256x128xbf16>, vector<32x128xf32> -> vector<32x128xf32>
    %7 = arith.addf %3, %6 : vector<32x128xf32>
    %c0_6 = arith.constant 0 : index
    %c0_7 = arith.constant 0 : index
    %8 = vector.load %arg7[%c0_6, %c0_7] : memref<32x128xf32, #tpu.memory_space<vmem>>, vector<32x128xf32>
    tpu.vector_store %arg7[%c0_6, %c0_7], %7 {strides = array<i32>} : memref<32x128xf32, #tpu.memory_space<vmem>>, vector<32x128xf32>,
    %c0_i32_8 = arith.constant 0 : i32
    %9 = arith.cmpi eq, %arg2, %c0_i32_8 : i32
    %10 = arith.extui %9 : i1 to i32
    %c0_i32_9 = arith.constant 0 : i32
    %11 = arith.cmpi ne, %10, %c0_i32_9 : i32
    scf.if %11 {
      %c0_10 = arith.constant 0 : index
      %c0_11 = arith.constant 0 : index
      %12 = vector.load %arg7[%c0_10, %c0_11] : memref<32x128xf32, #tpu.memory_space<vmem>>, vector<32x128xf32>
      %c0_12 = arith.constant 0 : index
      %c0_13 = arith.constant 0 : index
      %13 = vector.load %arg5[%c0_12, %c0_13] : memref<1x128xf32, #tpu.memory_space<vmem>>, vector<1x128xf32>
      %14 = vector.broadcast %13 : vector<1x128xf32> to vector<32x128xf32>
      %15 = arith.addf %12, %14 : vector<32x128xf32>
      %cst_14 = arith.constant 0.000000e+00 : f32
      %16 = vector.broadcast %cst_14 : f32 to vector<32x128xf32>
      %17 = arith.maximumf %15, %16 : vector<32x128xf32>
      %18 = arith.truncf %17 : vector<32x128xf32> to vector<32x128xbf16>
      %c0_15 = arith.constant 0 : index
      %c0_16 = arith.constant 0 : index
      %19 = vector.load %arg6[%c0_15, %c0_16] : memref<32x128xbf16, #tpu.memory_space<vmem>>, vector<32x128xbf16>
      tpu.vector_store %arg6[%c0_15, %c0_16], %18 {strides = array<i32>} : memref<32x128xbf16, #tpu.memory_space<vmem>>, vector<32x128xbf16>,
    } else {
    }
    return
  }
  func.func @transform_0(%arg0: i32, %arg1: i32, %arg2: i32) -> (i32, i32) {
    %c0_i32 = arith.constant 0 : i32
    return %arg0, %arg2 : i32, i32
  }
  func.func @transform_1(%arg0: i32, %arg1: i32, %arg2: i32) -> (i32, i32) {
    %c0_i32 = arith.constant 0 : i32
    return %arg2, %arg1 : i32, i32
  }
  func.func @transform_2(%arg0: i32, %arg1: i32, %arg2: i32) -> (i32, i32) {
    %c0_i32 = arith.constant 0 : i32
    %c0_i32_0 = arith.constant 0 : i32
    return %c0_i32, %arg1 : i32, i32
  }
  func.func @transform_3(%arg0: i32, %arg1: i32, %arg2: i32) -> (i32, i32) {
    %c0_i32 = arith.constant 0 : i32
    return %arg0, %arg1 : i32, i32
  }
}

module attributes {stable_mosaic.version = 11 : i64} {
  func.func @_matmul_bias_act_kernel(%arg0: i32, %arg1: i32, %arg2: i32, %arg3: memref<8x256xbf16, #tpu.memory_space<vmem>>, %arg4: memref<256x128xbf16, #tpu.memory_space<vmem>>, %arg5: memref<1x128xf32, #tpu.memory_space<vmem>>, %arg6: memref<8x128xbf16, #tpu.memory_space<vmem>>, %arg7: memref<8x128xf32, #tpu.memory_space<vmem>>) attributes {dimension_semantics = [#tpu.dimension_semantics<parallel>, #tpu.dimension_semantics<parallel>, #tpu.dimension_semantics<arbitrary>], iteration_bounds = array<i64: 1, 1, 1>, scalar_prefetch = 0 : i64, scratch_operands = 1 : i64, tpu.core_type = #tpu.core_type<tc>, window_params = [{transform_indices = @transform_0, window_bounds = array<i64: 8, 256>}, {transform_indices = @transform_1, window_bounds = array<i64: 256, 128>}, {transform_indices = @transform_2, window_bounds = array<i64: 1, 128>}, {transform_indices = @transform_3, window_bounds = array<i64: 8, 128>}]} {
    %c0_i32 = arith.constant 0 : i32
    %0 = arith.cmpi eq, %arg2, %c0_i32 : i32
    %1 = arith.extui %0 : i1 to i32
    %c0_i32_0 = arith.constant 0 : i32
    %2 = arith.cmpi ne, %1, %c0_i32_0 : i32
    scf.if %2 {
      %cst_10 = arith.constant 0.000000e+00 : f32
      %12 = vector.broadcast %cst_10 : f32 to vector<8x128xf32>
      %c0_11 = arith.constant 0 : index
      %c0_12 = arith.constant 0 : index
      %13 = vector.load %arg7[%c0_11, %c0_12] : memref<8x128xf32, #tpu.memory_space<vmem>>, vector<8x128xf32>
      tpu.vector_store %arg7[%c0_11, %c0_12], %12 {strides = array<i32>} : memref<8x128xf32, #tpu.memory_space<vmem>>, vector<8x128xf32>,
    } else {
    }
    %c0 = arith.constant 0 : index
    %c0_1 = arith.constant 0 : index
    %3 = vector.load %arg7[%c0, %c0_1] : memref<8x128xf32, #tpu.memory_space<vmem>>, vector<8x128xf32>
    %c0_2 = arith.constant 0 : index
    %c0_3 = arith.constant 0 : index
    %4 = vector.load %arg3[%c0_2, %c0_3] : memref<8x256xbf16, #tpu.memory_space<vmem>>, vector<8x256xbf16>
    %c0_4 = arith.constant 0 : index
    %c0_5 = arith.constant 0 : index
    %5 = vector.load %arg4[%c0_4, %c0_5] : memref<256x128xbf16, #tpu.memory_space<vmem>>, vector<256x128xbf16>
    %cst = arith.constant dense<0.000000e+00> : vector<8x128xf32>
    %6 = tpu.matmul %4, %5, %cst {dimension_numbers = #tpu.dot_dimension_numbers<[1], [0], [0], [1], [0, 0, 1, 1], [], []>} : vector<8x256xbf16>, vector<256x128xbf16>, vector<8x128xf32> -> vector<8x128xf32>
    %7 = arith.addf %3, %6 : vector<8x128xf32>
    %c0_6 = arith.constant 0 : index
    %c0_7 = arith.constant 0 : index
    %8 = vector.load %arg7[%c0_6, %c0_7] : memref<8x128xf32, #tpu.memory_space<vmem>>, vector<8x128xf32>
    tpu.vector_store %arg7[%c0_6, %c0_7], %7 {strides = array<i32>} : memref<8x128xf32, #tpu.memory_space<vmem>>, vector<8x128xf32>,
    %c0_i32_8 = arith.constant 0 : i32
    %9 = arith.cmpi eq, %arg2, %c0_i32_8 : i32
    %10 = arith.extui %9 : i1 to i32
    %c0_i32_9 = arith.constant 0 : i32
    %11 = arith.cmpi ne, %10, %c0_i32_9 : i32
    scf.if %11 {
      %c0_10 = arith.constant 0 : index
      %c0_11 = arith.constant 0 : index
      %12 = vector.load %arg7[%c0_10, %c0_11] : memref<8x128xf32, #tpu.memory_space<vmem>>, vector<8x128xf32>
      %c0_12 = arith.constant 0 : index
      %c0_13 = arith.constant 0 : index
      %13 = vector.load %arg5[%c0_12, %c0_13] : memref<1x128xf32, #tpu.memory_space<vmem>>, vector<1x128xf32>
      %14 = vector.broadcast %13 : vector<1x128xf32> to vector<8x128xf32>
      %15 = arith.addf %12, %14 : vector<8x128xf32>
      %cst_14 = arith.constant 0.000000e+00 : f32
      %16 = vector.broadcast %cst_14 : f32 to vector<8x128xf32>
      %17 = arith.maximumf %15, %16 : vector<8x128xf32>
      %18 = arith.truncf %17 : vector<8x128xf32> to vector<8x128xbf16>
      %c0_15 = arith.constant 0 : index
      %c0_16 = arith.constant 0 : index
      %19 = vector.load %arg6[%c0_15, %c0_16] : memref<8x128xbf16, #tpu.memory_space<vmem>>, vector<8x128xbf16>
      tpu.vector_store %arg6[%c0_15, %c0_16], %18 {strides = array<i32>} : memref<8x128xbf16, #tpu.memory_space<vmem>>, vector<8x128xbf16>,
    } else {
    }
    return
  }
  func.func @transform_0(%arg0: i32, %arg1: i32, %arg2: i32) -> (i32, i32) {
    %c0_i32 = arith.constant 0 : i32
    return %arg0, %arg2 : i32, i32
  }
  func.func @transform_1(%arg0: i32, %arg1: i32, %arg2: i32) -> (i32, i32) {
    %c0_i32 = arith.constant 0 : i32
    return %arg2, %arg1 : i32, i32
  }
  func.func @transform_2(%arg0: i32, %arg1: i32, %arg2: i32) -> (i32, i32) {
    %c0_i32 = arith.constant 0 : i32
    %c0_i32_0 = arith.constant 0 : i32
    return %c0_i32, %arg1 : i32, i32
  }
  func.func @transform_3(%arg0: i32, %arg1: i32, %arg2: i32) -> (i32, i32) {
    %c0_i32 = arith.constant 0 : i32
    return %arg0, %arg1 : i32, i32
  }
}

module attributes {stable_mosaic.version = 11 : i64} {
  func.func @_matmul_bias_act_kernel(%arg0: i32, %arg1: i32, %arg2: i32, %arg3: memref<8x384xbf16, #tpu.memory_space<vmem>>, %arg4: memref<384x128xbf16, #tpu.memory_space<vmem>>, %arg5: memref<1x128xf32, #tpu.memory_space<vmem>>, %arg6: memref<8x128xbf16, #tpu.memory_space<vmem>>, %arg7: memref<8x128xbf16, #tpu.memory_space<vmem>>, %arg8: memref<8x128xf32, #tpu.memory_space<vmem>>) attributes {dimension_semantics = [#tpu.dimension_semantics<parallel>, #tpu.dimension_semantics<parallel>, #tpu.dimension_semantics<arbitrary>], iteration_bounds = array<i64: 1, 1, 1>, scalar_prefetch = 0 : i64, scratch_operands = 1 : i64, tpu.core_type = #tpu.core_type<tc>, window_params = [{transform_indices = @transform_0, window_bounds = array<i64: 8, 384>}, {transform_indices = @transform_1, window_bounds = array<i64: 384, 128>}, {transform_indices = @transform_2, window_bounds = array<i64: 1, 128>}, {transform_indices = @transform_3, window_bounds = array<i64: 8, 128>}, {transform_indices = @transform_4, window_bounds = array<i64: 8, 128>}]} {
    %c0_i32 = arith.constant 0 : i32
    %0 = arith.cmpi eq, %arg2, %c0_i32 : i32
    %1 = arith.extui %0 : i1 to i32
    %c0_i32_0 = arith.constant 0 : i32
    %2 = arith.cmpi ne, %1, %c0_i32_0 : i32
    scf.if %2 {
      %cst_10 = arith.constant 0.000000e+00 : f32
      %12 = vector.broadcast %cst_10 : f32 to vector<8x128xf32>
      %c0_11 = arith.constant 0 : index
      %c0_12 = arith.constant 0 : index
      %13 = vector.load %arg8[%c0_11, %c0_12] : memref<8x128xf32, #tpu.memory_space<vmem>>, vector<8x128xf32>
      tpu.vector_store %arg8[%c0_11, %c0_12], %12 {strides = array<i32>} : memref<8x128xf32, #tpu.memory_space<vmem>>, vector<8x128xf32>,
    } else {
    }
    %c0 = arith.constant 0 : index
    %c0_1 = arith.constant 0 : index
    %3 = vector.load %arg8[%c0, %c0_1] : memref<8x128xf32, #tpu.memory_space<vmem>>, vector<8x128xf32>
    %c0_2 = arith.constant 0 : index
    %c0_3 = arith.constant 0 : index
    %4 = vector.load %arg3[%c0_2, %c0_3] : memref<8x384xbf16, #tpu.memory_space<vmem>>, vector<8x384xbf16>
    %c0_4 = arith.constant 0 : index
    %c0_5 = arith.constant 0 : index
    %5 = vector.load %arg4[%c0_4, %c0_5] : memref<384x128xbf16, #tpu.memory_space<vmem>>, vector<384x128xbf16>
    %cst = arith.constant dense<0.000000e+00> : vector<8x128xf32>
    %6 = tpu.matmul %4, %5, %cst {dimension_numbers = #tpu.dot_dimension_numbers<[1], [0], [0], [1], [0, 0, 1, 1], [], []>} : vector<8x384xbf16>, vector<384x128xbf16>, vector<8x128xf32> -> vector<8x128xf32>
    %7 = arith.addf %3, %6 : vector<8x128xf32>
    %c0_6 = arith.constant 0 : index
    %c0_7 = arith.constant 0 : index
    %8 = vector.load %arg8[%c0_6, %c0_7] : memref<8x128xf32, #tpu.memory_space<vmem>>, vector<8x128xf32>
    tpu.vector_store %arg8[%c0_6, %c0_7], %7 {strides = array<i32>} : memref<8x128xf32, #tpu.memory_space<vmem>>, vector<8x128xf32>,
    %c0_i32_8 = arith.constant 0 : i32
    %9 = arith.cmpi eq, %arg2, %c0_i32_8 : i32
    %10 = arith.extui %9 : i1 to i32
    %c0_i32_9 = arith.constant 0 : i32
    %11 = arith.cmpi ne, %10, %c0_i32_9 : i32
    scf.if %11 {
      %c0_10 = arith.constant 0 : index
      %c0_11 = arith.constant 0 : index
      %12 = vector.load %arg8[%c0_10, %c0_11] : memref<8x128xf32, #tpu.memory_space<vmem>>, vector<8x128xf32>
      %c0_12 = arith.constant 0 : index
      %c0_13 = arith.constant 0 : index
      %13 = vector.load %arg5[%c0_12, %c0_13] : memref<1x128xf32, #tpu.memory_space<vmem>>, vector<1x128xf32>
      %14 = vector.broadcast %13 : vector<1x128xf32> to vector<8x128xf32>
      %15 = arith.addf %12, %14 : vector<8x128xf32>
      %c0_14 = arith.constant 0 : index
      %c0_15 = arith.constant 0 : index
      %16 = vector.load %arg6[%c0_14, %c0_15] : memref<8x128xbf16, #tpu.memory_space<vmem>>, vector<8x128xbf16>
      %17 = arith.extf %16 : vector<8x128xbf16> to vector<8x128xf32>
      %18 = arith.addf %15, %17 : vector<8x128xf32>
      %cst_16 = arith.constant 0.000000e+00 : f32
      %19 = vector.broadcast %cst_16 : f32 to vector<8x128xf32>
      %20 = arith.maximumf %18, %19 : vector<8x128xf32>
      %21 = arith.truncf %20 : vector<8x128xf32> to vector<8x128xbf16>
      %c0_17 = arith.constant 0 : index
      %c0_18 = arith.constant 0 : index
      %22 = vector.load %arg7[%c0_17, %c0_18] : memref<8x128xbf16, #tpu.memory_space<vmem>>, vector<8x128xbf16>
      tpu.vector_store %arg7[%c0_17, %c0_18], %21 {strides = array<i32>} : memref<8x128xbf16, #tpu.memory_space<vmem>>, vector<8x128xbf16>,
    } else {
    }
    return
  }
  func.func @transform_0(%arg0: i32, %arg1: i32, %arg2: i32) -> (i32, i32) {
    %c0_i32 = arith.constant 0 : i32
    return %arg0, %arg2 : i32, i32
  }
  func.func @transform_1(%arg0: i32, %arg1: i32, %arg2: i32) -> (i32, i32) {
    %c0_i32 = arith.constant 0 : i32
    return %arg2, %arg1 : i32, i32
  }
  func.func @transform_2(%arg0: i32, %arg1: i32, %arg2: i32) -> (i32, i32) {
    %c0_i32 = arith.constant 0 : i32
    %c0_i32_0 = arith.constant 0 : i32
    return %c0_i32, %arg1 : i32, i32
  }
  func.func @transform_3(%arg0: i32, %arg1: i32, %arg2: i32) -> (i32, i32) {
    %c0_i32 = arith.constant 0 : i32
    return %arg0, %arg1 : i32, i32
  }
  func.func @transform_4(%arg0: i32, %arg1: i32, %arg2: i32) -> (i32, i32) {
    %c0_i32 = arith.constant 0 : i32
    return %arg0, %arg1 : i32, i32
  }
}

module attributes {stable_mosaic.version = 11 : i64} {
  func.func @_matmul_bias_act_kernel(%arg0: i32, %arg1: i32, %arg2: i32, %arg3: memref<8x128xbf16, #tpu.memory_space<vmem>>, %arg4: memref<128x128xbf16, #tpu.memory_space<vmem>>, %arg5: memref<1x128xf32, #tpu.memory_space<vmem>>, %arg6: memref<8x128xbf16, #tpu.memory_space<vmem>>, %arg7: memref<8x128xf32, #tpu.memory_space<vmem>>) attributes {dimension_semantics = [#tpu.dimension_semantics<parallel>, #tpu.dimension_semantics<parallel>, #tpu.dimension_semantics<arbitrary>], iteration_bounds = array<i64: 1, 1, 1>, scalar_prefetch = 0 : i64, scratch_operands = 1 : i64, tpu.core_type = #tpu.core_type<tc>, window_params = [{transform_indices = @transform_0, window_bounds = array<i64: 8, 128>}, {transform_indices = @transform_1, window_bounds = array<i64: 128, 128>}, {transform_indices = @transform_2, window_bounds = array<i64: 1, 128>}, {transform_indices = @transform_3, window_bounds = array<i64: 8, 128>}]} {
    %c0_i32 = arith.constant 0 : i32
    %0 = arith.cmpi eq, %arg2, %c0_i32 : i32
    %1 = arith.extui %0 : i1 to i32
    %c0_i32_0 = arith.constant 0 : i32
    %2 = arith.cmpi ne, %1, %c0_i32_0 : i32
    scf.if %2 {
      %cst_10 = arith.constant 0.000000e+00 : f32
      %12 = vector.broadcast %cst_10 : f32 to vector<8x128xf32>
      %c0_11 = arith.constant 0 : index
      %c0_12 = arith.constant 0 : index
      %13 = vector.load %arg7[%c0_11, %c0_12] : memref<8x128xf32, #tpu.memory_space<vmem>>, vector<8x128xf32>
      tpu.vector_store %arg7[%c0_11, %c0_12], %12 {strides = array<i32>} : memref<8x128xf32, #tpu.memory_space<vmem>>, vector<8x128xf32>,
    } else {
    }
    %c0 = arith.constant 0 : index
    %c0_1 = arith.constant 0 : index
    %3 = vector.load %arg7[%c0, %c0_1] : memref<8x128xf32, #tpu.memory_space<vmem>>, vector<8x128xf32>
    %c0_2 = arith.constant 0 : index
    %c0_3 = arith.constant 0 : index
    %4 = vector.load %arg3[%c0_2, %c0_3] : memref<8x128xbf16, #tpu.memory_space<vmem>>, vector<8x128xbf16>
    %c0_4 = arith.constant 0 : index
    %c0_5 = arith.constant 0 : index
    %5 = vector.load %arg4[%c0_4, %c0_5] : memref<128x128xbf16, #tpu.memory_space<vmem>>, vector<128x128xbf16>
    %cst = arith.constant dense<0.000000e+00> : vector<8x128xf32>
    %6 = tpu.matmul %4, %5, %cst {dimension_numbers = #tpu.dot_dimension_numbers<[1], [0], [0], [1], [0, 0, 1, 1], [], []>} : vector<8x128xbf16>, vector<128x128xbf16>, vector<8x128xf32> -> vector<8x128xf32>
    %7 = arith.addf %3, %6 : vector<8x128xf32>
    %c0_6 = arith.constant 0 : index
    %c0_7 = arith.constant 0 : index
    %8 = vector.load %arg7[%c0_6, %c0_7] : memref<8x128xf32, #tpu.memory_space<vmem>>, vector<8x128xf32>
    tpu.vector_store %arg7[%c0_6, %c0_7], %7 {strides = array<i32>} : memref<8x128xf32, #tpu.memory_space<vmem>>, vector<8x128xf32>,
    %c0_i32_8 = arith.constant 0 : i32
    %9 = arith.cmpi eq, %arg2, %c0_i32_8 : i32
    %10 = arith.extui %9 : i1 to i32
    %c0_i32_9 = arith.constant 0 : i32
    %11 = arith.cmpi ne, %10, %c0_i32_9 : i32
    scf.if %11 {
      %c0_10 = arith.constant 0 : index
      %c0_11 = arith.constant 0 : index
      %12 = vector.load %arg7[%c0_10, %c0_11] : memref<8x128xf32, #tpu.memory_space<vmem>>, vector<8x128xf32>
      %c0_12 = arith.constant 0 : index
      %c0_13 = arith.constant 0 : index
      %13 = vector.load %arg5[%c0_12, %c0_13] : memref<1x128xf32, #tpu.memory_space<vmem>>, vector<1x128xf32>
      %14 = vector.broadcast %13 : vector<1x128xf32> to vector<8x128xf32>
      %15 = arith.addf %12, %14 : vector<8x128xf32>
      %16 = arith.truncf %15 : vector<8x128xf32> to vector<8x128xbf16>
      %c0_14 = arith.constant 0 : index
      %c0_15 = arith.constant 0 : index
      %17 = vector.load %arg6[%c0_14, %c0_15] : memref<8x128xbf16, #tpu.memory_space<vmem>>, vector<8x128xbf16>
      tpu.vector_store %arg6[%c0_14, %c0_15], %16 {strides = array<i32>} : memref<8x128xbf16, #tpu.memory_space<vmem>>, vector<8x128xbf16>,
    } else {
    }
    return
  }
  func.func @transform_0(%arg0: i32, %arg1: i32, %arg2: i32) -> (i32, i32) {
    %c0_i32 = arith.constant 0 : i32
    return %arg0, %arg2 : i32, i32
  }
  func.func @transform_1(%arg0: i32, %arg1: i32, %arg2: i32) -> (i32, i32) {
    %c0_i32 = arith.constant 0 : i32
    return %arg2, %arg1 : i32, i32
  }
  func.func @transform_2(%arg0: i32, %arg1: i32, %arg2: i32) -> (i32, i32) {
    %c0_i32 = arith.constant 0 : i32
    %c0_i32_0 = arith.constant 0 : i32
    return %c0_i32, %arg1 : i32, i32
  }
  func.func @transform_3(%arg0: i32, %arg1: i32, %arg2: i32) -> (i32, i32) {
    %c0_i32 = arith.constant 0 : i32
    return %arg0, %arg1 : i32, i32
  }
}

module attributes {stable_mosaic.version = 11 : i64} {
  func.func @_matmul_bias_act_kernel(%arg0: i32, %arg1: i32, %arg2: i32, %arg3: memref<8x384xbf16, #tpu.memory_space<vmem>>, %arg4: memref<384x128xbf16, #tpu.memory_space<vmem>>, %arg5: memref<1x128xf32, #tpu.memory_space<vmem>>, %arg6: memref<8x128xbf16, #tpu.memory_space<vmem>>, %arg7: memref<8x128xf32, #tpu.memory_space<vmem>>) attributes {dimension_semantics = [#tpu.dimension_semantics<parallel>, #tpu.dimension_semantics<parallel>, #tpu.dimension_semantics<arbitrary>], iteration_bounds = array<i64: 1, 1, 1>, scalar_prefetch = 0 : i64, scratch_operands = 1 : i64, tpu.core_type = #tpu.core_type<tc>, window_params = [{transform_indices = @transform_0, window_bounds = array<i64: 8, 384>}, {transform_indices = @transform_1, window_bounds = array<i64: 384, 128>}, {transform_indices = @transform_2, window_bounds = array<i64: 1, 128>}, {transform_indices = @transform_3, window_bounds = array<i64: 8, 128>}]} {
    %c0_i32 = arith.constant 0 : i32
    %0 = arith.cmpi eq, %arg2, %c0_i32 : i32
    %1 = arith.extui %0 : i1 to i32
    %c0_i32_0 = arith.constant 0 : i32
    %2 = arith.cmpi ne, %1, %c0_i32_0 : i32
    scf.if %2 {
      %cst_10 = arith.constant 0.000000e+00 : f32
      %12 = vector.broadcast %cst_10 : f32 to vector<8x128xf32>
      %c0_11 = arith.constant 0 : index
      %c0_12 = arith.constant 0 : index
      %13 = vector.load %arg7[%c0_11, %c0_12] : memref<8x128xf32, #tpu.memory_space<vmem>>, vector<8x128xf32>
      tpu.vector_store %arg7[%c0_11, %c0_12], %12 {strides = array<i32>} : memref<8x128xf32, #tpu.memory_space<vmem>>, vector<8x128xf32>,
    } else {
    }
    %c0 = arith.constant 0 : index
    %c0_1 = arith.constant 0 : index
    %3 = vector.load %arg7[%c0, %c0_1] : memref<8x128xf32, #tpu.memory_space<vmem>>, vector<8x128xf32>
    %c0_2 = arith.constant 0 : index
    %c0_3 = arith.constant 0 : index
    %4 = vector.load %arg3[%c0_2, %c0_3] : memref<8x384xbf16, #tpu.memory_space<vmem>>, vector<8x384xbf16>
    %c0_4 = arith.constant 0 : index
    %c0_5 = arith.constant 0 : index
    %5 = vector.load %arg4[%c0_4, %c0_5] : memref<384x128xbf16, #tpu.memory_space<vmem>>, vector<384x128xbf16>
    %cst = arith.constant dense<0.000000e+00> : vector<8x128xf32>
    %6 = tpu.matmul %4, %5, %cst {dimension_numbers = #tpu.dot_dimension_numbers<[1], [0], [0], [1], [0, 0, 1, 1], [], []>} : vector<8x384xbf16>, vector<384x128xbf16>, vector<8x128xf32> -> vector<8x128xf32>
    %7 = arith.addf %3, %6 : vector<8x128xf32>
    %c0_6 = arith.constant 0 : index
    %c0_7 = arith.constant 0 : index
    %8 = vector.load %arg7[%c0_6, %c0_7] : memref<8x128xf32, #tpu.memory_space<vmem>>, vector<8x128xf32>
    tpu.vector_store %arg7[%c0_6, %c0_7], %7 {strides = array<i32>} : memref<8x128xf32, #tpu.memory_space<vmem>>, vector<8x128xf32>,
    %c0_i32_8 = arith.constant 0 : i32
    %9 = arith.cmpi eq, %arg2, %c0_i32_8 : i32
    %10 = arith.extui %9 : i1 to i32
    %c0_i32_9 = arith.constant 0 : i32
    %11 = arith.cmpi ne, %10, %c0_i32_9 : i32
    scf.if %11 {
      %c0_10 = arith.constant 0 : index
      %c0_11 = arith.constant 0 : index
      %12 = vector.load %arg7[%c0_10, %c0_11] : memref<8x128xf32, #tpu.memory_space<vmem>>, vector<8x128xf32>
      %c0_12 = arith.constant 0 : index
      %c0_13 = arith.constant 0 : index
      %13 = vector.load %arg5[%c0_12, %c0_13] : memref<1x128xf32, #tpu.memory_space<vmem>>, vector<1x128xf32>
      %14 = vector.broadcast %13 : vector<1x128xf32> to vector<8x128xf32>
      %15 = arith.addf %12, %14 : vector<8x128xf32>
      %cst_14 = arith.constant 0.000000e+00 : f32
      %16 = vector.broadcast %cst_14 : f32 to vector<8x128xf32>
      %17 = arith.maximumf %15, %16 : vector<8x128xf32>
      %18 = arith.truncf %17 : vector<8x128xf32> to vector<8x128xbf16>
      %c0_15 = arith.constant 0 : index
      %c0_16 = arith.constant 0 : index
      %19 = vector.load %arg6[%c0_15, %c0_16] : memref<8x128xbf16, #tpu.memory_space<vmem>>, vector<8x128xbf16>
      tpu.vector_store %arg6[%c0_15, %c0_16], %18 {strides = array<i32>} : memref<8x128xbf16, #tpu.memory_space<vmem>>, vector<8x128xbf16>,
    } else {
    }
    return
  }
  func.func @transform_0(%arg0: i32, %arg1: i32, %arg2: i32) -> (i32, i32) {
    %c0_i32 = arith.constant 0 : i32
    return %arg0, %arg2 : i32, i32
  }
  func.func @transform_1(%arg0: i32, %arg1: i32, %arg2: i32) -> (i32, i32) {
    %c0_i32 = arith.constant 0 : i32
    return %arg2, %arg1 : i32, i32
  }
  func.func @transform_2(%arg0: i32, %arg1: i32, %arg2: i32) -> (i32, i32) {
    %c0_i32 = arith.constant 0 : i32
    %c0_i32_0 = arith.constant 0 : i32
    return %c0_i32, %arg1 : i32, i32
  }
  func.func @transform_3(%arg0: i32, %arg1: i32, %arg2: i32) -> (i32, i32) {
    %c0_i32 = arith.constant 0 : i32
    return %arg0, %arg1 : i32, i32
  }
}

module attributes {stable_mosaic.version = 11 : i64} {
  func.func @_matmul_bias_act_kernel(%arg0: i32, %arg1: i32, %arg2: i32, %arg3: memref<8x128xbf16, #tpu.memory_space<vmem>>, %arg4: memref<128x128xbf16, #tpu.memory_space<vmem>>, %arg5: memref<1x128xf32, #tpu.memory_space<vmem>>, %arg6: memref<8x128xbf16, #tpu.memory_space<vmem>>, %arg7: memref<8x128xf32, #tpu.memory_space<vmem>>) attributes {dimension_semantics = [#tpu.dimension_semantics<parallel>, #tpu.dimension_semantics<parallel>, #tpu.dimension_semantics<arbitrary>], iteration_bounds = array<i64: 1, 1, 5>, scalar_prefetch = 0 : i64, scratch_operands = 1 : i64, tpu.core_type = #tpu.core_type<tc>, window_params = [{transform_indices = @transform_0, window_bounds = array<i64: 8, 128>}, {transform_indices = @transform_1, window_bounds = array<i64: 128, 128>}, {transform_indices = @transform_2, window_bounds = array<i64: 1, 128>}, {transform_indices = @transform_3, window_bounds = array<i64: 8, 128>}]} {
    %c0_i32 = arith.constant 0 : i32
    %0 = arith.cmpi eq, %arg2, %c0_i32 : i32
    %1 = arith.extui %0 : i1 to i32
    %c0_i32_0 = arith.constant 0 : i32
    %2 = arith.cmpi ne, %1, %c0_i32_0 : i32
    scf.if %2 {
      %cst_9 = arith.constant 0.000000e+00 : f32
      %12 = vector.broadcast %cst_9 : f32 to vector<8x128xf32>
      %c0_10 = arith.constant 0 : index
      %c0_11 = arith.constant 0 : index
      %13 = vector.load %arg7[%c0_10, %c0_11] : memref<8x128xf32, #tpu.memory_space<vmem>>, vector<8x128xf32>
      tpu.vector_store %arg7[%c0_10, %c0_11], %12 {strides = array<i32>} : memref<8x128xf32, #tpu.memory_space<vmem>>, vector<8x128xf32>,
    } else {
    }
    %c0 = arith.constant 0 : index
    %c0_1 = arith.constant 0 : index
    %3 = vector.load %arg7[%c0, %c0_1] : memref<8x128xf32, #tpu.memory_space<vmem>>, vector<8x128xf32>
    %c0_2 = arith.constant 0 : index
    %c0_3 = arith.constant 0 : index
    %4 = vector.load %arg3[%c0_2, %c0_3] : memref<8x128xbf16, #tpu.memory_space<vmem>>, vector<8x128xbf16>
    %c0_4 = arith.constant 0 : index
    %c0_5 = arith.constant 0 : index
    %5 = vector.load %arg4[%c0_4, %c0_5] : memref<128x128xbf16, #tpu.memory_space<vmem>>, vector<128x128xbf16>
    %cst = arith.constant dense<0.000000e+00> : vector<8x128xf32>
    %6 = tpu.matmul %4, %5, %cst {dimension_numbers = #tpu.dot_dimension_numbers<[1], [0], [0], [1], [0, 0, 1, 1], [], []>} : vector<8x128xbf16>, vector<128x128xbf16>, vector<8x128xf32> -> vector<8x128xf32>
    %7 = arith.addf %3, %6 : vector<8x128xf32>
    %c0_6 = arith.constant 0 : index
    %c0_7 = arith.constant 0 : index
    %8 = vector.load %arg7[%c0_6, %c0_7] : memref<8x128xf32, #tpu.memory_space<vmem>>, vector<8x128xf32>
    tpu.vector_store %arg7[%c0_6, %c0_7], %7 {strides = array<i32>} : memref<8x128xf32, #tpu.memory_space<vmem>>, vector<8x128xf32>,
    %c4_i32 = arith.constant 4 : i32
    %9 = arith.cmpi eq, %arg2, %c4_i32 : i32
    %10 = arith.extui %9 : i1 to i32
    %c0_i32_8 = arith.constant 0 : i32
    %11 = arith.cmpi ne, %10, %c0_i32_8 : i32
    scf.if %11 {
      %c0_9 = arith.constant 0 : index
      %c0_10 = arith.constant 0 : index
      %12 = vector.load %arg7[%c0_9, %c0_10] : memref<8x128xf32, #tpu.memory_space<vmem>>, vector<8x128xf32>
      %c0_11 = arith.constant 0 : index
      %c0_12 = arith.constant 0 : index
      %13 = vector.load %arg5[%c0_11, %c0_12] : memref<1x128xf32, #tpu.memory_space<vmem>>, vector<1x128xf32>
      %14 = vector.broadcast %13 : vector<1x128xf32> to vector<8x128xf32>
      %15 = arith.addf %12, %14 : vector<8x128xf32>
      %cst_13 = arith.constant 0.000000e+00 : f32
      %16 = vector.broadcast %cst_13 : f32 to vector<8x128xf32>
      %17 = arith.maximumf %15, %16 : vector<8x128xf32>
      %18 = arith.truncf %17 : vector<8x128xf32> to vector<8x128xbf16>
      %c0_14 = arith.constant 0 : index
      %c0_15 = arith.constant 0 : index
      %19 = vector.load %arg6[%c0_14, %c0_15] : memref<8x128xbf16, #tpu.memory_space<vmem>>, vector<8x128xbf16>
      tpu.vector_store %arg6[%c0_14, %c0_15], %18 {strides = array<i32>} : memref<8x128xbf16, #tpu.memory_space<vmem>>, vector<8x128xbf16>,
    } else {
    }
    return
  }
  func.func @transform_0(%arg0: i32, %arg1: i32, %arg2: i32) -> (i32, i32) {
    %c0_i32 = arith.constant 0 : i32
    return %arg0, %arg2 : i32, i32
  }
  func.func @transform_1(%arg0: i32, %arg1: i32, %arg2: i32) -> (i32, i32) {
    %c0_i32 = arith.constant 0 : i32
    return %arg2, %arg1 : i32, i32
  }
  func.func @transform_2(%arg0: i32, %arg1: i32, %arg2: i32) -> (i32, i32) {
    %c0_i32 = arith.constant 0 : i32
    %c0_i32_0 = arith.constant 0 : i32
    return %c0_i32, %arg1 : i32, i32
  }
  func.func @transform_3(%arg0: i32, %arg1: i32, %arg2: i32) -> (i32, i32) {
    %c0_i32 = arith.constant 0 : i32
    return %arg0, %arg1 : i32, i32
  }
}

module attributes {stable_mosaic.version = 11 : i64} {
  func.func @_matmul_bias_act_kernel(%arg0: i32, %arg1: i32, %arg2: i32, %arg3: memref<8x128xbf16, #tpu.memory_space<vmem>>, %arg4: memref<128x128xbf16, #tpu.memory_space<vmem>>, %arg5: memref<1x128xf32, #tpu.memory_space<vmem>>, %arg6: memref<8x128xbf16, #tpu.memory_space<vmem>>, %arg7: memref<8x128xbf16, #tpu.memory_space<vmem>>, %arg8: memref<8x128xf32, #tpu.memory_space<vmem>>) attributes {dimension_semantics = [#tpu.dimension_semantics<parallel>, #tpu.dimension_semantics<parallel>, #tpu.dimension_semantics<arbitrary>], iteration_bounds = array<i64: 1, 1, 5>, scalar_prefetch = 0 : i64, scratch_operands = 1 : i64, tpu.core_type = #tpu.core_type<tc>, window_params = [{transform_indices = @transform_0, window_bounds = array<i64: 8, 128>}, {transform_indices = @transform_1, window_bounds = array<i64: 128, 128>}, {transform_indices = @transform_2, window_bounds = array<i64: 1, 128>}, {transform_indices = @transform_3, window_bounds = array<i64: 8, 128>}, {transform_indices = @transform_4, window_bounds = array<i64: 8, 128>}]} {
    %c0_i32 = arith.constant 0 : i32
    %0 = arith.cmpi eq, %arg2, %c0_i32 : i32
    %1 = arith.extui %0 : i1 to i32
    %c0_i32_0 = arith.constant 0 : i32
    %2 = arith.cmpi ne, %1, %c0_i32_0 : i32
    scf.if %2 {
      %cst_9 = arith.constant 0.000000e+00 : f32
      %12 = vector.broadcast %cst_9 : f32 to vector<8x128xf32>
      %c0_10 = arith.constant 0 : index
      %c0_11 = arith.constant 0 : index
      %13 = vector.load %arg8[%c0_10, %c0_11] : memref<8x128xf32, #tpu.memory_space<vmem>>, vector<8x128xf32>
      tpu.vector_store %arg8[%c0_10, %c0_11], %12 {strides = array<i32>} : memref<8x128xf32, #tpu.memory_space<vmem>>, vector<8x128xf32>,
    } else {
    }
    %c0 = arith.constant 0 : index
    %c0_1 = arith.constant 0 : index
    %3 = vector.load %arg8[%c0, %c0_1] : memref<8x128xf32, #tpu.memory_space<vmem>>, vector<8x128xf32>
    %c0_2 = arith.constant 0 : index
    %c0_3 = arith.constant 0 : index
    %4 = vector.load %arg3[%c0_2, %c0_3] : memref<8x128xbf16, #tpu.memory_space<vmem>>, vector<8x128xbf16>
    %c0_4 = arith.constant 0 : index
    %c0_5 = arith.constant 0 : index
    %5 = vector.load %arg4[%c0_4, %c0_5] : memref<128x128xbf16, #tpu.memory_space<vmem>>, vector<128x128xbf16>
    %cst = arith.constant dense<0.000000e+00> : vector<8x128xf32>
    %6 = tpu.matmul %4, %5, %cst {dimension_numbers = #tpu.dot_dimension_numbers<[1], [0], [0], [1], [0, 0, 1, 1], [], []>} : vector<8x128xbf16>, vector<128x128xbf16>, vector<8x128xf32> -> vector<8x128xf32>
    %7 = arith.addf %3, %6 : vector<8x128xf32>
    %c0_6 = arith.constant 0 : index
    %c0_7 = arith.constant 0 : index
    %8 = vector.load %arg8[%c0_6, %c0_7] : memref<8x128xf32, #tpu.memory_space<vmem>>, vector<8x128xf32>
    tpu.vector_store %arg8[%c0_6, %c0_7], %7 {strides = array<i32>} : memref<8x128xf32, #tpu.memory_space<vmem>>, vector<8x128xf32>,
    %c4_i32 = arith.constant 4 : i32
    %9 = arith.cmpi eq, %arg2, %c4_i32 : i32
    %10 = arith.extui %9 : i1 to i32
    %c0_i32_8 = arith.constant 0 : i32
    %11 = arith.cmpi ne, %10, %c0_i32_8 : i32
    scf.if %11 {
      %c0_9 = arith.constant 0 : index
      %c0_10 = arith.constant 0 : index
      %12 = vector.load %arg8[%c0_9, %c0_10] : memref<8x128xf32, #tpu.memory_space<vmem>>, vector<8x128xf32>
      %c0_11 = arith.constant 0 : index
      %c0_12 = arith.constant 0 : index
      %13 = vector.load %arg5[%c0_11, %c0_12] : memref<1x128xf32, #tpu.memory_space<vmem>>, vector<1x128xf32>
      %14 = vector.broadcast %13 : vector<1x128xf32> to vector<8x128xf32>
      %15 = arith.addf %12, %14 : vector<8x128xf32>
      %c0_13 = arith.constant 0 : index
      %c0_14 = arith.constant 0 : index
      %16 = vector.load %arg6[%c0_13, %c0_14] : memref<8x128xbf16, #tpu.memory_space<vmem>>, vector<8x128xbf16>
      %17 = arith.extf %16 : vector<8x128xbf16> to vector<8x128xf32>
      %18 = arith.addf %15, %17 : vector<8x128xf32>
      %cst_15 = arith.constant 0.000000e+00 : f32
      %19 = vector.broadcast %cst_15 : f32 to vector<8x128xf32>
      %20 = arith.maximumf %18, %19 : vector<8x128xf32>
      %21 = arith.truncf %20 : vector<8x128xf32> to vector<8x128xbf16>
      %c0_16 = arith.constant 0 : index
      %c0_17 = arith.constant 0 : index
      %22 = vector.load %arg7[%c0_16, %c0_17] : memref<8x128xbf16, #tpu.memory_space<vmem>>, vector<8x128xbf16>
      tpu.vector_store %arg7[%c0_16, %c0_17], %21 {strides = array<i32>} : memref<8x128xbf16, #tpu.memory_space<vmem>>, vector<8x128xbf16>,
    } else {
    }
    return
  }
  func.func @transform_0(%arg0: i32, %arg1: i32, %arg2: i32) -> (i32, i32) {
    %c0_i32 = arith.constant 0 : i32
    return %arg0, %arg2 : i32, i32
  }
  func.func @transform_1(%arg0: i32, %arg1: i32, %arg2: i32) -> (i32, i32) {
    %c0_i32 = arith.constant 0 : i32
    return %arg2, %arg1 : i32, i32
  }
  func.func @transform_2(%arg0: i32, %arg1: i32, %arg2: i32) -> (i32, i32) {
    %c0_i32 = arith.constant 0 : i32
    %c0_i32_0 = arith.constant 0 : i32
    return %c0_i32, %arg1 : i32, i32
  }
  func.func @transform_3(%arg0: i32, %arg1: i32, %arg2: i32) -> (i32, i32) {
    %c0_i32 = arith.constant 0 : i32
    return %arg0, %arg1 : i32, i32
  }
  func.func @transform_4(%arg0: i32, %arg1: i32, %arg2: i32) -> (i32, i32) {
    %c0_i32 = arith.constant 0 : i32
    return %arg0, %arg1 : i32, i32
  }
}

module attributes {stable_mosaic.version = 11 : i64} {
  func.func @_avgpool_kernel(%arg0: i32, %arg1: memref<1x1x64xbf16, #tpu.memory_space<vmem>>, %arg2: memref<1x1x64xf32, #tpu.memory_space<vmem>>) attributes {dimension_semantics = [#tpu.dimension_semantics<parallel>], iteration_bounds = array<i64: 2>, scalar_prefetch = 0 : i64, scratch_operands = 0 : i64, tpu.core_type = #tpu.core_type<tc>, window_params = [{transform_indices = @transform_0, window_bounds = array<i64: 1, 1, 64>}, {transform_indices = @transform_1, window_bounds = array<i64: 1, 1, 64>}]} {
    %c0 = arith.constant 0 : index
    %c0_0 = arith.constant 0 : index
    %c0_1 = arith.constant 0 : index
    %0 = vector.load %arg1[%c0, %c0_0, %c0_1] : memref<1x1x64xbf16, #tpu.memory_space<vmem>>, vector<1x1x64xbf16>
    %1 = arith.extf %0 : vector<1x1x64xbf16> to vector<1x1x64xf32>
    %cst = arith.constant dense<0.000000e+00> : vector<1x64xf32>
    %2 = vector.multi_reduction <add>, %1, %cst [1] : vector<1x1x64xf32> to vector<1x64xf32>
    %3 = vector.shape_cast %2 : vector<1x64xf32> to vector<1x1x64xf32>
    %cst_2 = arith.constant 1.000000e+00 : f32
    %4 = vector.broadcast %cst_2 : f32 to vector<1x1x64xf32>
    %5 = arith.divf %3, %4 : vector<1x1x64xf32>
    %c0_3 = arith.constant 0 : index
    %c0_4 = arith.constant 0 : index
    %c0_5 = arith.constant 0 : index
    %6 = vector.load %arg2[%c0_3, %c0_4, %c0_5] : memref<1x1x64xf32, #tpu.memory_space<vmem>>, vector<1x1x64xf32>
    tpu.vector_store %arg2[%c0_3, %c0_4, %c0_5], %5 {strides = array<i32>} : memref<1x1x64xf32, #tpu.memory_space<vmem>>, vector<1x1x64xf32>,
    return
  }
  func.func @transform_0(%arg0: i32) -> (i32, i32, i32) {
    %c0_i32 = arith.constant 0 : i32
    %c0_i32_0 = arith.constant 0 : i32
    %c0_i32_1 = arith.constant 0 : i32
    return %arg0, %c0_i32, %c0_i32_0 : i32, i32, i32
  }
  func.func @transform_1(%arg0: i32) -> (i32, i32, i32) {
    %c0_i32 = arith.constant 0 : i32
    %c0_i32_0 = arith.constant 0 : i32
    %c0_i32_1 = arith.constant 0 : i32
    return %arg0, %c0_i32, %c0_i32_0 : i32, i32, i32
  }
}

</mosaic_0001>

<llo_original>
// kernel: resnet34fc_forward.39
$region0: #{resnet34fc_forward.39}
  #allocation0 [shape = 'u32[]', space=smem, size = 0x4, offset = 0x4, fixed_abs, tag = 'smem constant byte address 0x4 - core index']
  #allocation1 [shape = 'u32[144,128]{1,0:T(1,128)}', space=vmem, size = 0x12000, scoped, tag = 'internal scratch']
  %s0 = inlined_call_operand.vmem [shape: bf16[2,9,9,8], index: 0, kind: input, shape index: {}]
  %s1 = inlined_call_operand.vmem [shape: bf16[2,9,8,8], index: 1, kind: input, shape index: {}]
  %s2 = inlined_call_operand.vmem [shape: bf16[2,8,9,8], index: 2, kind: input, shape index: {}]
  %s3 = inlined_call_operand.vmem [shape: bf16[2,8,8,8], index: 3, kind: input, shape index: {}]
  %s4 = inlined_call_operand.vmem [shape: bf16[2,8,8,8], index: 4, kind: output, shape index: {}]
  %s5 = sld [smem:[#allocation0]]
  $region49: #{resnet34fc_forward.39} parent=0
    _
  %s7 = ssub.s32 1, %s5
  %s8 = scalar_select 0, %s7, %s5
  loop: start=0, step=1, limit=4
  $region2: #{resnet34fc_forward.39} parent=0 // loop_pre_header
    _
  $region3: #{resnet34fc_forward.39} parent=0 // loop_header
    %s10 = sphi 0, %s14
    %p11 = scmp.ge.s32.totalorder %s10, 4
    %s20 = sphi 0, %s22
    %s23 = sphi 0, %s20
    %s24 = sphi 0, %s23
    %s40 = sphi 0, %s24
    %s46 = sphi 0, %s48
    %s49 = sphi 0, %s46
    %s50 = sphi 0, %s49
    %s66 = sphi 0, %s50
    %s72 = sphi 0, %s74
    %s75 = sphi 0, %s72
    %s76 = sphi 0, %s75
    %s92 = sphi 0, %s76
    %s98 = sphi 0, %s100
    %s101 = sphi 0, %s98
    %s102 = sphi 0, %s101
    %s118 = sphi 0, %s102
    %s124 = sphi 0, %s126
    %s127 = sphi 0, %s124
    %s128 = sphi 0, %s127
    %s144 = sphi 0, %s128
  $region4: #{resnet34fc_forward.39} parent=0 // loop_header_branch
    %13 = sbr.rel (%p11) target = $region8
  $region5: #{resnet34fc_forward.39} parent=0 // loop_body
    %s15 = ssub.s32 %s10, 1
    %s16 = ssub.s32 %s10, 2
    %s17 = sadd.s32 %s10, 1
    %s18 = ssub.s32 %s10, %s17
    %p19 = scmp.eq.s32.totalorder %s18, 0
    %s21 = sadd.s32 %s20, 1
    %s22 = scalar_select %p19, %s20, %s21
    %p25 = pneg %p19
    %p26 = scmp.eq.s32.totalorder %s10, 1
    %p27 = por %p25, %p26
    %p28 = scmp.ne.s32.totalorder %s20, %s23
    %p29 = scmp.eq.s32.totalorder %s10, 0
    %p30 = por %p28, %p29
    %p31 = scmp.ne.s32.totalorder %s20, %s23
    %p32 = scmp.eq.s32.totalorder %s15, 1
    %p33 = por %p31, %p32
    %p34 = scmp.ne.s32.totalorder %s23, %s24
    %p35 = scmp.eq.s32.totalorder %s15, 0
    %p36 = por %p34, %p35
    %p37 = scmp.ne.s32.totalorder %s23, %s24
    %p38 = scmp.eq.s32.totalorder %s16, 1
    %p39 = por %p37, %p38
    %p41 = scmp.ne.s32.totalorder %s24, %s40
    %p42 = scmp.eq.s32.totalorder %s16, 0
    %p43 = por %p41, %p42
    %s44 = ssub.s32 %s10, %s17
    %p45 = scmp.eq.s32.totalorder %s44, 0
    %s47 = sadd.s32 %s46, 1
    %s48 = scalar_select %p45, %s46, %s47
    %p51 = pneg %p45
    %p52 = scmp.eq.s32.totalorder %s10, 1
    %p53 = por %p51, %p52
    %p54 = scmp.ne.s32.totalorder %s46, %s49
    %p55 = scmp.eq.s32.totalorder %s10, 0
    %p56 = por %p54, %p55
    %p57 = scmp.ne.s32.totalorder %s46, %s49
    %p58 = scmp.eq.s32.totalorder %s15, 1
    %p59 = por %p57, %p58
    %p60 = scmp.ne.s32.totalorder %s49, %s50
    %p61 = scmp.eq.s32.totalorder %s15, 0
    %p62 = por %p60, %p61
    %p63 = scmp.ne.s32.totalorder %s49, %s50
    %p64 = scmp.eq.s32.totalorder %s16, 1
    %p65 = por %p63, %p64
    %p67 = scmp.ne.s32.totalorder %s50, %s66
    %p68 = scmp.eq.s32.totalorder %s16, 0
    %p69 = por %p67, %p68
    %s70 = ssub.s32 %s10, %s17
    %p71 = scmp.eq.s32.totalorder %s70, 0
    %s73 = sadd.s32 %s72, 1
    %s74 = scalar_select %p71, %s72, %s73
    %p77 = pneg %p71
    %p78 = scmp.eq.s32.totalorder %s10, 1
    %p79 = por %p77, %p78
    %p80 = scmp.ne.s32.totalorder %s72, %s75
    %p81 = scmp.eq.s32.totalorder %s10, 0
    %p82 = por %p80, %p81
    %p83 = scmp.ne.s32.totalorder %s72, %s75
    %p84 = scmp.eq.s32.totalorder %s15, 1
    %p85 = por %p83, %p84
    %p86 = scmp.ne.s32.totalorder %s75, %s76
    %p87 = scmp.eq.s32.totalorder %s15, 0
    %p88 = por %p86, %p87
    %p89 = scmp.ne.s32.totalorder %s75, %s76
    %p90 = scmp.eq.s32.totalorder %s16, 1
    %p91 = por %p89, %p90
    %p93 = scmp.ne.s32.totalorder %s76, %s92
    %p94 = scmp.eq.s32.totalorder %s16, 0
    %p95 = por %p93, %p94
    %s96 = ssub.s32 %s10, %s17
    %p97 = scmp.eq.s32.totalorder %s96, 0
    %s99 = sadd.s32 %s98, 1
    %s100 = scalar_select %p97, %s98, %s99
    %p103 = pneg %p97
    %p104 = scmp.eq.s32.totalorder %s10, 1
    %p105 = por %p103, %p104
    %p106 = scmp.ne.s32.totalorder %s98, %s101
    %p107 = scmp.eq.s32.totalorder %s10, 0
    %p108 = por %p106, %p107
    %p109 = scmp.ne.s32.totalorder %s98, %s101
    %p110 = scmp.eq.s32.totalorder %s15, 1
    %p111 = por %p109, %p110
    %p112 = scmp.ne.s32.totalorder %s101, %s102
    %p113 = scmp.eq.s32.totalorder %s15, 0
    %p114 = por %p112, %p113
    %p115 = scmp.ne.s32.totalorder %s101, %s102
    %p116 = scmp.eq.s32.totalorder %s16, 1
    %p117 = por %p115, %p116
    %p119 = scmp.ne.s32.totalorder %s102, %s118
    %p120 = scmp.eq.s32.totalorder %s16, 0
    %p121 = por %p119, %p120
    %s122 = ssub.s32 %s10, %s17
    %p123 = scmp.eq.s32.totalorder %s122, 0
    %s125 = sadd.s32 %s124, 1
    %s126 = scalar_select %p123, %s124, %s125
    %p129 = pneg %p123
    %p130 = scmp.eq.s32.totalorder %s10, 1
    %p131 = por %p129, %p130
    %p132 = scmp.ne.s32.totalorder %s124, %s127
    %p133 = scmp.eq.s32.totalorder %s10, 0
    %p134 = por %p132, %p133
    %p135 = scmp.ne.s32.totalorder %s124, %s127
    %p136 = scmp.eq.s32.totalorder %s15, 1
    %p137 = por %p135, %p136
    %p138 = scmp.ne.s32.totalorder %s127, %s128
    %p139 = scmp.eq.s32.totalorder %s15, 0
    %p140 = por %p138, %p139
    %p141 = scmp.ne.s32.totalorder %s127, %s128
    %p142 = scmp.eq.s32.totalorder %s16, 1
    %p143 = por %p141, %p142
    %p145 = scmp.ne.s32.totalorder %s128, %s144
    %p146 = scmp.eq.s32.totalorder %s16, 0
    %p147 = por %p145, %p146
    %p148 = scmp.le.s32.totalorder 1, %s10
    %p149 = scmp.lt.s32.totalorder %s10, 3
    %p150 = pnand %p148, %p149
    %p151 = pneg %p150
    // Predicated region
    $region9: #{resnet34fc_forward.39} parent=5 // pred_check
      _
    $region10: #{resnet34fc_forward.39} parent=5 // pred_check_branch
      %153 = sbr.rel (%p150) target = $region12
    $region11: #{resnet34fc_forward.39} parent=5 // pred_region
      %s154 = ssub.s32 %s10, 1
    $region12: #{resnet34fc_forward.39} parent=5 // pred_fallthru
      _
    %p155 = scmp.lt.s32.totalorder %s10, 2
    // Predicated region
    $region13: #{resnet34fc_forward.39} parent=5 // pred_check
      %p156 = pneg %p155
    $region14: #{resnet34fc_forward.39} parent=5 // pred_check_branch
      %158 = sbr.rel (%p156) target = $region16
    $region15: #{resnet34fc_forward.39} parent=5 // pred_region
      // Predicated region
      $region17: #{resnet34fc_forward.39} parent=15 // pred_check
        %p159 = pneg %p30
      $region18: #{resnet34fc_forward.39} parent=15 // pred_check_branch
        %161 = sbr.rel (%p159) target = $region20
      $region19: #{resnet34fc_forward.39} parent=15 // pred_region
        %p162 = scmp.lt.s32.totalorder %s10, 1
        %s163 = scalar_select %p162, %s10, 1
        %s164 = smul.addr %s163, 18
        %s165 = smul.addr %s164, 4
        %s166 = scalar_lea.vmem %s0, %s165
      $region20: #{resnet34fc_forward.39} parent=15 // pred_fallthru
        _
      // Predicated region
      $region21: #{resnet34fc_forward.39} parent=15 // pred_check
        %p167 = pneg %p56
      $region22: #{resnet34fc_forward.39} parent=15 // pred_check_branch
        %169 = sbr.rel (%p167) target = $region24
      $region23: #{resnet34fc_forward.39} parent=15 // pred_region
        %p170 = scmp.lt.s32.totalorder %s10, 1
        %s171 = scalar_select %p170, %s10, 1
        %s172 = smul.addr %s171, 9
        %s173 = smul.addr %s172, 4
        %s174 = scalar_lea.vmem %s1, %s173
      $region24: #{resnet34fc_forward.39} parent=15 // pred_fallthru
        _
      // Predicated region
      $region25: #{resnet34fc_forward.39} parent=15 // pred_check
        %p175 = pneg %p82
      $region26: #{resnet34fc_forward.39} parent=15 // pred_check_branch
        %177 = sbr.rel (%p175) target = $region28
      $region27: #{resnet34fc_forward.39} parent=15 // pred_region
        %p178 = scmp.lt.s32.totalorder %s10, 1
        %s179 = scalar_select %p178, %s10, 1
        %s180 = smul.addr %s179, 16
        %s181 = smul.addr %s180, 4
        %s182 = scalar_lea.vmem %s2, %s181
      $region28: #{resnet34fc_forward.39} parent=15 // pred_fallthru
        _
      // Predicated region
      $region29: #{resnet34fc_forward.39} parent=15 // pred_check
        %p183 = pneg %p108
      $region30: #{resnet34fc_forward.39} parent=15 // pred_check_branch
        %185 = sbr.rel (%p183) target = $region32
      $region31: #{resnet34fc_forward.39} parent=15 // pred_region
        %p186 = scmp.lt.s32.totalorder %s10, 1
        %s187 = scalar_select %p186, %s10, 1
        %s188 = smul.addr %s187, 8
        %s189 = smul.addr %s188, 4
        %s190 = scalar_lea.vmem %s3, %s189
      $region32: #{resnet34fc_forward.39} parent=15 // pred_fallthru
        _
    $region16: #{resnet34fc_forward.39} parent=5 // pred_fallthru
      _
    %p191 = scmp.le.s32.totalorder 1, %s10
    %p192 = scmp.lt.s32.totalorder %s10, 3
    %p193 = pnand %p191, %p192
    %p194 = pneg %p193
    // Predicated region
    $region33: #{resnet34fc_forward.39} parent=5 // pred_check
      _
    $region34: #{resnet34fc_forward.39} parent=5 // pred_check_branch
      %196 = sbr.rel (%p193) target = $region36
    $region35: #{resnet34fc_forward.39} parent=5 // pred_region
      %s197 = ssub.s32 %s10, 1
      %p198 = scmp.lt.s32.totalorder %s15, 1
      %s199 = scalar_select %p198, %s15, 1
      %s200 = smul.addr %s199, 18
      %s201 = smul.addr %s200, 4
      %s202 = scalar_lea.vmem %s0, %s201
      %p203 = pneg %p36
      %p204 = pneg %p33
      %p205 = scmp.lt.s32.totalorder %s15, 1
      %s206 = scalar_select %p205, %s15, 1
      %s207 = smul.addr %s206, 9
      %s208 = smul.addr %s207, 4
      %s209 = scalar_lea.vmem %s1, %s208
      %p210 = pneg %p62
      %p211 = pneg %p59
      %p212 = scmp.lt.s32.totalorder %s15, 1
      %s213 = scalar_select %p212, %s15, 1
      %s214 = smul.addr %s213, 16
      %s215 = smul.addr %s214, 4
      %s216 = scalar_lea.vmem %s2, %s215
      %p217 = pneg %p88
      %p218 = pneg %p85
      %p219 = scmp.lt.s32.totalorder %s15, 1
      %s220 = scalar_select %p219, %s15, 1
      %s221 = smul.addr %s220, 8
      %s222 = smul.addr %s221, 4
      %s223 = scalar_lea.vmem %s3, %s222
      %p224 = pneg %p114
      %p225 = pneg %p111
      %p226 = pneg %p140
      %p227 = pneg %p137
      %p228 = scmp.lt.s32.totalorder %s15, 1
      %s229 = scalar_select %p228, %s15, 1
      %s230 = smul.addr %s229, 8
      %s231 = smul.addr %s230, 4
      %s232 = scalar_lea.vmem %s4, %s231
      %p233 = scmp.lt.s32.totalorder %s15, 1
      %s234 = scalar_select %p233, %s15, 1
      %s235 = smul.addr %s234, 18
      %s236 = smul.addr %s235, 4
      %s237 = scalar_lea.vmem %s0, %s236
      %p238 = scmp.lt.s32.totalorder %s15, 1
      %s239 = scalar_select %p238, %s15, 1
      %s240 = smul.addr %s239, 9
      %s241 = smul.addr %s240, 4
      %s242 = scalar_lea.vmem %s1, %s241
      %p243 = scmp.lt.s32.totalorder %s15, 1
      %s244 = scalar_select %p243, %s15, 1
      %s245 = smul.addr %s244, 16
      %s246 = smul.addr %s245, 4
      %s247 = scalar_lea.vmem %s2, %s246
      %p248 = scmp.lt.s32.totalorder %s15, 1
      %s249 = scalar_select %p248, %s15, 1
      %s250 = smul.addr %s249, 8
      %s251 = smul.addr %s250, 4
      %s252 = scalar_lea.vmem %s3, %s251
      %p253 = scmp.lt.s32.totalorder %s15, 1
      %s254 = scalar_select %p253, %s15, 1
      %s255 = smul.addr %s254, 8
      %s256 = smul.addr %s255, 4
      %s257 = scalar_lea.vmem %s4, %s256
      %v258 = vld [vmem:[%s237] sm:$0xf]
      %v259 = vld [vmem:[%s237 + $0x4] sm:$0x1]
      %v260 = vld [vmem:[%s237 + $0x8] sm:$0xf]
      %v261 = vld [vmem:[%s237 + $0xc] sm:$0x1]
      %v262 = vld [vmem:[%s237 + $0x10] sm:$0xf]
      %v263 = vld [vmem:[%s237 + $0x14] sm:$0x1]
      %v264 = vld [vmem:[%s237 + $0x18] sm:$0xf]
      %v265 = vld [vmem:[%s237 + $0x1c] sm:$0x1]
      %v266 = vld [vmem:[%s237 + $0x20] sm:$0xf]
      %v267 = vld [vmem:[%s237 + $0x24] sm:$0x1]
      %v268 = vld [vmem:[%s237 + $0x28] sm:$0xf]
      %v269 = vld [vmem:[%s237 + $0x2c] sm:$0x1]
      %v270 = vld [vmem:[%s237 + $0x30] sm:$0xf]
      %v271 = vld [vmem:[%s237 + $0x34] sm:$0x1]
      %v272 = vld [vmem:[%s237 + $0x38] sm:$0xf]
      %v273 = vld [vmem:[%s237 + $0x3c] sm:$0x1]
      %v274 = vld [vmem:[%s237 + $0x40] sm:$0xf]
      %v275 = vld [vmem:[%s237 + $0x44] sm:$0x1]
      %v276 = vld [vmem:[%s242] sm:$0xf]
      %v277 = vld [vmem:[%s242 + $0x4] sm:$0xf]
      %v278 = vld [vmem:[%s242 + $0x8] sm:$0xf]
      %v279 = vld [vmem:[%s242 + $0xc] sm:$0xf]
      %v280 = vld [vmem:[%s242 + $0x10] sm:$0xf]
      %v281 = vld [vmem:[%s242 + $0x14] sm:$0xf]
      %v282 = vld [vmem:[%s242 + $0x18] sm:$0xf]
      %v283 = vld [vmem:[%s242 + $0x1c] sm:$0xf]
      %v284 = vld [vmem:[%s242 + $0x20] sm:$0xf]
      %v285 = vld [vmem:[%s247] sm:$0xf]
      %v286 = vld [vmem:[%s247 + $0x4] sm:$0x1]
      %v287 = vld [vmem:[%s247 + $0x8] sm:$0xf]
      %v288 = vld [vmem:[%s247 + $0xc] sm:$0x1]
      %v289 = vld [vmem:[%s247 + $0x10] sm:$0xf]
      %v290 = vld [vmem:[%s247 + $0x14] sm:$0x1]
      %v291 = vld [vmem:[%s247 + $0x18] sm:$0xf]
      %v292 = vld [vmem:[%s247 + $0x1c] sm:$0x1]
      %v293 = vld [vmem:[%s247 + $0x20] sm:$0xf]
      %v294 = vld [vmem:[%s247 + $0x24] sm:$0x1]
      %v295 = vld [vmem:[%s247 + $0x28] sm:$0xf]
      %v296 = vld [vmem:[%s247 + $0x2c] sm:$0x1]
      %v297 = vld [vmem:[%s247 + $0x30] sm:$0xf]
      %v298 = vld [vmem:[%s247 + $0x34] sm:$0x1]
      %v299 = vld [vmem:[%s247 + $0x38] sm:$0xf]
      %v300 = vld [vmem:[%s247 + $0x3c] sm:$0x1]
      %v301 = vld [vmem:[%s252] sm:$0xf]
      %v302 = vld [vmem:[%s252 + $0x4] sm:$0xf]
      %v303 = vld [vmem:[%s252 + $0x8] sm:$0xf]
      %v304 = vld [vmem:[%s252 + $0xc] sm:$0xf]
      %v305 = vld [vmem:[%s252 + $0x10] sm:$0xf]
      %v306 = vld [vmem:[%s252 + $0x14] sm:$0xf]
      %v307 = vld [vmem:[%s252 + $0x18] sm:$0xf]
      %v308 = vld [vmem:[%s252 + $0x1c] sm:$0xf]
      %v309 = vmax.bf16 %v301, %v258
      %v310 = vmax.bf16 %v302, %v260
      %v311 = vmax.bf16 %v303, %v262
      %v312 = vmax.bf16 %v304, %v264
      %v313 = vmax.bf16 %v305, %v266
      %v314 = vmax.bf16 %v306, %v268
      %v315 = vmax.bf16 %v307, %v270
      %v316 = vmax.bf16 %v308, %v272
      %vm317 = vsmask.f32 3328
      %vm318 = vsmask.f32 7440
      %vm319 = vmor %vm317, %vm318
      %v321 = vshrl.u32 %v258, 16
      %v323 = vrot.slane %v321, 4
      %v324 = vshll.u32 %v258, 16
      %v326 = vrot.slane %v324, 5
      %v327 = vor.u32 %v323, %v326
      %v328 = vrot.slane %v327, 4
      %v330 = vshll.u32 %v259, 16
      %v332 = vrot.slane %v330, 5
      %v333 = vsel %vm319, %v328, %v332
      %v335 = vshrl.u32 %v260, 16
      %v337 = vrot.slane %v335, 4
      %v338 = vshll.u32 %v260, 16
      %v340 = vrot.slane %v338, 5
      %v341 = vor.u32 %v337, %v340
      %v342 = vrot.slane %v341, 4
      %v344 = vshll.u32 %v261, 16
      %v346 = vrot.slane %v344, 5
      %v347 = vsel %vm319, %v342, %v346
      %v349 = vshrl.u32 %v262, 16
      %v351 = vrot.slane %v349, 4
      %v352 = vshll.u32 %v262, 16
      %v354 = vrot.slane %v352, 5
      %v355 = vor.u32 %v351, %v354
      %v356 = vrot.slane %v355, 4
      %v358 = vshll.u32 %v263, 16
      %v360 = vrot.slane %v358, 5
      %v361 = vsel %vm319, %v356, %v360
      %v363 = vshrl.u32 %v264, 16
      %v365 = vrot.slane %v363, 4
      %v366 = vshll.u32 %v264, 16
      %v368 = vrot.slane %v366, 5
      %v369 = vor.u32 %v365, %v368
      %v370 = vrot.slane %v369, 4
      %v372 = vshll.u32 %v265, 16
      %v374 = vrot.slane %v372, 5
      %v375 = vsel %vm319, %v370, %v374
      %v377 = vshrl.u32 %v266, 16
      %v379 = vrot.slane %v377, 4
      %v380 = vshll.u32 %v266, 16
      %v382 = vrot.slane %v380, 5
      %v383 = vor.u32 %v379, %v382
      %v384 = vrot.slane %v383, 4
      %v386 = vshll.u32 %v267, 16
      %v388 = vrot.slane %v386, 5
      %v389 = vsel %vm319, %v384, %v388
      %v391 = vshrl.u32 %v268, 16
      %v393 = vrot.slane %v391, 4
      %v394 = vshll.u32 %v268, 16
      %v396 = vrot.slane %v394, 5
      %v397 = vor.u32 %v393, %v396
      %v398 = vrot.slane %v397, 4
      %v400 = vshll.u32 %v269, 16
      %v402 = vrot.slane %v400, 5
      %v403 = vsel %vm319, %v398, %v402
      %v405 = vshrl.u32 %v270, 16
      %v407 = vrot.slane %v405, 4
      %v408 = vshll.u32 %v270, 16
      %v410 = vrot.slane %v408, 5
      %v411 = vor.u32 %v407, %v410
      %v412 = vrot.slane %v411, 4
      %v414 = vshll.u32 %v271, 16
      %v416 = vrot.slane %v414, 5
      %v417 = vsel %vm319, %v412, %v416
      %v419 = vshrl.u32 %v272, 16
      %v421 = vrot.slane %v419, 4
      %v422 = vshll.u32 %v272, 16
      %v424 = vrot.slane %v422, 5
      %v425 = vor.u32 %v421, %v424
      %v426 = vrot.slane %v425, 4
      %v428 = vshll.u32 %v273, 16
      %v430 = vrot.slane %v428, 5
      %v431 = vsel %vm319, %v426, %v430
      %v440 = vmax.bf16 %v309, %v333
      %v441 = vmax.bf16 %v310, %v347
      %v442 = vmax.bf16 %v311, %v361
      %v443 = vmax.bf16 %v312, %v375
      %v444 = vmax.bf16 %v313, %v389
      %v445 = vmax.bf16 %v314, %v403
      %v446 = vmax.bf16 %v315, %v417
      %v447 = vmax.bf16 %v316, %v431
      %v448 = vmax.bf16 %v440, %v260
      %v449 = vmax.bf16 %v441, %v262
      %v450 = vmax.bf16 %v442, %v264
      %v451 = vmax.bf16 %v443, %v266
      %v452 = vmax.bf16 %v444, %v268
      %v453 = vmax.bf16 %v445, %v270
      %v454 = vmax.bf16 %v446, %v272
      %v455 = vmax.bf16 %v447, %v274
      %v457 = vshrl.u32 %v274, 16
      %v459 = vrot.slane %v457, 4
      %v460 = vshll.u32 %v274, 16
      %v462 = vrot.slane %v460, 5
      %v463 = vor.u32 %v459, %v462
      %v464 = vrot.slane %v463, 4
      %v466 = vshll.u32 %v275, 16
      %v468 = vrot.slane %v466, 5
      %v469 = vsel %vm319, %v464, %v468
      %v471 = vmax.bf16 %v448, %v347
      %v472 = vmax.bf16 %v449, %v361
      %v473 = vmax.bf16 %v450, %v375
      %v474 = vmax.bf16 %v451, %v389
      %v475 = vmax.bf16 %v452, %v403
      %v476 = vmax.bf16 %v453, %v417
      %v477 = vmax.bf16 %v454, %v431
      %v478 = vmax.bf16 %v455, %v469
      %v479 = vmax.bf16 %v471, %v276
      %v480 = vmax.bf16 %v472, %v277
      %v481 = vmax.bf16 %v473, %v278
      %v482 = vmax.bf16 %v474, %v279
      %v483 = vmax.bf16 %v475, %v280
      %v484 = vmax.bf16 %v476, %v281
      %v485 = vmax.bf16 %v477, %v282
      %v486 = vmax.bf16 %v478, %v283
      %v487 = vmax.bf16 %v479, %v277
      %v488 = vmax.bf16 %v480, %v278
      %v489 = vmax.bf16 %v481, %v279
      %v490 = vmax.bf16 %v482, %v280
      %v491 = vmax.bf16 %v483, %v281
      %v492 = vmax.bf16 %v484, %v282
      %v493 = vmax.bf16 %v485, %v283
      %v494 = vmax.bf16 %v486, %v284
      %v495 = vmax.bf16 %v487, %v285
      %v496 = vmax.bf16 %v488, %v287
      %v497 = vmax.bf16 %v489, %v289
      %v498 = vmax.bf16 %v490, %v291
      %v499 = vmax.bf16 %v491, %v293
      %v500 = vmax.bf16 %v492, %v295
      %v501 = vmax.bf16 %v493, %v297
      %v502 = vmax.bf16 %v494, %v299
      %v504 = vshrl.u32 %v285, 16
      %v506 = vrot.slane %v504, 4
      %v507 = vshll.u32 %v285, 16
      %v509 = vrot.slane %v507, 5
      %v510 = vor.u32 %v506, %v509
      %v511 = vrot.slane %v510, 4
      %v513 = vshll.u32 %v286, 16
      %v515 = vrot.slane %v513, 5
      %v516 = vsel %vm319, %v511, %v515
      %v518 = vshrl.u32 %v287, 16
      %v520 = vrot.slane %v518, 4
      %v521 = vshll.u32 %v287, 16
      %v523 = vrot.slane %v521, 5
      %v524 = vor.u32 %v520, %v523
      %v525 = vrot.slane %v524, 4
      %v527 = vshll.u32 %v288, 16
      %v529 = vrot.slane %v527, 5
      %v530 = vsel %vm319, %v525, %v529
      %v532 = vshrl.u32 %v289, 16
      %v534 = vrot.slane %v532, 4
      %v535 = vshll.u32 %v289, 16
      %v537 = vrot.slane %v535, 5
      %v538 = vor.u32 %v534, %v537
      %v539 = vrot.slane %v538, 4
      %v541 = vshll.u32 %v290, 16
      %v543 = vrot.slane %v541, 5
      %v544 = vsel %vm319, %v539, %v543
      %v546 = vshrl.u32 %v291, 16
      %v548 = vrot.slane %v546, 4
      %v549 = vshll.u32 %v291, 16
      %v551 = vrot.slane %v549, 5
      %v552 = vor.u32 %v548, %v551
      %v553 = vrot.slane %v552, 4
      %v555 = vshll.u32 %v292, 16
      %v557 = vrot.slane %v555, 5
      %v558 = vsel %vm319, %v553, %v557
      %v560 = vshrl.u32 %v293, 16
      %v562 = vrot.slane %v560, 4
      %v563 = vshll.u32 %v293, 16
      %v565 = vrot.slane %v563, 5
      %v566 = vor.u32 %v562, %v565
      %v567 = vrot.slane %v566, 4
      %v569 = vshll.u32 %v294, 16
      %v571 = vrot.slane %v569, 5
      %v572 = vsel %vm319, %v567, %v571
      %v574 = vshrl.u32 %v295, 16
      %v576 = vrot.slane %v574, 4
      %v577 = vshll.u32 %v295, 16
      %v579 = vrot.slane %v577, 5
      %v580 = vor.u32 %v576, %v579
      %v581 = vrot.slane %v580, 4
      %v583 = vshll.u32 %v296, 16
      %v585 = vrot.slane %v583, 5
      %v586 = vsel %vm319, %v581, %v585
      %v588 = vshrl.u32 %v297, 16
      %v590 = vrot.slane %v588, 4
      %v591 = vshll.u32 %v297, 16
      %v593 = vrot.slane %v591, 5
      %v594 = vor.u32 %v590, %v593
      %v595 = vrot.slane %v594, 4
      %v597 = vshll.u32 %v298, 16
      %v599 = vrot.slane %v597, 5
      %v600 = vsel %vm319, %v595, %v599
      %v602 = vshrl.u32 %v299, 16
      %v604 = vrot.slane %v602, 4
      %v605 = vshll.u32 %v299, 16
      %v607 = vrot.slane %v605, 5
      %v608 = vor.u32 %v604, %v607
      %v609 = vrot.slane %v608, 4
      %v611 = vshll.u32 %v300, 16
      %v613 = vrot.slane %v611, 5
      %v614 = vsel %vm319, %v609, %v613
      %v623 = vmax.bf16 %v495, %v516
      %v624 = vmax.bf16 %v496, %v530
      %v625 = vmax.bf16 %v497, %v544
      %v626 = vmax.bf16 %v498, %v558
      %v627 = vmax.bf16 %v499, %v572
      %v628 = vmax.bf16 %v500, %v586
      %v629 = vmax.bf16 %v501, %v600
      %v630 = vmax.bf16 %v502, %v614
      %vm631 = vcmask 60416
      %632 = vst.msk [vmem:[%s257] sm:$0xf] %vm631, %v623
      %633 = vst.msk [vmem:[%s257 + $0x4] sm:$0xf] %vm631, %v624
      %634 = vst.msk [vmem:[%s257 + $0x8] sm:$0xf] %vm631, %v625
      %635 = vst.msk [vmem:[%s257 + $0xc] sm:$0xf] %vm631, %v626
      %636 = vst.msk [vmem:[%s257 + $0x10] sm:$0xf] %vm631, %v627
      %637 = vst.msk [vmem:[%s257 + $0x14] sm:$0xf] %vm631, %v628
      %638 = vst.msk [vmem:[%s257 + $0x18] sm:$0xf] %vm631, %v629
      %639 = vst.msk [vmem:[%s257 + $0x1c] sm:$0xf] %vm631, %v630
      %p640 = scmp.lt.s32.totalorder %s15, 1
      %s641 = scalar_select %p640, %s15, 1
      %s642 = smul.addr %s641, 8
      %s643 = smul.addr %s642, 4
      %s644 = scalar_lea.vmem %s4, %s643
      // Predicated region
      $region37: #{resnet34fc_forward.39} parent=35 // pred_check
        %p645 = pneg %p137
      $region38: #{resnet34fc_forward.39} parent=35 // pred_check_branch
        %647 = sbr.rel (%p645) target = $region40
      $region39: #{resnet34fc_forward.39} parent=35 // pred_region
        _
      $region40: #{resnet34fc_forward.39} parent=35 // pred_fallthru
        _
    $region36: #{resnet34fc_forward.39} parent=5 // pred_fallthru
      _
    %p648 = scmp.le.s32.totalorder 2, %s10
    // Predicated region
    $region41: #{resnet34fc_forward.39} parent=5 // pred_check
      %p649 = pneg %p648
    $region42: #{resnet34fc_forward.39} parent=5 // pred_check_branch
      %651 = sbr.rel (%p649) target = $region44
    $region43: #{resnet34fc_forward.39} parent=5 // pred_region
      %s652 = ssub.s32 %s10, 2
      // Predicated region
      $region45: #{resnet34fc_forward.39} parent=43 // pred_check
        %p653 = pneg %p143
      $region46: #{resnet34fc_forward.39} parent=43 // pred_check_branch
        %655 = sbr.rel (%p653) target = $region48
      $region47: #{resnet34fc_forward.39} parent=43 // pred_region
        %p656 = scmp.lt.s32.totalorder %s16, 1
        %s657 = scalar_select %p656, %s16, 1
        %s658 = smul.addr %s657, 8
        %s659 = smul.addr %s658, 4
        %s660 = scalar_lea.vmem %s4, %s659
      $region48: #{resnet34fc_forward.39} parent=43 // pred_fallthru
        _
    $region44: #{resnet34fc_forward.39} parent=5 // pred_fallthru
      _
  $region6: #{resnet34fc_forward.39} parent=0 // loop_footer
    %s14 = sadd.s32 1, %s10
  $region7: #{resnet34fc_forward.39} parent=0 // loop_footer_branch
    %9 = sbr.rel target = $region3
  $region8: #{resnet34fc_forward.39} parent=0 // loop_exit
    _

// kernel: resnet34fc_forward.38
$region0: #{resnet34fc_forward.38}
  #allocation0 [shape = 'u32[]', space=smem, size = 0x4, offset = 0x4, fixed_abs, tag = 'smem constant byte address 0x4 - core index']
  #allocation1 [shape = 'u32[144,128]{1,0:T(1,128)}', space=vmem, size = 0x12000, scoped, tag = 'internal scratch']
  #allocation2 [shape = 'f32[256,128]{1,0:T(8,128)}', space=vmem, size = 0x20000, scoped, tag = 'scratch operand']
  %s0 = inlined_call_operand.vmem [shape: bf16[512,256], index: 0, kind: input, shape index: {}]
  %s1 = inlined_call_operand.vmem [shape: bf16[256,128], index: 1, kind: input, shape index: {}]
  %s2 = inlined_call_operand.vmem [shape: f32[1,128], index: 2, kind: input, shape index: {}]
  %s3 = inlined_call_operand.vmem [shape: bf16[512,128], index: 3, kind: output, shape index: {}]
  %s4 = sld [smem:[#allocation0]]
  $region53: #{resnet34fc_forward.38} parent=0
    _
  %s6 = ssub.s32 1, %s4
  %s7 = scalar_select 0, %s6, %s4
  loop: start=0, step=1, limit=4
  $region2: #{resnet34fc_forward.38} parent=0 // loop_pre_header
    _
  $region3: #{resnet34fc_forward.38} parent=0 // loop_header
    %s9 = sphi 0, %s13
    %p10 = scmp.ge.s32.totalorder %s9, 4
    %s16 = sphi 0, %s35
    %s17 = sphi 0, %s31
    %s18 = sphi 0, %s27
    %s19 = sphi 0, %s16
    %s20 = sphi 0, %s17
    %s21 = sphi 0, %s18
    %s22 = sphi 0, %s19
    %s23 = sphi 0, %s20
    %s24 = sphi 0, %s21
    %s40 = sphi 0, %s42
    %s43 = sphi 0, %s40
    %s44 = sphi 0, %s43
    %s60 = sphi 0, %s44
    %s68 = sphi 0, %s70
    %s71 = sphi 0, %s68
    %s72 = sphi 0, %s71
    %s88 = sphi 0, %s72
    %s94 = sphi 0, %s96
    %s97 = sphi 0, %s94
    %s98 = sphi 0, %s97
    %s114 = sphi 0, %s98
    %s122 = sphi 0, %s124
    %s125 = sphi 0, %s122
    %s126 = sphi 0, %s125
    %s142 = sphi 0, %s126
  $region4: #{resnet34fc_forward.38} parent=0 // loop_header_branch
    %12 = sbr.rel (%p10) target = $region8
  $region5: #{resnet34fc_forward.38} parent=0 // loop_body
    %s14 = ssub.s32 %s9, 1
    %s15 = ssub.s32 %s9, 2
    %s25 = sadd.s32 1, %s18
    %p26 = scmp.ge.s32.totalorder %s25, 1
    %s27 = scalar_select %p26, 0, %s25
    %s28 = sadd.s32 1, %s17
    %s29 = scalar_select %p26, %s28, %s17
    %p30 = scmp.ge.s32.totalorder %s29, 1
    %s31 = scalar_select %p30, 0, %s29
    %s32 = sadd.s32 1, %s16
    %s33 = scalar_select %p30, %s32, %s16
    %p34 = scmp.ge.s32.totalorder %s33, 2
    %s35 = scalar_select %p34, 0, %s33
    %s36 = ssub.s32 %s16, %s35
    %s37 = ssub.s32 %s18, %s27
    %s38 = sor.u32 %s36, %s37
    %p39 = scmp.eq.s32.totalorder %s38, 0
    %s41 = sadd.s32 %s40, 1
    %s42 = scalar_select %p39, %s40, %s41
    %p45 = pneg %p39
    %p46 = scmp.eq.s32.totalorder %s9, 1
    %p47 = por %p45, %p46
    %p48 = scmp.ne.s32.totalorder %s40, %s43
    %p49 = scmp.eq.s32.totalorder %s9, 0
    %p50 = por %p48, %p49
    %p51 = scmp.ne.s32.totalorder %s40, %s43
    %p52 = scmp.eq.s32.totalorder %s14, 1
    %p53 = por %p51, %p52
    %p54 = scmp.ne.s32.totalorder %s43, %s44
    %p55 = scmp.eq.s32.totalorder %s14, 0
    %p56 = por %p54, %p55
    %p57 = scmp.ne.s32.totalorder %s43, %s44
    %p58 = scmp.eq.s32.totalorder %s15, 1
    %p59 = por %p57, %p58
    %p61 = scmp.ne.s32.totalorder %s44, %s60
    %p62 = scmp.eq.s32.totalorder %s15, 0
    %p63 = por %p61, %p62
    %s64 = ssub.s32 %s18, %s27
    %s65 = ssub.s32 %s17, %s31
    %s66 = sor.u32 %s64, %s65
    %p67 = scmp.eq.s32.totalorder %s66, 0
    %s69 = sadd.s32 %s68, 1
    %s70 = scalar_select %p67, %s68, %s69
    %p73 = pneg %p67
    %p74 = scmp.eq.s32.totalorder %s9, 1
    %p75 = por %p73, %p74
    %p76 = scmp.ne.s32.totalorder %s68, %s71
    %p77 = scmp.eq.s32.totalorder %s9, 0
    %p78 = por %p76, %p77
    %p79 = scmp.ne.s32.totalorder %s68, %s71
    %p80 = scmp.eq.s32.totalorder %s14, 1
    %p81 = por %p79, %p80
    %p82 = scmp.ne.s32.totalorder %s71, %s72
    %p83 = scmp.eq.s32.totalorder %s14, 0
    %p84 = por %p82, %p83
    %p85 = scmp.ne.s32.totalorder %s71, %s72
    %p86 = scmp.eq.s32.totalorder %s15, 1
    %p87 = por %p85, %p86
    %p89 = scmp.ne.s32.totalorder %s72, %s88
    %p90 = scmp.eq.s32.totalorder %s15, 0
    %p91 = por %p89, %p90
    %s92 = ssub.s32 %s17, %s31
    %p93 = scmp.eq.s32.totalorder %s92, 0
    %s95 = sadd.s32 %s94, 1
    %s96 = scalar_select %p93, %s94, %s95
    %p99 = pneg %p93
    %p100 = scmp.eq.s32.totalorder %s9, 1
    %p101 = por %p99, %p100
    %p102 = scmp.ne.s32.totalorder %s94, %s97
    %p103 = scmp.eq.s32.totalorder %s9, 0
    %p104 = por %p102, %p103
    %p105 = scmp.ne.s32.totalorder %s94, %s97
    %p106 = scmp.eq.s32.totalorder %s14, 1
    %p107 = por %p105, %p106
    %p108 = scmp.ne.s32.totalorder %s97, %s98
    %p109 = scmp.eq.s32.totalorder %s14, 0
    %p110 = por %p108, %p109
    %p111 = scmp.ne.s32.totalorder %s97, %s98
    %p112 = scmp.eq.s32.totalorder %s15, 1
    %p113 = por %p111, %p112
    %p115 = scmp.ne.s32.totalorder %s98, %s114
    %p116 = scmp.eq.s32.totalorder %s15, 0
    %p117 = por %p115, %p116
    %s118 = ssub.s32 %s16, %s35
    %s119 = ssub.s32 %s17, %s31
    %s120 = sor.u32 %s118, %s119
    %p121 = scmp.eq.s32.totalorder %s120, 0
    %s123 = sadd.s32 %s122, 1
    %s124 = scalar_select %p121, %s122, %s123
    %p127 = pneg %p121
    %p128 = scmp.eq.s32.totalorder %s9, 1
    %p129 = por %p127, %p128
    %p130 = scmp.ne.s32.totalorder %s122, %s125
    %p131 = scmp.eq.s32.totalorder %s9, 0
    %p132 = por %p130, %p131
    %p133 = scmp.ne.s32.totalorder %s122, %s125
    %p134 = scmp.eq.s32.totalorder %s14, 1
    %p135 = por %p133, %p134
    %p136 = scmp.ne.s32.totalorder %s125, %s126
    %p137 = scmp.eq.s32.totalorder %s14, 0
    %p138 = por %p136, %p137
    %p139 = scmp.ne.s32.totalorder %s125, %s126
    %p140 = scmp.eq.s32.totalorder %s15, 1
    %p141 = por %p139, %p140
    %p143 = scmp.ne.s32.totalorder %s126, %s142
    %p144 = scmp.eq.s32.totalorder %s15, 0
    %p145 = por %p143, %p144
    %p146 = scmp.le.s32.totalorder 1, %s9
    %p147 = scmp.lt.s32.totalorder %s9, 3
    %p148 = pnand %p146, %p147
    %p149 = pneg %p148
    // Predicated region
    $region9: #{resnet34fc_forward.38} parent=5 // pred_check
      _
    $region10: #{resnet34fc_forward.38} parent=5 // pred_check_branch
      %151 = sbr.rel (%p148) target = $region12
    $region11: #{resnet34fc_forward.38} parent=5 // pred_region
      %s152 = ssub.s32 %s9, 1
      // Predicated region
      $region13: #{resnet34fc_forward.38} parent=11 // pred_check
        %p153 = pneg %p84
      $region14: #{resnet34fc_forward.38} parent=11 // pred_check_branch
        %155 = sbr.rel (%p153) target = $region16
      $region15: #{resnet34fc_forward.38} parent=11 // pred_region
        %s156 = smul.u32 32, %s21
        %p157 = scmp.lt.s32.totalorder %s156, 31
        %s158 = scalar_select %p157, %s156, 31
        %p159 = scmp.lt.s32.totalorder %s20, 0
        %s160 = scalar_select %p159, %s20, 0
        %s161 = sadd.s32 %s160, %s158
        %s162 = smul.addr %s161, 4
        %s163 = scalar_lea.vmem %s1, %s162
        %s164 = smul.u32 32, %s21
      $region16: #{resnet34fc_forward.38} parent=11 // pred_fallthru
        _
      // Predicated region
      $region17: #{resnet34fc_forward.38} parent=11 // pred_check
        %p165 = pneg %p110
      $region18: #{resnet34fc_forward.38} parent=11 // pred_check_branch
        %167 = sbr.rel (%p165) target = $region20
      $region19: #{resnet34fc_forward.38} parent=11 // pred_region
        %p168 = scmp.lt.s32.totalorder %s20, 0
        %s169 = scalar_select %p168, %s20, 0
        %s170 = scalar_lea.vmem %s2, %s169
      $region20: #{resnet34fc_forward.38} parent=11 // pred_fallthru
        _
    $region12: #{resnet34fc_forward.38} parent=5 // pred_fallthru
      _
    %p171 = scmp.lt.s32.totalorder %s9, 2
    // Predicated region
    $region21: #{resnet34fc_forward.38} parent=5 // pred_check
      %p172 = pneg %p171
    $region22: #{resnet34fc_forward.38} parent=5 // pred_check_branch
      %174 = sbr.rel (%p172) target = $region24
    $region23: #{resnet34fc_forward.38} parent=5 // pred_region
      // Predicated region
      $region25: #{resnet34fc_forward.38} parent=23 // pred_check
        %p175 = pneg %p50
      $region26: #{resnet34fc_forward.38} parent=23 // pred_check_branch
        %177 = sbr.rel (%p175) target = $region28
      $region27: #{resnet34fc_forward.38} parent=23 // pred_region
        %s178 = smul.u32 32, %s16
        %s179 = smul.u32 2, %s18
        %p180 = scmp.lt.s32.totalorder %s178, 63
        %s181 = scalar_select %p180, %s178, 63
        %p182 = scmp.lt.s32.totalorder %s179, 1
        %s183 = scalar_select %p182, %s179, 1
        %s184 = smul.addr %s181, 2
        %s185 = sadd.s32 %s183, %s184
        %s186 = smul.addr %s185, 4
        %s187 = scalar_lea.vmem %s0, %s186
        %s188 = smul.u32 32, %s16
        %s189 = smul.u32 2, %s18
      $region28: #{resnet34fc_forward.38} parent=23 // pred_fallthru
        _
    $region24: #{resnet34fc_forward.38} parent=5 // pred_fallthru
      _
    %p190 = scmp.le.s32.totalorder 1, %s9
    %p191 = scmp.lt.s32.totalorder %s9, 3
    %p192 = pnand %p190, %p191
    %p193 = pneg %p192
    // Predicated region
    $region29: #{resnet34fc_forward.38} parent=5 // pred_check
      _
    $region30: #{resnet34fc_forward.38} parent=5 // pred_check_branch
      %195 = sbr.rel (%p192) target = $region32
    $region31: #{resnet34fc_forward.38} parent=5 // pred_region
      %s196 = ssub.s32 %s9, 1
      %s197 = smul.u32 32, %s19
      %s198 = smul.u32 2, %s21
      %p199 = scmp.lt.s32.totalorder %s197, 63
      %s200 = scalar_select %p199, %s197, 63
      %p201 = scmp.lt.s32.totalorder %s198, 1
      %s202 = scalar_select %p201, %s198, 1
      %s203 = smul.addr %s200, 2
      %s204 = sadd.s32 %s202, %s203
      %s205 = smul.addr %s204, 4
      %s206 = scalar_lea.vmem %s0, %s205
      %p207 = pneg %p56
      %p208 = pneg %p53
      %s209 = smul.u32 32, %s21
      %p210 = scmp.lt.s32.totalorder %s209, 31
      %s211 = scalar_select %p210, %s209, 31
      %p212 = scmp.lt.s32.totalorder %s20, 0
      %s213 = scalar_select %p212, %s20, 0
      %s214 = sadd.s32 %s213, %s211
      %s215 = smul.addr %s214, 4
      %s216 = scalar_lea.vmem %s1, %s215
      %p217 = pneg %p84
      %p218 = pneg %p81
      %p219 = scmp.lt.s32.totalorder %s20, 0
      %s220 = scalar_select %p219, %s20, 0
      %s221 = scalar_lea.vmem %s2, %s220
      %p222 = pneg %p110
      %p223 = pneg %p107
      %p224 = pneg %p138
      %p225 = pneg %p135
      %s226 = smul.u32 32, %s19
      %p227 = scmp.lt.s32.totalorder %s226, 63
      %s228 = scalar_select %p227, %s226, 63
      %p229 = scmp.lt.s32.totalorder %s20, 0
      %s230 = scalar_select %p229, %s20, 0
      %s231 = sadd.s32 %s230, %s228
      %s232 = smul.addr %s231, 4
      %s233 = scalar_lea.vmem %s3, %s232
      %s234 = smul.u32 32, %s19
      %s235 = smul.u32 2, %s21
      %p236 = scmp.lt.s32.totalorder %s234, 63
      %s237 = scalar_select %p236, %s234, 63
      %p238 = scmp.lt.s32.totalorder %s235, 1
      %s239 = scalar_select %p238, %s235, 1
      %s240 = smul.addr %s237, 2
      %s241 = sadd.s32 %s239, %s240
      %s242 = smul.addr %s241, 4
      %s243 = scalar_lea.vmem %s0, %s242
      %s244 = smul.u32 32, %s19
      %s245 = smul.u32 2, %s21
      %s246 = smul.u32 32, %s21
      %p247 = scmp.lt.s32.totalorder %s246, 31
      %s248 = scalar_select %p247, %s246, 31
      %p249 = scmp.lt.s32.totalorder %s20, 0
      %s250 = scalar_select %p249, %s20, 0
      %s251 = sadd.s32 %s250, %s248
      %s252 = smul.addr %s251, 4
      %s253 = scalar_lea.vmem %s1, %s252
      %s254 = smul.u32 32, %s21
      %p255 = scmp.lt.s32.totalorder %s20, 0
      %s256 = scalar_select %p255, %s20, 0
      %s257 = scalar_lea.vmem %s2, %s256
      %s258 = smul.u32 32, %s19
      %p259 = scmp.lt.s32.totalorder %s258, 63
      %s260 = scalar_select %p259, %s258, 63
      %p261 = scmp.lt.s32.totalorder %s20, 0
      %s262 = scalar_select %p261, %s20, 0
      %s263 = sadd.s32 %s262, %s260
      %s264 = smul.addr %s263, 4
      %s265 = scalar_lea.vmem %s3, %s264
      %s266 = smul.u32 32, %s19
      %p268 = scmp.eq.s32.totalorder %s21, 0
      // Predicated region
      $region33: #{resnet34fc_forward.38} parent=31 // pred_check
        %p269 = pneg %p268
      $region34: #{resnet34fc_forward.38} parent=31 // pred_check_branch
        %271 = sbr.rel (%p269) target = $region36
      $region35: #{resnet34fc_forward.38} parent=31 // pred_region
        %272 = vst [vmem:[#allocation2] sm:$0xff] 0.0
        %273 = vst [vmem:[#allocation2 + $0x8] sm:$0xff] 0.0
        %274 = vst [vmem:[#allocation2 + $0x10] sm:$0xff] 0.0
        %275 = vst [vmem:[#allocation2 + $0x18] sm:$0xff] 0.0
        %276 = vst [vmem:[#allocation2 + $0x20] sm:$0xff] 0.0
        %277 = vst [vmem:[#allocation2 + $0x28] sm:$0xff] 0.0
        %278 = vst [vmem:[#allocation2 + $0x30] sm:$0xff] 0.0
        %279 = vst [vmem:[#allocation2 + $0x38] sm:$0xff] 0.0
        %280 = vst [vmem:[#allocation2 + $0x40] sm:$0xff] 0.0
        %281 = vst [vmem:[#allocation2 + $0x48] sm:$0xff] 0.0
        %282 = vst [vmem:[#allocation2 + $0x50] sm:$0xff] 0.0
        %283 = vst [vmem:[#allocation2 + $0x58] sm:$0xff] 0.0
        %284 = vst [vmem:[#allocation2 + $0x60] sm:$0xff] 0.0
        %285 = vst [vmem:[#allocation2 + $0x68] sm:$0xff] 0.0
        %286 = vst [vmem:[#allocation2 + $0x70] sm:$0xff] 0.0
        %287 = vst [vmem:[#allocation2 + $0x78] sm:$0xff] 0.0
        %288 = vst [vmem:[#allocation2 + $0x80] sm:$0xff] 0.0
        %289 = vst [vmem:[#allocation2 + $0x88] sm:$0xff] 0.0
        %290 = vst [vmem:[#allocation2 + $0x90] sm:$0xff] 0.0
        %291 = vst [vmem:[#allocation2 + $0x98] sm:$0xff] 0.0
        %292 = vst [vmem:[#allocation2 + $0xa0] sm:$0xff] 0.0
        %293 = vst [vmem:[#allocation2 + $0xa8] sm:$0xff] 0.0
        %294 = vst [vmem:[#allocation2 + $0xb0] sm:$0xff] 0.0
        %295 = vst [vmem:[#allocation2 + $0xb8] sm:$0xff] 0.0
        %296 = vst [vmem:[#allocation2 + $0xc0] sm:$0xff] 0.0
        %297 = vst [vmem:[#allocation2 + $0xc8] sm:$0xff] 0.0
        %298 = vst [vmem:[#allocation2 + $0xd0] sm:$0xff] 0.0
        %299 = vst [vmem:[#allocation2 + $0xd8] sm:$0xff] 0.0
        %300 = vst [vmem:[#allocation2 + $0xe0] sm:$0xff] 0.0
        %301 = vst [vmem:[#allocation2 + $0xe8] sm:$0xff] 0.0
        %302 = vst [vmem:[#allocation2 + $0xf0] sm:$0xff] 0.0
        %303 = vst [vmem:[#allocation2 + $0xf8] sm:$0xff] 0.0
      $region36: #{resnet34fc_forward.38} parent=31 // pred_fallthru
        _
      %v304 = vld [vmem:[#allocation2] sm:$0xff]
      %v305 = vld [vmem:[#allocation2 + $0x8] sm:$0xff]
      %v306 = vld [vmem:[#allocation2 + $0x10] sm:$0xff]
      %v307 = vld [vmem:[#allocation2 + $0x18] sm:$0xff]
      %v308 = vld [vmem:[#allocation2 + $0x20] sm:$0xff]
      %v309 = vld [vmem:[#allocation2 + $0x28] sm:$0xff]
      %v310 = vld [vmem:[#allocation2 + $0x30] sm:$0xff]
      %v311 = vld [vmem:[#allocation2 + $0x38] sm:$0xff]
      %v312 = vld [vmem:[#allocation2 + $0x40] sm:$0xff]
      %v313 = vld [vmem:[#allocation2 + $0x48] sm:$0xff]
      %v314 = vld [vmem:[#allocation2 + $0x50] sm:$0xff]
      %v315 = vld [vmem:[#allocation2 + $0x58] sm:$0xff]
      %v316 = vld [vmem:[#allocation2 + $0x60] sm:$0xff]
      %v317 = vld [vmem:[#allocation2 + $0x68] sm:$0xff]
      %v318 = vld [vmem:[#allocation2 + $0x70] sm:$0xff]
      %v319 = vld [vmem:[#allocation2 + $0x78] sm:$0xff]
      %v320 = vld [vmem:[#allocation2 + $0x80] sm:$0xff]
      %v321 = vld [vmem:[#allocation2 + $0x88] sm:$0xff]
      %v322 = vld [vmem:[#allocation2 + $0x90] sm:$0xff]
      %v323 = vld [vmem:[#allocation2 + $0x98] sm:$0xff]
      %v324 = vld [vmem:[#allocation2 + $0xa0] sm:$0xff]
      %v325 = vld [vmem:[#allocation2 + $0xa8] sm:$0xff]
      %v326 = vld [vmem:[#allocation2 + $0xb0] sm:$0xff]
      %v327 = vld [vmem:[#allocation2 + $0xb8] sm:$0xff]
      %v328 = vld [vmem:[#allocation2 + $0xc0] sm:$0xff]
      %v329 = vld [vmem:[#allocation2 + $0xc8] sm:$0xff]
      %v330 = vld [vmem:[#allocation2 + $0xd0] sm:$0xff]
      %v331 = vld [vmem:[#allocation2 + $0xd8] sm:$0xff]
      %v332 = vld [vmem:[#allocation2 + $0xe0] sm:$0xff]
      %v333 = vld [vmem:[#allocation2 + $0xe8] sm:$0xff]
      %v334 = vld [vmem:[#allocation2 + $0xf0] sm:$0xff]
      %v335 = vld [vmem:[#allocation2 + $0xf8] sm:$0xff]
      %v336 = vld [vmem:[%s243] sm:$0xff]
      %v337 = vld [vmem:[%s243 + $0x8] sm:$0xff]
      %v338 = vld [vmem:[%s243 + $0x10] sm:$0xff]
      %v339 = vld [vmem:[%s243 + $0x18] sm:$0xff]
      %v340 = vld [vmem:[%s243 + $0x20] sm:$0xff]
      %v341 = vld [vmem:[%s243 + $0x28] sm:$0xff]
      %v342 = vld [vmem:[%s243 + $0x30] sm:$0xff]
      %v343 = vld [vmem:[%s243 + $0x38] sm:$0xff]
      %v344 = vld [vmem:[%s243 + $0x40] sm:$0xff]
      %v345 = vld [vmem:[%s243 + $0x48] sm:$0xff]
      %v346 = vld [vmem:[%s243 + $0x50] sm:$0xff]
      %v347 = vld [vmem:[%s243 + $0x58] sm:$0xff]
      %v348 = vld [vmem:[%s243 + $0x60] sm:$0xff]
      %v349 = vld [vmem:[%s243 + $0x68] sm:$0xff]
      %v350 = vld [vmem:[%s243 + $0x70] sm:$0xff]
      %v351 = vld [vmem:[%s243 + $0x78] sm:$0xff]
      %v352 = vld [vmem:[%s243 + $0x80] sm:$0xff]
      %v353 = vld [vmem:[%s243 + $0x88] sm:$0xff]
      %v354 = vld [vmem:[%s243 + $0x90] sm:$0xff]
      %v355 = vld [vmem:[%s243 + $0x98] sm:$0xff]
      %v356 = vld [vmem:[%s243 + $0xa0] sm:$0xff]
      %v357 = vld [vmem:[%s243 + $0xa8] sm:$0xff]
      %v358 = vld [vmem:[%s243 + $0xb0] sm:$0xff]
      %v359 = vld [vmem:[%s243 + $0xb8] sm:$0xff]
      %v360 = vld [vmem:[%s243 + $0xc0] sm:$0xff]
      %v361 = vld [vmem:[%s243 + $0xc8] sm:$0xff]
      %v362 = vld [vmem:[%s243 + $0xd0] sm:$0xff]
      %v363 = vld [vmem:[%s243 + $0xd8] sm:$0xff]
      %v364 = vld [vmem:[%s243 + $0xe0] sm:$0xff]
      %v365 = vld [vmem:[%s243 + $0xe8] sm:$0xff]
      %v366 = vld [vmem:[%s243 + $0xf0] sm:$0xff]
      %v367 = vld [vmem:[%s243 + $0xf8] sm:$0xff]
      %v368 = vld [vmem:[%s253] sm:$0xf]
      %v369 = vld [vmem:[%s253 + $0x4] sm:$0xf]
      %v370 = vld [vmem:[%s253 + $0x8] sm:$0xf]
      %v371 = vld [vmem:[%s253 + $0xc] sm:$0xf]
      %v372 = vld [vmem:[%s253 + $0x10] sm:$0xf]
      %v373 = vld [vmem:[%s253 + $0x14] sm:$0xf]
      %v374 = vld [vmem:[%s253 + $0x18] sm:$0xf]
      %v375 = vld [vmem:[%s253 + $0x1c] sm:$0xf]
      %v376 = vld [vmem:[%s253 + $0x20] sm:$0xf]
      %v377 = vld [vmem:[%s253 + $0x24] sm:$0xf]
      %v378 = vld [vmem:[%s253 + $0x28] sm:$0xf]
      %v379 = vld [vmem:[%s253 + $0x2c] sm:$0xf]
      %v380 = vld [vmem:[%s253 + $0x30] sm:$0xf]
      %v381 = vld [vmem:[%s253 + $0x34] sm:$0xf]
      %v382 = vld [vmem:[%s253 + $0x38] sm:$0xf]
      %v383 = vld [vmem:[%s253 + $0x3c] sm:$0xf]
      %v384 = vld [vmem:[%s253 + $0x40] sm:$0xf]
      %v385 = vld [vmem:[%s253 + $0x44] sm:$0xf]
      %v386 = vld [vmem:[%s253 + $0x48] sm:$0xf]
      %v387 = vld [vmem:[%s253 + $0x4c] sm:$0xf]
      %v388 = vld [vmem:[%s253 + $0x50] sm:$0xf]
      %v389 = vld [vmem:[%s253 + $0x54] sm:$0xf]
      %v390 = vld [vmem:[%s253 + $0x58] sm:$0xf]
      %v391 = vld [vmem:[%s253 + $0x5c] sm:$0xf]
      %v392 = vld [vmem:[%s253 + $0x60] sm:$0xf]
      %v393 = vld [vmem:[%s253 + $0x64] sm:$0xf]
      %v394 = vld [vmem:[%s253 + $0x68] sm:$0xf]
      %v395 = vld [vmem:[%s253 + $0x6c] sm:$0xf]
      %v396 = vld [vmem:[%s253 + $0x70] sm:$0xf]
      %v397 = vld [vmem:[%s253 + $0x74] sm:$0xf]
      %v398 = vld [vmem:[%s253 + $0x78] sm:$0xf]
      %v399 = vld [vmem:[%s253 + $0x7c] sm:$0xf]
      %v432 = vunpack.c.l.b16 %v336
      %v433 = vunpack.c.h.b16 %v336
      %v434 = vunpack.c.l.b16 %v337
      %v435 = vunpack.c.h.b16 %v337
      %v436 = vunpack.c.l.b16 %v338
      %v437 = vunpack.c.h.b16 %v338
      %v438 = vunpack.c.l.b16 %v339
      %v439 = vunpack.c.h.b16 %v339
      %v440 = vunpack.c.l.b16 %v340
      %v441 = vunpack.c.h.b16 %v340
      %v442 = vunpack.c.l.b16 %v341
      %v443 = vunpack.c.h.b16 %v341
      %v444 = vunpack.c.l.b16 %v342
      %v445 = vunpack.c.h.b16 %v342
      %v446 = vunpack.c.l.b16 %v343
      %v447 = vunpack.c.h.b16 %v343
      %v448 = vunpack.c.l.b16 %v344
      %v449 = vunpack.c.h.b16 %v344
      %v450 = vunpack.c.l.b16 %v345
      %v451 = vunpack.c.h.b16 %v345
      %v452 = vunpack.c.l.b16 %v346
      %v453 = vunpack.c.h.b16 %v346
      %v454 = vunpack.c.l.b16 %v347
      %v455 = vunpack.c.h.b16 %v347
      %v456 = vunpack.c.l.b16 %v348
      %v457 = vunpack.c.h.b16 %v348
      %v458 = vunpack.c.l.b16 %v349
      %v459 = vunpack.c.h.b16 %v349
      %v460 = vunpack.c.l.b16 %v350
      %v461 = vunpack.c.h.b16 %v350
      %v462 = vunpack.c.l.b16 %v351
      %v463 = vunpack.c.h.b16 %v351
      %v464 = vunpack.c.l.b16 %v352
      %v465 = vunpack.c.h.b16 %v352
      %v466 = vunpack.c.l.b16 %v353
      %v467 = vunpack.c.h.b16 %v353
      %v468 = vunpack.c.l.b16 %v354
      %v469 = vunpack.c.h.b16 %v354
      %v470 = vunpack.c.l.b16 %v355
      %v471 = vunpack.c.h.b16 %v355
      %v472 = vunpack.c.l.b16 %v356
      %v473 = vunpack.c.h.b16 %v356
      %v474 = vunpack.c.l.b16 %v357
      %v475 = vunpack.c.h.b16 %v357
      %v476 = vunpack.c.l.b16 %v358
      %v477 = vunpack.c.h.b16 %v358
      %v478 = vunpack.c.l.b16 %v359
      %v479 = vunpack.c.h.b16 %v359
      %v480 = vunpack.c.l.b16 %v360
      %v481 = vunpack.c.h.b16 %v360
      %v482 = vunpack.c.l.b16 %v361
      %v483 = vunpack.c.h.b16 %v361
      %v484 = vunpack.c.l.b16 %v362
      %v485 = vunpack.c.h.b16 %v362
      %v486 = vunpack.c.l.b16 %v363
      %v487 = vunpack.c.h.b16 %v363
      %v488 = vunpack.c.l.b16 %v364
      %v489 = vunpack.c.h.b16 %v364
      %v490 = vunpack.c.l.b16 %v365
      %v491 = vunpack.c.h.b16 %v365
      %v492 = vunpack.c.l.b16 %v366
      %v493 = vunpack.c.h.b16 %v366
      %v494 = vunpack.c.l.b16 %v367
      %v495 = vunpack.c.h.b16 %v367
      %v496 = vpack.c.b16 %v434, %v432
      %v497 = vpack.c.b16 %v435, %v433
      %v498 = vpack.c.b16 %v438, %v436
      %v499 = vpack.c.b16 %v439, %v437
      %v500 = vpack.c.b16 %v442, %v440
      %v501 = vpack.c.b16 %v443, %v441
      %v502 = vpack.c.b16 %v446, %v444
      %v503 = vpack.c.b16 %v447, %v445
      %v504 = vpack.c.b16 %v450, %v448
      %v505 = vpack.c.b16 %v451, %v449
      %v506 = vpack.c.b16 %v454, %v452
      %v507 = vpack.c.b16 %v455, %v453
      %v508 = vpack.c.b16 %v458, %v456
      %v509 = vpack.c.b16 %v459, %v457
      %v510 = vpack.c.b16 %v462, %v460
      %v511 = vpack.c.b16 %v463, %v461
      %v512 = vpack.c.b16 %v466, %v464
      %v513 = vpack.c.b16 %v467, %v465
      %v514 = vpack.c.b16 %v470, %v468
      %v515 = vpack.c.b16 %v471, %v469
      %v516 = vpack.c.b16 %v474, %v472
      %v517 = vpack.c.b16 %v475, %v473
      %v518 = vpack.c.b16 %v478, %v476
      %v519 = vpack.c.b16 %v479, %v477
      %v520 = vpack.c.b16 %v482, %v480
      %v521 = vpack.c.b16 %v483, %v481
      %v522 = vpack.c.b16 %v486, %v484
      %v523 = vpack.c.b16 %v487, %v485
      %v524 = vpack.c.b16 %v490, %v488
      %v525 = vpack.c.b16 %v491, %v489
      %v526 = vpack.c.b16 %v494, %v492
      %v527 = vpack.c.b16 %v495, %v493
      %v592 = vunpack.c.l.b16 %v368
      %v593 = vunpack.c.l.b16 %v369
      %v594 = vunpack.c.l.b16 %v370
      %v595 = vunpack.c.l.b16 %v371
      %v596 = vunpack.c.l.b16 %v372
      %v597 = vunpack.c.l.b16 %v373
      %v598 = vunpack.c.l.b16 %v374
      %v599 = vunpack.c.l.b16 %v375
      %v600 = vunpack.c.l.b16 %v376
      %v601 = vunpack.c.l.b16 %v377
      %v602 = vunpack.c.l.b16 %v378
      %v603 = vunpack.c.l.b16 %v379
      %v604 = vunpack.c.l.b16 %v380
      %v605 = vunpack.c.l.b16 %v381
      %v606 = vunpack.c.l.b16 %v382
      %v607 = vunpack.c.l.b16 %v383
      %v608 = vunpack.c.l.b16 %v384
      %v609 = vunpack.c.l.b16 %v385
      %v610 = vunpack.c.l.b16 %v386
      %v611 = vunpack.c.l.b16 %v387
      %v612 = vunpack.c.l.b16 %v388
      %v613 = vunpack.c.l.b16 %v389
      %v614 = vunpack.c.l.b16 %v390
      %v615 = vunpack.c.l.b16 %v391
      %v616 = vunpack.c.l.b16 %v392
      %v617 = vunpack.c.l.b16 %v393
      %v618 = vunpack.c.l.b16 %v394
      %v619 = vunpack.c.l.b16 %v395
      %v620 = vunpack.c.l.b16 %v396
      %v621 = vunpack.c.l.b16 %v397
      %v622 = vunpack.c.l.b16 %v398
      %v623 = vunpack.c.l.b16 %v399
      %v624 = vpack.c.b16 %v593, %v592
      %v625 = vpack.c.b16 %v595, %v594
      %v626 = vpack.c.b16 %v597, %v596
      %v627 = vpack.c.b16 %v599, %v598
      %v628 = vpack.c.b16 %v601, %v600
      %v629 = vpack.c.b16 %v603, %v602
      %v630 = vpack.c.b16 %v605, %v604
      %v631 = vpack.c.b16 %v607, %v606
      %v632 = vpack.c.b16 %v609, %v608
      %v633 = vpack.c.b16 %v611, %v610
      %v634 = vpack.c.b16 %v613, %v612
      %v635 = vpack.c.b16 %v615, %v614
      %v636 = vpack.c.b16 %v617, %v616
      %v637 = vpack.c.b16 %v619, %v618
      %v638 = vpack.c.b16 %v621, %v620
      %v639 = vpack.c.b16 %v623, %v622
      %656 = vmatprep.subr.bf16.mxu0 0
      %657 = vmatpush1.bf16.msra.mxu0 %v624
      %658 = vmatprep.subr.bf16.mxu0 0
      %659 = vmatpush1.bf16.msra.mxu0 %v625
      %660 = vmatprep.subr.bf16.mxu0 0
      %661 = vmatpush1.bf16.msra.mxu0 %v626
      %662 = vmatprep.subr.bf16.mxu0 0
      %663 = vmatpush1.bf16.msra.mxu0 %v627
      %664 = vmatprep.subr.bf16.mxu0 0
      %665 = vmatpush1.bf16.msra.mxu0 %v628
      %666 = vmatprep.subr.bf16.mxu0 0
      %667 = vmatpush1.bf16.msra.mxu0 %v629
      %668 = vmatprep.subr.bf16.mxu0 0
      %669 = vmatpush1.bf16.msra.mxu0 %v630
      %670 = vmatprep.subr.bf16.mxu0 0
      %671 = vmatpush1.bf16.msra.mxu0 %v631
      %672 = vmatprep.subr.bf16.mxu0 0
      %673 = vmatpush1.bf16.msra.mxu0 %v632
      %674 = vmatprep.subr.bf16.mxu0 0
      %675 = vmatpush1.bf16.msra.mxu0 %v633
      %676 = vmatprep.subr.bf16.mxu0 0
      %677 = vmatpush1.bf16.msra.mxu0 %v634
      %678 = vmatprep.subr.bf16.mxu0 0
      %679 = vmatpush1.bf16.msra.mxu0 %v635
      %680 = vmatprep.subr.bf16.mxu0 0
      %681 = vmatpush1.bf16.msra.mxu0 %v636
      %682 = vmatprep.subr.bf16.mxu0 0
      %683 = vmatpush1.bf16.msra.mxu0 %v637
      %684 = vmatprep.subr.bf16.mxu0 0
      %685 = vmatpush1.bf16.msra.mxu0 %v638
      %686 = vmatprep.subr.bf16.mxu0 0
      %687 = vmatpush1.bf16.msra.mxu0 %v639
      %688 = vmatprep.mubr.bf16.mxu0 %v497
      %689 = vmatmul.mubr.bf16.gmra.mrb[0].mxu0 %v496
      %v690 = vpop.f32.mrb[0].mxu0
      %v691 = vadd.f32 0.0, %v690
      %v692 = vpop.f32.mrb[0].mxu0
      %v693 = vpop.f32.mrb[0].mxu0
      %v694 = vadd.f32 0.0, %v693
      %v695 = vpop.f32.mrb[0].mxu0
      %696 = vmatprep.mubr.bf16.mxu0 %v499
      %697 = vmatmul.mubr.bf16.gmra.mrb[0].mxu0 %v498
      %v698 = vpop.f32.mrb[0].mxu0
      %v699 = vadd.f32 0.0, %v698
      %v700 = vpop.f32.mrb[0].mxu0
      %v701 = vpop.f32.mrb[0].mxu0
      %v702 = vadd.f32 0.0, %v701
      %v703 = vpop.f32.mrb[0].mxu0
      %704 = vmatprep.mubr.bf16.mxu0 %v501
      %705 = vmatmul.mubr.bf16.gmra.mrb[0].mxu0 %v500
      %v706 = vpop.f32.mrb[0].mxu0
      %v707 = vadd.f32 0.0, %v706
      %v708 = vpop.f32.mrb[0].mxu0
      %v709 = vpop.f32.mrb[0].mxu0
      %v710 = vadd.f32 0.0, %v709
      %v711 = vpop.f32.mrb[0].mxu0
      %712 = vmatprep.mubr.bf16.mxu0 %v503
      %713 = vmatmul.mubr.bf16.gmra.mrb[0].mxu0 %v502
      %v714 = vpop.f32.mrb[0].mxu0
      %v715 = vadd.f32 0.0, %v714
      %v716 = vpop.f32.mrb[0].mxu0
      %v717 = vpop.f32.mrb[0].mxu0
      %v718 = vadd.f32 0.0, %v717
      %v719 = vpop.f32.mrb[0].mxu0
      %720 = vmatprep.mubr.bf16.mxu0 %v505
      %721 = vmatmul.mubr.bf16.gmra.mrb[0].mxu0 %v504
      %v722 = vpop.f32.mrb[0].mxu0
      %v723 = vadd.f32 0.0, %v722
      %v724 = vpop.f32.mrb[0].mxu0
      %v725 = vpop.f32.mrb[0].mxu0
      %v726 = vadd.f32 0.0, %v725
      %v727 = vpop.f32.mrb[0].mxu0
      %728 = vmatprep.mubr.bf16.mxu0 %v507
      %729 = vmatmul.mubr.bf16.gmra.mrb[0].mxu0 %v506
      %v730 = vpop.f32.mrb[0].mxu0
      %v731 = vadd.f32 0.0, %v730
      %v732 = vpop.f32.mrb[0].mxu0
      %v733 = vpop.f32.mrb[0].mxu0
      %v734 = vadd.f32 0.0, %v733
      %v735 = vpop.f32.mrb[0].mxu0
      %736 = vmatprep.mubr.bf16.mxu0 %v509
      %737 = vmatmul.mubr.bf16.gmra.mrb[0].mxu0 %v508
      %v738 = vpop.f32.mrb[0].mxu0
      %v739 = vadd.f32 0.0, %v738
      %v740 = vpop.f32.mrb[0].mxu0
      %v741 = vpop.f32.mrb[0].mxu0
      %v742 = vadd.f32 0.0, %v741
      %v743 = vpop.f32.mrb[0].mxu0
      %744 = vmatprep.mubr.bf16.mxu0 %v511
      %745 = vmatmul.mubr.bf16.gmra.mrb[0].mxu0 %v510
      %v746 = vpop.f32.mrb[0].mxu0
      %v747 = vadd.f32 0.0, %v746
      %v748 = vpop.f32.mrb[0].mxu0
      %v749 = vpop.f32.mrb[0].mxu0
      %v750 = vadd.f32 0.0, %v749
      %v751 = vpop.f32.mrb[0].mxu0
      %752 = vmatprep.mubr.bf16.mxu0 %v513
      %753 = vmatmul.mubr.bf16.gmra.mrb[0].mxu0 %v512
      %v754 = vpop.f32.mrb[0].mxu0
      %v755 = vadd.f32 0.0, %v754
      %v756 = vpop.f32.mrb[0].mxu0
      %v757 = vpop.f32.mrb[0].mxu0
      %v758 = vadd.f32 0.0, %v757
      %v759 = vpop.f32.mrb[0].mxu0
      %760 = vmatprep.mubr.bf16.mxu0 %v515
      %761 = vmatmul.mubr.bf16.gmra.mrb[0].mxu0 %v514
      %v762 = vpop.f32.mrb[0].mxu0
      %v763 = vadd.f32 0.0, %v762
      %v764 = vpop.f32.mrb[0].mxu0
      %v765 = vpop.f32.mrb[0].mxu0
      %v766 = vadd.f32 0.0, %v765
      %v767 = vpop.f32.mrb[0].mxu0
      %768 = vmatprep.mubr.bf16.mxu0 %v517
      %769 = vmatmul.mubr.bf16.gmra.mrb[0].mxu0 %v516
      %v770 = vpop.f32.mrb[0].mxu0
      %v771 = vadd.f32 0.0, %v770
      %v772 = vpop.f32.mrb[0].mxu0
      %v773 = vpop.f32.mrb[0].mxu0
      %v774 = vadd.f32 0.0, %v773
      %v775 = vpop.f32.mrb[0].mxu0
      %776 = vmatprep.mubr.bf16.mxu0 %v519
      %777 = vmatmul.mubr.bf16.gmra.mrb[0].mxu0 %v518
      %v778 = vpop.f32.mrb[0].mxu0
      %v779 = vadd.f32 0.0, %v778
      %v780 = vpop.f32.mrb[0].mxu0
      %v781 = vpop.f32.mrb[0].mxu0
      %v782 = vadd.f32 0.0, %v781
      %v783 = vpop.f32.mrb[0].mxu0
      %784 = vmatprep.mubr.bf16.mxu0 %v521
      %785 = vmatmul.mubr.bf16.gmra.mrb[0].mxu0 %v520
      %v786 = vpop.f32.mrb[0].mxu0
      %v787 = vadd.f32 0.0, %v786
      %v788 = vpop.f32.mrb[0].mxu0
      %v789 = vpop.f32.mrb[0].mxu0
      %v790 = vadd.f32 0.0, %v789
      %v791 = vpop.f32.mrb[0].mxu0
      %792 = vmatprep.mubr.bf16.mxu0 %v523
      %793 = vmatmul.mubr.bf16.gmra.mrb[0].mxu0 %v522
      %v794 = vpop.f32.mrb[0].mxu0
      %v795 = vadd.f32 0.0, %v794
      %v796 = vpop.f32.mrb[0].mxu0
      %v797 = vpop.f32.mrb[0].mxu0
      %v798 = vadd.f32 0.0, %v797
      %v799 = vpop.f32.mrb[0].mxu0
      %800 = vmatprep.mubr.bf16.mxu0 %v525
      %801 = vmatmul.mubr.bf16.gmra.mrb[0].mxu0 %v524
      %v802 = vpop.f32.mrb[0].mxu0
      %v803 = vadd.f32 0.0, %v802
      %v804 = vpop.f32.mrb[0].mxu0
      %v805 = vpop.f32.mrb[0].mxu0
      %v806 = vadd.f32 0.0, %v805
      %v807 = vpop.f32.mrb[0].mxu0
      %808 = vmatprep.mubr.bf16.mxu0 %v527
      %809 = vmatmul.mubr.bf16.gmra.mrb[0].mxu0 %v526
      %v810 = vpop.f32.mrb[0].mxu0
      %v811 = vadd.f32 0.0, %v810
      %v812 = vpop.f32.mrb[0].mxu0
      %v813 = vpop.f32.mrb[0].mxu0
      %v814 = vadd.f32 0.0, %v813
      %v815 = vpop.f32.mrb[0].mxu0
      %816 = vdwg.mxu0
      %v817 = vadd.f32 %v304, %v691
      %v818 = vadd.f32 %v305, %v694
      %v819 = vadd.f32 %v306, %v699
      %v820 = vadd.f32 %v307, %v702
      %v821 = vadd.f32 %v308, %v707
      %v822 = vadd.f32 %v309, %v710
      %v823 = vadd.f32 %v310, %v715
      %v824 = vadd.f32 %v311, %v718
      %v825 = vadd.f32 %v312, %v723
      %v826 = vadd.f32 %v313, %v726
      %v827 = vadd.f32 %v314, %v731
      %v828 = vadd.f32 %v315, %v734
      %v829 = vadd.f32 %v316, %v739
      %v830 = vadd.f32 %v317, %v742
      %v831 = vadd.f32 %v318, %v747
      %v832 = vadd.f32 %v319, %v750
      %v833 = vadd.f32 %v320, %v755
      %v834 = vadd.f32 %v321, %v758
      %v835 = vadd.f32 %v322, %v763
      %v836 = vadd.f32 %v323, %v766
      %v837 = vadd.f32 %v324, %v771
      %v838 = vadd.f32 %v325, %v774
      %v839 = vadd.f32 %v326, %v779
      %v840 = vadd.f32 %v327, %v782
      %v841 = vadd.f32 %v328, %v787
      %v842 = vadd.f32 %v329, %v790
      %v843 = vadd.f32 %v330, %v795
      %v844 = vadd.f32 %v331, %v798
      %v845 = vadd.f32 %v332, %v803
      %v846 = vadd.f32 %v333, %v806
      %v847 = vadd.f32 %v334, %v811
      %v848 = vadd.f32 %v335, %v814
      %849 = vst [vmem:[#allocation2] sm:$0xff] %v817
      %850 = vst [vmem:[#allocation2 + $0x8] sm:$0xff] %v818
      %851 = vst [vmem:[#allocation2 + $0x10] sm:$0xff] %v819
      %852 = vst [vmem:[#allocation2 + $0x18] sm:$0xff] %v820
      %853 = vst [vmem:[#allocation2 + $0x20] sm:$0xff] %v821
      %854 = vst [vmem:[#allocation2 + $0x28] sm:$0xff] %v822
      %855 = vst [vmem:[#allocation2 + $0x30] sm:$0xff] %v823
      %856 = vst [vmem:[#allocation2 + $0x38] sm:$0xff] %v824
      %857 = vst [vmem:[#allocation2 + $0x40] sm:$0xff] %v825
      %858 = vst [vmem:[#allocation2 + $0x48] sm:$0xff] %v826
      %859 = vst [vmem:[#allocation2 + $0x50] sm:$0xff] %v827
      %860 = vst [vmem:[#allocation2 + $0x58] sm:$0xff] %v828
      %861 = vst [vmem:[#allocation2 + $0x60] sm:$0xff] %v829
      %862 = vst [vmem:[#allocation2 + $0x68] sm:$0xff] %v830
      %863 = vst [vmem:[#allocation2 + $0x70] sm:$0xff] %v831
      %864 = vst [vmem:[#allocation2 + $0x78] sm:$0xff] %v832
      %865 = vst [vmem:[#allocation2 + $0x80] sm:$0xff] %v833
      %866 = vst [vmem:[#allocation2 + $0x88] sm:$0xff] %v834
      %867 = vst [vmem:[#allocation2 + $0x90] sm:$0xff] %v835
      %868 = vst [vmem:[#allocation2 + $0x98] sm:$0xff] %v836
      %869 = vst [vmem:[#allocation2 + $0xa0] sm:$0xff] %v837
      %870 = vst [vmem:[#allocation2 + $0xa8] sm:$0xff] %v838
      %871 = vst [vmem:[#allocation2 + $0xb0] sm:$0xff] %v839
      %872 = vst [vmem:[#allocation2 + $0xb8] sm:$0xff] %v840
      %873 = vst [vmem:[#allocation2 + $0xc0] sm:$0xff] %v841
      %874 = vst [vmem:[#allocation2 + $0xc8] sm:$0xff] %v842
      %875 = vst [vmem:[#allocation2 + $0xd0] sm:$0xff] %v843
      %876 = vst [vmem:[#allocation2 + $0xd8] sm:$0xff] %v844
      %877 = vst [vmem:[#allocation2 + $0xe0] sm:$0xff] %v845
      %878 = vst [vmem:[#allocation2 + $0xe8] sm:$0xff] %v846
      %879 = vst [vmem:[#allocation2 + $0xf0] sm:$0xff] %v847
      %880 = vst [vmem:[#allocation2 + $0xf8] sm:$0xff] %v848
      // Predicated region
      $region37: #{resnet34fc_forward.38} parent=31 // pred_check
        %p881 = pneg %p268
      $region38: #{resnet34fc_forward.38} parent=31 // pred_check_branch
        %883 = sbr.rel (%p881) target = $region40
      $region39: #{resnet34fc_forward.38} parent=31 // pred_region
        %v884 = vld [vmem:[#allocation2] sm:$0xff]
        %v885 = vld [vmem:[#allocation2 + $0x8] sm:$0xff]
        %v886 = vld [vmem:[#allocation2 + $0x10] sm:$0xff]
        %v887 = vld [vmem:[#allocation2 + $0x18] sm:$0xff]
        %v888 = vld [vmem:[#allocation2 + $0x20] sm:$0xff]
        %v889 = vld [vmem:[#allocation2 + $0x28] sm:$0xff]
        %v890 = vld [vmem:[#allocation2 + $0x30] sm:$0xff]
        %v891 = vld [vmem:[#allocation2 + $0x38] sm:$0xff]
        %v892 = vld [vmem:[#allocation2 + $0x40] sm:$0xff]
        %v893 = vld [vmem:[#allocation2 + $0x48] sm:$0xff]
        %v894 = vld [vmem:[#allocation2 + $0x50] sm:$0xff]
        %v895 = vld [vmem:[#allocation2 + $0x58] sm:$0xff]
        %v896 = vld [vmem:[#allocation2 + $0x60] sm:$0xff]
        %v897 = vld [vmem:[#allocation2 + $0x68] sm:$0xff]
        %v898 = vld [vmem:[#allocation2 + $0x70] sm:$0xff]
        %v899 = vld [vmem:[#allocation2 + $0x78] sm:$0xff]
        %v900 = vld [vmem:[#allocation2 + $0x80] sm:$0xff]
        %v901 = vld [vmem:[#allocation2 + $0x88] sm:$0xff]
        %v902 = vld [vmem:[#allocation2 + $0x90] sm:$0xff]
        %v903 = vld [vmem:[#allocation2 + $0x98] sm:$0xff]
        %v904 = vld [vmem:[#allocation2 + $0xa0] sm:$0xff]
        %v905 = vld [vmem:[#allocation2 + $0xa8] sm:$0xff]
        %v906 = vld [vmem:[#allocation2 + $0xb0] sm:$0xff]
        %v907 = vld [vmem:[#allocation2 + $0xb8] sm:$0xff]
        %v908 = vld [vmem:[#allocation2 + $0xc0] sm:$0xff]
        %v909 = vld [vmem:[#allocation2 + $0xc8] sm:$0xff]
        %v910 = vld [vmem:[#allocation2 + $0xd0] sm:$0xff]
        %v911 = vld [vmem:[#allocation2 + $0xd8] sm:$0xff]
        %v912 = vld [vmem:[#allocation2 + $0xe0] sm:$0xff]
        %v913 = vld [vmem:[#allocation2 + $0xe8] sm:$0xff]
        %v914 = vld [vmem:[#allocation2 + $0xf0] sm:$0xff]
        %v915 = vld [vmem:[#allocation2 + $0xf8] sm:$0xff]
        %v916 = vld [vmem:[%s257] sm:$0x1]
        %v918 = vlaneseq
        %v919 = vshrl.u32 %v918, 7
        %v920 = vsub.s32 0, %v919
        %v921 = vrot.slane %v916, %v920
        %v923 = vadd.f32 %v884, %v921
        %v924 = vadd.f32 %v885, %v921
        %v925 = vadd.f32 %v886, %v921
        %v926 = vadd.f32 %v887, %v921
        %v927 = vadd.f32 %v888, %v921
        %v928 = vadd.f32 %v889, %v921
        %v929 = vadd.f32 %v890, %v921
        %v930 = vadd.f32 %v891, %v921
        %v931 = vadd.f32 %v892, %v921
        %v932 = vadd.f32 %v893, %v921
        %v933 = vadd.f32 %v894, %v921
        %v934 = vadd.f32 %v895, %v921
        %v935 = vadd.f32 %v896, %v921
        %v936 = vadd.f32 %v897, %v921
        %v937 = vadd.f32 %v898, %v921
        %v938 = vadd.f32 %v899, %v921
        %v939 = vadd.f32 %v900, %v921
        %v940 = vadd.f32 %v901, %v921
        %v941 = vadd.f32 %v902, %v921
        %v942 = vadd.f32 %v903, %v921
        %v943 = vadd.f32 %v904, %v921
        %v944 = vadd.f32 %v905, %v921
        %v945 = vadd.f32 %v906, %v921
        %v946 = vadd.f32 %v907, %v921
        %v947 = vadd.f32 %v908, %v921
        %v948 = vadd.f32 %v909, %v921
        %v949 = vadd.f32 %v910, %v921
        %v950 = vadd.f32 %v911, %v921
        %v951 = vadd.f32 %v912, %v921
        %v952 = vadd.f32 %v913, %v921
        %v953 = vadd.f32 %v914, %v921
        %v954 = vadd.f32 %v915, %v921
        %v955 = vmax.f32 %v923, 0.0
        %v956 = vmax.f32 %v924, 0.0
        %v957 = vmax.f32 %v925, 0.0
        %v958 = vmax.f32 %v926, 0.0
        %v959 = vmax.f32 %v927, 0.0
        %v960 = vmax.f32 %v928, 0.0
        %v961 = vmax.f32 %v929, 0.0
        %v962 = vmax.f32 %v930, 0.0
        %v963 = vmax.f32 %v931, 0.0
        %v964 = vmax.f32 %v932, 0.0
        %v965 = vmax.f32 %v933, 0.0
        %v966 = vmax.f32 %v934, 0.0
        %v967 = vmax.f32 %v935, 0.0
        %v968 = vmax.f32 %v936, 0.0
        %v969 = vmax.f32 %v937, 0.0
        %v970 = vmax.f32 %v938, 0.0
        %v971 = vmax.f32 %v939, 0.0
        %v972 = vmax.f32 %v940, 0.0
        %v973 = vmax.f32 %v941, 0.0
        %v974 = vmax.f32 %v942, 0.0
        %v975 = vmax.f32 %v943, 0.0
        %v976 = vmax.f32 %v944, 0.0
        %v977 = vmax.f32 %v945, 0.0
        %v978 = vmax.f32 %v946, 0.0
        %v979 = vmax.f32 %v947, 0.0
        %v980 = vmax.f32 %v948, 0.0
        %v981 = vmax.f32 %v949, 0.0
        %v982 = vmax.f32 %v950, 0.0
        %v983 = vmax.f32 %v951, 0.0
        %v984 = vmax.f32 %v952, 0.0
        %v985 = vmax.f32 %v953, 0.0
        %v986 = vmax.f32 %v954, 0.0
        %v987 = vpack.c.bf16 %v956, %v955
        %v988 = vpack.c.bf16 %v958, %v957
        %v989 = vpack.c.bf16 %v960, %v959
        %v990 = vpack.c.bf16 %v962, %v961
        %v991 = vpack.c.bf16 %v964, %v963
        %v992 = vpack.c.bf16 %v966, %v965
        %v993 = vpack.c.bf16 %v968, %v967
        %v994 = vpack.c.bf16 %v970, %v969
        %v995 = vpack.c.bf16 %v972, %v971
        %v996 = vpack.c.bf16 %v974, %v973
        %v997 = vpack.c.bf16 %v976, %v975
        %v998 = vpack.c.bf16 %v978, %v977
        %v999 = vpack.c.bf16 %v980, %v979
        %v1000 = vpack.c.bf16 %v982, %v981
        %v1001 = vpack.c.bf16 %v984, %v983
        %v1002 = vpack.c.bf16 %v986, %v985
        %v1019 = vunpack.c.l.b16 %v987
        %v1020 = vunpack.c.h.b16 %v987
        %v1021 = vunpack.c.l.b16 %v988
        %v1022 = vunpack.c.h.b16 %v988
        %v1023 = vunpack.c.l.b16 %v989
        %v1024 = vunpack.c.h.b16 %v989
        %v1025 = vunpack.c.l.b16 %v990
        %v1026 = vunpack.c.h.b16 %v990
        %v1027 = vunpack.c.l.b16 %v991
        %v1028 = vunpack.c.h.b16 %v991
        %v1029 = vunpack.c.l.b16 %v992
        %v1030 = vunpack.c.h.b16 %v992
        %v1031 = vunpack.c.l.b16 %v993
        %v1032 = vunpack.c.h.b16 %v993
        %v1033 = vunpack.c.l.b16 %v994
        %v1034 = vunpack.c.h.b16 %v994
        %v1035 = vunpack.c.l.b16 %v995
        %v1036 = vunpack.c.h.b16 %v995
        %v1037 = vunpack.c.l.b16 %v996
        %v1038 = vunpack.c.h.b16 %v996
        %v1039 = vunpack.c.l.b16 %v997
        %v1040 = vunpack.c.h.b16 %v997
        %v1041 = vunpack.c.l.b16 %v998
        %v1042 = vunpack.c.h.b16 %v998
        %v1043 = vunpack.c.l.b16 %v999
        %v1044 = vunpack.c.h.b16 %v999
        %v1045 = vunpack.c.l.b16 %v1000
        %v1046 = vunpack.c.h.b16 %v1000
        %v1047 = vunpack.c.l.b16 %v1001
        %v1048 = vunpack.c.h.b16 %v1001
        %v1049 = vunpack.c.l.b16 %v1002
        %v1050 = vunpack.c.h.b16 %v1002
        %v1051 = vpack.c.b16 %v1019, %v1019
        %v1052 = vpack.c.b16 %v1020, %v1020
        %v1053 = vpack.c.b16 %v1021, %v1021
        %v1054 = vpack.c.b16 %v1022, %v1022
        %v1055 = vpack.c.b16 %v1023, %v1023
        %v1056 = vpack.c.b16 %v1024, %v1024
        %v1057 = vpack.c.b16 %v1025, %v1025
        %v1058 = vpack.c.b16 %v1026, %v1026
        %v1059 = vpack.c.b16 %v1027, %v1027
        %v1060 = vpack.c.b16 %v1028, %v1028
        %v1061 = vpack.c.b16 %v1029, %v1029
        %v1062 = vpack.c.b16 %v1030, %v1030
        %v1063 = vpack.c.b16 %v1031, %v1031
        %v1064 = vpack.c.b16 %v1032, %v1032
        %v1065 = vpack.c.b16 %v1033, %v1033
        %v1066 = vpack.c.b16 %v1034, %v1034
        %v1067 = vpack.c.b16 %v1035, %v1035
        %v1068 = vpack.c.b16 %v1036, %v1036
        %v1069 = vpack.c.b16 %v1037, %v1037
        %v1070 = vpack.c.b16 %v1038, %v1038
        %v1071 = vpack.c.b16 %v1039, %v1039
        %v1072 = vpack.c.b16 %v1040, %v1040
        %v1073 = vpack.c.b16 %v1041, %v1041
        %v1074 = vpack.c.b16 %v1042, %v1042
        %v1075 = vpack.c.b16 %v1043, %v1043
        %v1076 = vpack.c.b16 %v1044, %v1044
        %v1077 = vpack.c.b16 %v1045, %v1045
        %v1078 = vpack.c.b16 %v1046, %v1046
        %v1079 = vpack.c.b16 %v1047, %v1047
        %v1080 = vpack.c.b16 %v1048, %v1048
        %v1081 = vpack.c.b16 %v1049, %v1049
        %v1082 = vpack.c.b16 %v1050, %v1050
        %1115 = vst [vmem:[%s265] sm:$0xf] %v1051
        %1116 = vst [vmem:[%s265 + $0x4] sm:$0xf] %v1052
        %1117 = vst [vmem:[%s265 + $0x8] sm:$0xf] %v1053
        %1118 = vst [vmem:[%s265 + $0xc] sm:$0xf] %v1054
        %1119 = vst [vmem:[%s265 + $0x10] sm:$0xf] %v1055
        %1120 = vst [vmem:[%s265 + $0x14] sm:$0xf] %v1056
        %1121 = vst [vmem:[%s265 + $0x18] sm:$0xf] %v1057
        %1122 = vst [vmem:[%s265 + $0x1c] sm:$0xf] %v1058
        %1123 = vst [vmem:[%s265 + $0x20] sm:$0xf] %v1059
        %1124 = vst [vmem:[%s265 + $0x24] sm:$0xf] %v1060
        %1125 = vst [vmem:[%s265 + $0x28] sm:$0xf] %v1061
        %1126 = vst [vmem:[%s265 + $0x2c] sm:$0xf] %v1062
        %1127 = vst [vmem:[%s265 + $0x30] sm:$0xf] %v1063
        %1128 = vst [vmem:[%s265 + $0x34] sm:$0xf] %v1064
        %1129 = vst [vmem:[%s265 + $0x38] sm:$0xf] %v1065
        %1130 = vst [vmem:[%s265 + $0x3c] sm:$0xf] %v1066
        %1131 = vst [vmem:[%s265 + $0x40] sm:$0xf] %v1067
        %1132 = vst [vmem:[%s265 + $0x44] sm:$0xf] %v1068
        %1133 = vst [vmem:[%s265 + $0x48] sm:$0xf] %v1069
        %1134 = vst [vmem:[%s265 + $0x4c] sm:$0xf] %v1070
        %1135 = vst [vmem:[%s265 + $0x50] sm:$0xf] %v1071
        %1136 = vst [vmem:[%s265 + $0x54] sm:$0xf] %v1072
        %1137 = vst [vmem:[%s265 + $0x58] sm:$0xf] %v1073
        %1138 = vst [vmem:[%s265 + $0x5c] sm:$0xf] %v1074
        %1139 = vst [vmem:[%s265 + $0x60] sm:$0xf] %v1075
        %1140 = vst [vmem:[%s265 + $0x64] sm:$0xf] %v1076
        %1141 = vst [vmem:[%s265 + $0x68] sm:$0xf] %v1077
        %1142 = vst [vmem:[%s265 + $0x6c] sm:$0xf] %v1078
        %1143 = vst [vmem:[%s265 + $0x70] sm:$0xf] %v1079
        %1144 = vst [vmem:[%s265 + $0x74] sm:$0xf] %v1080
        %1145 = vst [vmem:[%s265 + $0x78] sm:$0xf] %v1081
        %1146 = vst [vmem:[%s265 + $0x7c] sm:$0xf] %v1082
      $region40: #{resnet34fc_forward.38} parent=31 // pred_fallthru
        _
      %s1147 = smul.u32 32, %s19
      %p1148 = scmp.lt.s32.totalorder %s1147, 63
      %s1149 = scalar_select %p1148, %s1147, 63
      %p1150 = scmp.lt.s32.totalorder %s20, 0
      %s1151 = scalar_select %p1150, %s20, 0
      %s1152 = sadd.s32 %s1151, %s1149
      %s1153 = smul.addr %s1152, 4
      %s1154 = scalar_lea.vmem %s3, %s1153
      // Predicated region
      $region41: #{resnet34fc_forward.38} parent=31 // pred_check
        %p1155 = pneg %p135
      $region42: #{resnet34fc_forward.38} parent=31 // pred_check_branch
        %1157 = sbr.rel (%p1155) target = $region44
      $region43: #{resnet34fc_forward.38} parent=31 // pred_region
        %s1158 = smul.u32 32, %s19
      $region44: #{resnet34fc_forward.38} parent=31 // pred_fallthru
        _
    $region32: #{resnet34fc_forward.38} parent=5 // pred_fallthru
      _
    %p1159 = scmp.le.s32.totalorder 2, %s9
    // Predicated region
    $region45: #{resnet34fc_forward.38} parent=5 // pred_check
      %p1160 = pneg %p1159
    $region46: #{resnet34fc_forward.38} parent=5 // pred_check_branch
      %1162 = sbr.rel (%p1160) target = $region48
    $region47: #{resnet34fc_forward.38} parent=5 // pred_region
      %s1163 = ssub.s32 %s9, 2
      // Predicated region
      $region49: #{resnet34fc_forward.38} parent=47 // pred_check
        %p1164 = pneg %p141
      $region50: #{resnet34fc_forward.38} parent=47 // pred_check_branch
        %1166 = sbr.rel (%p1164) target = $region52
      $region51: #{resnet34fc_forward.38} parent=47 // pred_region
        %s1167 = smul.u32 32, %s22
        %p1168 = scmp.lt.s32.totalorder %s1167, 63
        %s1169 = scalar_select %p1168, %s1167, 63
        %p1170 = scmp.lt.s32.totalorder %s23, 0
        %s1171 = scalar_select %p1170, %s23, 0
        %s1172 = sadd.s32 %s1171, %s1169
        %s1173 = smul.addr %s1172, 4
        %s1174 = scalar_lea.vmem %s3, %s1173
      $region52: #{resnet34fc_forward.38} parent=47 // pred_fallthru
        _
    $region48: #{resnet34fc_forward.38} parent=5 // pred_fallthru
      _
  $region6: #{resnet34fc_forward.38} parent=0 // loop_footer
    %s13 = sadd.s32 1, %s9
  $region7: #{resnet34fc_forward.38} parent=0 // loop_footer_branch
    %8 = sbr.rel target = $region3
  $region8: #{resnet34fc_forward.38} parent=0 // loop_exit
    _

// kernel: resnet34fc_forward.40
$region0: #{resnet34fc_forward.40}
  #allocation0 [shape = 'u32[]', space=smem, size = 0x4, offset = 0x4, fixed_abs, tag = 'smem constant byte address 0x4 - core index']
  #allocation1 [shape = 'u32[144,128]{1,0:T(1,128)}', space=vmem, size = 0x12000, scoped, tag = 'internal scratch']
  #allocation2 [shape = 'f32[128,128]{1,0:T(8,128)}', space=vmem, size = 0x10000, scoped, tag = 'scratch operand']
  %s0 = inlined_call_operand.vmem [shape: bf16[128,128], index: 0, kind: input, shape index: {}]
  %s1 = inlined_call_operand.vmem [shape: bf16[128,128], index: 1, kind: input, shape index: {}]
  %s2 = inlined_call_operand.vmem [shape: f32[1,128], index: 2, kind: input, shape index: {}]
  %s3 = inlined_call_operand.vmem [shape: bf16[128,128], index: 3, kind: output, shape index: {}]
  %s4 = sld [smem:[#allocation0]]
  $region30: #{resnet34fc_forward.40} parent=0
    _
  %s6 = ssub.s32 1, %s4
  %s7 = scalar_select 0, %s6, %s4
  // Predicated region
  $region2: #{resnet34fc_forward.40} parent=0 // pred_check
    _
  $region3: #{resnet34fc_forward.40} parent=0 // pred_check_branch
    %9 = sbr.rel (0) target = $region5
  $region4: #{resnet34fc_forward.40} parent=0 // pred_region
    _
  $region5: #{resnet34fc_forward.40} parent=0 // pred_fallthru
    _
  // Predicated region
  $region6: #{resnet34fc_forward.40} parent=0 // pred_check
    _
  $region7: #{resnet34fc_forward.40} parent=0 // pred_check_branch
    %11 = sbr.rel (0) target = $region9
  $region8: #{resnet34fc_forward.40} parent=0 // pred_region
    _
  $region9: #{resnet34fc_forward.40} parent=0 // pred_fallthru
    _
  // Predicated region
  $region10: #{resnet34fc_forward.40} parent=0 // pred_check
    _
  $region11: #{resnet34fc_forward.40} parent=0 // pred_check_branch
    %13 = sbr.rel (0) target = $region13
  $region12: #{resnet34fc_forward.40} parent=0 // pred_region
    _
  $region13: #{resnet34fc_forward.40} parent=0 // pred_fallthru
    _
  %p15 = scmp.eq.s32.totalorder 0, 0
  // Predicated region
  $region14: #{resnet34fc_forward.40} parent=0 // pred_check
    %p16 = pneg %p15
  $region15: #{resnet34fc_forward.40} parent=0 // pred_check_branch
    %18 = sbr.rel (%p16) target = $region17
  $region16: #{resnet34fc_forward.40} parent=0 // pred_region
    %19 = vst [vmem:[#allocation2] sm:$0xff] 0.0
    %20 = vst [vmem:[#allocation2 + $0x8] sm:$0xff] 0.0
    %21 = vst [vmem:[#allocation2 + $0x10] sm:$0xff] 0.0
    %22 = vst [vmem:[#allocation2 + $0x18] sm:$0xff] 0.0
    %23 = vst [vmem:[#allocation2 + $0x20] sm:$0xff] 0.0
    %24 = vst [vmem:[#allocation2 + $0x28] sm:$0xff] 0.0
    %25 = vst [vmem:[#allocation2 + $0x30] sm:$0xff] 0.0
    %26 = vst [vmem:[#allocation2 + $0x38] sm:$0xff] 0.0
    %27 = vst [vmem:[#allocation2 + $0x40] sm:$0xff] 0.0
    %28 = vst [vmem:[#allocation2 + $0x48] sm:$0xff] 0.0
    %29 = vst [vmem:[#allocation2 + $0x50] sm:$0xff] 0.0
    %30 = vst [vmem:[#allocation2 + $0x58] sm:$0xff] 0.0
    %31 = vst [vmem:[#allocation2 + $0x60] sm:$0xff] 0.0
    %32 = vst [vmem:[#allocation2 + $0x68] sm:$0xff] 0.0
    %33 = vst [vmem:[#allocation2 + $0x70] sm:$0xff] 0.0
    %34 = vst [vmem:[#allocation2 + $0x78] sm:$0xff] 0.0
  $region17: #{resnet34fc_forward.40} parent=0 // pred_fallthru
    _
  %v35 = vld [vmem:[#allocation2] sm:$0xff]
  %v36 = vld [vmem:[#allocation2 + $0x8] sm:$0xff]
  %v37 = vld [vmem:[#allocation2 + $0x10] sm:$0xff]
  %v38 = vld [vmem:[#allocation2 + $0x18] sm:$0xff]
  %v39 = vld [vmem:[#allocation2 + $0x20] sm:$0xff]
  %v40 = vld [vmem:[#allocation2 + $0x28] sm:$0xff]
  %v41 = vld [vmem:[#allocation2 + $0x30] sm:$0xff]
  %v42 = vld [vmem:[#allocation2 + $0x38] sm:$0xff]
  %v43 = vld [vmem:[#allocation2 + $0x40] sm:$0xff]
  %v44 = vld [vmem:[#allocation2 + $0x48] sm:$0xff]
  %v45 = vld [vmem:[#allocation2 + $0x50] sm:$0xff]
  %v46 = vld [vmem:[#allocation2 + $0x58] sm:$0xff]
  %v47 = vld [vmem:[#allocation2 + $0x60] sm:$0xff]
  %v48 = vld [vmem:[#allocation2 + $0x68] sm:$0xff]
  %v49 = vld [vmem:[#allocation2 + $0x70] sm:$0xff]
  %v50 = vld [vmem:[#allocation2 + $0x78] sm:$0xff]
  %v51 = vld [vmem:[%s0] sm:$0xf]
  %v52 = vld [vmem:[%s0 + $0x4] sm:$0xf]
  %v53 = vld [vmem:[%s0 + $0x8] sm:$0xf]
  %v54 = vld [vmem:[%s0 + $0xc] sm:$0xf]
  %v55 = vld [vmem:[%s0 + $0x10] sm:$0xf]
  %v56 = vld [vmem:[%s0 + $0x14] sm:$0xf]
  %v57 = vld [vmem:[%s0 + $0x18] sm:$0xf]
  %v58 = vld [vmem:[%s0 + $0x1c] sm:$0xf]
  %v59 = vld [vmem:[%s0 + $0x20] sm:$0xf]
  %v60 = vld [vmem:[%s0 + $0x24] sm:$0xf]
  %v61 = vld [vmem:[%s0 + $0x28] sm:$0xf]
  %v62 = vld [vmem:[%s0 + $0x2c] sm:$0xf]
  %v63 = vld [vmem:[%s0 + $0x30] sm:$0xf]
  %v64 = vld [vmem:[%s0 + $0x34] sm:$0xf]
  %v65 = vld [vmem:[%s0 + $0x38] sm:$0xf]
  %v66 = vld [vmem:[%s0 + $0x3c] sm:$0xf]
  %v67 = vld [vmem:[%s1] sm:$0xf]
  %v68 = vld [vmem:[%s1 + $0x4] sm:$0xf]
  %v69 = vld [vmem:[%s1 + $0x8] sm:$0xf]
  %v70 = vld [vmem:[%s1 + $0xc] sm:$0xf]
  %v71 = vld [vmem:[%s1 + $0x10] sm:$0xf]
  %v72 = vld [vmem:[%s1 + $0x14] sm:$0xf]
  %v73 = vld [vmem:[%s1 + $0x18] sm:$0xf]
  %v74 = vld [vmem:[%s1 + $0x1c] sm:$0xf]
  %v75 = vld [vmem:[%s1 + $0x20] sm:$0xf]
  %v76 = vld [vmem:[%s1 + $0x24] sm:$0xf]
  %v77 = vld [vmem:[%s1 + $0x28] sm:$0xf]
  %v78 = vld [vmem:[%s1 + $0x2c] sm:$0xf]
  %v79 = vld [vmem:[%s1 + $0x30] sm:$0xf]
  %v80 = vld [vmem:[%s1 + $0x34] sm:$0xf]
  %v81 = vld [vmem:[%s1 + $0x38] sm:$0xf]
  %v82 = vld [vmem:[%s1 + $0x3c] sm:$0xf]
  %v99 = vunpack.c.l.b16 %v51
  %v100 = vunpack.c.l.b16 %v52
  %v101 = vunpack.c.l.b16 %v53
  %v102 = vunpack.c.l.b16 %v54
  %v103 = vunpack.c.l.b16 %v55
  %v104 = vunpack.c.l.b16 %v56
  %v105 = vunpack.c.l.b16 %v57
  %v106 = vunpack.c.l.b16 %v58
  %v107 = vunpack.c.l.b16 %v59
  %v108 = vunpack.c.l.b16 %v60
  %v109 = vunpack.c.l.b16 %v61
  %v110 = vunpack.c.l.b16 %v62
  %v111 = vunpack.c.l.b16 %v63
  %v112 = vunpack.c.l.b16 %v64
  %v113 = vunpack.c.l.b16 %v65
  %v114 = vunpack.c.l.b16 %v66
  %v115 = vpack.c.b16 %v100, %v99
  %v116 = vpack.c.b16 %v102, %v101
  %v117 = vpack.c.b16 %v104, %v103
  %v118 = vpack.c.b16 %v106, %v105
  %v119 = vpack.c.b16 %v108, %v107
  %v120 = vpack.c.b16 %v110, %v109
  %v121 = vpack.c.b16 %v112, %v111
  %v122 = vpack.c.b16 %v114, %v113
  %v147 = vunpack.c.l.b16 %v67
  %v148 = vunpack.c.l.b16 %v68
  %v149 = vunpack.c.l.b16 %v69
  %v150 = vunpack.c.l.b16 %v70
  %v151 = vunpack.c.l.b16 %v71
  %v152 = vunpack.c.l.b16 %v72
  %v153 = vunpack.c.l.b16 %v73
  %v154 = vunpack.c.l.b16 %v74
  %v155 = vunpack.c.l.b16 %v75
  %v156 = vunpack.c.l.b16 %v76
  %v157 = vunpack.c.l.b16 %v77
  %v158 = vunpack.c.l.b16 %v78
  %v159 = vunpack.c.l.b16 %v79
  %v160 = vunpack.c.l.b16 %v80
  %v161 = vunpack.c.l.b16 %v81
  %v162 = vunpack.c.l.b16 %v82
  %v163 = vpack.c.b16 %v148, %v147
  %v164 = vpack.c.b16 %v150, %v149
  %v165 = vpack.c.b16 %v152, %v151
  %v166 = vpack.c.b16 %v154, %v153
  %v167 = vpack.c.b16 %v156, %v155
  %v168 = vpack.c.b16 %v158, %v157
  %v169 = vpack.c.b16 %v160, %v159
  %v170 = vpack.c.b16 %v162, %v161
  %179 = vmatprep.subr.bf16.mxu0 0
  %180 = vmatpush1.bf16.msra.mxu0 %v163
  %181 = vmatprep.subr.bf16.mxu0 0
  %182 = vmatpush1.bf16.msra.mxu0 %v164
  %183 = vmatprep.subr.bf16.mxu0 0
  %184 = vmatpush1.bf16.msra.mxu0 %v165
  %185 = vmatprep.subr.bf16.mxu0 0
  %186 = vmatpush1.bf16.msra.mxu0 %v166
  %187 = vmatprep.subr.bf16.mxu0 0
  %188 = vmatpush1.bf16.msra.mxu0 %v167
  %189 = vmatprep.subr.bf16.mxu0 0
  %190 = vmatpush1.bf16.msra.mxu0 %v168
  %191 = vmatprep.subr.bf16.mxu0 0
  %192 = vmatpush1.bf16.msra.mxu0 %v169
  %193 = vmatprep.subr.bf16.mxu0 0
  %194 = vmatpush1.bf16.msra.mxu0 %v170
  %195 = vmatprep.subr.bf16.mxu0 0
  %196 = vmatpush1.bf16.msra.mxu0 0
  %197 = vmatprep.subr.bf16.mxu0 0
  %198 = vmatpush1.bf16.msra.mxu0 0
  %199 = vmatprep.subr.bf16.mxu0 0
  %200 = vmatpush1.bf16.msra.mxu0 0
  %201 = vmatprep.subr.bf16.mxu0 0
  %202 = vmatpush1.bf16.msra.mxu0 0
  %203 = vmatprep.subr.bf16.mxu0 0
  %204 = vmatpush1.bf16.msra.mxu0 0
  %205 = vmatprep.subr.bf16.mxu0 0
  %206 = vmatpush1.bf16.msra.mxu0 0
  %207 = vmatprep.subr.bf16.mxu0 0
  %208 = vmatpush1.bf16.msra.mxu0 0
  %209 = vmatprep.subr.bf16.mxu0 0
  %210 = vmatpush1.bf16.msra.mxu0 0
  %211 = vmatprep.mubr.bf16.mxu0 0
  %212 = vmatmul.mubr.bf16.gmra.mrb[0].mxu0 %v115
  %v213 = vpop.f32.mrb[0].mxu0
  %v214 = vadd.f32 0.0, %v213
  %v215 = vpop.f32.mrb[0].mxu0
  %v216 = vpop.f32.mrb[0].mxu0
  %v217 = vadd.f32 0.0, %v216
  %v218 = vpop.f32.mrb[0].mxu0
  %219 = vmatprep.mubr.bf16.mxu0 0
  %220 = vmatmul.mubr.bf16.gmra.mrb[0].mxu0 %v116
  %v221 = vpop.f32.mrb[0].mxu0
  %v222 = vadd.f32 0.0, %v221
  %v223 = vpop.f32.mrb[0].mxu0
  %v224 = vpop.f32.mrb[0].mxu0
  %v225 = vadd.f32 0.0, %v224
  %v226 = vpop.f32.mrb[0].mxu0
  %227 = vmatprep.mubr.bf16.mxu0 0
  %228 = vmatmul.mubr.bf16.gmra.mrb[0].mxu0 %v117
  %v229 = vpop.f32.mrb[0].mxu0
  %v230 = vadd.f32 0.0, %v229
  %v231 = vpop.f32.mrb[0].mxu0
  %v232 = vpop.f32.mrb[0].mxu0
  %v233 = vadd.f32 0.0, %v232
  %v234 = vpop.f32.mrb[0].mxu0
  %235 = vmatprep.mubr.bf16.mxu0 0
  %236 = vmatmul.mubr.bf16.gmra.mrb[0].mxu0 %v118
  %v237 = vpop.f32.mrb[0].mxu0
  %v238 = vadd.f32 0.0, %v237
  %v239 = vpop.f32.mrb[0].mxu0
  %v240 = vpop.f32.mrb[0].mxu0
  %v241 = vadd.f32 0.0, %v240
  %v242 = vpop.f32.mrb[0].mxu0
  %243 = vmatprep.mubr.bf16.mxu0 0
  %244 = vmatmul.mubr.bf16.gmra.mrb[0].mxu0 %v119
  %v245 = vpop.f32.mrb[0].mxu0
  %v246 = vadd.f32 0.0, %v245
  %v247 = vpop.f32.mrb[0].mxu0
  %v248 = vpop.f32.mrb[0].mxu0
  %v249 = vadd.f32 0.0, %v248
  %v250 = vpop.f32.mrb[0].mxu0
  %251 = vmatprep.mubr.bf16.mxu0 0
  %252 = vmatmul.mubr.bf16.gmra.mrb[0].mxu0 %v120
  %v253 = vpop.f32.mrb[0].mxu0
  %v254 = vadd.f32 0.0, %v253
  %v255 = vpop.f32.mrb[0].mxu0
  %v256 = vpop.f32.mrb[0].mxu0
  %v257 = vadd.f32 0.0, %v256
  %v258 = vpop.f32.mrb[0].mxu0
  %259 = vmatprep.mubr.bf16.mxu0 0
  %260 = vmatmul.mubr.bf16.gmra.mrb[0].mxu0 %v121
  %v261 = vpop.f32.mrb[0].mxu0
  %v262 = vadd.f32 0.0, %v261
  %v263 = vpop.f32.mrb[0].mxu0
  %v264 = vpop.f32.mrb[0].mxu0
  %v265 = vadd.f32 0.0, %v264
  %v266 = vpop.f32.mrb[0].mxu0
  %267 = vmatprep.mubr.bf16.mxu0 0
  %268 = vmatmul.mubr.bf16.gmra.mrb[0].mxu0 %v122
  %v269 = vpop.f32.mrb[0].mxu0
  %v270 = vadd.f32 0.0, %v269
  %v271 = vpop.f32.mrb[0].mxu0
  %v272 = vpop.f32.mrb[0].mxu0
  %v273 = vadd.f32 0.0, %v272
  %v274 = vpop.f32.mrb[0].mxu0
  %275 = vdwg.mxu0
  %v276 = vadd.f32 %v35, %v214
  %v277 = vadd.f32 %v36, %v217
  %v278 = vadd.f32 %v37, %v222
  %v279 = vadd.f32 %v38, %v225
  %v280 = vadd.f32 %v39, %v230
  %v281 = vadd.f32 %v40, %v233
  %v282 = vadd.f32 %v41, %v238
  %v283 = vadd.f32 %v42, %v241
  %v284 = vadd.f32 %v43, %v246
  %v285 = vadd.f32 %v44, %v249
  %v286 = vadd.f32 %v45, %v254
  %v287 = vadd.f32 %v46, %v257
  %v288 = vadd.f32 %v47, %v262
  %v289 = vadd.f32 %v48, %v265
  %v290 = vadd.f32 %v49, %v270
  %v291 = vadd.f32 %v50, %v273
  %292 = vst [vmem:[#allocation2] sm:$0xff] %v276
  %293 = vst [vmem:[#allocation2 + $0x8] sm:$0xff] %v277
  %294 = vst [vmem:[#allocation2 + $0x10] sm:$0xff] %v278
  %295 = vst [vmem:[#allocation2 + $0x18] sm:$0xff] %v279
  %296 = vst [vmem:[#allocation2 + $0x20] sm:$0xff] %v280
  %297 = vst [vmem:[#allocation2 + $0x28] sm:$0xff] %v281
  %298 = vst [vmem:[#allocation2 + $0x30] sm:$0xff] %v282
  %299 = vst [vmem:[#allocation2 + $0x38] sm:$0xff] %v283
  %300 = vst [vmem:[#allocation2 + $0x40] sm:$0xff] %v284
  %301 = vst [vmem:[#allocation2 + $0x48] sm:$0xff] %v285
  %302 = vst [vmem:[#allocation2 + $0x50] sm:$0xff] %v286
  %303 = vst [vmem:[#allocation2 + $0x58] sm:$0xff] %v287
  %304 = vst [vmem:[#allocation2 + $0x60] sm:$0xff] %v288
  %305 = vst [vmem:[#allocation2 + $0x68] sm:$0xff] %v289
  %306 = vst [vmem:[#allocation2 + $0x70] sm:$0xff] %v290
  %307 = vst [vmem:[#allocation2 + $0x78] sm:$0xff] %v291
  // Predicated region
  $region18: #{resnet34fc_forward.40} parent=0 // pred_check
    %p308 = pneg %p15
  $region19: #{resnet34fc_forward.40} parent=0 // pred_check_branch
    %310 = sbr.rel (%p308) target = $region21
  $region20: #{resnet34fc_forward.40} parent=0 // pred_region
    %v311 = vld [vmem:[#allocation2] sm:$0xff]
    %v312 = vld [vmem:[#allocation2 + $0x8] sm:$0xff]
    %v313 = vld [vmem:[#allocation2 + $0x10] sm:$0xff]
    %v314 = vld [vmem:[#allocation2 + $0x18] sm:$0xff]
    %v315 = vld [vmem:[#allocation2 + $0x20] sm:$0xff]
    %v316 = vld [vmem:[#allocation2 + $0x28] sm:$0xff]
    %v317 = vld [vmem:[#allocation2 + $0x30] sm:$0xff]
    %v318 = vld [vmem:[#allocation2 + $0x38] sm:$0xff]
    %v319 = vld [vmem:[#allocation2 + $0x40] sm:$0xff]
    %v320 = vld [vmem:[#allocation2 + $0x48] sm:$0xff]
    %v321 = vld [vmem:[#allocation2 + $0x50] sm:$0xff]
    %v322 = vld [vmem:[#allocation2 + $0x58] sm:$0xff]
    %v323 = vld [vmem:[#allocation2 + $0x60] sm:$0xff]
    %v324 = vld [vmem:[#allocation2 + $0x68] sm:$0xff]
    %v325 = vld [vmem:[#allocation2 + $0x70] sm:$0xff]
    %v326 = vld [vmem:[#allocation2 + $0x78] sm:$0xff]
    %v327 = vld [vmem:[%s2] sm:$0x1]
    %v329 = vlaneseq
    %v330 = vshrl.u32 %v329, 7
    %v331 = vsub.s32 0, %v330
    %v332 = vrot.slane %v327, %v331
    %v334 = vadd.f32 %v311, %v332
    %v335 = vadd.f32 %v312, %v332
    %v336 = vadd.f32 %v313, %v332
    %v337 = vadd.f32 %v314, %v332
    %v338 = vadd.f32 %v315, %v332
    %v339 = vadd.f32 %v316, %v332
    %v340 = vadd.f32 %v317, %v332
    %v341 = vadd.f32 %v318, %v332
    %v342 = vadd.f32 %v319, %v332
    %v343 = vadd.f32 %v320, %v332
    %v344 = vadd.f32 %v321, %v332
    %v345 = vadd.f32 %v322, %v332
    %v346 = vadd.f32 %v323, %v332
    %v347 = vadd.f32 %v324, %v332
    %v348 = vadd.f32 %v325, %v332
    %v349 = vadd.f32 %v326, %v332
    %v350 = vmax.f32 %v334, 0.0
    %v351 = vmax.f32 %v335, 0.0
    %v352 = vmax.f32 %v336, 0.0
    %v353 = vmax.f32 %v337, 0.0
    %v354 = vmax.f32 %v338, 0.0
    %v355 = vmax.f32 %v339, 0.0
    %v356 = vmax.f32 %v340, 0.0
    %v357 = vmax.f32 %v341, 0.0
    %v358 = vmax.f32 %v342, 0.0
    %v359 = vmax.f32 %v343, 0.0
    %v360 = vmax.f32 %v344, 0.0
    %v361 = vmax.f32 %v345, 0.0
    %v362 = vmax.f32 %v346, 0.0
    %v363 = vmax.f32 %v347, 0.0
    %v364 = vmax.f32 %v348, 0.0
    %v365 = vmax.f32 %v349, 0.0
    %v366 = vpack.c.bf16 %v351, %v350
    %v367 = vpack.c.bf16 %v353, %v352
    %v368 = vpack.c.bf16 %v355, %v354
    %v369 = vpack.c.bf16 %v357, %v356
    %v370 = vpack.c.bf16 %v359, %v358
    %v371 = vpack.c.bf16 %v361, %v360
    %v372 = vpack.c.bf16 %v363, %v362
    %v373 = vpack.c.bf16 %v365, %v364
    %v382 = vunpack.c.l.b16 %v366
    %v383 = vunpack.c.h.b16 %v366
    %v384 = vunpack.c.l.b16 %v367
    %v385 = vunpack.c.h.b16 %v367
    %v386 = vunpack.c.l.b16 %v368
    %v387 = vunpack.c.h.b16 %v368
    %v388 = vunpack.c.l.b16 %v369
    %v389 = vunpack.c.h.b16 %v369
    %v390 = vunpack.c.l.b16 %v370
    %v391 = vunpack.c.h.b16 %v370
    %v392 = vunpack.c.l.b16 %v371
    %v393 = vunpack.c.h.b16 %v371
    %v394 = vunpack.c.l.b16 %v372
    %v395 = vunpack.c.h.b16 %v372
    %v396 = vunpack.c.l.b16 %v373
    %v397 = vunpack.c.h.b16 %v373
    %v398 = vpack.c.b16 %v382, %v382
    %v399 = vpack.c.b16 %v383, %v383
    %v400 = vpack.c.b16 %v384, %v384
    %v401 = vpack.c.b16 %v385, %v385
    %v402 = vpack.c.b16 %v386, %v386
    %v403 = vpack.c.b16 %v387, %v387
    %v404 = vpack.c.b16 %v388, %v388
    %v405 = vpack.c.b16 %v389, %v389
    %v406 = vpack.c.b16 %v390, %v390
    %v407 = vpack.c.b16 %v391, %v391
    %v408 = vpack.c.b16 %v392, %v392
    %v409 = vpack.c.b16 %v393, %v393
    %v410 = vpack.c.b16 %v394, %v394
    %v411 = vpack.c.b16 %v395, %v395
    %v412 = vpack.c.b16 %v396, %v396
    %v413 = vpack.c.b16 %v397, %v397
    %430 = vst [vmem:[%s3] sm:$0xf] %v398
    %431 = vst [vmem:[%s3 + $0x4] sm:$0xf] %v399
    %432 = vst [vmem:[%s3 + $0x8] sm:$0xf] %v400
    %433 = vst [vmem:[%s3 + $0xc] sm:$0xf] %v401
    %434 = vst [vmem:[%s3 + $0x10] sm:$0xf] %v402
    %435 = vst [vmem:[%s3 + $0x14] sm:$0xf] %v403
    %436 = vst [vmem:[%s3 + $0x18] sm:$0xf] %v404
    %437 = vst [vmem:[%s3 + $0x1c] sm:$0xf] %v405
    %438 = vst [vmem:[%s3 + $0x20] sm:$0xf] %v406
    %439 = vst [vmem:[%s3 + $0x24] sm:$0xf] %v407
    %440 = vst [vmem:[%s3 + $0x28] sm:$0xf] %v408
    %441 = vst [vmem:[%s3 + $0x2c] sm:$0xf] %v409
    %442 = vst [vmem:[%s3 + $0x30] sm:$0xf] %v410
    %443 = vst [vmem:[%s3 + $0x34] sm:$0xf] %v411
    %444 = vst [vmem:[%s3 + $0x38] sm:$0xf] %v412
    %445 = vst [vmem:[%s3 + $0x3c] sm:$0xf] %v413
  $region21: #{resnet34fc_forward.40} parent=0 // pred_fallthru
    _
  // Predicated region
  $region22: #{resnet34fc_forward.40} parent=0 // pred_check
    _
  $region23: #{resnet34fc_forward.40} parent=0 // pred_check_branch
    %447 = sbr.rel (0) target = $region25
  $region24: #{resnet34fc_forward.40} parent=0 // pred_region
    _
  $region25: #{resnet34fc_forward.40} parent=0 // pred_fallthru
    _
  // Predicated region
  $region26: #{resnet34fc_forward.40} parent=0 // pred_check
    _
  $region27: #{resnet34fc_forward.40} parent=0 // pred_check_branch
    %449 = sbr.rel (0) target = $region29
  $region28: #{resnet34fc_forward.40} parent=0 // pred_region
    _
  $region29: #{resnet34fc_forward.40} parent=0 // pred_fallthru
    _

// kernel: resnet34fc_forward.41
$region0: #{resnet34fc_forward.41}
  #allocation0 [shape = 'u32[]', space=smem, size = 0x4, offset = 0x4, fixed_abs, tag = 'smem constant byte address 0x4 - core index']
  #allocation1 [shape = 'u32[144,128]{1,0:T(1,128)}', space=vmem, size = 0x12000, scoped, tag = 'internal scratch']
  #allocation2 [shape = 'f32[128,128]{1,0:T(8,128)}', space=vmem, size = 0x10000, scoped, tag = 'scratch operand']
  %s0 = inlined_call_operand.vmem [shape: bf16[128,128], index: 0, kind: input, shape index: {}]
  %s1 = inlined_call_operand.vmem [shape: bf16[128,128], index: 1, kind: input, shape index: {}]
  %s2 = inlined_call_operand.vmem [shape: f32[1,128], index: 2, kind: input, shape index: {}]
  %s3 = inlined_call_operand.vmem [shape: bf16[128,128], index: 3, kind: input, shape index: {}]
  %s4 = inlined_call_operand.vmem [shape: bf16[128,128], index: 4, kind: output, shape index: {}]
  %s5 = sld [smem:[#allocation0]]
  $region34: #{resnet34fc_forward.41} parent=0
    _
  %s7 = ssub.s32 1, %s5
  %s8 = scalar_select 0, %s7, %s5
  // Predicated region
  $region2: #{resnet34fc_forward.41} parent=0 // pred_check
    _
  $region3: #{resnet34fc_forward.41} parent=0 // pred_check_branch
    %10 = sbr.rel (0) target = $region5
  $region4: #{resnet34fc_forward.41} parent=0 // pred_region
    _
  $region5: #{resnet34fc_forward.41} parent=0 // pred_fallthru
    _
  // Predicated region
  $region6: #{resnet34fc_forward.41} parent=0 // pred_check
    _
  $region7: #{resnet34fc_forward.41} parent=0 // pred_check_branch
    %12 = sbr.rel (0) target = $region9
  $region8: #{resnet34fc_forward.41} parent=0 // pred_region
    _
  $region9: #{resnet34fc_forward.41} parent=0 // pred_fallthru
    _
  // Predicated region
  $region10: #{resnet34fc_forward.41} parent=0 // pred_check
    _
  $region11: #{resnet34fc_forward.41} parent=0 // pred_check_branch
    %14 = sbr.rel (0) target = $region13
  $region12: #{resnet34fc_forward.41} parent=0 // pred_region
    _
  $region13: #{resnet34fc_forward.41} parent=0 // pred_fallthru
    _
  // Predicated region
  $region14: #{resnet34fc_forward.41} parent=0 // pred_check
    _
  $region15: #{resnet34fc_forward.41} parent=0 // pred_check_branch
    %16 = sbr.rel (0) target = $region17
  $region16: #{resnet34fc_forward.41} parent=0 // pred_region
    _
  $region17: #{resnet34fc_forward.41} parent=0 // pred_fallthru
    _
  %p18 = scmp.eq.s32.totalorder 0, 0
  // Predicated region
  $region18: #{resnet34fc_forward.41} parent=0 // pred_check
    %p19 = pneg %p18
  $region19: #{resnet34fc_forward.41} parent=0 // pred_check_branch
    %21 = sbr.rel (%p19) target = $region21
  $region20: #{resnet34fc_forward.41} parent=0 // pred_region
    %22 = vst [vmem:[#allocation2] sm:$0xff] 0.0
    %23 = vst [vmem:[#allocation2 + $0x8] sm:$0xff] 0.0
    %24 = vst [vmem:[#allocation2 + $0x10] sm:$0xff] 0.0
    %25 = vst [vmem:[#allocation2 + $0x18] sm:$0xff] 0.0
    %26 = vst [vmem:[#allocation2 + $0x20] sm:$0xff] 0.0
    %27 = vst [vmem:[#allocation2 + $0x28] sm:$0xff] 0.0
    %28 = vst [vmem:[#allocation2 + $0x30] sm:$0xff] 0.0
    %29 = vst [vmem:[#allocation2 + $0x38] sm:$0xff] 0.0
    %30 = vst [vmem:[#allocation2 + $0x40] sm:$0xff] 0.0
    %31 = vst [vmem:[#allocation2 + $0x48] sm:$0xff] 0.0
    %32 = vst [vmem:[#allocation2 + $0x50] sm:$0xff] 0.0
    %33 = vst [vmem:[#allocation2 + $0x58] sm:$0xff] 0.0
    %34 = vst [vmem:[#allocation2 + $0x60] sm:$0xff] 0.0
    %35 = vst [vmem:[#allocation2 + $0x68] sm:$0xff] 0.0
    %36 = vst [vmem:[#allocation2 + $0x70] sm:$0xff] 0.0
    %37 = vst [vmem:[#allocation2 + $0x78] sm:$0xff] 0.0
  $region21: #{resnet34fc_forward.41} parent=0 // pred_fallthru
    _
  %v38 = vld [vmem:[#allocation2] sm:$0xff]
  %v39 = vld [vmem:[#allocation2 + $0x8] sm:$0xff]
  %v40 = vld [vmem:[#allocation2 + $0x10] sm:$0xff]
  %v41 = vld [vmem:[#allocation2 + $0x18] sm:$0xff]
  %v42 = vld [vmem:[#allocation2 + $0x20] sm:$0xff]
  %v43 = vld [vmem:[#allocation2 + $0x28] sm:$0xff]
  %v44 = vld [vmem:[#allocation2 + $0x30] sm:$0xff]
  %v45 = vld [vmem:[#allocation2 + $0x38] sm:$0xff]
  %v46 = vld [vmem:[#allocation2 + $0x40] sm:$0xff]
  %v47 = vld [vmem:[#allocation2 + $0x48] sm:$0xff]
  %v48 = vld [vmem:[#allocation2 + $0x50] sm:$0xff]
  %v49 = vld [vmem:[#allocation2 + $0x58] sm:$0xff]
  %v50 = vld [vmem:[#allocation2 + $0x60] sm:$0xff]
  %v51 = vld [vmem:[#allocation2 + $0x68] sm:$0xff]
  %v52 = vld [vmem:[#allocation2 + $0x70] sm:$0xff]
  %v53 = vld [vmem:[#allocation2 + $0x78] sm:$0xff]
  %v54 = vld [vmem:[%s0] sm:$0xf]
  %v55 = vld [vmem:[%s0 + $0x4] sm:$0xf]
  %v56 = vld [vmem:[%s0 + $0x8] sm:$0xf]
  %v57 = vld [vmem:[%s0 + $0xc] sm:$0xf]
  %v58 = vld [vmem:[%s0 + $0x10] sm:$0xf]
  %v59 = vld [vmem:[%s0 + $0x14] sm:$0xf]
  %v60 = vld [vmem:[%s0 + $0x18] sm:$0xf]
  %v61 = vld [vmem:[%s0 + $0x1c] sm:$0xf]
  %v62 = vld [vmem:[%s0 + $0x20] sm:$0xf]
  %v63 = vld [vmem:[%s0 + $0x24] sm:$0xf]
  %v64 = vld [vmem:[%s0 + $0x28] sm:$0xf]
  %v65 = vld [vmem:[%s0 + $0x2c] sm:$0xf]
  %v66 = vld [vmem:[%s0 + $0x30] sm:$0xf]
  %v67 = vld [vmem:[%s0 + $0x34] sm:$0xf]
  %v68 = vld [vmem:[%s0 + $0x38] sm:$0xf]
  %v69 = vld [vmem:[%s0 + $0x3c] sm:$0xf]
  %v70 = vld [vmem:[%s1] sm:$0xf]
  %v71 = vld [vmem:[%s1 + $0x4] sm:$0xf]
  %v72 = vld [vmem:[%s1 + $0x8] sm:$0xf]
  %v73 = vld [vmem:[%s1 + $0xc] sm:$0xf]
  %v74 = vld [vmem:[%s1 + $0x10] sm:$0xf]
  %v75 = vld [vmem:[%s1 + $0x14] sm:$0xf]
  %v76 = vld [vmem:[%s1 + $0x18] sm:$0xf]
  %v77 = vld [vmem:[%s1 + $0x1c] sm:$0xf]
  %v78 = vld [vmem:[%s1 + $0x20] sm:$0xf]
  %v79 = vld [vmem:[%s1 + $0x24] sm:$0xf]
  %v80 = vld [vmem:[%s1 + $0x28] sm:$0xf]
  %v81 = vld [vmem:[%s1 + $0x2c] sm:$0xf]
  %v82 = vld [vmem:[%s1 + $0x30] sm:$0xf]
  %v83 = vld [vmem:[%s1 + $0x34] sm:$0xf]
  %v84 = vld [vmem:[%s1 + $0x38] sm:$0xf]
  %v85 = vld [vmem:[%s1 + $0x3c] sm:$0xf]
  %v102 = vunpack.c.l.b16 %v54
  %v103 = vunpack.c.l.b16 %v55
  %v104 = vunpack.c.l.b16 %v56
  %v105 = vunpack.c.l.b16 %v57
  %v106 = vunpack.c.l.b16 %v58
  %v107 = vunpack.c.l.b16 %v59
  %v108 = vunpack.c.l.b16 %v60
  %v109 = vunpack.c.l.b16 %v61
  %v110 = vunpack.c.l.b16 %v62
  %v111 = vunpack.c.l.b16 %v63
  %v112 = vunpack.c.l.b16 %v64
  %v113 = vunpack.c.l.b16 %v65
  %v114 = vunpack.c.l.b16 %v66
  %v115 = vunpack.c.l.b16 %v67
  %v116 = vunpack.c.l.b16 %v68
  %v117 = vunpack.c.l.b16 %v69
  %v118 = vpack.c.b16 %v103, %v102
  %v119 = vpack.c.b16 %v105, %v104
  %v120 = vpack.c.b16 %v107, %v106
  %v121 = vpack.c.b16 %v109, %v108
  %v122 = vpack.c.b16 %v111, %v110
  %v123 = vpack.c.b16 %v113, %v112
  %v124 = vpack.c.b16 %v115, %v114
  %v125 = vpack.c.b16 %v117, %v116
  %v150 = vunpack.c.l.b16 %v70
  %v151 = vunpack.c.l.b16 %v71
  %v152 = vunpack.c.l.b16 %v72
  %v153 = vunpack.c.l.b16 %v73
  %v154 = vunpack.c.l.b16 %v74
  %v155 = vunpack.c.l.b16 %v75
  %v156 = vunpack.c.l.b16 %v76
  %v157 = vunpack.c.l.b16 %v77
  %v158 = vunpack.c.l.b16 %v78
  %v159 = vunpack.c.l.b16 %v79
  %v160 = vunpack.c.l.b16 %v80
  %v161 = vunpack.c.l.b16 %v81
  %v162 = vunpack.c.l.b16 %v82
  %v163 = vunpack.c.l.b16 %v83
  %v164 = vunpack.c.l.b16 %v84
  %v165 = vunpack.c.l.b16 %v85
  %v166 = vpack.c.b16 %v151, %v150
  %v167 = vpack.c.b16 %v153, %v152
  %v168 = vpack.c.b16 %v155, %v154
  %v169 = vpack.c.b16 %v157, %v156
  %v170 = vpack.c.b16 %v159, %v158
  %v171 = vpack.c.b16 %v161, %v160
  %v172 = vpack.c.b16 %v163, %v162
  %v173 = vpack.c.b16 %v165, %v164
  %182 = vmatprep.subr.bf16.mxu0 0
  %183 = vmatpush1.bf16.msra.mxu0 %v166
  %184 = vmatprep.subr.bf16.mxu0 0
  %185 = vmatpush1.bf16.msra.mxu0 %v167
  %186 = vmatprep.subr.bf16.mxu0 0
  %187 = vmatpush1.bf16.msra.mxu0 %v168
  %188 = vmatprep.subr.bf16.mxu0 0
  %189 = vmatpush1.bf16.msra.mxu0 %v169
  %190 = vmatprep.subr.bf16.mxu0 0
  %191 = vmatpush1.bf16.msra.mxu0 %v170
  %192 = vmatprep.subr.bf16.mxu0 0
  %193 = vmatpush1.bf16.msra.mxu0 %v171
  %194 = vmatprep.subr.bf16.mxu0 0
  %195 = vmatpush1.bf16.msra.mxu0 %v172
  %196 = vmatprep.subr.bf16.mxu0 0
  %197 = vmatpush1.bf16.msra.mxu0 %v173
  %198 = vmatprep.subr.bf16.mxu0 0
  %199 = vmatpush1.bf16.msra.mxu0 0
  %200 = vmatprep.subr.bf16.mxu0 0
  %201 = vmatpush1.bf16.msra.mxu0 0
  %202 = vmatprep.subr.bf16.mxu0 0
  %203 = vmatpush1.bf16.msra.mxu0 0
  %204 = vmatprep.subr.bf16.mxu0 0
  %205 = vmatpush1.bf16.msra.mxu0 0
  %206 = vmatprep.subr.bf16.mxu0 0
  %207 = vmatpush1.bf16.msra.mxu0 0
  %208 = vmatprep.subr.bf16.mxu0 0
  %209 = vmatpush1.bf16.msra.mxu0 0
  %210 = vmatprep.subr.bf16.mxu0 0
  %211 = vmatpush1.bf16.msra.mxu0 0
  %212 = vmatprep.subr.bf16.mxu0 0
  %213 = vmatpush1.bf16.msra.mxu0 0
  %214 = vmatprep.mubr.bf16.mxu0 0
  %215 = vmatmul.mubr.bf16.gmra.mrb[0].mxu0 %v118
  %v216 = vpop.f32.mrb[0].mxu0
  %v217 = vadd.f32 0.0, %v216
  %v218 = vpop.f32.mrb[0].mxu0
  %v219 = vpop.f32.mrb[0].mxu0
  %v220 = vadd.f32 0.0, %v219
  %v221 = vpop.f32.mrb[0].mxu0
  %222 = vmatprep.mubr.bf16.mxu0 0
  %223 = vmatmul.mubr.bf16.gmra.mrb[0].mxu0 %v119
  %v224 = vpop.f32.mrb[0].mxu0
  %v225 = vadd.f32 0.0, %v224
  %v226 = vpop.f32.mrb[0].mxu0
  %v227 = vpop.f32.mrb[0].mxu0
  %v228 = vadd.f32 0.0, %v227
  %v229 = vpop.f32.mrb[0].mxu0
  %230 = vmatprep.mubr.bf16.mxu0 0
  %231 = vmatmul.mubr.bf16.gmra.mrb[0].mxu0 %v120
  %v232 = vpop.f32.mrb[0].mxu0
  %v233 = vadd.f32 0.0, %v232
  %v234 = vpop.f32.mrb[0].mxu0
  %v235 = vpop.f32.mrb[0].mxu0
  %v236 = vadd.f32 0.0, %v235
  %v237 = vpop.f32.mrb[0].mxu0
  %238 = vmatprep.mubr.bf16.mxu0 0
  %239 = vmatmul.mubr.bf16.gmra.mrb[0].mxu0 %v121
  %v240 = vpop.f32.mrb[0].mxu0
  %v241 = vadd.f32 0.0, %v240
  %v242 = vpop.f32.mrb[0].mxu0
  %v243 = vpop.f32.mrb[0].mxu0
  %v244 = vadd.f32 0.0, %v243
  %v245 = vpop.f32.mrb[0].mxu0
  %246 = vmatprep.mubr.bf16.mxu0 0
  %247 = vmatmul.mubr.bf16.gmra.mrb[0].mxu0 %v122
  %v248 = vpop.f32.mrb[0].mxu0
  %v249 = vadd.f32 0.0, %v248
  %v250 = vpop.f32.mrb[0].mxu0
  %v251 = vpop.f32.mrb[0].mxu0
  %v252 = vadd.f32 0.0, %v251
  %v253 = vpop.f32.mrb[0].mxu0
  %254 = vmatprep.mubr.bf16.mxu0 0
  %255 = vmatmul.mubr.bf16.gmra.mrb[0].mxu0 %v123
  %v256 = vpop.f32.mrb[0].mxu0
  %v257 = vadd.f32 0.0, %v256
  %v258 = vpop.f32.mrb[0].mxu0
  %v259 = vpop.f32.mrb[0].mxu0
  %v260 = vadd.f32 0.0, %v259
  %v261 = vpop.f32.mrb[0].mxu0
  %262 = vmatprep.mubr.bf16.mxu0 0
  %263 = vmatmul.mubr.bf16.gmra.mrb[0].mxu0 %v124
  %v264 = vpop.f32.mrb[0].mxu0
  %v265 = vadd.f32 0.0, %v264
  %v266 = vpop.f32.mrb[0].mxu0
  %v267 = vpop.f32.mrb[0].mxu0
  %v268 = vadd.f32 0.0, %v267
  %v269 = vpop.f32.mrb[0].mxu0
  %270 = vmatprep.mubr.bf16.mxu0 0
  %271 = vmatmul.mubr.bf16.gmra.mrb[0].mxu0 %v125
  %v272 = vpop.f32.mrb[0].mxu0
  %v273 = vadd.f32 0.0, %v272
  %v274 = vpop.f32.mrb[0].mxu0
  %v275 = vpop.f32.mrb[0].mxu0
  %v276 = vadd.f32 0.0, %v275
  %v277 = vpop.f32.mrb[0].mxu0
  %278 = vdwg.mxu0
  %v279 = vadd.f32 %v38, %v217
  %v280 = vadd.f32 %v39, %v220
  %v281 = vadd.f32 %v40, %v225
  %v282 = vadd.f32 %v41, %v228
  %v283 = vadd.f32 %v42, %v233
  %v284 = vadd.f32 %v43, %v236
  %v285 = vadd.f32 %v44, %v241
  %v286 = vadd.f32 %v45, %v244
  %v287 = vadd.f32 %v46, %v249
  %v288 = vadd.f32 %v47, %v252
  %v289 = vadd.f32 %v48, %v257
  %v290 = vadd.f32 %v49, %v260
  %v291 = vadd.f32 %v50, %v265
  %v292 = vadd.f32 %v51, %v268
  %v293 = vadd.f32 %v52, %v273
  %v294 = vadd.f32 %v53, %v276
  %295 = vst [vmem:[#allocation2] sm:$0xff] %v279
  %296 = vst [vmem:[#allocation2 + $0x8] sm:$0xff] %v280
  %297 = vst [vmem:[#allocation2 + $0x10] sm:$0xff] %v281
  %298 = vst [vmem:[#allocation2 + $0x18] sm:$0xff] %v282
  %299 = vst [vmem:[#allocation2 + $0x20] sm:$0xff] %v283
  %300 = vst [vmem:[#allocation2 + $0x28] sm:$0xff] %v284
  %301 = vst [vmem:[#allocation2 + $0x30] sm:$0xff] %v285
  %302 = vst [vmem:[#allocation2 + $0x38] sm:$0xff] %v286
  %303 = vst [vmem:[#allocation2 + $0x40] sm:$0xff] %v287
  %304 = vst [vmem:[#allocation2 + $0x48] sm:$0xff] %v288
  %305 = vst [vmem:[#allocation2 + $0x50] sm:$0xff] %v289
  %306 = vst [vmem:[#allocation2 + $0x58] sm:$0xff] %v290
  %307 = vst [vmem:[#allocation2 + $0x60] sm:$0xff] %v291
  %308 = vst [vmem:[#allocation2 + $0x68] sm:$0xff] %v292
  %309 = vst [vmem:[#allocation2 + $0x70] sm:$0xff] %v293
  %310 = vst [vmem:[#allocation2 + $0x78] sm:$0xff] %v294
  // Predicated region
  $region22: #{resnet34fc_forward.41} parent=0 // pred_check
    %p311 = pneg %p18
  $region23: #{resnet34fc_forward.41} parent=0 // pred_check_branch
    %313 = sbr.rel (%p311) target = $region25
  $region24: #{resnet34fc_forward.41} parent=0 // pred_region
    %v314 = vld [vmem:[#allocation2] sm:$0xff]
    %v315 = vld [vmem:[#allocation2 + $0x8] sm:$0xff]
    %v316 = vld [vmem:[#allocation2 + $0x10] sm:$0xff]
    %v317 = vld [vmem:[#allocation2 + $0x18] sm:$0xff]
    %v318 = vld [vmem:[#allocation2 + $0x20] sm:$0xff]
    %v319 = vld [vmem:[#allocation2 + $0x28] sm:$0xff]
    %v320 = vld [vmem:[#allocation2 + $0x30] sm:$0xff]
    %v321 = vld [vmem:[#allocation2 + $0x38] sm:$0xff]
    %v322 = vld [vmem:[#allocation2 + $0x40] sm:$0xff]
    %v323 = vld [vmem:[#allocation2 + $0x48] sm:$0xff]
    %v324 = vld [vmem:[#allocation2 + $0x50] sm:$0xff]
    %v325 = vld [vmem:[#allocation2 + $0x58] sm:$0xff]
    %v326 = vld [vmem:[#allocation2 + $0x60] sm:$0xff]
    %v327 = vld [vmem:[#allocation2 + $0x68] sm:$0xff]
    %v328 = vld [vmem:[#allocation2 + $0x70] sm:$0xff]
    %v329 = vld [vmem:[#allocation2 + $0x78] sm:$0xff]
    %v330 = vld [vmem:[%s2] sm:$0x1]
    %v332 = vlaneseq
    %v333 = vshrl.u32 %v332, 7
    %v334 = vsub.s32 0, %v333
    %v335 = vrot.slane %v330, %v334
    %v337 = vadd.f32 %v314, %v335
    %v338 = vadd.f32 %v315, %v335
    %v339 = vadd.f32 %v316, %v335
    %v340 = vadd.f32 %v317, %v335
    %v341 = vadd.f32 %v318, %v335
    %v342 = vadd.f32 %v319, %v335
    %v343 = vadd.f32 %v320, %v335
    %v344 = vadd.f32 %v321, %v335
    %v345 = vadd.f32 %v322, %v335
    %v346 = vadd.f32 %v323, %v335
    %v347 = vadd.f32 %v324, %v335
    %v348 = vadd.f32 %v325, %v335
    %v349 = vadd.f32 %v326, %v335
    %v350 = vadd.f32 %v327, %v335
    %v351 = vadd.f32 %v328, %v335
    %v352 = vadd.f32 %v329, %v335
    %v353 = vld [vmem:[%s3] sm:$0xf]
    %v354 = vld [vmem:[%s3 + $0x4] sm:$0xf]
    %v355 = vld [vmem:[%s3 + $0x8] sm:$0xf]
    %v356 = vld [vmem:[%s3 + $0xc] sm:$0xf]
    %v357 = vld [vmem:[%s3 + $0x10] sm:$0xf]
    %v358 = vld [vmem:[%s3 + $0x14] sm:$0xf]
    %v359 = vld [vmem:[%s3 + $0x18] sm:$0xf]
    %v360 = vld [vmem:[%s3 + $0x1c] sm:$0xf]
    %v361 = vld [vmem:[%s3 + $0x20] sm:$0xf]
    %v362 = vld [vmem:[%s3 + $0x24] sm:$0xf]
    %v363 = vld [vmem:[%s3 + $0x28] sm:$0xf]
    %v364 = vld [vmem:[%s3 + $0x2c] sm:$0xf]
    %v365 = vld [vmem:[%s3 + $0x30] sm:$0xf]
    %v366 = vld [vmem:[%s3 + $0x34] sm:$0xf]
    %v367 = vld [vmem:[%s3 + $0x38] sm:$0xf]
    %v368 = vld [vmem:[%s3 + $0x3c] sm:$0xf]
    %v369 = vunpack.c.l.bf16 %v353
    %v370 = vunpack.c.l.bf16 %v354
    %v371 = vunpack.c.l.bf16 %v355
    %v372 = vunpack.c.l.bf16 %v356
    %v373 = vunpack.c.l.bf16 %v357
    %v374 = vunpack.c.l.bf16 %v358
    %v375 = vunpack.c.l.bf16 %v359
    %v376 = vunpack.c.l.bf16 %v360
    %v377 = vunpack.c.l.bf16 %v361
    %v378 = vunpack.c.l.bf16 %v362
    %v379 = vunpack.c.l.bf16 %v363
    %v380 = vunpack.c.l.bf16 %v364
    %v381 = vunpack.c.l.bf16 %v365
    %v382 = vunpack.c.l.bf16 %v366
    %v383 = vunpack.c.l.bf16 %v367
    %v384 = vunpack.c.l.bf16 %v368
    %v385 = vadd.f32 %v337, %v369
    %v386 = vadd.f32 %v338, %v370
    %v387 = vadd.f32 %v339, %v371
    %v388 = vadd.f32 %v340, %v372
    %v389 = vadd.f32 %v341, %v373
    %v390 = vadd.f32 %v342, %v374
    %v391 = vadd.f32 %v343, %v375
    %v392 = vadd.f32 %v344, %v376
    %v393 = vadd.f32 %v345, %v377
    %v394 = vadd.f32 %v346, %v378
    %v395 = vadd.f32 %v347, %v379
    %v396 = vadd.f32 %v348, %v380
    %v397 = vadd.f32 %v349, %v381
    %v398 = vadd.f32 %v350, %v382
    %v399 = vadd.f32 %v351, %v383
    %v400 = vadd.f32 %v352, %v384
    %v401 = vmax.f32 %v385, 0.0
    %v402 = vmax.f32 %v386, 0.0
    %v403 = vmax.f32 %v387, 0.0
    %v404 = vmax.f32 %v388, 0.0
    %v405 = vmax.f32 %v389, 0.0
    %v406 = vmax.f32 %v390, 0.0
    %v407 = vmax.f32 %v391, 0.0
    %v408 = vmax.f32 %v392, 0.0
    %v409 = vmax.f32 %v393, 0.0
    %v410 = vmax.f32 %v394, 0.0
    %v411 = vmax.f32 %v395, 0.0
    %v412 = vmax.f32 %v396, 0.0
    %v413 = vmax.f32 %v397, 0.0
    %v414 = vmax.f32 %v398, 0.0
    %v415 = vmax.f32 %v399, 0.0
    %v416 = vmax.f32 %v400, 0.0
    %v417 = vpack.c.bf16 %v402, %v401
    %v418 = vpack.c.bf16 %v404, %v403
    %v419 = vpack.c.bf16 %v406, %v405
    %v420 = vpack.c.bf16 %v408, %v407
    %v421 = vpack.c.bf16 %v410, %v409
    %v422 = vpack.c.bf16 %v412, %v411
    %v423 = vpack.c.bf16 %v414, %v413
    %v424 = vpack.c.bf16 %v416, %v415
    %v433 = vunpack.c.l.b16 %v417
    %v434 = vunpack.c.h.b16 %v417
    %v435 = vunpack.c.l.b16 %v418
    %v436 = vunpack.c.h.b16 %v418
    %v437 = vunpack.c.l.b16 %v419
    %v438 = vunpack.c.h.b16 %v419
    %v439 = vunpack.c.l.b16 %v420
    %v440 = vunpack.c.h.b16 %v420
    %v441 = vunpack.c.l.b16 %v421
    %v442 = vunpack.c.h.b16 %v421
    %v443 = vunpack.c.l.b16 %v422
    %v444 = vunpack.c.h.b16 %v422
    %v445 = vunpack.c.l.b16 %v423
    %v446 = vunpack.c.h.b16 %v423
    %v447 = vunpack.c.l.b16 %v424
    %v448 = vunpack.c.h.b16 %v424
    %v449 = vpack.c.b16 %v433, %v433
    %v450 = vpack.c.b16 %v434, %v434
    %v451 = vpack.c.b16 %v435, %v435
    %v452 = vpack.c.b16 %v436, %v436
    %v453 = vpack.c.b16 %v437, %v437
    %v454 = vpack.c.b16 %v438, %v438
    %v455 = vpack.c.b16 %v439, %v439
    %v456 = vpack.c.b16 %v440, %v440
    %v457 = vpack.c.b16 %v441, %v441
    %v458 = vpack.c.b16 %v442, %v442
    %v459 = vpack.c.b16 %v443, %v443
    %v460 = vpack.c.b16 %v444, %v444
    %v461 = vpack.c.b16 %v445, %v445
    %v462 = vpack.c.b16 %v446, %v446
    %v463 = vpack.c.b16 %v447, %v447
    %v464 = vpack.c.b16 %v448, %v448
    %481 = vst [vmem:[%s4] sm:$0xf] %v449
    %482 = vst [vmem:[%s4 + $0x4] sm:$0xf] %v450
    %483 = vst [vmem:[%s4 + $0x8] sm:$0xf] %v451
    %484 = vst [vmem:[%s4 + $0xc] sm:$0xf] %v452
    %485 = vst [vmem:[%s4 + $0x10] sm:$0xf] %v453
    %486 = vst [vmem:[%s4 + $0x14] sm:$0xf] %v454
    %487 = vst [vmem:[%s4 + $0x18] sm:$0xf] %v455
    %488 = vst [vmem:[%s4 + $0x1c] sm:$0xf] %v456
    %489 = vst [vmem:[%s4 + $0x20] sm:$0xf] %v457
    %490 = vst [vmem:[%s4 + $0x24] sm:$0xf] %v458
    %491 = vst [vmem:[%s4 + $0x28] sm:$0xf] %v459
    %492 = vst [vmem:[%s4 + $0x2c] sm:$0xf] %v460
    %493 = vst [vmem:[%s4 + $0x30] sm:$0xf] %v461
    %494 = vst [vmem:[%s4 + $0x34] sm:$0xf] %v462
    %495 = vst [vmem:[%s4 + $0x38] sm:$0xf] %v463
    %496 = vst [vmem:[%s4 + $0x3c] sm:$0xf] %v464
  $region25: #{resnet34fc_forward.41} parent=0 // pred_fallthru
    _
  // Predicated region
  $region26: #{resnet34fc_forward.41} parent=0 // pred_check
    _
  $region27: #{resnet34fc_forward.41} parent=0 // pred_check_branch
    %498 = sbr.rel (0) target = $region29
  $region28: #{resnet34fc_forward.41} parent=0 // pred_region
    _
  $region29: #{resnet34fc_forward.41} parent=0 // pred_fallthru
    _
  // Predicated region
  $region30: #{resnet34fc_forward.41} parent=0 // pred_check
    _
  $region31: #{resnet34fc_forward.41} parent=0 // pred_check_branch
    %500 = sbr.rel (0) target = $region33
  $region32: #{resnet34fc_forward.41} parent=0 // pred_region
    _
  $region33: #{resnet34fc_forward.41} parent=0 // pred_fallthru
    _

// kernel: resnet34fc_forward.47
$region0: #{resnet34fc_forward.47}
  #allocation0 [shape = 'u32[]', space=smem, size = 0x4, offset = 0x4, fixed_abs, tag = 'smem constant byte address 0x4 - core index']
  #allocation1 [shape = 'u32[144,128]{1,0:T(1,128)}', space=vmem, size = 0x12000, scoped, tag = 'internal scratch']
  #allocation2 [shape = 'f32[32,128]{1,0:T(8,128)}', space=vmem, size = 0x4000, scoped, tag = 'scratch operand']
  %s0 = inlined_call_operand.vmem [shape: bf16[32,128], index: 0, kind: input, shape index: {}]
  %s1 = inlined_call_operand.vmem [shape: bf16[128,128], index: 1, kind: input, shape index: {}]
  %s2 = inlined_call_operand.vmem [shape: f32[1,128], index: 2, kind: input, shape index: {}]
  %s3 = inlined_call_operand.vmem [shape: bf16[32,128], index: 3, kind: output, shape index: {}]
  %s4 = sld [smem:[#allocation0]]
  $region30: #{resnet34fc_forward.47} parent=0
    _
  %s6 = ssub.s32 1, %s4
  %s7 = scalar_select 0, %s6, %s4
  // Predicated region
  $region2: #{resnet34fc_forward.47} parent=0 // pred_check
    _
  $region3: #{resnet34fc_forward.47} parent=0 // pred_check_branch
    %9 = sbr.rel (0) target = $region5
  $region4: #{resnet34fc_forward.47} parent=0 // pred_region
    _
  $region5: #{resnet34fc_forward.47} parent=0 // pred_fallthru
    _
  // Predicated region
  $region6: #{resnet34fc_forward.47} parent=0 // pred_check
    _
  $region7: #{resnet34fc_forward.47} parent=0 // pred_check_branch
    %11 = sbr.rel (0) target = $region9
  $region8: #{resnet34fc_forward.47} parent=0 // pred_region
    _
  $region9: #{resnet34fc_forward.47} parent=0 // pred_fallthru
    _
  // Predicated region
  $region10: #{resnet34fc_forward.47} parent=0 // pred_check
    _
  $region11: #{resnet34fc_forward.47} parent=0 // pred_check_branch
    %13 = sbr.rel (0) target = $region13
  $region12: #{resnet34fc_forward.47} parent=0 // pred_region
    _
  $region13: #{resnet34fc_forward.47} parent=0 // pred_fallthru
    _
  %p15 = scmp.eq.s32.totalorder 0, 0
  // Predicated region
  $region14: #{resnet34fc_forward.47} parent=0 // pred_check
    %p16 = pneg %p15
  $region15: #{resnet34fc_forward.47} parent=0 // pred_check_branch
    %18 = sbr.rel (%p16) target = $region17
  $region16: #{resnet34fc_forward.47} parent=0 // pred_region
    %19 = vst [vmem:[#allocation2] sm:$0xff] 0.0
    %20 = vst [vmem:[#allocation2 + $0x8] sm:$0xff] 0.0
    %21 = vst [vmem:[#allocation2 + $0x10] sm:$0xff] 0.0
    %22 = vst [vmem:[#allocation2 + $0x18] sm:$0xff] 0.0
  $region17: #{resnet34fc_forward.47} parent=0 // pred_fallthru
    _
  %v23 = vld [vmem:[#allocation2] sm:$0xff]
  %v24 = vld [vmem:[#allocation2 + $0x8] sm:$0xff]
  %v25 = vld [vmem:[#allocation2 + $0x10] sm:$0xff]
  %v26 = vld [vmem:[#allocation2 + $0x18] sm:$0xff]
  %v27 = vld [vmem:[%s0] sm:$0xf]
  %v28 = vld [vmem:[%s0 + $0x4] sm:$0xf]
  %v29 = vld [vmem:[%s0 + $0x8] sm:$0xf]
  %v30 = vld [vmem:[%s0 + $0xc] sm:$0xf]
  %v31 = vld [vmem:[%s1] sm:$0xf]
  %v32 = vld [vmem:[%s1 + $0x4] sm:$0xf]
  %v33 = vld [vmem:[%s1 + $0x8] sm:$0xf]
  %v34 = vld [vmem:[%s1 + $0xc] sm:$0xf]
  %v35 = vld [vmem:[%s1 + $0x10] sm:$0xf]
  %v36 = vld [vmem:[%s1 + $0x14] sm:$0xf]
  %v37 = vld [vmem:[%s1 + $0x18] sm:$0xf]
  %v38 = vld [vmem:[%s1 + $0x1c] sm:$0xf]
  %v39 = vld [vmem:[%s1 + $0x20] sm:$0xf]
  %v40 = vld [vmem:[%s1 + $0x24] sm:$0xf]
  %v41 = vld [vmem:[%s1 + $0x28] sm:$0xf]
  %v42 = vld [vmem:[%s1 + $0x2c] sm:$0xf]
  %v43 = vld [vmem:[%s1 + $0x30] sm:$0xf]
  %v44 = vld [vmem:[%s1 + $0x34] sm:$0xf]
  %v45 = vld [vmem:[%s1 + $0x38] sm:$0xf]
  %v46 = vld [vmem:[%s1 + $0x3c] sm:$0xf]
  %v51 = vunpack.c.l.b16 %v27
  %v52 = vunpack.c.l.b16 %v28
  %v53 = vunpack.c.l.b16 %v29
  %v54 = vunpack.c.l.b16 %v30
  %v55 = vpack.c.b16 %v52, %v51
  %v56 = vpack.c.b16 %v54, %v53
  %v75 = vunpack.c.l.b16 %v31
  %v76 = vunpack.c.l.b16 %v32
  %v77 = vunpack.c.l.b16 %v33
  %v78 = vunpack.c.l.b16 %v34
  %v79 = vunpack.c.l.b16 %v35
  %v80 = vunpack.c.l.b16 %v36
  %v81 = vunpack.c.l.b16 %v37
  %v82 = vunpack.c.l.b16 %v38
  %v83 = vunpack.c.l.b16 %v39
  %v84 = vunpack.c.l.b16 %v40
  %v85 = vunpack.c.l.b16 %v41
  %v86 = vunpack.c.l.b16 %v42
  %v87 = vunpack.c.l.b16 %v43
  %v88 = vunpack.c.l.b16 %v44
  %v89 = vunpack.c.l.b16 %v45
  %v90 = vunpack.c.l.b16 %v46
  %v91 = vpack.c.b16 %v76, %v75
  %v92 = vpack.c.b16 %v78, %v77
  %v93 = vpack.c.b16 %v80, %v79
  %v94 = vpack.c.b16 %v82, %v81
  %v95 = vpack.c.b16 %v84, %v83
  %v96 = vpack.c.b16 %v86, %v85
  %v97 = vpack.c.b16 %v88, %v87
  %v98 = vpack.c.b16 %v90, %v89
  %107 = vmatprep.subr.bf16.mxu0 0
  %108 = vmatpush1.bf16.msra.mxu0 %v91
  %109 = vmatprep.subr.bf16.mxu0 0
  %110 = vmatpush1.bf16.msra.mxu0 %v92
  %111 = vmatprep.subr.bf16.mxu0 0
  %112 = vmatpush1.bf16.msra.mxu0 %v93
  %113 = vmatprep.subr.bf16.mxu0 0
  %114 = vmatpush1.bf16.msra.mxu0 %v94
  %115 = vmatprep.subr.bf16.mxu0 0
  %116 = vmatpush1.bf16.msra.mxu0 %v95
  %117 = vmatprep.subr.bf16.mxu0 0
  %118 = vmatpush1.bf16.msra.mxu0 %v96
  %119 = vmatprep.subr.bf16.mxu0 0
  %120 = vmatpush1.bf16.msra.mxu0 %v97
  %121 = vmatprep.subr.bf16.mxu0 0
  %122 = vmatpush1.bf16.msra.mxu0 %v98
  %123 = vmatprep.subr.bf16.mxu0 0
  %124 = vmatpush1.bf16.msra.mxu0 0
  %125 = vmatprep.subr.bf16.mxu0 0
  %126 = vmatpush1.bf16.msra.mxu0 0
  %127 = vmatprep.subr.bf16.mxu0 0
  %128 = vmatpush1.bf16.msra.mxu0 0
  %129 = vmatprep.subr.bf16.mxu0 0
  %130 = vmatpush1.bf16.msra.mxu0 0
  %131 = vmatprep.subr.bf16.mxu0 0
  %132 = vmatpush1.bf16.msra.mxu0 0
  %133 = vmatprep.subr.bf16.mxu0 0
  %134 = vmatpush1.bf16.msra.mxu0 0
  %135 = vmatprep.subr.bf16.mxu0 0
  %136 = vmatpush1.bf16.msra.mxu0 0
  %137 = vmatprep.subr.bf16.mxu0 0
  %138 = vmatpush1.bf16.msra.mxu0 0
  %139 = vmatprep.mubr.bf16.mxu0 0
  %140 = vmatmul.mubr.bf16.gmra.mrb[0].mxu0 %v55
  %v141 = vpop.f32.mrb[0].mxu0
  %v142 = vadd.f32 0.0, %v141
  %v143 = vpop.f32.mrb[0].mxu0
  %v144 = vpop.f32.mrb[0].mxu0
  %v145 = vadd.f32 0.0, %v144
  %v146 = vpop.f32.mrb[0].mxu0
  %147 = vmatprep.mubr.bf16.mxu0 0
  %148 = vmatmul.mubr.bf16.gmra.mrb[0].mxu0 %v56
  %v149 = vpop.f32.mrb[0].mxu0
  %v150 = vadd.f32 0.0, %v149
  %v151 = vpop.f32.mrb[0].mxu0
  %v152 = vpop.f32.mrb[0].mxu0
  %v153 = vadd.f32 0.0, %v152
  %v154 = vpop.f32.mrb[0].mxu0
  %155 = vdwg.mxu0
  %v156 = vadd.f32 %v23, %v142
  %v157 = vadd.f32 %v24, %v145
  %v158 = vadd.f32 %v25, %v150
  %v159 = vadd.f32 %v26, %v153
  %160 = vst [vmem:[#allocation2] sm:$0xff] %v156
  %161 = vst [vmem:[#allocation2 + $0x8] sm:$0xff] %v157
  %162 = vst [vmem:[#allocation2 + $0x10] sm:$0xff] %v158
  %163 = vst [vmem:[#allocation2 + $0x18] sm:$0xff] %v159
  // Predicated region
  $region18: #{resnet34fc_forward.47} parent=0 // pred_check
    %p164 = pneg %p15
  $region19: #{resnet34fc_forward.47} parent=0 // pred_check_branch
    %166 = sbr.rel (%p164) target = $region21
  $region20: #{resnet34fc_forward.47} parent=0 // pred_region
    %v167 = vld [vmem:[#allocation2] sm:$0xff]
    %v168 = vld [vmem:[#allocation2 + $0x8] sm:$0xff]
    %v169 = vld [vmem:[#allocation2 + $0x10] sm:$0xff]
    %v170 = vld [vmem:[#allocation2 + $0x18] sm:$0xff]
    %v171 = vld [vmem:[%s2] sm:$0x1]
    %v173 = vlaneseq
    %v174 = vshrl.u32 %v173, 7
    %v175 = vsub.s32 0, %v174
    %v176 = vrot.slane %v171, %v175
    %v178 = vadd.f32 %v167, %v176
    %v179 = vadd.f32 %v168, %v176
    %v180 = vadd.f32 %v169, %v176
    %v181 = vadd.f32 %v170, %v176
    %v182 = vmax.f32 %v178, 0.0
    %v183 = vmax.f32 %v179, 0.0
    %v184 = vmax.f32 %v180, 0.0
    %v185 = vmax.f32 %v181, 0.0
    %v186 = vpack.c.bf16 %v183, %v182
    %v187 = vpack.c.bf16 %v185, %v184
    %v190 = vunpack.c.l.b16 %v186
    %v191 = vunpack.c.h.b16 %v186
    %v192 = vunpack.c.l.b16 %v187
    %v193 = vunpack.c.h.b16 %v187
    %v194 = vpack.c.b16 %v190, %v190
    %v195 = vpack.c.b16 %v191, %v191
    %v196 = vpack.c.b16 %v192, %v192
    %v197 = vpack.c.b16 %v193, %v193
    %202 = vst [vmem:[%s3] sm:$0xf] %v194
    %203 = vst [vmem:[%s3 + $0x4] sm:$0xf] %v195
    %204 = vst [vmem:[%s3 + $0x8] sm:$0xf] %v196
    %205 = vst [vmem:[%s3 + $0xc] sm:$0xf] %v197
  $region21: #{resnet34fc_forward.47} parent=0 // pred_fallthru
    _
  // Predicated region
  $region22: #{resnet34fc_forward.47} parent=0 // pred_check
    _
  $region23: #{resnet34fc_forward.47} parent=0 // pred_check_branch
    %207 = sbr.rel (0) target = $region25
  $region24: #{resnet34fc_forward.47} parent=0 // pred_region
    _
  $region25: #{resnet34fc_forward.47} parent=0 // pred_fallthru
    _
  // Predicated region
  $region26: #{resnet34fc_forward.47} parent=0 // pred_check
    _
  $region27: #{resnet34fc_forward.47} parent=0 // pred_check_branch
    %209 = sbr.rel (0) target = $region29
  $region28: #{resnet34fc_forward.47} parent=0 // pred_region
    _
  $region29: #{resnet34fc_forward.47} parent=0 // pred_fallthru
    _

// kernel: resnet34fc_forward.46
$region0: #{resnet34fc_forward.46}
  #allocation0 [shape = 'u32[]', space=smem, size = 0x4, offset = 0x4, fixed_abs, tag = 'smem constant byte address 0x4 - core index']
  #allocation1 [shape = 'u32[144,128]{1,0:T(1,128)}', space=vmem, size = 0x12000, scoped, tag = 'internal scratch']
  #allocation2 [shape = 'f32[32,128]{1,0:T(8,128)}', space=vmem, size = 0x4000, scoped, tag = 'scratch operand']
  %s0 = inlined_call_operand.vmem [shape: bf16[32,128], index: 0, kind: input, shape index: {}]
  %s1 = inlined_call_operand.vmem [shape: bf16[128,128], index: 1, kind: input, shape index: {}]
  %s2 = inlined_call_operand.vmem [shape: f32[1,128], index: 2, kind: input, shape index: {}]
  %s3 = inlined_call_operand.vmem [shape: bf16[32,128], index: 3, kind: output, shape index: {}]
  %s4 = sld [smem:[#allocation0]]
  $region30: #{resnet34fc_forward.46} parent=0
    _
  %s6 = ssub.s32 1, %s4
  %s7 = scalar_select 0, %s6, %s4
  // Predicated region
  $region2: #{resnet34fc_forward.46} parent=0 // pred_check
    _
  $region3: #{resnet34fc_forward.46} parent=0 // pred_check_branch
    %9 = sbr.rel (0) target = $region5
  $region4: #{resnet34fc_forward.46} parent=0 // pred_region
    _
  $region5: #{resnet34fc_forward.46} parent=0 // pred_fallthru
    _
  // Predicated region
  $region6: #{resnet34fc_forward.46} parent=0 // pred_check
    _
  $region7: #{resnet34fc_forward.46} parent=0 // pred_check_branch
    %11 = sbr.rel (0) target = $region9
  $region8: #{resnet34fc_forward.46} parent=0 // pred_region
    _
  $region9: #{resnet34fc_forward.46} parent=0 // pred_fallthru
    _
  // Predicated region
  $region10: #{resnet34fc_forward.46} parent=0 // pred_check
    _
  $region11: #{resnet34fc_forward.46} parent=0 // pred_check_branch
    %13 = sbr.rel (0) target = $region13
  $region12: #{resnet34fc_forward.46} parent=0 // pred_region
    _
  $region13: #{resnet34fc_forward.46} parent=0 // pred_fallthru
    _
  %p15 = scmp.eq.s32.totalorder 0, 0
  // Predicated region
  $region14: #{resnet34fc_forward.46} parent=0 // pred_check
    %p16 = pneg %p15
  $region15: #{resnet34fc_forward.46} parent=0 // pred_check_branch
    %18 = sbr.rel (%p16) target = $region17
  $region16: #{resnet34fc_forward.46} parent=0 // pred_region
    %19 = vst [vmem:[#allocation2] sm:$0xff] 0.0
    %20 = vst [vmem:[#allocation2 + $0x8] sm:$0xff] 0.0
    %21 = vst [vmem:[#allocation2 + $0x10] sm:$0xff] 0.0
    %22 = vst [vmem:[#allocation2 + $0x18] sm:$0xff] 0.0
  $region17: #{resnet34fc_forward.46} parent=0 // pred_fallthru
    _
  %v23 = vld [vmem:[#allocation2] sm:$0xff]
  %v24 = vld [vmem:[#allocation2 + $0x8] sm:$0xff]
  %v25 = vld [vmem:[#allocation2 + $0x10] sm:$0xff]
  %v26 = vld [vmem:[#allocation2 + $0x18] sm:$0xff]
  %v27 = vld [vmem:[%s0] sm:$0xf]
  %v28 = vld [vmem:[%s0 + $0x4] sm:$0xf]
  %v29 = vld [vmem:[%s0 + $0x8] sm:$0xf]
  %v30 = vld [vmem:[%s0 + $0xc] sm:$0xf]
  %v31 = vld [vmem:[%s1] sm:$0xf]
  %v32 = vld [vmem:[%s1 + $0x4] sm:$0xf]
  %v33 = vld [vmem:[%s1 + $0x8] sm:$0xf]
  %v34 = vld [vmem:[%s1 + $0xc] sm:$0xf]
  %v35 = vld [vmem:[%s1 + $0x10] sm:$0xf]
  %v36 = vld [vmem:[%s1 + $0x14] sm:$0xf]
  %v37 = vld [vmem:[%s1 + $0x18] sm:$0xf]
  %v38 = vld [vmem:[%s1 + $0x1c] sm:$0xf]
  %v39 = vld [vmem:[%s1 + $0x20] sm:$0xf]
  %v40 = vld [vmem:[%s1 + $0x24] sm:$0xf]
  %v41 = vld [vmem:[%s1 + $0x28] sm:$0xf]
  %v42 = vld [vmem:[%s1 + $0x2c] sm:$0xf]
  %v43 = vld [vmem:[%s1 + $0x30] sm:$0xf]
  %v44 = vld [vmem:[%s1 + $0x34] sm:$0xf]
  %v45 = vld [vmem:[%s1 + $0x38] sm:$0xf]
  %v46 = vld [vmem:[%s1 + $0x3c] sm:$0xf]
  %v51 = vunpack.c.l.b16 %v27
  %v52 = vunpack.c.l.b16 %v28
  %v53 = vunpack.c.l.b16 %v29
  %v54 = vunpack.c.l.b16 %v30
  %v55 = vpack.c.b16 %v52, %v51
  %v56 = vpack.c.b16 %v54, %v53
  %v75 = vunpack.c.l.b16 %v31
  %v76 = vunpack.c.l.b16 %v32
  %v77 = vunpack.c.l.b16 %v33
  %v78 = vunpack.c.l.b16 %v34
  %v79 = vunpack.c.l.b16 %v35
  %v80 = vunpack.c.l.b16 %v36
  %v81 = vunpack.c.l.b16 %v37
  %v82 = vunpack.c.l.b16 %v38
  %v83 = vunpack.c.l.b16 %v39
  %v84 = vunpack.c.l.b16 %v40
  %v85 = vunpack.c.l.b16 %v41
  %v86 = vunpack.c.l.b16 %v42
  %v87 = vunpack.c.l.b16 %v43
  %v88 = vunpack.c.l.b16 %v44
  %v89 = vunpack.c.l.b16 %v45
  %v90 = vunpack.c.l.b16 %v46
  %v91 = vpack.c.b16 %v76, %v75
  %v92 = vpack.c.b16 %v78, %v77
  %v93 = vpack.c.b16 %v80, %v79
  %v94 = vpack.c.b16 %v82, %v81
  %v95 = vpack.c.b16 %v84, %v83
  %v96 = vpack.c.b16 %v86, %v85
  %v97 = vpack.c.b16 %v88, %v87
  %v98 = vpack.c.b16 %v90, %v89
  %107 = vmatprep.subr.bf16.mxu0 0
  %108 = vmatpush1.bf16.msra.mxu0 %v91
  %109 = vmatprep.subr.bf16.mxu0 0
  %110 = vmatpush1.bf16.msra.mxu0 %v92
  %111 = vmatprep.subr.bf16.mxu0 0
  %112 = vmatpush1.bf16.msra.mxu0 %v93
  %113 = vmatprep.subr.bf16.mxu0 0
  %114 = vmatpush1.bf16.msra.mxu0 %v94
  %115 = vmatprep.subr.bf16.mxu0 0
  %116 = vmatpush1.bf16.msra.mxu0 %v95
  %117 = vmatprep.subr.bf16.mxu0 0
  %118 = vmatpush1.bf16.msra.mxu0 %v96
  %119 = vmatprep.subr.bf16.mxu0 0
  %120 = vmatpush1.bf16.msra.mxu0 %v97
  %121 = vmatprep.subr.bf16.mxu0 0
  %122 = vmatpush1.bf16.msra.mxu0 %v98
  %123 = vmatprep.subr.bf16.mxu0 0
  %124 = vmatpush1.bf16.msra.mxu0 0
  %125 = vmatprep.subr.bf16.mxu0 0
  %126 = vmatpush1.bf16.msra.mxu0 0
  %127 = vmatprep.subr.bf16.mxu0 0
  %128 = vmatpush1.bf16.msra.mxu0 0
  %129 = vmatprep.subr.bf16.mxu0 0
  %130 = vmatpush1.bf16.msra.mxu0 0
  %131 = vmatprep.subr.bf16.mxu0 0
  %132 = vmatpush1.bf16.msra.mxu0 0
  %133 = vmatprep.subr.bf16.mxu0 0
  %134 = vmatpush1.bf16.msra.mxu0 0
  %135 = vmatprep.subr.bf16.mxu0 0
  %136 = vmatpush1.bf16.msra.mxu0 0
  %137 = vmatprep.subr.bf16.mxu0 0
  %138 = vmatpush1.bf16.msra.mxu0 0
  %139 = vmatprep.mubr.bf16.mxu0 0
  %140 = vmatmul.mubr.bf16.gmra.mrb[0].mxu0 %v55
  %v141 = vpop.f32.mrb[0].mxu0
  %v142 = vadd.f32 0.0, %v141
  %v143 = vpop.f32.mrb[0].mxu0
  %v144 = vpop.f32.mrb[0].mxu0
  %v145 = vadd.f32 0.0, %v144
  %v146 = vpop.f32.mrb[0].mxu0
  %147 = vmatprep.mubr.bf16.mxu0 0
  %148 = vmatmul.mubr.bf16.gmra.mrb[0].mxu0 %v56
  %v149 = vpop.f32.mrb[0].mxu0
  %v150 = vadd.f32 0.0, %v149
  %v151 = vpop.f32.mrb[0].mxu0
  %v152 = vpop.f32.mrb[0].mxu0
  %v153 = vadd.f32 0.0, %v152
  %v154 = vpop.f32.mrb[0].mxu0
  %155 = vdwg.mxu0
  %v156 = vadd.f32 %v23, %v142
  %v157 = vadd.f32 %v24, %v145
  %v158 = vadd.f32 %v25, %v150
  %v159 = vadd.f32 %v26, %v153
  %160 = vst [vmem:[#allocation2] sm:$0xff] %v156
  %161 = vst [vmem:[#allocation2 + $0x8] sm:$0xff] %v157
  %162 = vst [vmem:[#allocation2 + $0x10] sm:$0xff] %v158
  %163 = vst [vmem:[#allocation2 + $0x18] sm:$0xff] %v159
  // Predicated region
  $region18: #{resnet34fc_forward.46} parent=0 // pred_check
    %p164 = pneg %p15
  $region19: #{resnet34fc_forward.46} parent=0 // pred_check_branch
    %166 = sbr.rel (%p164) target = $region21
  $region20: #{resnet34fc_forward.46} parent=0 // pred_region
    %v167 = vld [vmem:[#allocation2] sm:$0xff]
    %v168 = vld [vmem:[#allocation2 + $0x8] sm:$0xff]
    %v169 = vld [vmem:[#allocation2 + $0x10] sm:$0xff]
    %v170 = vld [vmem:[#allocation2 + $0x18] sm:$0xff]
    %v171 = vld [vmem:[%s2] sm:$0x1]
    %v173 = vlaneseq
    %v174 = vshrl.u32 %v173, 7
    %v175 = vsub.s32 0, %v174
    %v176 = vrot.slane %v171, %v175
    %v178 = vadd.f32 %v167, %v176
    %v179 = vadd.f32 %v168, %v176
    %v180 = vadd.f32 %v169, %v176
    %v181 = vadd.f32 %v170, %v176
    %v182 = vpack.c.bf16 %v179, %v178
    %v183 = vpack.c.bf16 %v181, %v180
    %v186 = vunpack.c.l.b16 %v182
    %v187 = vunpack.c.h.b16 %v182
    %v188 = vunpack.c.l.b16 %v183
    %v189 = vunpack.c.h.b16 %v183
    %v190 = vpack.c.b16 %v186, %v186
    %v191 = vpack.c.b16 %v187, %v187
    %v192 = vpack.c.b16 %v188, %v188
    %v193 = vpack.c.b16 %v189, %v189
    %198 = vst [vmem:[%s3] sm:$0xf] %v190
    %199 = vst [vmem:[%s3 + $0x4] sm:$0xf] %v191
    %200 = vst [vmem:[%s3 + $0x8] sm:$0xf] %v192
    %201 = vst [vmem:[%s3 + $0xc] sm:$0xf] %v193
  $region21: #{resnet34fc_forward.46} parent=0 // pred_fallthru
    _
  // Predicated region
  $region22: #{resnet34fc_forward.46} parent=0 // pred_check
    _
  $region23: #{resnet34fc_forward.46} parent=0 // pred_check_branch
    %203 = sbr.rel (0) target = $region25
  $region24: #{resnet34fc_forward.46} parent=0 // pred_region
    _
  $region25: #{resnet34fc_forward.46} parent=0 // pred_fallthru
    _
  // Predicated region
  $region26: #{resnet34fc_forward.46} parent=0 // pred_check
    _
  $region27: #{resnet34fc_forward.46} parent=0 // pred_check_branch
    %205 = sbr.rel (0) target = $region29
  $region28: #{resnet34fc_forward.46} parent=0 // pred_region
    _
  $region29: #{resnet34fc_forward.46} parent=0 // pred_fallthru
    _

// kernel: resnet34fc_forward.48
$region0: #{resnet34fc_forward.48}
  #allocation0 [shape = 'u32[]', space=smem, size = 0x4, offset = 0x4, fixed_abs, tag = 'smem constant byte address 0x4 - core index']
  #allocation1 [shape = 'u32[144,128]{1,0:T(1,128)}', space=vmem, size = 0x12000, scoped, tag = 'internal scratch']
  #allocation2 [shape = 'f32[32,128]{1,0:T(8,128)}', space=vmem, size = 0x4000, scoped, tag = 'scratch operand']
  %s0 = inlined_call_operand.vmem [shape: bf16[32,256], index: 0, kind: input, shape index: {}]
  %s1 = inlined_call_operand.vmem [shape: bf16[256,128], index: 1, kind: input, shape index: {}]
  %s2 = inlined_call_operand.vmem [shape: f32[1,128], index: 2, kind: input, shape index: {}]
  %s3 = inlined_call_operand.vmem [shape: bf16[32,128], index: 3, kind: input, shape index: {}]
  %s4 = inlined_call_operand.vmem [shape: bf16[32,128], index: 4, kind: output, shape index: {}]
  %s5 = sld [smem:[#allocation0]]
  $region34: #{resnet34fc_forward.48} parent=0
    _
  %s7 = ssub.s32 1, %s5
  %s8 = scalar_select 0, %s7, %s5
  // Predicated region
  $region2: #{resnet34fc_forward.48} parent=0 // pred_check
    _
  $region3: #{resnet34fc_forward.48} parent=0 // pred_check_branch
    %10 = sbr.rel (0) target = $region5
  $region4: #{resnet34fc_forward.48} parent=0 // pred_region
    _
  $region5: #{resnet34fc_forward.48} parent=0 // pred_fallthru
    _
  // Predicated region
  $region6: #{resnet34fc_forward.48} parent=0 // pred_check
    _
  $region7: #{resnet34fc_forward.48} parent=0 // pred_check_branch
    %12 = sbr.rel (0) target = $region9
  $region8: #{resnet34fc_forward.48} parent=0 // pred_region
    _
  $region9: #{resnet34fc_forward.48} parent=0 // pred_fallthru
    _
  // Predicated region
  $region10: #{resnet34fc_forward.48} parent=0 // pred_check
    _
  $region11: #{resnet34fc_forward.48} parent=0 // pred_check_branch
    %14 = sbr.rel (0) target = $region13
  $region12: #{resnet34fc_forward.48} parent=0 // pred_region
    _
  $region13: #{resnet34fc_forward.48} parent=0 // pred_fallthru
    _
  // Predicated region
  $region14: #{resnet34fc_forward.48} parent=0 // pred_check
    _
  $region15: #{resnet34fc_forward.48} parent=0 // pred_check_branch
    %16 = sbr.rel (0) target = $region17
  $region16: #{resnet34fc_forward.48} parent=0 // pred_region
    _
  $region17: #{resnet34fc_forward.48} parent=0 // pred_fallthru
    _
  %p18 = scmp.eq.s32.totalorder 0, 0
  // Predicated region
  $region18: #{resnet34fc_forward.48} parent=0 // pred_check
    %p19 = pneg %p18
  $region19: #{resnet34fc_forward.48} parent=0 // pred_check_branch
    %21 = sbr.rel (%p19) target = $region21
  $region20: #{resnet34fc_forward.48} parent=0 // pred_region
    %22 = vst [vmem:[#allocation2] sm:$0xff] 0.0
    %23 = vst [vmem:[#allocation2 + $0x8] sm:$0xff] 0.0
    %24 = vst [vmem:[#allocation2 + $0x10] sm:$0xff] 0.0
    %25 = vst [vmem:[#allocation2 + $0x18] sm:$0xff] 0.0
  $region21: #{resnet34fc_forward.48} parent=0 // pred_fallthru
    _
  %v26 = vld [vmem:[#allocation2] sm:$0xff]
  %v27 = vld [vmem:[#allocation2 + $0x8] sm:$0xff]
  %v28 = vld [vmem:[#allocation2 + $0x10] sm:$0xff]
  %v29 = vld [vmem:[#allocation2 + $0x18] sm:$0xff]
  %v30 = vld [vmem:[%s0] sm:$0xff]
  %v31 = vld [vmem:[%s0 + $0x8] sm:$0xff]
  %v32 = vld [vmem:[%s0 + $0x10] sm:$0xff]
  %v33 = vld [vmem:[%s0 + $0x18] sm:$0xff]
  %v34 = vld [vmem:[%s1] sm:$0xf]
  %v35 = vld [vmem:[%s1 + $0x4] sm:$0xf]
  %v36 = vld [vmem:[%s1 + $0x8] sm:$0xf]
  %v37 = vld [vmem:[%s1 + $0xc] sm:$0xf]
  %v38 = vld [vmem:[%s1 + $0x10] sm:$0xf]
  %v39 = vld [vmem:[%s1 + $0x14] sm:$0xf]
  %v40 = vld [vmem:[%s1 + $0x18] sm:$0xf]
  %v41 = vld [vmem:[%s1 + $0x1c] sm:$0xf]
  %v42 = vld [vmem:[%s1 + $0x20] sm:$0xf]
  %v43 = vld [vmem:[%s1 + $0x24] sm:$0xf]
  %v44 = vld [vmem:[%s1 + $0x28] sm:$0xf]
  %v45 = vld [vmem:[%s1 + $0x2c] sm:$0xf]
  %v46 = vld [vmem:[%s1 + $0x30] sm:$0xf]
  %v47 = vld [vmem:[%s1 + $0x34] sm:$0xf]
  %v48 = vld [vmem:[%s1 + $0x38] sm:$0xf]
  %v49 = vld [vmem:[%s1 + $0x3c] sm:$0xf]
  %v50 = vld [vmem:[%s1 + $0x40] sm:$0xf]
  %v51 = vld [vmem:[%s1 + $0x44] sm:$0xf]
  %v52 = vld [vmem:[%s1 + $0x48] sm:$0xf]
  %v53 = vld [vmem:[%s1 + $0x4c] sm:$0xf]
  %v54 = vld [vmem:[%s1 + $0x50] sm:$0xf]
  %v55 = vld [vmem:[%s1 + $0x54] sm:$0xf]
  %v56 = vld [vmem:[%s1 + $0x58] sm:$0xf]
  %v57 = vld [vmem:[%s1 + $0x5c] sm:$0xf]
  %v58 = vld [vmem:[%s1 + $0x60] sm:$0xf]
  %v59 = vld [vmem:[%s1 + $0x64] sm:$0xf]
  %v60 = vld [vmem:[%s1 + $0x68] sm:$0xf]
  %v61 = vld [vmem:[%s1 + $0x6c] sm:$0xf]
  %v62 = vld [vmem:[%s1 + $0x70] sm:$0xf]
  %v63 = vld [vmem:[%s1 + $0x74] sm:$0xf]
  %v64 = vld [vmem:[%s1 + $0x78] sm:$0xf]
  %v65 = vld [vmem:[%s1 + $0x7c] sm:$0xf]
  %v70 = vunpack.c.l.b16 %v30
  %v71 = vunpack.c.h.b16 %v30
  %v72 = vunpack.c.l.b16 %v31
  %v73 = vunpack.c.h.b16 %v31
  %v74 = vunpack.c.l.b16 %v32
  %v75 = vunpack.c.h.b16 %v32
  %v76 = vunpack.c.l.b16 %v33
  %v77 = vunpack.c.h.b16 %v33
  %v78 = vpack.c.b16 %v72, %v70
  %v79 = vpack.c.b16 %v73, %v71
  %v80 = vpack.c.b16 %v76, %v74
  %v81 = vpack.c.b16 %v77, %v75
  %v118 = vunpack.c.l.b16 %v34
  %v119 = vunpack.c.l.b16 %v35
  %v120 = vunpack.c.l.b16 %v36
  %v121 = vunpack.c.l.b16 %v37
  %v122 = vunpack.c.l.b16 %v38
  %v123 = vunpack.c.l.b16 %v39
  %v124 = vunpack.c.l.b16 %v40
  %v125 = vunpack.c.l.b16 %v41
  %v126 = vunpack.c.l.b16 %v42
  %v127 = vunpack.c.l.b16 %v43
  %v128 = vunpack.c.l.b16 %v44
  %v129 = vunpack.c.l.b16 %v45
  %v130 = vunpack.c.l.b16 %v46
  %v131 = vunpack.c.l.b16 %v47
  %v132 = vunpack.c.l.b16 %v48
  %v133 = vunpack.c.l.b16 %v49
  %v134 = vunpack.c.l.b16 %v50
  %v135 = vunpack.c.l.b16 %v51
  %v136 = vunpack.c.l.b16 %v52
  %v137 = vunpack.c.l.b16 %v53
  %v138 = vunpack.c.l.b16 %v54
  %v139 = vunpack.c.l.b16 %v55
  %v140 = vunpack.c.l.b16 %v56
  %v141 = vunpack.c.l.b16 %v57
  %v142 = vunpack.c.l.b16 %v58
  %v143 = vunpack.c.l.b16 %v59
  %v144 = vunpack.c.l.b16 %v60
  %v145 = vunpack.c.l.b16 %v61
  %v146 = vunpack.c.l.b16 %v62
  %v147 = vunpack.c.l.b16 %v63
  %v148 = vunpack.c.l.b16 %v64
  %v149 = vunpack.c.l.b16 %v65
  %v150 = vpack.c.b16 %v119, %v118
  %v151 = vpack.c.b16 %v121, %v120
  %v152 = vpack.c.b16 %v123, %v122
  %v153 = vpack.c.b16 %v125, %v124
  %v154 = vpack.c.b16 %v127, %v126
  %v155 = vpack.c.b16 %v129, %v128
  %v156 = vpack.c.b16 %v131, %v130
  %v157 = vpack.c.b16 %v133, %v132
  %v158 = vpack.c.b16 %v135, %v134
  %v159 = vpack.c.b16 %v137, %v136
  %v160 = vpack.c.b16 %v139, %v138
  %v161 = vpack.c.b16 %v141, %v140
  %v162 = vpack.c.b16 %v143, %v142
  %v163 = vpack.c.b16 %v145, %v144
  %v164 = vpack.c.b16 %v147, %v146
  %v165 = vpack.c.b16 %v149, %v148
  %182 = vmatprep.subr.bf16.mxu0 0
  %183 = vmatpush1.bf16.msra.mxu0 %v150
  %184 = vmatprep.subr.bf16.mxu0 0
  %185 = vmatpush1.bf16.msra.mxu0 %v151
  %186 = vmatprep.subr.bf16.mxu0 0
  %187 = vmatpush1.bf16.msra.mxu0 %v152
  %188 = vmatprep.subr.bf16.mxu0 0
  %189 = vmatpush1.bf16.msra.mxu0 %v153
  %190 = vmatprep.subr.bf16.mxu0 0
  %191 = vmatpush1.bf16.msra.mxu0 %v154
  %192 = vmatprep.subr.bf16.mxu0 0
  %193 = vmatpush1.bf16.msra.mxu0 %v155
  %194 = vmatprep.subr.bf16.mxu0 0
  %195 = vmatpush1.bf16.msra.mxu0 %v156
  %196 = vmatprep.subr.bf16.mxu0 0
  %197 = vmatpush1.bf16.msra.mxu0 %v157
  %198 = vmatprep.subr.bf16.mxu0 0
  %199 = vmatpush1.bf16.msra.mxu0 %v158
  %200 = vmatprep.subr.bf16.mxu0 0
  %201 = vmatpush1.bf16.msra.mxu0 %v159
  %202 = vmatprep.subr.bf16.mxu0 0
  %203 = vmatpush1.bf16.msra.mxu0 %v160
  %204 = vmatprep.subr.bf16.mxu0 0
  %205 = vmatpush1.bf16.msra.mxu0 %v161
  %206 = vmatprep.subr.bf16.mxu0 0
  %207 = vmatpush1.bf16.msra.mxu0 %v162
  %208 = vmatprep.subr.bf16.mxu0 0
  %209 = vmatpush1.bf16.msra.mxu0 %v163
  %210 = vmatprep.subr.bf16.mxu0 0
  %211 = vmatpush1.bf16.msra.mxu0 %v164
  %212 = vmatprep.subr.bf16.mxu0 0
  %213 = vmatpush1.bf16.msra.mxu0 %v165
  %214 = vmatprep.mubr.bf16.mxu0 %v79
  %215 = vmatmul.mubr.bf16.gmra.mrb[0].mxu0 %v78
  %v216 = vpop.f32.mrb[0].mxu0
  %v217 = vadd.f32 0.0, %v216
  %v218 = vpop.f32.mrb[0].mxu0
  %v219 = vpop.f32.mrb[0].mxu0
  %v220 = vadd.f32 0.0, %v219
  %v221 = vpop.f32.mrb[0].mxu0
  %222 = vmatprep.mubr.bf16.mxu0 %v81
  %223 = vmatmul.mubr.bf16.gmra.mrb[0].mxu0 %v80
  %v224 = vpop.f32.mrb[0].mxu0
  %v225 = vadd.f32 0.0, %v224
  %v226 = vpop.f32.mrb[0].mxu0
  %v227 = vpop.f32.mrb[0].mxu0
  %v228 = vadd.f32 0.0, %v227
  %v229 = vpop.f32.mrb[0].mxu0
  %230 = vdwg.mxu0
  %v231 = vadd.f32 %v26, %v217
  %v232 = vadd.f32 %v27, %v220
  %v233 = vadd.f32 %v28, %v225
  %v234 = vadd.f32 %v29, %v228
  %235 = vst [vmem:[#allocation2] sm:$0xff] %v231
  %236 = vst [vmem:[#allocation2 + $0x8] sm:$0xff] %v232
  %237 = vst [vmem:[#allocation2 + $0x10] sm:$0xff] %v233
  %238 = vst [vmem:[#allocation2 + $0x18] sm:$0xff] %v234
  // Predicated region
  $region22: #{resnet34fc_forward.48} parent=0 // pred_check
    %p239 = pneg %p18
  $region23: #{resnet34fc_forward.48} parent=0 // pred_check_branch
    %241 = sbr.rel (%p239) target = $region25
  $region24: #{resnet34fc_forward.48} parent=0 // pred_region
    %v242 = vld [vmem:[#allocation2] sm:$0xff]
    %v243 = vld [vmem:[#allocation2 + $0x8] sm:$0xff]
    %v244 = vld [vmem:[#allocation2 + $0x10] sm:$0xff]
    %v245 = vld [vmem:[#allocation2 + $0x18] sm:$0xff]
    %v246 = vld [vmem:[%s2] sm:$0x1]
    %v248 = vlaneseq
    %v249 = vshrl.u32 %v248, 7
    %v250 = vsub.s32 0, %v249
    %v251 = vrot.slane %v246, %v250
    %v253 = vadd.f32 %v242, %v251
    %v254 = vadd.f32 %v243, %v251
    %v255 = vadd.f32 %v244, %v251
    %v256 = vadd.f32 %v245, %v251
    %v257 = vld [vmem:[%s3] sm:$0xf]
    %v258 = vld [vmem:[%s3 + $0x4] sm:$0xf]
    %v259 = vld [vmem:[%s3 + $0x8] sm:$0xf]
    %v260 = vld [vmem:[%s3 + $0xc] sm:$0xf]
    %v261 = vunpack.c.l.bf16 %v257
    %v262 = vunpack.c.l.bf16 %v258
    %v263 = vunpack.c.l.bf16 %v259
    %v264 = vunpack.c.l.bf16 %v260
    %v265 = vadd.f32 %v253, %v261
    %v266 = vadd.f32 %v254, %v262
    %v267 = vadd.f32 %v255, %v263
    %v268 = vadd.f32 %v256, %v264
    %v269 = vmax.f32 %v265, 0.0
    %v270 = vmax.f32 %v266, 0.0
    %v271 = vmax.f32 %v267, 0.0
    %v272 = vmax.f32 %v268, 0.0
    %v273 = vpack.c.bf16 %v270, %v269
    %v274 = vpack.c.bf16 %v272, %v271
    %v277 = vunpack.c.l.b16 %v273
    %v278 = vunpack.c.h.b16 %v273
    %v279 = vunpack.c.l.b16 %v274
    %v280 = vunpack.c.h.b16 %v274
    %v281 = vpack.c.b16 %v277, %v277
    %v282 = vpack.c.b16 %v278, %v278
    %v283 = vpack.c.b16 %v279, %v279
    %v284 = vpack.c.b16 %v280, %v280
    %289 = vst [vmem:[%s4] sm:$0xf] %v281
    %290 = vst [vmem:[%s4 + $0x4] sm:$0xf] %v282
    %291 = vst [vmem:[%s4 + $0x8] sm:$0xf] %v283
    %292 = vst [vmem:[%s4 + $0xc] sm:$0xf] %v284
  $region25: #{resnet34fc_forward.48} parent=0 // pred_fallthru
    _
  // Predicated region
  $region26: #{resnet34fc_forward.48} parent=0 // pred_check
    _
  $region27: #{resnet34fc_forward.48} parent=0 // pred_check_branch
    %294 = sbr.rel (0) target = $region29
  $region28: #{resnet34fc_forward.48} parent=0 // pred_region
    _
  $region29: #{resnet34fc_forward.48} parent=0 // pred_fallthru
    _
  // Predicated region
  $region30: #{resnet34fc_forward.48} parent=0 // pred_check
    _
  $region31: #{resnet34fc_forward.48} parent=0 // pred_check_branch
    %296 = sbr.rel (0) target = $region33
  $region32: #{resnet34fc_forward.48} parent=0 // pred_region
    _
  $region33: #{resnet34fc_forward.48} parent=0 // pred_fallthru
    _

// kernel: resnet34fc_forward.49
$region0: #{resnet34fc_forward.49}
  #allocation0 [shape = 'u32[]', space=smem, size = 0x4, offset = 0x4, fixed_abs, tag = 'smem constant byte address 0x4 - core index']
  #allocation1 [shape = 'u32[144,128]{1,0:T(1,128)}', space=vmem, size = 0x12000, scoped, tag = 'internal scratch']
  #allocation2 [shape = 'f32[32,128]{1,0:T(8,128)}', space=vmem, size = 0x4000, scoped, tag = 'scratch operand']
  %s0 = inlined_call_operand.vmem [shape: bf16[32,256], index: 0, kind: input, shape index: {}]
  %s1 = inlined_call_operand.vmem [shape: bf16[256,128], index: 1, kind: input, shape index: {}]
  %s2 = inlined_call_operand.vmem [shape: f32[1,128], index: 2, kind: input, shape index: {}]
  %s3 = inlined_call_operand.vmem [shape: bf16[32,128], index: 3, kind: output, shape index: {}]
  %s4 = sld [smem:[#allocation0]]
  $region30: #{resnet34fc_forward.49} parent=0
    _
  %s6 = ssub.s32 1, %s4
  %s7 = scalar_select 0, %s6, %s4
  // Predicated region
  $region2: #{resnet34fc_forward.49} parent=0 // pred_check
    _
  $region3: #{resnet34fc_forward.49} parent=0 // pred_check_branch
    %9 = sbr.rel (0) target = $region5
  $region4: #{resnet34fc_forward.49} parent=0 // pred_region
    _
  $region5: #{resnet34fc_forward.49} parent=0 // pred_fallthru
    _
  // Predicated region
  $region6: #{resnet34fc_forward.49} parent=0 // pred_check
    _
  $region7: #{resnet34fc_forward.49} parent=0 // pred_check_branch
    %11 = sbr.rel (0) target = $region9
  $region8: #{resnet34fc_forward.49} parent=0 // pred_region
    _
  $region9: #{resnet34fc_forward.49} parent=0 // pred_fallthru
    _
  // Predicated region
  $region10: #{resnet34fc_forward.49} parent=0 // pred_check
    _
  $region11: #{resnet34fc_forward.49} parent=0 // pred_check_branch
    %13 = sbr.rel (0) target = $region13
  $region12: #{resnet34fc_forward.49} parent=0 // pred_region
    _
  $region13: #{resnet34fc_forward.49} parent=0 // pred_fallthru
    _
  %p15 = scmp.eq.s32.totalorder 0, 0
  // Predicated region
  $region14: #{resnet34fc_forward.49} parent=0 // pred_check
    %p16 = pneg %p15
  $region15: #{resnet34fc_forward.49} parent=0 // pred_check_branch
    %18 = sbr.rel (%p16) target = $region17
  $region16: #{resnet34fc_forward.49} parent=0 // pred_region
    %19 = vst [vmem:[#allocation2] sm:$0xff] 0.0
    %20 = vst [vmem:[#allocation2 + $0x8] sm:$0xff] 0.0
    %21 = vst [vmem:[#allocation2 + $0x10] sm:$0xff] 0.0
    %22 = vst [vmem:[#allocation2 + $0x18] sm:$0xff] 0.0
  $region17: #{resnet34fc_forward.49} parent=0 // pred_fallthru
    _
  %v23 = vld [vmem:[#allocation2] sm:$0xff]
  %v24 = vld [vmem:[#allocation2 + $0x8] sm:$0xff]
  %v25 = vld [vmem:[#allocation2 + $0x10] sm:$0xff]
  %v26 = vld [vmem:[#allocation2 + $0x18] sm:$0xff]
  %v27 = vld [vmem:[%s0] sm:$0xff]
  %v28 = vld [vmem:[%s0 + $0x8] sm:$0xff]
  %v29 = vld [vmem:[%s0 + $0x10] sm:$0xff]
  %v30 = vld [vmem:[%s0 + $0x18] sm:$0xff]
  %v31 = vld [vmem:[%s1] sm:$0xf]
  %v32 = vld [vmem:[%s1 + $0x4] sm:$0xf]
  %v33 = vld [vmem:[%s1 + $0x8] sm:$0xf]
  %v34 = vld [vmem:[%s1 + $0xc] sm:$0xf]
  %v35 = vld [vmem:[%s1 + $0x10] sm:$0xf]
  %v36 = vld [vmem:[%s1 + $0x14] sm:$0xf]
  %v37 = vld [vmem:[%s1 + $0x18] sm:$0xf]
  %v38 = vld [vmem:[%s1 + $0x1c] sm:$0xf]
  %v39 = vld [vmem:[%s1 + $0x20] sm:$0xf]
  %v40 = vld [vmem:[%s1 + $0x24] sm:$0xf]
  %v41 = vld [vmem:[%s1 + $0x28] sm:$0xf]
  %v42 = vld [vmem:[%s1 + $0x2c] sm:$0xf]
  %v43 = vld [vmem:[%s1 + $0x30] sm:$0xf]
  %v44 = vld [vmem:[%s1 + $0x34] sm:$0xf]
  %v45 = vld [vmem:[%s1 + $0x38] sm:$0xf]
  %v46 = vld [vmem:[%s1 + $0x3c] sm:$0xf]
  %v47 = vld [vmem:[%s1 + $0x40] sm:$0xf]
  %v48 = vld [vmem:[%s1 + $0x44] sm:$0xf]
  %v49 = vld [vmem:[%s1 + $0x48] sm:$0xf]
  %v50 = vld [vmem:[%s1 + $0x4c] sm:$0xf]
  %v51 = vld [vmem:[%s1 + $0x50] sm:$0xf]
  %v52 = vld [vmem:[%s1 + $0x54] sm:$0xf]
  %v53 = vld [vmem:[%s1 + $0x58] sm:$0xf]
  %v54 = vld [vmem:[%s1 + $0x5c] sm:$0xf]
  %v55 = vld [vmem:[%s1 + $0x60] sm:$0xf]
  %v56 = vld [vmem:[%s1 + $0x64] sm:$0xf]
  %v57 = vld [vmem:[%s1 + $0x68] sm:$0xf]
  %v58 = vld [vmem:[%s1 + $0x6c] sm:$0xf]
  %v59 = vld [vmem:[%s1 + $0x70] sm:$0xf]
  %v60 = vld [vmem:[%s1 + $0x74] sm:$0xf]
  %v61 = vld [vmem:[%s1 + $0x78] sm:$0xf]
  %v62 = vld [vmem:[%s1 + $0x7c] sm:$0xf]
  %v67 = vunpack.c.l.b16 %v27
  %v68 = vunpack.c.h.b16 %v27
  %v69 = vunpack.c.l.b16 %v28
  %v70 = vunpack.c.h.b16 %v28
  %v71 = vunpack.c.l.b16 %v29
  %v72 = vunpack.c.h.b16 %v29
  %v73 = vunpack.c.l.b16 %v30
  %v74 = vunpack.c.h.b16 %v30
  %v75 = vpack.c.b16 %v69, %v67
  %v76 = vpack.c.b16 %v70, %v68
  %v77 = vpack.c.b16 %v73, %v71
  %v78 = vpack.c.b16 %v74, %v72
  %v115 = vunpack.c.l.b16 %v31
  %v116 = vunpack.c.l.b16 %v32
  %v117 = vunpack.c.l.b16 %v33
  %v118 = vunpack.c.l.b16 %v34
  %v119 = vunpack.c.l.b16 %v35
  %v120 = vunpack.c.l.b16 %v36
  %v121 = vunpack.c.l.b16 %v37
  %v122 = vunpack.c.l.b16 %v38
  %v123 = vunpack.c.l.b16 %v39
  %v124 = vunpack.c.l.b16 %v40
  %v125 = vunpack.c.l.b16 %v41
  %v126 = vunpack.c.l.b16 %v42
  %v127 = vunpack.c.l.b16 %v43
  %v128 = vunpack.c.l.b16 %v44
  %v129 = vunpack.c.l.b16 %v45
  %v130 = vunpack.c.l.b16 %v46
  %v131 = vunpack.c.l.b16 %v47
  %v132 = vunpack.c.l.b16 %v48
  %v133 = vunpack.c.l.b16 %v49
  %v134 = vunpack.c.l.b16 %v50
  %v135 = vunpack.c.l.b16 %v51
  %v136 = vunpack.c.l.b16 %v52
  %v137 = vunpack.c.l.b16 %v53
  %v138 = vunpack.c.l.b16 %v54
  %v139 = vunpack.c.l.b16 %v55
  %v140 = vunpack.c.l.b16 %v56
  %v141 = vunpack.c.l.b16 %v57
  %v142 = vunpack.c.l.b16 %v58
  %v143 = vunpack.c.l.b16 %v59
  %v144 = vunpack.c.l.b16 %v60
  %v145 = vunpack.c.l.b16 %v61
  %v146 = vunpack.c.l.b16 %v62
  %v147 = vpack.c.b16 %v116, %v115
  %v148 = vpack.c.b16 %v118, %v117
  %v149 = vpack.c.b16 %v120, %v119
  %v150 = vpack.c.b16 %v122, %v121
  %v151 = vpack.c.b16 %v124, %v123
  %v152 = vpack.c.b16 %v126, %v125
  %v153 = vpack.c.b16 %v128, %v127
  %v154 = vpack.c.b16 %v130, %v129
  %v155 = vpack.c.b16 %v132, %v131
  %v156 = vpack.c.b16 %v134, %v133
  %v157 = vpack.c.b16 %v136, %v135
  %v158 = vpack.c.b16 %v138, %v137
  %v159 = vpack.c.b16 %v140, %v139
  %v160 = vpack.c.b16 %v142, %v141
  %v161 = vpack.c.b16 %v144, %v143
  %v162 = vpack.c.b16 %v146, %v145
  %179 = vmatprep.subr.bf16.mxu0 0
  %180 = vmatpush1.bf16.msra.mxu0 %v147
  %181 = vmatprep.subr.bf16.mxu0 0
  %182 = vmatpush1.bf16.msra.mxu0 %v148
  %183 = vmatprep.subr.bf16.mxu0 0
  %184 = vmatpush1.bf16.msra.mxu0 %v149
  %185 = vmatprep.subr.bf16.mxu0 0
  %186 = vmatpush1.bf16.msra.mxu0 %v150
  %187 = vmatprep.subr.bf16.mxu0 0
  %188 = vmatpush1.bf16.msra.mxu0 %v151
  %189 = vmatprep.subr.bf16.mxu0 0
  %190 = vmatpush1.bf16.msra.mxu0 %v152
  %191 = vmatprep.subr.bf16.mxu0 0
  %192 = vmatpush1.bf16.msra.mxu0 %v153
  %193 = vmatprep.subr.bf16.mxu0 0
  %194 = vmatpush1.bf16.msra.mxu0 %v154
  %195 = vmatprep.subr.bf16.mxu0 0
  %196 = vmatpush1.bf16.msra.mxu0 %v155
  %197 = vmatprep.subr.bf16.mxu0 0
  %198 = vmatpush1.bf16.msra.mxu0 %v156
  %199 = vmatprep.subr.bf16.mxu0 0
  %200 = vmatpush1.bf16.msra.mxu0 %v157
  %201 = vmatprep.subr.bf16.mxu0 0
  %202 = vmatpush1.bf16.msra.mxu0 %v158
  %203 = vmatprep.subr.bf16.mxu0 0
  %204 = vmatpush1.bf16.msra.mxu0 %v159
  %205 = vmatprep.subr.bf16.mxu0 0
  %206 = vmatpush1.bf16.msra.mxu0 %v160
  %207 = vmatprep.subr.bf16.mxu0 0
  %208 = vmatpush1.bf16.msra.mxu0 %v161
  %209 = vmatprep.subr.bf16.mxu0 0
  %210 = vmatpush1.bf16.msra.mxu0 %v162
  %211 = vmatprep.mubr.bf16.mxu0 %v76
  %212 = vmatmul.mubr.bf16.gmra.mrb[0].mxu0 %v75
  %v213 = vpop.f32.mrb[0].mxu0
  %v214 = vadd.f32 0.0, %v213
  %v215 = vpop.f32.mrb[0].mxu0
  %v216 = vpop.f32.mrb[0].mxu0
  %v217 = vadd.f32 0.0, %v216
  %v218 = vpop.f32.mrb[0].mxu0
  %219 = vmatprep.mubr.bf16.mxu0 %v78
  %220 = vmatmul.mubr.bf16.gmra.mrb[0].mxu0 %v77
  %v221 = vpop.f32.mrb[0].mxu0
  %v222 = vadd.f32 0.0, %v221
  %v223 = vpop.f32.mrb[0].mxu0
  %v224 = vpop.f32.mrb[0].mxu0
  %v225 = vadd.f32 0.0, %v224
  %v226 = vpop.f32.mrb[0].mxu0
  %227 = vdwg.mxu0
  %v228 = vadd.f32 %v23, %v214
  %v229 = vadd.f32 %v24, %v217
  %v230 = vadd.f32 %v25, %v222
  %v231 = vadd.f32 %v26, %v225
  %232 = vst [vmem:[#allocation2] sm:$0xff] %v228
  %233 = vst [vmem:[#allocation2 + $0x8] sm:$0xff] %v229
  %234 = vst [vmem:[#allocation2 + $0x10] sm:$0xff] %v230
  %235 = vst [vmem:[#allocation2 + $0x18] sm:$0xff] %v231
  // Predicated region
  $region18: #{resnet34fc_forward.49} parent=0 // pred_check
    %p236 = pneg %p15
  $region19: #{resnet34fc_forward.49} parent=0 // pred_check_branch
    %238 = sbr.rel (%p236) target = $region21
  $region20: #{resnet34fc_forward.49} parent=0 // pred_region
    %v239 = vld [vmem:[#allocation2] sm:$0xff]
    %v240 = vld [vmem:[#allocation2 + $0x8] sm:$0xff]
    %v241 = vld [vmem:[#allocation2 + $0x10] sm:$0xff]
    %v242 = vld [vmem:[#allocation2 + $0x18] sm:$0xff]
    %v243 = vld [vmem:[%s2] sm:$0x1]
    %v245 = vlaneseq
    %v246 = vshrl.u32 %v245, 7
    %v247 = vsub.s32 0, %v246
    %v248 = vrot.slane %v243, %v247
    %v250 = vadd.f32 %v239, %v248
    %v251 = vadd.f32 %v240, %v248
    %v252 = vadd.f32 %v241, %v248
    %v253 = vadd.f32 %v242, %v248
    %v254 = vmax.f32 %v250, 0.0
    %v255 = vmax.f32 %v251, 0.0
    %v256 = vmax.f32 %v252, 0.0
    %v257 = vmax.f32 %v253, 0.0
    %v258 = vpack.c.bf16 %v255, %v254
    %v259 = vpack.c.bf16 %v257, %v256
    %v262 = vunpack.c.l.b16 %v258
    %v263 = vunpack.c.h.b16 %v258
    %v264 = vunpack.c.l.b16 %v259
    %v265 = vunpack.c.h.b16 %v259
    %v266 = vpack.c.b16 %v262, %v262
    %v267 = vpack.c.b16 %v263, %v263
    %v268 = vpack.c.b16 %v264, %v264
    %v269 = vpack.c.b16 %v265, %v265
    %274 = vst [vmem:[%s3] sm:$0xf] %v266
    %275 = vst [vmem:[%s3 + $0x4] sm:$0xf] %v267
    %276 = vst [vmem:[%s3 + $0x8] sm:$0xf] %v268
    %277 = vst [vmem:[%s3 + $0xc] sm:$0xf] %v269
  $region21: #{resnet34fc_forward.49} parent=0 // pred_fallthru
    _
  // Predicated region
  $region22: #{resnet34fc_forward.49} parent=0 // pred_check
    _
  $region23: #{resnet34fc_forward.49} parent=0 // pred_check_branch
    %279 = sbr.rel (0) target = $region25
  $region24: #{resnet34fc_forward.49} parent=0 // pred_region
    _
  $region25: #{resnet34fc_forward.49} parent=0 // pred_fallthru
    _
  // Predicated region
  $region26: #{resnet34fc_forward.49} parent=0 // pred_check
    _
  $region27: #{resnet34fc_forward.49} parent=0 // pred_check_branch
    %281 = sbr.rel (0) target = $region29
  $region28: #{resnet34fc_forward.49} parent=0 // pred_region
    _
  $region29: #{resnet34fc_forward.49} parent=0 // pred_fallthru
    _

// kernel: resnet34fc_forward.56
$region0: #{resnet34fc_forward.56}
  #allocation0 [shape = 'u32[]', space=smem, size = 0x4, offset = 0x4, fixed_abs, tag = 'smem constant byte address 0x4 - core index']
  #allocation1 [shape = 'u32[144,128]{1,0:T(1,128)}', space=vmem, size = 0x12000, scoped, tag = 'internal scratch']
  #allocation2 [shape = 'f32[8,128]{1,0:T(8,128)}', space=vmem, size = 0x1000, scoped, tag = 'scratch operand']
  %s0 = inlined_call_operand.vmem [shape: bf16[8,256], index: 0, kind: input, shape index: {}]
  %s1 = inlined_call_operand.vmem [shape: bf16[256,128], index: 1, kind: input, shape index: {}]
  %s2 = inlined_call_operand.vmem [shape: f32[1,128], index: 2, kind: input, shape index: {}]
  %s3 = inlined_call_operand.vmem [shape: bf16[8,128], index: 3, kind: output, shape index: {}]
  %s4 = sld [smem:[#allocation0]]
  $region30: #{resnet34fc_forward.56} parent=0
    _
  %s6 = ssub.s32 1, %s4
  %s7 = scalar_select 0, %s6, %s4
  // Predicated region
  $region2: #{resnet34fc_forward.56} parent=0 // pred_check
    _
  $region3: #{resnet34fc_forward.56} parent=0 // pred_check_branch
    %9 = sbr.rel (0) target = $region5
  $region4: #{resnet34fc_forward.56} parent=0 // pred_region
    _
  $region5: #{resnet34fc_forward.56} parent=0 // pred_fallthru
    _
  // Predicated region
  $region6: #{resnet34fc_forward.56} parent=0 // pred_check
    _
  $region7: #{resnet34fc_forward.56} parent=0 // pred_check_branch
    %11 = sbr.rel (0) target = $region9
  $region8: #{resnet34fc_forward.56} parent=0 // pred_region
    _
  $region9: #{resnet34fc_forward.56} parent=0 // pred_fallthru
    _
  // Predicated region
  $region10: #{resnet34fc_forward.56} parent=0 // pred_check
    _
  $region11: #{resnet34fc_forward.56} parent=0 // pred_check_branch
    %13 = sbr.rel (0) target = $region13
  $region12: #{resnet34fc_forward.56} parent=0 // pred_region
    _
  $region13: #{resnet34fc_forward.56} parent=0 // pred_fallthru
    _
  %p15 = scmp.eq.s32.totalorder 0, 0
  // Predicated region
  $region14: #{resnet34fc_forward.56} parent=0 // pred_check
    %p16 = pneg %p15
  $region15: #{resnet34fc_forward.56} parent=0 // pred_check_branch
    %18 = sbr.rel (%p16) target = $region17
  $region16: #{resnet34fc_forward.56} parent=0 // pred_region
    %19 = vst [vmem:[#allocation2] sm:$0xff] 0.0
  $region17: #{resnet34fc_forward.56} parent=0 // pred_fallthru
    _
  %v20 = vld [vmem:[#allocation2] sm:$0xff]
  %v21 = vld [vmem:[%s0] sm:$0xff]
  %v22 = vld [vmem:[%s1] sm:$0xf]
  %v23 = vld [vmem:[%s1 + $0x4] sm:$0xf]
  %v24 = vld [vmem:[%s1 + $0x8] sm:$0xf]
  %v25 = vld [vmem:[%s1 + $0xc] sm:$0xf]
  %v26 = vld [vmem:[%s1 + $0x10] sm:$0xf]
  %v27 = vld [vmem:[%s1 + $0x14] sm:$0xf]
  %v28 = vld [vmem:[%s1 + $0x18] sm:$0xf]
  %v29 = vld [vmem:[%s1 + $0x1c] sm:$0xf]
  %v30 = vld [vmem:[%s1 + $0x20] sm:$0xf]
  %v31 = vld [vmem:[%s1 + $0x24] sm:$0xf]
  %v32 = vld [vmem:[%s1 + $0x28] sm:$0xf]
  %v33 = vld [vmem:[%s1 + $0x2c] sm:$0xf]
  %v34 = vld [vmem:[%s1 + $0x30] sm:$0xf]
  %v35 = vld [vmem:[%s1 + $0x34] sm:$0xf]
  %v36 = vld [vmem:[%s1 + $0x38] sm:$0xf]
  %v37 = vld [vmem:[%s1 + $0x3c] sm:$0xf]
  %v38 = vld [vmem:[%s1 + $0x40] sm:$0xf]
  %v39 = vld [vmem:[%s1 + $0x44] sm:$0xf]
  %v40 = vld [vmem:[%s1 + $0x48] sm:$0xf]
  %v41 = vld [vmem:[%s1 + $0x4c] sm:$0xf]
  %v42 = vld [vmem:[%s1 + $0x50] sm:$0xf]
  %v43 = vld [vmem:[%s1 + $0x54] sm:$0xf]
  %v44 = vld [vmem:[%s1 + $0x58] sm:$0xf]
  %v45 = vld [vmem:[%s1 + $0x5c] sm:$0xf]
  %v46 = vld [vmem:[%s1 + $0x60] sm:$0xf]
  %v47 = vld [vmem:[%s1 + $0x64] sm:$0xf]
  %v48 = vld [vmem:[%s1 + $0x68] sm:$0xf]
  %v49 = vld [vmem:[%s1 + $0x6c] sm:$0xf]
  %v50 = vld [vmem:[%s1 + $0x70] sm:$0xf]
  %v51 = vld [vmem:[%s1 + $0x74] sm:$0xf]
  %v52 = vld [vmem:[%s1 + $0x78] sm:$0xf]
  %v53 = vld [vmem:[%s1 + $0x7c] sm:$0xf]
  %v55 = vunpack.c.l.b16 %v21
  %v56 = vunpack.c.h.b16 %v21
  %v57 = vpack.c.b16 %v55, %v55
  %v58 = vpack.c.b16 %v56, %v56
  %v93 = vunpack.c.l.b16 %v22
  %v94 = vunpack.c.l.b16 %v23
  %v95 = vunpack.c.l.b16 %v24
  %v96 = vunpack.c.l.b16 %v25
  %v97 = vunpack.c.l.b16 %v26
  %v98 = vunpack.c.l.b16 %v27
  %v99 = vunpack.c.l.b16 %v28
  %v100 = vunpack.c.l.b16 %v29
  %v101 = vunpack.c.l.b16 %v30
  %v102 = vunpack.c.l.b16 %v31
  %v103 = vunpack.c.l.b16 %v32
  %v104 = vunpack.c.l.b16 %v33
  %v105 = vunpack.c.l.b16 %v34
  %v106 = vunpack.c.l.b16 %v35
  %v107 = vunpack.c.l.b16 %v36
  %v108 = vunpack.c.l.b16 %v37
  %v109 = vunpack.c.l.b16 %v38
  %v110 = vunpack.c.l.b16 %v39
  %v111 = vunpack.c.l.b16 %v40
  %v112 = vunpack.c.l.b16 %v41
  %v113 = vunpack.c.l.b16 %v42
  %v114 = vunpack.c.l.b16 %v43
  %v115 = vunpack.c.l.b16 %v44
  %v116 = vunpack.c.l.b16 %v45
  %v117 = vunpack.c.l.b16 %v46
  %v118 = vunpack.c.l.b16 %v47
  %v119 = vunpack.c.l.b16 %v48
  %v120 = vunpack.c.l.b16 %v49
  %v121 = vunpack.c.l.b16 %v50
  %v122 = vunpack.c.l.b16 %v51
  %v123 = vunpack.c.l.b16 %v52
  %v124 = vunpack.c.l.b16 %v53
  %v125 = vpack.c.b16 %v94, %v93
  %v126 = vpack.c.b16 %v96, %v95
  %v127 = vpack.c.b16 %v98, %v97
  %v128 = vpack.c.b16 %v100, %v99
  %v129 = vpack.c.b16 %v102, %v101
  %v130 = vpack.c.b16 %v104, %v103
  %v131 = vpack.c.b16 %v106, %v105
  %v132 = vpack.c.b16 %v108, %v107
  %v133 = vpack.c.b16 %v110, %v109
  %v134 = vpack.c.b16 %v112, %v111
  %v135 = vpack.c.b16 %v114, %v113
  %v136 = vpack.c.b16 %v116, %v115
  %v137 = vpack.c.b16 %v118, %v117
  %v138 = vpack.c.b16 %v120, %v119
  %v139 = vpack.c.b16 %v122, %v121
  %v140 = vpack.c.b16 %v124, %v123
  %157 = vmatprep.subr.bf16.mxu0 0
  %158 = vmatpush1.bf16.msra.mxu0 %v125
  %159 = vmatprep.subr.bf16.mxu0 0
  %160 = vmatpush1.bf16.msra.mxu0 %v126
  %161 = vmatprep.subr.bf16.mxu0 0
  %162 = vmatpush1.bf16.msra.mxu0 %v127
  %163 = vmatprep.subr.bf16.mxu0 0
  %164 = vmatpush1.bf16.msra.mxu0 %v128
  %165 = vmatprep.subr.bf16.mxu0 0
  %166 = vmatpush1.bf16.msra.mxu0 %v129
  %167 = vmatprep.subr.bf16.mxu0 0
  %168 = vmatpush1.bf16.msra.mxu0 %v130
  %169 = vmatprep.subr.bf16.mxu0 0
  %170 = vmatpush1.bf16.msra.mxu0 %v131
  %171 = vmatprep.subr.bf16.mxu0 0
  %172 = vmatpush1.bf16.msra.mxu0 %v132
  %173 = vmatprep.subr.bf16.mxu0 0
  %174 = vmatpush1.bf16.msra.mxu0 %v133
  %175 = vmatprep.subr.bf16.mxu0 0
  %176 = vmatpush1.bf16.msra.mxu0 %v134
  %177 = vmatprep.subr.bf16.mxu0 0
  %178 = vmatpush1.bf16.msra.mxu0 %v135
  %179 = vmatprep.subr.bf16.mxu0 0
  %180 = vmatpush1.bf16.msra.mxu0 %v136
  %181 = vmatprep.subr.bf16.mxu0 0
  %182 = vmatpush1.bf16.msra.mxu0 %v137
  %183 = vmatprep.subr.bf16.mxu0 0
  %184 = vmatpush1.bf16.msra.mxu0 %v138
  %185 = vmatprep.subr.bf16.mxu0 0
  %186 = vmatpush1.bf16.msra.mxu0 %v139
  %187 = vmatprep.subr.bf16.mxu0 0
  %188 = vmatpush1.bf16.msra.mxu0 %v140
  %189 = vmatprep.mubr.bf16.mxu0 %v58
  %190 = vmatmul.mubr.bf16.gmra.mrb[0].mxu0 %v57
  %v191 = vpop.f32.mrb[0].mxu0
  %v192 = vadd.f32 0.0, %v191
  %v193 = vpop.f32.mrb[0].mxu0
  %v194 = vpop.f32.mrb[0].mxu0
  %v195 = vpop.f32.mrb[0].mxu0
  %196 = vdwg.mxu0
  %v197 = vadd.f32 %v20, %v192
  %198 = vst [vmem:[#allocation2] sm:$0xff] %v197
  // Predicated region
  $region18: #{resnet34fc_forward.56} parent=0 // pred_check
    %p199 = pneg %p15
  $region19: #{resnet34fc_forward.56} parent=0 // pred_check_branch
    %201 = sbr.rel (%p199) target = $region21
  $region20: #{resnet34fc_forward.56} parent=0 // pred_region
    %v202 = vld [vmem:[#allocation2] sm:$0xff]
    %v203 = vld [vmem:[%s2] sm:$0x1]
    %v205 = vlaneseq
    %v206 = vshrl.u32 %v205, 7
    %v207 = vsub.s32 0, %v206
    %v208 = vrot.slane %v203, %v207
    %v210 = vadd.f32 %v202, %v208
    %v211 = vmax.f32 %v210, 0.0
    %v212 = vpack.c.bf16 %v211, %v211
    %213 = vst [vmem:[%s3] sm:$0xf] %v212
  $region21: #{resnet34fc_forward.56} parent=0 // pred_fallthru
    _
  // Predicated region
  $region22: #{resnet34fc_forward.56} parent=0 // pred_check
    _
  $region23: #{resnet34fc_forward.56} parent=0 // pred_check_branch
    %215 = sbr.rel (0) target = $region25
  $region24: #{resnet34fc_forward.56} parent=0 // pred_region
    _
  $region25: #{resnet34fc_forward.56} parent=0 // pred_fallthru
    _
  // Predicated region
  $region26: #{resnet34fc_forward.56} parent=0 // pred_check
    _
  $region27: #{resnet34fc_forward.56} parent=0 // pred_check_branch
    %217 = sbr.rel (0) target = $region29
  $region28: #{resnet34fc_forward.56} parent=0 // pred_region
    _
  $region29: #{resnet34fc_forward.56} parent=0 // pred_fallthru
    _

// kernel: resnet34fc_forward.55
$region0: #{resnet34fc_forward.55}
  #allocation0 [shape = 'u32[]', space=smem, size = 0x4, offset = 0x4, fixed_abs, tag = 'smem constant byte address 0x4 - core index']
  #allocation1 [shape = 'u32[144,128]{1,0:T(1,128)}', space=vmem, size = 0x12000, scoped, tag = 'internal scratch']
  #allocation2 [shape = 'f32[8,128]{1,0:T(8,128)}', space=vmem, size = 0x1000, scoped, tag = 'scratch operand']
  %s0 = inlined_call_operand.vmem [shape: bf16[8,128], index: 0, kind: input, shape index: {}]
  %s1 = inlined_call_operand.vmem [shape: bf16[128,128], index: 1, kind: input, shape index: {}]
  %s2 = inlined_call_operand.vmem [shape: f32[1,128], index: 2, kind: input, shape index: {}]
  %s3 = inlined_call_operand.vmem [shape: bf16[8,128], index: 3, kind: output, shape index: {}]
  %s4 = sld [smem:[#allocation0]]
  $region30: #{resnet34fc_forward.55} parent=0
    _
  %s6 = ssub.s32 1, %s4
  %s7 = scalar_select 0, %s6, %s4
  // Predicated region
  $region2: #{resnet34fc_forward.55} parent=0 // pred_check
    _
  $region3: #{resnet34fc_forward.55} parent=0 // pred_check_branch
    %9 = sbr.rel (0) target = $region5
  $region4: #{resnet34fc_forward.55} parent=0 // pred_region
    _
  $region5: #{resnet34fc_forward.55} parent=0 // pred_fallthru
    _
  // Predicated region
  $region6: #{resnet34fc_forward.55} parent=0 // pred_check
    _
  $region7: #{resnet34fc_forward.55} parent=0 // pred_check_branch
    %11 = sbr.rel (0) target = $region9
  $region8: #{resnet34fc_forward.55} parent=0 // pred_region
    _
  $region9: #{resnet34fc_forward.55} parent=0 // pred_fallthru
    _
  // Predicated region
  $region10: #{resnet34fc_forward.55} parent=0 // pred_check
    _
  $region11: #{resnet34fc_forward.55} parent=0 // pred_check_branch
    %13 = sbr.rel (0) target = $region13
  $region12: #{resnet34fc_forward.55} parent=0 // pred_region
    _
  $region13: #{resnet34fc_forward.55} parent=0 // pred_fallthru
    _
  %p15 = scmp.eq.s32.totalorder 0, 0
  // Predicated region
  $region14: #{resnet34fc_forward.55} parent=0 // pred_check
    %p16 = pneg %p15
  $region15: #{resnet34fc_forward.55} parent=0 // pred_check_branch
    %18 = sbr.rel (%p16) target = $region17
  $region16: #{resnet34fc_forward.55} parent=0 // pred_region
    %19 = vst [vmem:[#allocation2] sm:$0xff] 0.0
  $region17: #{resnet34fc_forward.55} parent=0 // pred_fallthru
    _
  %v20 = vld [vmem:[#allocation2] sm:$0xff]
  %v21 = vld [vmem:[%s0] sm:$0xf]
  %v22 = vld [vmem:[%s1] sm:$0xf]
  %v23 = vld [vmem:[%s1 + $0x4] sm:$0xf]
  %v24 = vld [vmem:[%s1 + $0x8] sm:$0xf]
  %v25 = vld [vmem:[%s1 + $0xc] sm:$0xf]
  %v26 = vld [vmem:[%s1 + $0x10] sm:$0xf]
  %v27 = vld [vmem:[%s1 + $0x14] sm:$0xf]
  %v28 = vld [vmem:[%s1 + $0x18] sm:$0xf]
  %v29 = vld [vmem:[%s1 + $0x1c] sm:$0xf]
  %v30 = vld [vmem:[%s1 + $0x20] sm:$0xf]
  %v31 = vld [vmem:[%s1 + $0x24] sm:$0xf]
  %v32 = vld [vmem:[%s1 + $0x28] sm:$0xf]
  %v33 = vld [vmem:[%s1 + $0x2c] sm:$0xf]
  %v34 = vld [vmem:[%s1 + $0x30] sm:$0xf]
  %v35 = vld [vmem:[%s1 + $0x34] sm:$0xf]
  %v36 = vld [vmem:[%s1 + $0x38] sm:$0xf]
  %v37 = vld [vmem:[%s1 + $0x3c] sm:$0xf]
  %v54 = vunpack.c.l.b16 %v22
  %v55 = vunpack.c.l.b16 %v23
  %v56 = vunpack.c.l.b16 %v24
  %v57 = vunpack.c.l.b16 %v25
  %v58 = vunpack.c.l.b16 %v26
  %v59 = vunpack.c.l.b16 %v27
  %v60 = vunpack.c.l.b16 %v28
  %v61 = vunpack.c.l.b16 %v29
  %v62 = vunpack.c.l.b16 %v30
  %v63 = vunpack.c.l.b16 %v31
  %v64 = vunpack.c.l.b16 %v32
  %v65 = vunpack.c.l.b16 %v33
  %v66 = vunpack.c.l.b16 %v34
  %v67 = vunpack.c.l.b16 %v35
  %v68 = vunpack.c.l.b16 %v36
  %v69 = vunpack.c.l.b16 %v37
  %v70 = vpack.c.b16 %v55, %v54
  %v71 = vpack.c.b16 %v57, %v56
  %v72 = vpack.c.b16 %v59, %v58
  %v73 = vpack.c.b16 %v61, %v60
  %v74 = vpack.c.b16 %v63, %v62
  %v75 = vpack.c.b16 %v65, %v64
  %v76 = vpack.c.b16 %v67, %v66
  %v77 = vpack.c.b16 %v69, %v68
  %86 = vmatprep.subr.bf16.mxu0 0
  %87 = vmatpush1.bf16.msra.mxu0 %v70
  %88 = vmatprep.subr.bf16.mxu0 0
  %89 = vmatpush1.bf16.msra.mxu0 %v71
  %90 = vmatprep.subr.bf16.mxu0 0
  %91 = vmatpush1.bf16.msra.mxu0 %v72
  %92 = vmatprep.subr.bf16.mxu0 0
  %93 = vmatpush1.bf16.msra.mxu0 %v73
  %94 = vmatprep.subr.bf16.mxu0 0
  %95 = vmatpush1.bf16.msra.mxu0 %v74
  %96 = vmatprep.subr.bf16.mxu0 0
  %97 = vmatpush1.bf16.msra.mxu0 %v75
  %98 = vmatprep.subr.bf16.mxu0 0
  %99 = vmatpush1.bf16.msra.mxu0 %v76
  %100 = vmatprep.subr.bf16.mxu0 0
  %101 = vmatpush1.bf16.msra.mxu0 %v77
  %102 = vmatprep.subr.bf16.mxu0 0
  %103 = vmatpush1.bf16.msra.mxu0 0
  %104 = vmatprep.subr.bf16.mxu0 0
  %105 = vmatpush1.bf16.msra.mxu0 0
  %106 = vmatprep.subr.bf16.mxu0 0
  %107 = vmatpush1.bf16.msra.mxu0 0
  %108 = vmatprep.subr.bf16.mxu0 0
  %109 = vmatpush1.bf16.msra.mxu0 0
  %110 = vmatprep.subr.bf16.mxu0 0
  %111 = vmatpush1.bf16.msra.mxu0 0
  %112 = vmatprep.subr.bf16.mxu0 0
  %113 = vmatpush1.bf16.msra.mxu0 0
  %114 = vmatprep.subr.bf16.mxu0 0
  %115 = vmatpush1.bf16.msra.mxu0 0
  %116 = vmatprep.subr.bf16.mxu0 0
  %117 = vmatpush1.bf16.msra.mxu0 0
  %118 = vmatprep.mubr.bf16.mxu0 0
  %119 = vmatmul.mubr.bf16.gmra.mrb[0].mxu0 %v21
  %v120 = vpop.f32.mrb[0].mxu0
  %v121 = vadd.f32 0.0, %v120
  %v122 = vpop.f32.mrb[0].mxu0
  %v123 = vpop.f32.mrb[0].mxu0
  %v124 = vpop.f32.mrb[0].mxu0
  %125 = vdwg.mxu0
  %v126 = vadd.f32 %v20, %v121
  %127 = vst [vmem:[#allocation2] sm:$0xff] %v126
  // Predicated region
  $region18: #{resnet34fc_forward.55} parent=0 // pred_check
    %p128 = pneg %p15
  $region19: #{resnet34fc_forward.55} parent=0 // pred_check_branch
    %130 = sbr.rel (%p128) target = $region21
  $region20: #{resnet34fc_forward.55} parent=0 // pred_region
    %v131 = vld [vmem:[#allocation2] sm:$0xff]
    %v132 = vld [vmem:[%s2] sm:$0x1]
    %v134 = vlaneseq
    %v135 = vshrl.u32 %v134, 7
    %v136 = vsub.s32 0, %v135
    %v137 = vrot.slane %v132, %v136
    %v139 = vadd.f32 %v131, %v137
    %v140 = vpack.c.bf16 %v139, %v139
    %141 = vst [vmem:[%s3] sm:$0xf] %v140
  $region21: #{resnet34fc_forward.55} parent=0 // pred_fallthru
    _
  // Predicated region
  $region22: #{resnet34fc_forward.55} parent=0 // pred_check
    _
  $region23: #{resnet34fc_forward.55} parent=0 // pred_check_branch
    %143 = sbr.rel (0) target = $region25
  $region24: #{resnet34fc_forward.55} parent=0 // pred_region
    _
  $region25: #{resnet34fc_forward.55} parent=0 // pred_fallthru
    _
  // Predicated region
  $region26: #{resnet34fc_forward.55} parent=0 // pred_check
    _
  $region27: #{resnet34fc_forward.55} parent=0 // pred_check_branch
    %145 = sbr.rel (0) target = $region29
  $region28: #{resnet34fc_forward.55} parent=0 // pred_region
    _
  $region29: #{resnet34fc_forward.55} parent=0 // pred_fallthru
    _

// kernel: resnet34fc_forward.57
$region0: #{resnet34fc_forward.57}
  #allocation0 [shape = 'u32[]', space=smem, size = 0x4, offset = 0x4, fixed_abs, tag = 'smem constant byte address 0x4 - core index']
  #allocation1 [shape = 'u32[144,128]{1,0:T(1,128)}', space=vmem, size = 0x12000, scoped, tag = 'internal scratch']
  #allocation2 [shape = 'f32[8,128]{1,0:T(8,128)}', space=vmem, size = 0x1000, scoped, tag = 'scratch operand']
  %s0 = inlined_call_operand.vmem [shape: bf16[8,384], index: 0, kind: input, shape index: {}]
  %s1 = inlined_call_operand.vmem [shape: bf16[384,128], index: 1, kind: input, shape index: {}]
  %s2 = inlined_call_operand.vmem [shape: f32[1,128], index: 2, kind: input, shape index: {}]
  %s3 = inlined_call_operand.vmem [shape: bf16[8,128], index: 3, kind: input, shape index: {}]
  %s4 = inlined_call_operand.vmem [shape: bf16[8,128], index: 4, kind: output, shape index: {}]
  %s5 = sld [smem:[#allocation0]]
  $region34: #{resnet34fc_forward.57} parent=0
    _
  %s7 = ssub.s32 1, %s5
  %s8 = scalar_select 0, %s7, %s5
  // Predicated region
  $region2: #{resnet34fc_forward.57} parent=0 // pred_check
    _
  $region3: #{resnet34fc_forward.57} parent=0 // pred_check_branch
    %10 = sbr.rel (0) target = $region5
  $region4: #{resnet34fc_forward.57} parent=0 // pred_region
    _
  $region5: #{resnet34fc_forward.57} parent=0 // pred_fallthru
    _
  // Predicated region
  $region6: #{resnet34fc_forward.57} parent=0 // pred_check
    _
  $region7: #{resnet34fc_forward.57} parent=0 // pred_check_branch
    %12 = sbr.rel (0) target = $region9
  $region8: #{resnet34fc_forward.57} parent=0 // pred_region
    _
  $region9: #{resnet34fc_forward.57} parent=0 // pred_fallthru
    _
  // Predicated region
  $region10: #{resnet34fc_forward.57} parent=0 // pred_check
    _
  $region11: #{resnet34fc_forward.57} parent=0 // pred_check_branch
    %14 = sbr.rel (0) target = $region13
  $region12: #{resnet34fc_forward.57} parent=0 // pred_region
    _
  $region13: #{resnet34fc_forward.57} parent=0 // pred_fallthru
    _
  // Predicated region
  $region14: #{resnet34fc_forward.57} parent=0 // pred_check
    _
  $region15: #{resnet34fc_forward.57} parent=0 // pred_check_branch
    %16 = sbr.rel (0) target = $region17
  $region16: #{resnet34fc_forward.57} parent=0 // pred_region
    _
  $region17: #{resnet34fc_forward.57} parent=0 // pred_fallthru
    _
  %p18 = scmp.eq.s32.totalorder 0, 0
  // Predicated region
  $region18: #{resnet34fc_forward.57} parent=0 // pred_check
    %p19 = pneg %p18
  $region19: #{resnet34fc_forward.57} parent=0 // pred_check_branch
    %21 = sbr.rel (%p19) target = $region21
  $region20: #{resnet34fc_forward.57} parent=0 // pred_region
    %22 = vst [vmem:[#allocation2] sm:$0xff] 0.0
  $region21: #{resnet34fc_forward.57} parent=0 // pred_fallthru
    _
  %v23 = vld [vmem:[#allocation2] sm:$0xff]
  %v24 = vld [vmem:[%s0] sm:$0xff]
  %v25 = vld [vmem:[%s0 + $0x8] sm:$0xf]
  %v26 = vld [vmem:[%s1] sm:$0xf]
  %v27 = vld [vmem:[%s1 + $0x4] sm:$0xf]
  %v28 = vld [vmem:[%s1 + $0x8] sm:$0xf]
  %v29 = vld [vmem:[%s1 + $0xc] sm:$0xf]
  %v30 = vld [vmem:[%s1 + $0x10] sm:$0xf]
  %v31 = vld [vmem:[%s1 + $0x14] sm:$0xf]
  %v32 = vld [vmem:[%s1 + $0x18] sm:$0xf]
  %v33 = vld [vmem:[%s1 + $0x1c] sm:$0xf]
  %v34 = vld [vmem:[%s1 + $0x20] sm:$0xf]
  %v35 = vld [vmem:[%s1 + $0x24] sm:$0xf]
  %v36 = vld [vmem:[%s1 + $0x28] sm:$0xf]
  %v37 = vld [vmem:[%s1 + $0x2c] sm:$0xf]
  %v38 = vld [vmem:[%s1 + $0x30] sm:$0xf]
  %v39 = vld [vmem:[%s1 + $0x34] sm:$0xf]
  %v40 = vld [vmem:[%s1 + $0x38] sm:$0xf]
  %v41 = vld [vmem:[%s1 + $0x3c] sm:$0xf]
  %v42 = vld [vmem:[%s1 + $0x40] sm:$0xf]
  %v43 = vld [vmem:[%s1 + $0x44] sm:$0xf]
  %v44 = vld [vmem:[%s1 + $0x48] sm:$0xf]
  %v45 = vld [vmem:[%s1 + $0x4c] sm:$0xf]
  %v46 = vld [vmem:[%s1 + $0x50] sm:$0xf]
  %v47 = vld [vmem:[%s1 + $0x54] sm:$0xf]
  %v48 = vld [vmem:[%s1 + $0x58] sm:$0xf]
  %v49 = vld [vmem:[%s1 + $0x5c] sm:$0xf]
  %v50 = vld [vmem:[%s1 + $0x60] sm:$0xf]
  %v51 = vld [vmem:[%s1 + $0x64] sm:$0xf]
  %v52 = vld [vmem:[%s1 + $0x68] sm:$0xf]
  %v53 = vld [vmem:[%s1 + $0x6c] sm:$0xf]
  %v54 = vld [vmem:[%s1 + $0x70] sm:$0xf]
  %v55 = vld [vmem:[%s1 + $0x74] sm:$0xf]
  %v56 = vld [vmem:[%s1 + $0x78] sm:$0xf]
  %v57 = vld [vmem:[%s1 + $0x7c] sm:$0xf]
  %v58 = vld [vmem:[%s1 + $0x80] sm:$0xf]
  %v59 = vld [vmem:[%s1 + $0x84] sm:$0xf]
  %v60 = vld [vmem:[%s1 + $0x88] sm:$0xf]
  %v61 = vld [vmem:[%s1 + $0x8c] sm:$0xf]
  %v62 = vld [vmem:[%s1 + $0x90] sm:$0xf]
  %v63 = vld [vmem:[%s1 + $0x94] sm:$0xf]
  %v64 = vld [vmem:[%s1 + $0x98] sm:$0xf]
  %v65 = vld [vmem:[%s1 + $0x9c] sm:$0xf]
  %v66 = vld [vmem:[%s1 + $0xa0] sm:$0xf]
  %v67 = vld [vmem:[%s1 + $0xa4] sm:$0xf]
  %v68 = vld [vmem:[%s1 + $0xa8] sm:$0xf]
  %v69 = vld [vmem:[%s1 + $0xac] sm:$0xf]
  %v70 = vld [vmem:[%s1 + $0xb0] sm:$0xf]
  %v71 = vld [vmem:[%s1 + $0xb4] sm:$0xf]
  %v72 = vld [vmem:[%s1 + $0xb8] sm:$0xf]
  %v73 = vld [vmem:[%s1 + $0xbc] sm:$0xf]
  %v76 = vunpack.c.l.b16 %v24
  %v77 = vunpack.c.h.b16 %v24
  %v78 = vunpack.c.l.b16 %v25
  %v79 = vpack.c.b16 %v76, %v76
  %v80 = vpack.c.b16 %v77, %v77
  %v81 = vpack.c.b16 %v78, %v78
  %v133 = vunpack.c.l.b16 %v26
  %v134 = vunpack.c.l.b16 %v27
  %v135 = vunpack.c.l.b16 %v28
  %v136 = vunpack.c.l.b16 %v29
  %v137 = vunpack.c.l.b16 %v30
  %v138 = vunpack.c.l.b16 %v31
  %v139 = vunpack.c.l.b16 %v32
  %v140 = vunpack.c.l.b16 %v33
  %v141 = vunpack.c.l.b16 %v34
  %v142 = vunpack.c.l.b16 %v35
  %v143 = vunpack.c.l.b16 %v36
  %v144 = vunpack.c.l.b16 %v37
  %v145 = vunpack.c.l.b16 %v38
  %v146 = vunpack.c.l.b16 %v39
  %v147 = vunpack.c.l.b16 %v40
  %v148 = vunpack.c.l.b16 %v41
  %v149 = vunpack.c.l.b16 %v42
  %v150 = vunpack.c.l.b16 %v43
  %v151 = vunpack.c.l.b16 %v44
  %v152 = vunpack.c.l.b16 %v45
  %v153 = vunpack.c.l.b16 %v46
  %v154 = vunpack.c.l.b16 %v47
  %v155 = vunpack.c.l.b16 %v48
  %v156 = vunpack.c.l.b16 %v49
  %v157 = vunpack.c.l.b16 %v50
  %v158 = vunpack.c.l.b16 %v51
  %v159 = vunpack.c.l.b16 %v52
  %v160 = vunpack.c.l.b16 %v53
  %v161 = vunpack.c.l.b16 %v54
  %v162 = vunpack.c.l.b16 %v55
  %v163 = vunpack.c.l.b16 %v56
  %v164 = vunpack.c.l.b16 %v57
  %v165 = vunpack.c.l.b16 %v58
  %v166 = vunpack.c.l.b16 %v59
  %v167 = vunpack.c.l.b16 %v60
  %v168 = vunpack.c.l.b16 %v61
  %v169 = vunpack.c.l.b16 %v62
  %v170 = vunpack.c.l.b16 %v63
  %v171 = vunpack.c.l.b16 %v64
  %v172 = vunpack.c.l.b16 %v65
  %v173 = vunpack.c.l.b16 %v66
  %v174 = vunpack.c.l.b16 %v67
  %v175 = vunpack.c.l.b16 %v68
  %v176 = vunpack.c.l.b16 %v69
  %v177 = vunpack.c.l.b16 %v70
  %v178 = vunpack.c.l.b16 %v71
  %v179 = vunpack.c.l.b16 %v72
  %v180 = vunpack.c.l.b16 %v73
  %v181 = vpack.c.b16 %v134, %v133
  %v182 = vpack.c.b16 %v136, %v135
  %v183 = vpack.c.b16 %v138, %v137
  %v184 = vpack.c.b16 %v140, %v139
  %v185 = vpack.c.b16 %v142, %v141
  %v186 = vpack.c.b16 %v144, %v143
  %v187 = vpack.c.b16 %v146, %v145
  %v188 = vpack.c.b16 %v148, %v147
  %v189 = vpack.c.b16 %v150, %v149
  %v190 = vpack.c.b16 %v152, %v151
  %v191 = vpack.c.b16 %v154, %v153
  %v192 = vpack.c.b16 %v156, %v155
  %v193 = vpack.c.b16 %v158, %v157
  %v194 = vpack.c.b16 %v160, %v159
  %v195 = vpack.c.b16 %v162, %v161
  %v196 = vpack.c.b16 %v164, %v163
  %v197 = vpack.c.b16 %v166, %v165
  %v198 = vpack.c.b16 %v168, %v167
  %v199 = vpack.c.b16 %v170, %v169
  %v200 = vpack.c.b16 %v172, %v171
  %v201 = vpack.c.b16 %v174, %v173
  %v202 = vpack.c.b16 %v176, %v175
  %v203 = vpack.c.b16 %v178, %v177
  %v204 = vpack.c.b16 %v180, %v179
  %229 = vmatprep.subr.bf16.mxu0 0
  %230 = vmatpush1.bf16.msra.mxu0 %v181
  %231 = vmatprep.subr.bf16.mxu0 0
  %232 = vmatpush1.bf16.msra.mxu0 %v182
  %233 = vmatprep.subr.bf16.mxu0 0
  %234 = vmatpush1.bf16.msra.mxu0 %v183
  %235 = vmatprep.subr.bf16.mxu0 0
  %236 = vmatpush1.bf16.msra.mxu0 %v184
  %237 = vmatprep.subr.bf16.mxu0 0
  %238 = vmatpush1.bf16.msra.mxu0 %v185
  %239 = vmatprep.subr.bf16.mxu0 0
  %240 = vmatpush1.bf16.msra.mxu0 %v186
  %241 = vmatprep.subr.bf16.mxu0 0
  %242 = vmatpush1.bf16.msra.mxu0 %v187
  %243 = vmatprep.subr.bf16.mxu0 0
  %244 = vmatpush1.bf16.msra.mxu0 %v188
  %245 = vmatprep.subr.bf16.mxu0 0
  %246 = vmatpush1.bf16.msra.mxu0 %v189
  %247 = vmatprep.subr.bf16.mxu0 0
  %248 = vmatpush1.bf16.msra.mxu0 %v190
  %249 = vmatprep.subr.bf16.mxu0 0
  %250 = vmatpush1.bf16.msra.mxu0 %v191
  %251 = vmatprep.subr.bf16.mxu0 0
  %252 = vmatpush1.bf16.msra.mxu0 %v192
  %253 = vmatprep.subr.bf16.mxu0 0
  %254 = vmatpush1.bf16.msra.mxu0 %v193
  %255 = vmatprep.subr.bf16.mxu0 0
  %256 = vmatpush1.bf16.msra.mxu0 %v194
  %257 = vmatprep.subr.bf16.mxu0 0
  %258 = vmatpush1.bf16.msra.mxu0 %v195
  %259 = vmatprep.subr.bf16.mxu0 0
  %260 = vmatpush1.bf16.msra.mxu0 %v196
  %261 = vmatprep.mubr.bf16.mxu0 %v80
  %262 = vmatmul.mubr.bf16.gmra.mrb[0].mxu0 %v79
  %v263 = vpop.f32.mrb[0].mxu0
  %v264 = vadd.f32 0.0, %v263
  %v265 = vpop.f32.mrb[0].mxu0
  %v266 = vpop.f32.mrb[0].mxu0
  %v267 = vpop.f32.mrb[0].mxu0
  %268 = vdwg.mxu0
  %269 = vmatprep.subr.bf16.mxu0 0
  %270 = vmatpush1.bf16.msra.mxu0 %v197
  %271 = vmatprep.subr.bf16.mxu0 0
  %272 = vmatpush1.bf16.msra.mxu0 %v198
  %273 = vmatprep.subr.bf16.mxu0 0
  %274 = vmatpush1.bf16.msra.mxu0 %v199
  %275 = vmatprep.subr.bf16.mxu0 0
  %276 = vmatpush1.bf16.msra.mxu0 %v200
  %277 = vmatprep.subr.bf16.mxu0 0
  %278 = vmatpush1.bf16.msra.mxu0 %v201
  %279 = vmatprep.subr.bf16.mxu0 0
  %280 = vmatpush1.bf16.msra.mxu0 %v202
  %281 = vmatprep.subr.bf16.mxu0 0
  %282 = vmatpush1.bf16.msra.mxu0 %v203
  %283 = vmatprep.subr.bf16.mxu0 0
  %284 = vmatpush1.bf16.msra.mxu0 %v204
  %285 = vmatprep.subr.bf16.mxu0 0
  %286 = vmatpush1.bf16.msra.mxu0 0
  %287 = vmatprep.subr.bf16.mxu0 0
  %288 = vmatpush1.bf16.msra.mxu0 0
  %289 = vmatprep.subr.bf16.mxu0 0
  %290 = vmatpush1.bf16.msra.mxu0 0
  %291 = vmatprep.subr.bf16.mxu0 0
  %292 = vmatpush1.bf16.msra.mxu0 0
  %293 = vmatprep.subr.bf16.mxu0 0
  %294 = vmatpush1.bf16.msra.mxu0 0
  %295 = vmatprep.subr.bf16.mxu0 0
  %296 = vmatpush1.bf16.msra.mxu0 0
  %297 = vmatprep.subr.bf16.mxu0 0
  %298 = vmatpush1.bf16.msra.mxu0 0
  %299 = vmatprep.subr.bf16.mxu0 0
  %300 = vmatpush1.bf16.msra.mxu0 0
  %301 = vmatprep.mubr.bf16.mxu0 0
  %302 = vmatmul.mubr.bf16.gmra.mrb[0].mxu0 %v81
  %v303 = vpop.f32.mrb[0].mxu0
  %v304 = vadd.f32 %v264, %v303
  %v305 = vpop.f32.mrb[0].mxu0
  %v306 = vpop.f32.mrb[0].mxu0
  %v307 = vpop.f32.mrb[0].mxu0
  %308 = vdwg.mxu0
  %v309 = vadd.f32 %v23, %v304
  %310 = vst [vmem:[#allocation2] sm:$0xff] %v309
  // Predicated region
  $region22: #{resnet34fc_forward.57} parent=0 // pred_check
    %p311 = pneg %p18
  $region23: #{resnet34fc_forward.57} parent=0 // pred_check_branch
    %313 = sbr.rel (%p311) target = $region25
  $region24: #{resnet34fc_forward.57} parent=0 // pred_region
    %v314 = vld [vmem:[#allocation2] sm:$0xff]
    %v315 = vld [vmem:[%s2] sm:$0x1]
    %v317 = vlaneseq
    %v318 = vshrl.u32 %v317, 7
    %v319 = vsub.s32 0, %v318
    %v320 = vrot.slane %v315, %v319
    %v322 = vadd.f32 %v314, %v320
    %v323 = vld [vmem:[%s3] sm:$0xf]
    %v324 = vunpack.c.l.bf16 %v323
    %v325 = vadd.f32 %v322, %v324
    %v326 = vmax.f32 %v325, 0.0
    %v327 = vpack.c.bf16 %v326, %v326
    %328 = vst [vmem:[%s4] sm:$0xf] %v327
  $region25: #{resnet34fc_forward.57} parent=0 // pred_fallthru
    _
  // Predicated region
  $region26: #{resnet34fc_forward.57} parent=0 // pred_check
    _
  $region27: #{resnet34fc_forward.57} parent=0 // pred_check_branch
    %330 = sbr.rel (0) target = $region29
  $region28: #{resnet34fc_forward.57} parent=0 // pred_region
    _
  $region29: #{resnet34fc_forward.57} parent=0 // pred_fallthru
    _
  // Predicated region
  $region30: #{resnet34fc_forward.57} parent=0 // pred_check
    _
  $region31: #{resnet34fc_forward.57} parent=0 // pred_check_branch
    %332 = sbr.rel (0) target = $region33
  $region32: #{resnet34fc_forward.57} parent=0 // pred_region
    _
  $region33: #{resnet34fc_forward.57} parent=0 // pred_fallthru
    _

// kernel: resnet34fc_forward.58
$region0: #{resnet34fc_forward.58}
  #allocation0 [shape = 'u32[]', space=smem, size = 0x4, offset = 0x4, fixed_abs, tag = 'smem constant byte address 0x4 - core index']
  #allocation1 [shape = 'u32[144,128]{1,0:T(1,128)}', space=vmem, size = 0x12000, scoped, tag = 'internal scratch']
  #allocation2 [shape = 'f32[8,128]{1,0:T(8,128)}', space=vmem, size = 0x1000, scoped, tag = 'scratch operand']
  %s0 = inlined_call_operand.vmem [shape: bf16[8,384], index: 0, kind: input, shape index: {}]
  %s1 = inlined_call_operand.vmem [shape: bf16[384,128], index: 1, kind: input, shape index: {}]
  %s2 = inlined_call_operand.vmem [shape: f32[1,128], index: 2, kind: input, shape index: {}]
  %s3 = inlined_call_operand.vmem [shape: bf16[8,128], index: 3, kind: output, shape index: {}]
  %s4 = sld [smem:[#allocation0]]
  $region30: #{resnet34fc_forward.58} parent=0
    _
  %s6 = ssub.s32 1, %s4
  %s7 = scalar_select 0, %s6, %s4
  // Predicated region
  $region2: #{resnet34fc_forward.58} parent=0 // pred_check
    _
  $region3: #{resnet34fc_forward.58} parent=0 // pred_check_branch
    %9 = sbr.rel (0) target = $region5
  $region4: #{resnet34fc_forward.58} parent=0 // pred_region
    _
  $region5: #{resnet34fc_forward.58} parent=0 // pred_fallthru
    _
  // Predicated region
  $region6: #{resnet34fc_forward.58} parent=0 // pred_check
    _
  $region7: #{resnet34fc_forward.58} parent=0 // pred_check_branch
    %11 = sbr.rel (0) target = $region9
  $region8: #{resnet34fc_forward.58} parent=0 // pred_region
    _
  $region9: #{resnet34fc_forward.58} parent=0 // pred_fallthru
    _
  // Predicated region
  $region10: #{resnet34fc_forward.58} parent=0 // pred_check
    _
  $region11: #{resnet34fc_forward.58} parent=0 // pred_check_branch
    %13 = sbr.rel (0) target = $region13
  $region12: #{resnet34fc_forward.58} parent=0 // pred_region
    _
  $region13: #{resnet34fc_forward.58} parent=0 // pred_fallthru
    _
  %p15 = scmp.eq.s32.totalorder 0, 0
  // Predicated region
  $region14: #{resnet34fc_forward.58} parent=0 // pred_check
    %p16 = pneg %p15
  $region15: #{resnet34fc_forward.58} parent=0 // pred_check_branch
    %18 = sbr.rel (%p16) target = $region17
  $region16: #{resnet34fc_forward.58} parent=0 // pred_region
    %19 = vst [vmem:[#allocation2] sm:$0xff] 0.0
  $region17: #{resnet34fc_forward.58} parent=0 // pred_fallthru
    _
  %v20 = vld [vmem:[#allocation2] sm:$0xff]
  %v21 = vld [vmem:[%s0] sm:$0xff]
  %v22 = vld [vmem:[%s0 + $0x8] sm:$0xf]
  %v23 = vld [vmem:[%s1] sm:$0xf]
  %v24 = vld [vmem:[%s1 + $0x4] sm:$0xf]
  %v25 = vld [vmem:[%s1 + $0x8] sm:$0xf]
  %v26 = vld [vmem:[%s1 + $0xc] sm:$0xf]
  %v27 = vld [vmem:[%s1 + $0x10] sm:$0xf]
  %v28 = vld [vmem:[%s1 + $0x14] sm:$0xf]
  %v29 = vld [vmem:[%s1 + $0x18] sm:$0xf]
  %v30 = vld [vmem:[%s1 + $0x1c] sm:$0xf]
  %v31 = vld [vmem:[%s1 + $0x20] sm:$0xf]
  %v32 = vld [vmem:[%s1 + $0x24] sm:$0xf]
  %v33 = vld [vmem:[%s1 + $0x28] sm:$0xf]
  %v34 = vld [vmem:[%s1 + $0x2c] sm:$0xf]
  %v35 = vld [vmem:[%s1 + $0x30] sm:$0xf]
  %v36 = vld [vmem:[%s1 + $0x34] sm:$0xf]
  %v37 = vld [vmem:[%s1 + $0x38] sm:$0xf]
  %v38 = vld [vmem:[%s1 + $0x3c] sm:$0xf]
  %v39 = vld [vmem:[%s1 + $0x40] sm:$0xf]
  %v40 = vld [vmem:[%s1 + $0x44] sm:$0xf]
  %v41 = vld [vmem:[%s1 + $0x48] sm:$0xf]
  %v42 = vld [vmem:[%s1 + $0x4c] sm:$0xf]
  %v43 = vld [vmem:[%s1 + $0x50] sm:$0xf]
  %v44 = vld [vmem:[%s1 + $0x54] sm:$0xf]
  %v45 = vld [vmem:[%s1 + $0x58] sm:$0xf]
  %v46 = vld [vmem:[%s1 + $0x5c] sm:$0xf]
  %v47 = vld [vmem:[%s1 + $0x60] sm:$0xf]
  %v48 = vld [vmem:[%s1 + $0x64] sm:$0xf]
  %v49 = vld [vmem:[%s1 + $0x68] sm:$0xf]
  %v50 = vld [vmem:[%s1 + $0x6c] sm:$0xf]
  %v51 = vld [vmem:[%s1 + $0x70] sm:$0xf]
  %v52 = vld [vmem:[%s1 + $0x74] sm:$0xf]
  %v53 = vld [vmem:[%s1 + $0x78] sm:$0xf]
  %v54 = vld [vmem:[%s1 + $0x7c] sm:$0xf]
  %v55 = vld [vmem:[%s1 + $0x80] sm:$0xf]
  %v56 = vld [vmem:[%s1 + $0x84] sm:$0xf]
  %v57 = vld [vmem:[%s1 + $0x88] sm:$0xf]
  %v58 = vld [vmem:[%s1 + $0x8c] sm:$0xf]
  %v59 = vld [vmem:[%s1 + $0x90] sm:$0xf]
  %v60 = vld [vmem:[%s1 + $0x94] sm:$0xf]
  %v61 = vld [vmem:[%s1 + $0x98] sm:$0xf]
  %v62 = vld [vmem:[%s1 + $0x9c] sm:$0xf]
  %v63 = vld [vmem:[%s1 + $0xa0] sm:$0xf]
  %v64 = vld [vmem:[%s1 + $0xa4] sm:$0xf]
  %v65 = vld [vmem:[%s1 + $0xa8] sm:$0xf]
  %v66 = vld [vmem:[%s1 + $0xac] sm:$0xf]
  %v67 = vld [vmem:[%s1 + $0xb0] sm:$0xf]
  %v68 = vld [vmem:[%s1 + $0xb4] sm:$0xf]
  %v69 = vld [vmem:[%s1 + $0xb8] sm:$0xf]
  %v70 = vld [vmem:[%s1 + $0xbc] sm:$0xf]
  %v73 = vunpack.c.l.b16 %v21
  %v74 = vunpack.c.h.b16 %v21
  %v75 = vunpack.c.l.b16 %v22
  %v76 = vpack.c.b16 %v73, %v73
  %v77 = vpack.c.b16 %v74, %v74
  %v78 = vpack.c.b16 %v75, %v75
  %v130 = vunpack.c.l.b16 %v23
  %v131 = vunpack.c.l.b16 %v24
  %v132 = vunpack.c.l.b16 %v25
  %v133 = vunpack.c.l.b16 %v26
  %v134 = vunpack.c.l.b16 %v27
  %v135 = vunpack.c.l.b16 %v28
  %v136 = vunpack.c.l.b16 %v29
  %v137 = vunpack.c.l.b16 %v30
  %v138 = vunpack.c.l.b16 %v31
  %v139 = vunpack.c.l.b16 %v32
  %v140 = vunpack.c.l.b16 %v33
  %v141 = vunpack.c.l.b16 %v34
  %v142 = vunpack.c.l.b16 %v35
  %v143 = vunpack.c.l.b16 %v36
  %v144 = vunpack.c.l.b16 %v37
  %v145 = vunpack.c.l.b16 %v38
  %v146 = vunpack.c.l.b16 %v39
  %v147 = vunpack.c.l.b16 %v40
  %v148 = vunpack.c.l.b16 %v41
  %v149 = vunpack.c.l.b16 %v42
  %v150 = vunpack.c.l.b16 %v43
  %v151 = vunpack.c.l.b16 %v44
  %v152 = vunpack.c.l.b16 %v45
  %v153 = vunpack.c.l.b16 %v46
  %v154 = vunpack.c.l.b16 %v47
  %v155 = vunpack.c.l.b16 %v48
  %v156 = vunpack.c.l.b16 %v49
  %v157 = vunpack.c.l.b16 %v50
  %v158 = vunpack.c.l.b16 %v51
  %v159 = vunpack.c.l.b16 %v52
  %v160 = vunpack.c.l.b16 %v53
  %v161 = vunpack.c.l.b16 %v54
  %v162 = vunpack.c.l.b16 %v55
  %v163 = vunpack.c.l.b16 %v56
  %v164 = vunpack.c.l.b16 %v57
  %v165 = vunpack.c.l.b16 %v58
  %v166 = vunpack.c.l.b16 %v59
  %v167 = vunpack.c.l.b16 %v60
  %v168 = vunpack.c.l.b16 %v61
  %v169 = vunpack.c.l.b16 %v62
  %v170 = vunpack.c.l.b16 %v63
  %v171 = vunpack.c.l.b16 %v64
  %v172 = vunpack.c.l.b16 %v65
  %v173 = vunpack.c.l.b16 %v66
  %v174 = vunpack.c.l.b16 %v67
  %v175 = vunpack.c.l.b16 %v68
  %v176 = vunpack.c.l.b16 %v69
  %v177 = vunpack.c.l.b16 %v70
  %v178 = vpack.c.b16 %v131, %v130
  %v179 = vpack.c.b16 %v133, %v132
  %v180 = vpack.c.b16 %v135, %v134
  %v181 = vpack.c.b16 %v137, %v136
  %v182 = vpack.c.b16 %v139, %v138
  %v183 = vpack.c.b16 %v141, %v140
  %v184 = vpack.c.b16 %v143, %v142
  %v185 = vpack.c.b16 %v145, %v144
  %v186 = vpack.c.b16 %v147, %v146
  %v187 = vpack.c.b16 %v149, %v148
  %v188 = vpack.c.b16 %v151, %v150
  %v189 = vpack.c.b16 %v153, %v152
  %v190 = vpack.c.b16 %v155, %v154
  %v191 = vpack.c.b16 %v157, %v156
  %v192 = vpack.c.b16 %v159, %v158
  %v193 = vpack.c.b16 %v161, %v160
  %v194 = vpack.c.b16 %v163, %v162
  %v195 = vpack.c.b16 %v165, %v164
  %v196 = vpack.c.b16 %v167, %v166
  %v197 = vpack.c.b16 %v169, %v168
  %v198 = vpack.c.b16 %v171, %v170
  %v199 = vpack.c.b16 %v173, %v172
  %v200 = vpack.c.b16 %v175, %v174
  %v201 = vpack.c.b16 %v177, %v176
  %226 = vmatprep.subr.bf16.mxu0 0
  %227 = vmatpush1.bf16.msra.mxu0 %v178
  %228 = vmatprep.subr.bf16.mxu0 0
  %229 = vmatpush1.bf16.msra.mxu0 %v179
  %230 = vmatprep.subr.bf16.mxu0 0
  %231 = vmatpush1.bf16.msra.mxu0 %v180
  %232 = vmatprep.subr.bf16.mxu0 0
  %233 = vmatpush1.bf16.msra.mxu0 %v181
  %234 = vmatprep.subr.bf16.mxu0 0
  %235 = vmatpush1.bf16.msra.mxu0 %v182
  %236 = vmatprep.subr.bf16.mxu0 0
  %237 = vmatpush1.bf16.msra.mxu0 %v183
  %238 = vmatprep.subr.bf16.mxu0 0
  %239 = vmatpush1.bf16.msra.mxu0 %v184
  %240 = vmatprep.subr.bf16.mxu0 0
  %241 = vmatpush1.bf16.msra.mxu0 %v185
  %242 = vmatprep.subr.bf16.mxu0 0
  %243 = vmatpush1.bf16.msra.mxu0 %v186
  %244 = vmatprep.subr.bf16.mxu0 0
  %245 = vmatpush1.bf16.msra.mxu0 %v187
  %246 = vmatprep.subr.bf16.mxu0 0
  %247 = vmatpush1.bf16.msra.mxu0 %v188
  %248 = vmatprep.subr.bf16.mxu0 0
  %249 = vmatpush1.bf16.msra.mxu0 %v189
  %250 = vmatprep.subr.bf16.mxu0 0
  %251 = vmatpush1.bf16.msra.mxu0 %v190
  %252 = vmatprep.subr.bf16.mxu0 0
  %253 = vmatpush1.bf16.msra.mxu0 %v191
  %254 = vmatprep.subr.bf16.mxu0 0
  %255 = vmatpush1.bf16.msra.mxu0 %v192
  %256 = vmatprep.subr.bf16.mxu0 0
  %257 = vmatpush1.bf16.msra.mxu0 %v193
  %258 = vmatprep.mubr.bf16.mxu0 %v77
  %259 = vmatmul.mubr.bf16.gmra.mrb[0].mxu0 %v76
  %v260 = vpop.f32.mrb[0].mxu0
  %v261 = vadd.f32 0.0, %v260
  %v262 = vpop.f32.mrb[0].mxu0
  %v263 = vpop.f32.mrb[0].mxu0
  %v264 = vpop.f32.mrb[0].mxu0
  %265 = vdwg.mxu0
  %266 = vmatprep.subr.bf16.mxu0 0
  %267 = vmatpush1.bf16.msra.mxu0 %v194
  %268 = vmatprep.subr.bf16.mxu0 0
  %269 = vmatpush1.bf16.msra.mxu0 %v195
  %270 = vmatprep.subr.bf16.mxu0 0
  %271 = vmatpush1.bf16.msra.mxu0 %v196
  %272 = vmatprep.subr.bf16.mxu0 0
  %273 = vmatpush1.bf16.msra.mxu0 %v197
  %274 = vmatprep.subr.bf16.mxu0 0
  %275 = vmatpush1.bf16.msra.mxu0 %v198
  %276 = vmatprep.subr.bf16.mxu0 0
  %277 = vmatpush1.bf16.msra.mxu0 %v199
  %278 = vmatprep.subr.bf16.mxu0 0
  %279 = vmatpush1.bf16.msra.mxu0 %v200
  %280 = vmatprep.subr.bf16.mxu0 0
  %281 = vmatpush1.bf16.msra.mxu0 %v201
  %282 = vmatprep.subr.bf16.mxu0 0
  %283 = vmatpush1.bf16.msra.mxu0 0
  %284 = vmatprep.subr.bf16.mxu0 0
  %285 = vmatpush1.bf16.msra.mxu0 0
  %286 = vmatprep.subr.bf16.mxu0 0
  %287 = vmatpush1.bf16.msra.mxu0 0
  %288 = vmatprep.subr.bf16.mxu0 0
  %289 = vmatpush1.bf16.msra.mxu0 0
  %290 = vmatprep.subr.bf16.mxu0 0
  %291 = vmatpush1.bf16.msra.mxu0 0
  %292 = vmatprep.subr.bf16.mxu0 0
  %293 = vmatpush1.bf16.msra.mxu0 0
  %294 = vmatprep.subr.bf16.mxu0 0
  %295 = vmatpush1.bf16.msra.mxu0 0
  %296 = vmatprep.subr.bf16.mxu0 0
  %297 = vmatpush1.bf16.msra.mxu0 0
  %298 = vmatprep.mubr.bf16.mxu0 0
  %299 = vmatmul.mubr.bf16.gmra.mrb[0].mxu0 %v78
  %v300 = vpop.f32.mrb[0].mxu0
  %v301 = vadd.f32 %v261, %v300
  %v302 = vpop.f32.mrb[0].mxu0
  %v303 = vpop.f32.mrb[0].mxu0
  %v304 = vpop.f32.mrb[0].mxu0
  %305 = vdwg.mxu0
  %v306 = vadd.f32 %v20, %v301
  %307 = vst [vmem:[#allocation2] sm:$0xff] %v306
  // Predicated region
  $region18: #{resnet34fc_forward.58} parent=0 // pred_check
    %p308 = pneg %p15
  $region19: #{resnet34fc_forward.58} parent=0 // pred_check_branch
    %310 = sbr.rel (%p308) target = $region21
  $region20: #{resnet34fc_forward.58} parent=0 // pred_region
    %v311 = vld [vmem:[#allocation2] sm:$0xff]
    %v312 = vld [vmem:[%s2] sm:$0x1]
    %v314 = vlaneseq
    %v315 = vshrl.u32 %v314, 7
    %v316 = vsub.s32 0, %v315
    %v317 = vrot.slane %v312, %v316
    %v319 = vadd.f32 %v311, %v317
    %v320 = vmax.f32 %v319, 0.0
    %v321 = vpack.c.bf16 %v320, %v320
    %322 = vst [vmem:[%s3] sm:$0xf] %v321
  $region21: #{resnet34fc_forward.58} parent=0 // pred_fallthru
    _
  // Predicated region
  $region22: #{resnet34fc_forward.58} parent=0 // pred_check
    _
  $region23: #{resnet34fc_forward.58} parent=0 // pred_check_branch
    %324 = sbr.rel (0) target = $region25
  $region24: #{resnet34fc_forward.58} parent=0 // pred_region
    _
  $region25: #{resnet34fc_forward.58} parent=0 // pred_fallthru
    _
  // Predicated region
  $region26: #{resnet34fc_forward.58} parent=0 // pred_check
    _
  $region27: #{resnet34fc_forward.58} parent=0 // pred_check_branch
    %326 = sbr.rel (0) target = $region29
  $region28: #{resnet34fc_forward.58} parent=0 // pred_region
    _
  $region29: #{resnet34fc_forward.58} parent=0 // pred_fallthru
    _

// kernel: resnet34fc_forward.75
$region0: #{resnet34fc_forward.75}
  #allocation0 [shape = 'u32[]', space=smem, size = 0x4, offset = 0x4, fixed_abs, tag = 'smem constant byte address 0x4 - core index']
  #allocation1 [shape = 'u32[144,128]{1,0:T(1,128)}', space=vmem, size = 0x12000, scoped, tag = 'internal scratch']
  %s0 = inlined_call_operand.vmem [shape: bf16[2,1,64], index: 0, kind: input, shape index: {}]
  %s1 = inlined_call_operand.hbm [shape: f32[2,1,64], index: 1, kind: output, shape index: {}]
  %s2 = sld [smem:[#allocation0]]
  $region37: #{resnet34fc_forward.75} parent=0
    _
  %s4 = ssub.s32 1, %s2
  %s5 = scalar_select 0, %s4, %s2
  $region1: #{resnet34fc_forward.75} parent=0
    #allocation2 [shape = 'u8[1024]{0}', space=vmem, size = 0x400, scoped, tag = 'output window, operand 0']
    #allocation3 [shape = 's32[2]{0}', space=sflag, size = 0x8, scoped, tag = 'scoped memory for resnet34fc_forward.75']
    %6 = vsyncpa [#allocation3], 0
    %s7 = scalar_lea.sflag [#allocation3], 1
    %8 = vsyncpa %s7, 0
    loop: start=0, step=1, limit=4
    $region2: #{resnet34fc_forward.75} parent=1 // loop_pre_header
      _
    $region3: #{resnet34fc_forward.75} parent=1 // loop_header
      %s10 = sphi 0, %s14
      %p11 = scmp.ge.s32.totalorder %s10, 4
      %s20 = sphi 0, %s22
      %s23 = sphi 0, %s20
      %s24 = sphi 0, %s23
      %s40 = sphi 0, %s24
      %s46 = sphi 0, %s48
      %s49 = sphi 0, %s46
      %s50 = sphi 0, %s49
      %s66 = sphi 0, %s50
    $region4: #{resnet34fc_forward.75} parent=1 // loop_header_branch
      %13 = sbr.rel (%p11) target = $region8
    $region5: #{resnet34fc_forward.75} parent=1 // loop_body
      %s15 = ssub.s32 %s10, 1
      %s16 = ssub.s32 %s10, 2
      %s17 = sadd.s32 %s10, 1
      %s18 = ssub.s32 %s10, %s17
      %p19 = scmp.eq.s32.totalorder %s18, 0
      %s21 = sadd.s32 %s20, 1
      %s22 = scalar_select %p19, %s20, %s21
      %p25 = pneg %p19
      %p26 = scmp.eq.s32.totalorder %s10, 1
      %p27 = por %p25, %p26
      %p28 = scmp.ne.s32.totalorder %s20, %s23
      %p29 = scmp.eq.s32.totalorder %s10, 0
      %p30 = por %p28, %p29
      %p31 = scmp.ne.s32.totalorder %s20, %s23
      %p32 = scmp.eq.s32.totalorder %s15, 1
      %p33 = por %p31, %p32
      %p34 = scmp.ne.s32.totalorder %s23, %s24
      %p35 = scmp.eq.s32.totalorder %s15, 0
      %p36 = por %p34, %p35
      %p37 = scmp.ne.s32.totalorder %s23, %s24
      %p38 = scmp.eq.s32.totalorder %s16, 1
      %p39 = por %p37, %p38
      %p41 = scmp.ne.s32.totalorder %s24, %s40
      %p42 = scmp.eq.s32.totalorder %s16, 0
      %p43 = por %p41, %p42
      %s44 = ssub.s32 %s10, %s17
      %p45 = scmp.eq.s32.totalorder %s44, 0
      %s47 = sadd.s32 %s46, 1
      %s48 = scalar_select %p45, %s46, %s47
      %p51 = pneg %p45
      %p52 = scmp.eq.s32.totalorder %s10, 1
      %p53 = por %p51, %p52
      %p54 = scmp.ne.s32.totalorder %s46, %s49
      %p55 = scmp.eq.s32.totalorder %s10, 0
      %p56 = por %p54, %p55
      %p57 = scmp.ne.s32.totalorder %s46, %s49
      %p58 = scmp.eq.s32.totalorder %s15, 1
      %p59 = por %p57, %p58
      %p60 = scmp.ne.s32.totalorder %s49, %s50
      %p61 = scmp.eq.s32.totalorder %s15, 0
      %p62 = por %p60, %p61
      %p63 = scmp.ne.s32.totalorder %s49, %s50
      %p64 = scmp.eq.s32.totalorder %s16, 1
      %p65 = por %p63, %p64
      %p67 = scmp.ne.s32.totalorder %s50, %s66
      %p68 = scmp.eq.s32.totalorder %s16, 0
      %p69 = por %p67, %p68
      %p70 = scmp.le.s32.totalorder 1, %s10
      %p71 = scmp.lt.s32.totalorder %s10, 3
      %p72 = pnand %p70, %p71
      %p73 = pneg %p72
      // Predicated region
      $region9: #{resnet34fc_forward.75} parent=5 // pred_check
        _
      $region10: #{resnet34fc_forward.75} parent=5 // pred_check_branch
        %75 = sbr.rel (%p72) target = $region12
      $region11: #{resnet34fc_forward.75} parent=5 // pred_region
        %s76 = ssub.s32 %s10, 1
      $region12: #{resnet34fc_forward.75} parent=5 // pred_fallthru
        _
      %p77 = scmp.lt.s32.totalorder %s10, 2
      // Predicated region
      $region13: #{resnet34fc_forward.75} parent=5 // pred_check
        %p78 = pneg %p77
      $region14: #{resnet34fc_forward.75} parent=5 // pred_check_branch
        %80 = sbr.rel (%p78) target = $region16
      $region15: #{resnet34fc_forward.75} parent=5 // pred_region
        // Predicated region
        $region17: #{resnet34fc_forward.75} parent=15 // pred_check
          %p81 = pneg %p30
        $region18: #{resnet34fc_forward.75} parent=15 // pred_check_branch
          %83 = sbr.rel (%p81) target = $region20
        $region19: #{resnet34fc_forward.75} parent=15 // pred_region
          %p84 = scmp.lt.s32.totalorder %s10, 1
          %s85 = scalar_select %p84, %s10, 1
          %s86 = scalar_lea.vmem %s0, %s85
        $region20: #{resnet34fc_forward.75} parent=15 // pred_fallthru
          _
      $region16: #{resnet34fc_forward.75} parent=5 // pred_fallthru
        _
      %p87 = scmp.le.s32.totalorder 1, %s10
      %p88 = scmp.lt.s32.totalorder %s10, 3
      %p89 = pnand %p87, %p88
      %p90 = pneg %p89
      // Predicated region
      $region21: #{resnet34fc_forward.75} parent=5 // pred_check
        _
      $region22: #{resnet34fc_forward.75} parent=5 // pred_check_branch
        %92 = sbr.rel (%p89) target = $region24
      $region23: #{resnet34fc_forward.75} parent=5 // pred_region
        %s93 = ssub.s32 %s10, 1
        %p94 = scmp.lt.s32.totalorder %s15, 1
        %s95 = scalar_select %p94, %s15, 1
        %s96 = scalar_lea.vmem %s0, %s95
        %p97 = pneg %p36
        %p98 = pneg %p33
        %p99 = pneg %p62
        %p100 = pneg %p59
        %s101 = sand.u32 %s49, 1
        %s102 = scalar_lea.sflag [#allocation3], %s101
        %s103 = sand.u32 %s49, 1
        %s104 = scalar_lea.vmem [#allocation2], %s103
        %p105 = scmp.lt.s32.totalorder %s15, 1
        %s106 = scalar_select %p105, %s15, 1
        %s107 = scalar_lea.vmem %s0, %s106
        %v108 = vld [vmem:[%s107] sm:$0x1]
        %v109 = vunpack.c.l.bf16 %v108
        %v110 = vadd.f32 %v109, 0.0
        %vm111 = vcmask 516096
        %112 = vst.msk [vmem:[%s104] sm:$0x1] %vm111, %v110
        %s113 = sand.u32 %s49, 1
        %s114 = scalar_lea.sflag [#allocation3], %s113
        %s115 = sand.u32 %s49, 1
        %s116 = scalar_lea.vmem [#allocation2], %s115
        // Predicated region
        $region25: #{resnet34fc_forward.75} parent=23 // pred_check
          %p117 = pneg %p59
        $region26: #{resnet34fc_forward.75} parent=23 // pred_check_branch
          %119 = sbr.rel (%p117) target = $region28
        $region27: #{resnet34fc_forward.75} parent=23 // pred_region
          %s121 = ssub.s32 16, 16
          %122 = vsyncadd %s114, %s121
          %s123 = smul.addr %s15, 16
          %s124 = scalar_lea.hbm %s1, %s123
          %s126 = sshll.u32 %s116, 4
          %s127 = int_to_ptr.vmem [resolvable:$true] %s126
          %129 = dma.vmem_to_hbm [thread:$0]  %s127, 16, %s124, %s114
        $region28: #{resnet34fc_forward.75} parent=23 // pred_fallthru
          _
      $region24: #{resnet34fc_forward.75} parent=5 // pred_fallthru
        _
      %p130 = scmp.le.s32.totalorder 2, %s10
      // Predicated region
      $region29: #{resnet34fc_forward.75} parent=5 // pred_check
        %p131 = pneg %p130
      $region30: #{resnet34fc_forward.75} parent=5 // pred_check_branch
        %133 = sbr.rel (%p131) target = $region32
      $region31: #{resnet34fc_forward.75} parent=5 // pred_region
        %s134 = ssub.s32 %s10, 2
        // Predicated region
        $region33: #{resnet34fc_forward.75} parent=31 // pred_check
          %p135 = pneg %p65
        $region34: #{resnet34fc_forward.75} parent=31 // pred_check_branch
          %137 = sbr.rel (%p135) target = $region36
        $region35: #{resnet34fc_forward.75} parent=31 // pred_region
          %s138 = sand.u32 %s50, 1
          %s139 = scalar_lea.sflag [#allocation3], %s138
          %s140 = sand.u32 %s50, 1
          %s141 = scalar_lea.vmem [#allocation2], %s140
          %142 = dma.done %s139, 16
        $region36: #{resnet34fc_forward.75} parent=31 // pred_fallthru
          _
      $region32: #{resnet34fc_forward.75} parent=5 // pred_fallthru
        _
    $region6: #{resnet34fc_forward.75} parent=1 // loop_footer
      %s14 = sadd.s32 1, %s10
    $region7: #{resnet34fc_forward.75} parent=1 // loop_footer_branch
      %9 = sbr.rel target = $region3
    $region8: #{resnet34fc_forward.75} parent=1 // loop_exit
      _
    %143 = vsyncpa [#allocation3], 1
    %s144 = scalar_lea.sflag [#allocation3], 1
    %145 = vsyncpa %s144, 1

// kernel: resnet34fc_forward.71
$region0: #{resnet34fc_forward.71}
  #allocation0 [shape = 'u32[]', space=smem, size = 0x4, offset = 0x4, fixed_abs, tag = 'smem constant byte address 0x4 - core index']
  #allocation1 [shape = 'u32[144,128]{1,0:T(1,128)}', space=vmem, size = 0x12000, scoped, tag = 'internal scratch']
  #allocation2 [shape = 'f32[8,128]{1,0:T(8,128)}', space=vmem, size = 0x1000, scoped, tag = 'scratch operand']
  %s0 = inlined_call_operand.vmem [shape: bf16[8,640], index: 0, kind: input, shape index: {}]
  %s1 = inlined_call_operand.vmem [shape: bf16[640,128], index: 1, kind: input, shape index: {}]
  %s2 = inlined_call_operand.vmem [shape: f32[1,128], index: 2, kind: input, shape index: {}]
  %s3 = inlined_call_operand.vmem [shape: bf16[8,128], index: 3, kind: output, shape index: {}]
  %s4 = sld [smem:[#allocation0]]
  $region53: #{resnet34fc_forward.71} parent=0
    _
  %s6 = ssub.s32 1, %s4
  %s7 = scalar_select 0, %s6, %s4
  loop: start=0, step=1, limit=7
  $region2: #{resnet34fc_forward.71} parent=0 // loop_pre_header
    _
  $region3: #{resnet34fc_forward.71} parent=0 // loop_header
    %s9 = sphi 0, %s13
    %p10 = scmp.ge.s32.totalorder %s9, 7
    %s16 = sphi 0, %s35
    %s17 = sphi 0, %s31
    %s18 = sphi 0, %s27
    %s19 = sphi 0, %s16
    %s20 = sphi 0, %s17
    %s21 = sphi 0, %s18
    %s22 = sphi 0, %s19
    %s23 = sphi 0, %s20
    %s24 = sphi 0, %s21
    %s40 = sphi 0, %s42
    %s43 = sphi 0, %s40
    %s44 = sphi 0, %s43
    %s60 = sphi 0, %s44
    %s68 = sphi 0, %s70
    %s71 = sphi 0, %s68
    %s72 = sphi 0, %s71
    %s88 = sphi 0, %s72
    %s94 = sphi 0, %s96
    %s97 = sphi 0, %s94
    %s98 = sphi 0, %s97
    %s114 = sphi 0, %s98
    %s122 = sphi 0, %s124
    %s125 = sphi 0, %s122
    %s126 = sphi 0, %s125
    %s142 = sphi 0, %s126
  $region4: #{resnet34fc_forward.71} parent=0 // loop_header_branch
    %12 = sbr.rel (%p10) target = $region8
  $region5: #{resnet34fc_forward.71} parent=0 // loop_body
    %s14 = ssub.s32 %s9, 1
    %s15 = ssub.s32 %s9, 2
    %s25 = sadd.s32 1, %s18
    %p26 = scmp.ge.s32.totalorder %s25, 5
    %s27 = scalar_select %p26, 0, %s25
    %s28 = sadd.s32 1, %s17
    %s29 = scalar_select %p26, %s28, %s17
    %p30 = scmp.ge.s32.totalorder %s29, 1
    %s31 = scalar_select %p30, 0, %s29
    %s32 = sadd.s32 1, %s16
    %s33 = scalar_select %p30, %s32, %s16
    %p34 = scmp.ge.s32.totalorder %s33, 1
    %s35 = scalar_select %p34, 0, %s33
    %s36 = ssub.s32 %s16, %s35
    %s37 = ssub.s32 %s18, %s27
    %s38 = sor.u32 %s36, %s37
    %p39 = scmp.eq.s32.totalorder %s38, 0
    %s41 = sadd.s32 %s40, 1
    %s42 = scalar_select %p39, %s40, %s41
    %p45 = pneg %p39
    %p46 = scmp.eq.s32.totalorder %s9, 4
    %p47 = por %p45, %p46
    %p48 = scmp.ne.s32.totalorder %s40, %s43
    %p49 = scmp.eq.s32.totalorder %s9, 0
    %p50 = por %p48, %p49
    %p51 = scmp.ne.s32.totalorder %s40, %s43
    %p52 = scmp.eq.s32.totalorder %s14, 4
    %p53 = por %p51, %p52
    %p54 = scmp.ne.s32.totalorder %s43, %s44
    %p55 = scmp.eq.s32.totalorder %s14, 0
    %p56 = por %p54, %p55
    %p57 = scmp.ne.s32.totalorder %s43, %s44
    %p58 = scmp.eq.s32.totalorder %s15, 4
    %p59 = por %p57, %p58
    %p61 = scmp.ne.s32.totalorder %s44, %s60
    %p62 = scmp.eq.s32.totalorder %s15, 0
    %p63 = por %p61, %p62
    %s64 = ssub.s32 %s18, %s27
    %s65 = ssub.s32 %s17, %s31
    %s66 = sor.u32 %s64, %s65
    %p67 = scmp.eq.s32.totalorder %s66, 0
    %s69 = sadd.s32 %s68, 1
    %s70 = scalar_select %p67, %s68, %s69
    %p73 = pneg %p67
    %p74 = scmp.eq.s32.totalorder %s9, 4
    %p75 = por %p73, %p74
    %p76 = scmp.ne.s32.totalorder %s68, %s71
    %p77 = scmp.eq.s32.totalorder %s9, 0
    %p78 = por %p76, %p77
    %p79 = scmp.ne.s32.totalorder %s68, %s71
    %p80 = scmp.eq.s32.totalorder %s14, 4
    %p81 = por %p79, %p80
    %p82 = scmp.ne.s32.totalorder %s71, %s72
    %p83 = scmp.eq.s32.totalorder %s14, 0
    %p84 = por %p82, %p83
    %p85 = scmp.ne.s32.totalorder %s71, %s72
    %p86 = scmp.eq.s32.totalorder %s15, 4
    %p87 = por %p85, %p86
    %p89 = scmp.ne.s32.totalorder %s72, %s88
    %p90 = scmp.eq.s32.totalorder %s15, 0
    %p91 = por %p89, %p90
    %s92 = ssub.s32 %s17, %s31
    %p93 = scmp.eq.s32.totalorder %s92, 0
    %s95 = sadd.s32 %s94, 1
    %s96 = scalar_select %p93, %s94, %s95
    %p99 = pneg %p93
    %p100 = scmp.eq.s32.totalorder %s9, 4
    %p101 = por %p99, %p100
    %p102 = scmp.ne.s32.totalorder %s94, %s97
    %p103 = scmp.eq.s32.totalorder %s9, 0
    %p104 = por %p102, %p103
    %p105 = scmp.ne.s32.totalorder %s94, %s97
    %p106 = scmp.eq.s32.totalorder %s14, 4
    %p107 = por %p105, %p106
    %p108 = scmp.ne.s32.totalorder %s97, %s98
    %p109 = scmp.eq.s32.totalorder %s14, 0
    %p110 = por %p108, %p109
    %p111 = scmp.ne.s32.totalorder %s97, %s98
    %p112 = scmp.eq.s32.totalorder %s15, 4
    %p113 = por %p111, %p112
    %p115 = scmp.ne.s32.totalorder %s98, %s114
    %p116 = scmp.eq.s32.totalorder %s15, 0
    %p117 = por %p115, %p116
    %s118 = ssub.s32 %s16, %s35
    %s119 = ssub.s32 %s17, %s31
    %s120 = sor.u32 %s118, %s119
    %p121 = scmp.eq.s32.totalorder %s120, 0
    %s123 = sadd.s32 %s122, 1
    %s124 = scalar_select %p121, %s122, %s123
    %p127 = pneg %p121
    %p128 = scmp.eq.s32.totalorder %s9, 4
    %p129 = por %p127, %p128
    %p130 = scmp.ne.s32.totalorder %s122, %s125
    %p131 = scmp.eq.s32.totalorder %s9, 0
    %p132 = por %p130, %p131
    %p133 = scmp.ne.s32.totalorder %s122, %s125
    %p134 = scmp.eq.s32.totalorder %s14, 4
    %p135 = por %p133, %p134
    %p136 = scmp.ne.s32.totalorder %s125, %s126
    %p137 = scmp.eq.s32.totalorder %s14, 0
    %p138 = por %p136, %p137
    %p139 = scmp.ne.s32.totalorder %s125, %s126
    %p140 = scmp.eq.s32.totalorder %s15, 4
    %p141 = por %p139, %p140
    %p143 = scmp.ne.s32.totalorder %s126, %s142
    %p144 = scmp.eq.s32.totalorder %s15, 0
    %p145 = por %p143, %p144
    %p146 = scmp.le.s32.totalorder 1, %s9
    %p147 = scmp.lt.s32.totalorder %s9, 6
    %p148 = pnand %p146, %p147
    %p149 = pneg %p148
    // Predicated region
    $region9: #{resnet34fc_forward.71} parent=5 // pred_check
      _
    $region10: #{resnet34fc_forward.71} parent=5 // pred_check_branch
      %151 = sbr.rel (%p148) target = $region12
    $region11: #{resnet34fc_forward.71} parent=5 // pred_region
      %s152 = ssub.s32 %s9, 1
      // Predicated region
      $region13: #{resnet34fc_forward.71} parent=11 // pred_check
        %p153 = pneg %p110
      $region14: #{resnet34fc_forward.71} parent=11 // pred_check_branch
        %155 = sbr.rel (%p153) target = $region16
      $region15: #{resnet34fc_forward.71} parent=11 // pred_region
        %p156 = scmp.lt.s32.totalorder %s20, 0
        %s157 = scalar_select %p156, %s20, 0
        %s158 = scalar_lea.vmem %s2, %s157
      $region16: #{resnet34fc_forward.71} parent=11 // pred_fallthru
        _
    $region12: #{resnet34fc_forward.71} parent=5 // pred_fallthru
      _
    %p159 = scmp.lt.s32.totalorder %s9, 5
    // Predicated region
    $region17: #{resnet34fc_forward.71} parent=5 // pred_check
      %p160 = pneg %p159
    $region18: #{resnet34fc_forward.71} parent=5 // pred_check_branch
      %162 = sbr.rel (%p160) target = $region20
    $region19: #{resnet34fc_forward.71} parent=5 // pred_region
      // Predicated region
      $region21: #{resnet34fc_forward.71} parent=19 // pred_check
        %p163 = pneg %p50
      $region22: #{resnet34fc_forward.71} parent=19 // pred_check_branch
        %165 = sbr.rel (%p163) target = $region24
      $region23: #{resnet34fc_forward.71} parent=19 // pred_region
        %p166 = scmp.lt.s32.totalorder %s16, 0
        %s167 = scalar_select %p166, %s16, 0
        %p168 = scmp.lt.s32.totalorder %s18, 4
        %s169 = scalar_select %p168, %s18, 4
        %s170 = smul.addr %s167, 5
        %s171 = sadd.s32 %s169, %s170
        %s172 = smul.addr %s171, 4
        %s173 = scalar_lea.vmem %s0, %s172
      $region24: #{resnet34fc_forward.71} parent=19 // pred_fallthru
        _
      // Predicated region
      $region25: #{resnet34fc_forward.71} parent=19 // pred_check
        %p174 = pneg %p78
      $region26: #{resnet34fc_forward.71} parent=19 // pred_check_branch
        %176 = sbr.rel (%p174) target = $region28
      $region27: #{resnet34fc_forward.71} parent=19 // pred_region
        %s177 = smul.u32 16, %s18
        %p178 = scmp.lt.s32.totalorder %s177, 79
        %s179 = scalar_select %p178, %s177, 79
        %p180 = scmp.lt.s32.totalorder %s17, 0
        %s181 = scalar_select %p180, %s17, 0
        %s182 = sadd.s32 %s181, %s179
        %s183 = smul.addr %s182, 4
        %s184 = scalar_lea.vmem %s1, %s183
        %s185 = smul.u32 16, %s18
      $region28: #{resnet34fc_forward.71} parent=19 // pred_fallthru
        _
    $region20: #{resnet34fc_forward.71} parent=5 // pred_fallthru
      _
    %p186 = scmp.le.s32.totalorder 1, %s9
    %p187 = scmp.lt.s32.totalorder %s9, 6
    %p188 = pnand %p186, %p187
    %p189 = pneg %p188
    // Predicated region
    $region29: #{resnet34fc_forward.71} parent=5 // pred_check
      _
    $region30: #{resnet34fc_forward.71} parent=5 // pred_check_branch
      %191 = sbr.rel (%p188) target = $region32
    $region31: #{resnet34fc_forward.71} parent=5 // pred_region
      %s192 = ssub.s32 %s9, 1
      %p193 = scmp.lt.s32.totalorder %s19, 0
      %s194 = scalar_select %p193, %s19, 0
      %p195 = scmp.lt.s32.totalorder %s21, 4
      %s196 = scalar_select %p195, %s21, 4
      %s197 = smul.addr %s194, 5
      %s198 = sadd.s32 %s196, %s197
      %s199 = smul.addr %s198, 4
      %s200 = scalar_lea.vmem %s0, %s199
      %p201 = pneg %p56
      %p202 = pneg %p53
      %s203 = smul.u32 16, %s21
      %p204 = scmp.lt.s32.totalorder %s203, 79
      %s205 = scalar_select %p204, %s203, 79
      %p206 = scmp.lt.s32.totalorder %s20, 0
      %s207 = scalar_select %p206, %s20, 0
      %s208 = sadd.s32 %s207, %s205
      %s209 = smul.addr %s208, 4
      %s210 = scalar_lea.vmem %s1, %s209
      %p211 = pneg %p84
      %p212 = pneg %p81
      %p213 = scmp.lt.s32.totalorder %s20, 0
      %s214 = scalar_select %p213, %s20, 0
      %s215 = scalar_lea.vmem %s2, %s214
      %p216 = pneg %p110
      %p217 = pneg %p107
      %p218 = pneg %p138
      %p219 = pneg %p135
      %p220 = scmp.lt.s32.totalorder %s19, 0
      %s221 = scalar_select %p220, %s19, 0
      %p222 = scmp.lt.s32.totalorder %s20, 0
      %s223 = scalar_select %p222, %s20, 0
      %s224 = sadd.s32 %s223, %s221
      %s225 = smul.addr %s224, 4
      %s226 = scalar_lea.vmem %s3, %s225
      %p227 = scmp.lt.s32.totalorder %s19, 0
      %s228 = scalar_select %p227, %s19, 0
      %p229 = scmp.lt.s32.totalorder %s21, 4
      %s230 = scalar_select %p229, %s21, 4
      %s231 = smul.addr %s228, 5
      %s232 = sadd.s32 %s230, %s231
      %s233 = smul.addr %s232, 4
      %s234 = scalar_lea.vmem %s0, %s233
      %s235 = smul.u32 16, %s21
      %p236 = scmp.lt.s32.totalorder %s235, 79
      %s237 = scalar_select %p236, %s235, 79
      %p238 = scmp.lt.s32.totalorder %s20, 0
      %s239 = scalar_select %p238, %s20, 0
      %s240 = sadd.s32 %s239, %s237
      %s241 = smul.addr %s240, 4
      %s242 = scalar_lea.vmem %s1, %s241
      %s243 = smul.u32 16, %s21
      %p244 = scmp.lt.s32.totalorder %s20, 0
      %s245 = scalar_select %p244, %s20, 0
      %s246 = scalar_lea.vmem %s2, %s245
      %p247 = scmp.lt.s32.totalorder %s19, 0
      %s248 = scalar_select %p247, %s19, 0
      %p249 = scmp.lt.s32.totalorder %s20, 0
      %s250 = scalar_select %p249, %s20, 0
      %s251 = sadd.s32 %s250, %s248
      %s252 = smul.addr %s251, 4
      %s253 = scalar_lea.vmem %s3, %s252
      %p255 = scmp.eq.s32.totalorder %s21, 0
      // Predicated region
      $region33: #{resnet34fc_forward.71} parent=31 // pred_check
        %p256 = pneg %p255
      $region34: #{resnet34fc_forward.71} parent=31 // pred_check_branch
        %258 = sbr.rel (%p256) target = $region36
      $region35: #{resnet34fc_forward.71} parent=31 // pred_region
        %259 = vst [vmem:[#allocation2] sm:$0xff] 0.0
      $region36: #{resnet34fc_forward.71} parent=31 // pred_fallthru
        _
      %v260 = vld [vmem:[#allocation2] sm:$0xff]
      %v261 = vld [vmem:[%s234] sm:$0xf]
      %v262 = vld [vmem:[%s242] sm:$0xf]
      %v263 = vld [vmem:[%s242 + $0x4] sm:$0xf]
      %v264 = vld [vmem:[%s242 + $0x8] sm:$0xf]
      %v265 = vld [vmem:[%s242 + $0xc] sm:$0xf]
      %v266 = vld [vmem:[%s242 + $0x10] sm:$0xf]
      %v267 = vld [vmem:[%s242 + $0x14] sm:$0xf]
      %v268 = vld [vmem:[%s242 + $0x18] sm:$0xf]
      %v269 = vld [vmem:[%s242 + $0x1c] sm:$0xf]
      %v270 = vld [vmem:[%s242 + $0x20] sm:$0xf]
      %v271 = vld [vmem:[%s242 + $0x24] sm:$0xf]
      %v272 = vld [vmem:[%s242 + $0x28] sm:$0xf]
      %v273 = vld [vmem:[%s242 + $0x2c] sm:$0xf]
      %v274 = vld [vmem:[%s242 + $0x30] sm:$0xf]
      %v275 = vld [vmem:[%s242 + $0x34] sm:$0xf]
      %v276 = vld [vmem:[%s242 + $0x38] sm:$0xf]
      %v277 = vld [vmem:[%s242 + $0x3c] sm:$0xf]
      %v294 = vunpack.c.l.b16 %v262
      %v295 = vunpack.c.l.b16 %v263
      %v296 = vunpack.c.l.b16 %v264
      %v297 = vunpack.c.l.b16 %v265
      %v298 = vunpack.c.l.b16 %v266
      %v299 = vunpack.c.l.b16 %v267
      %v300 = vunpack.c.l.b16 %v268
      %v301 = vunpack.c.l.b16 %v269
      %v302 = vunpack.c.l.b16 %v270
      %v303 = vunpack.c.l.b16 %v271
      %v304 = vunpack.c.l.b16 %v272
      %v305 = vunpack.c.l.b16 %v273
      %v306 = vunpack.c.l.b16 %v274
      %v307 = vunpack.c.l.b16 %v275
      %v308 = vunpack.c.l.b16 %v276
      %v309 = vunpack.c.l.b16 %v277
      %v310 = vpack.c.b16 %v295, %v294
      %v311 = vpack.c.b16 %v297, %v296
      %v312 = vpack.c.b16 %v299, %v298
      %v313 = vpack.c.b16 %v301, %v300
      %v314 = vpack.c.b16 %v303, %v302
      %v315 = vpack.c.b16 %v305, %v304
      %v316 = vpack.c.b16 %v307, %v306
      %v317 = vpack.c.b16 %v309, %v308
      %326 = vmatprep.subr.bf16.mxu0 0
      %327 = vmatpush1.bf16.msra.mxu0 %v310
      %328 = vmatprep.subr.bf16.mxu0 0
      %329 = vmatpush1.bf16.msra.mxu0 %v311
      %330 = vmatprep.subr.bf16.mxu0 0
      %331 = vmatpush1.bf16.msra.mxu0 %v312
      %332 = vmatprep.subr.bf16.mxu0 0
      %333 = vmatpush1.bf16.msra.mxu0 %v313
      %334 = vmatprep.subr.bf16.mxu0 0
      %335 = vmatpush1.bf16.msra.mxu0 %v314
      %336 = vmatprep.subr.bf16.mxu0 0
      %337 = vmatpush1.bf16.msra.mxu0 %v315
      %338 = vmatprep.subr.bf16.mxu0 0
      %339 = vmatpush1.bf16.msra.mxu0 %v316
      %340 = vmatprep.subr.bf16.mxu0 0
      %341 = vmatpush1.bf16.msra.mxu0 %v317
      %342 = vmatprep.subr.bf16.mxu0 0
      %343 = vmatpush1.bf16.msra.mxu0 0
      %344 = vmatprep.subr.bf16.mxu0 0
      %345 = vmatpush1.bf16.msra.mxu0 0
      %346 = vmatprep.subr.bf16.mxu0 0
      %347 = vmatpush1.bf16.msra.mxu0 0
      %348 = vmatprep.subr.bf16.mxu0 0
      %349 = vmatpush1.bf16.msra.mxu0 0
      %350 = vmatprep.subr.bf16.mxu0 0
      %351 = vmatpush1.bf16.msra.mxu0 0
      %352 = vmatprep.subr.bf16.mxu0 0
      %353 = vmatpush1.bf16.msra.mxu0 0
      %354 = vmatprep.subr.bf16.mxu0 0
      %355 = vmatpush1.bf16.msra.mxu0 0
      %356 = vmatprep.subr.bf16.mxu0 0
      %357 = vmatpush1.bf16.msra.mxu0 0
      %358 = vmatprep.mubr.bf16.mxu0 0
      %359 = vmatmul.mubr.bf16.gmra.mrb[0].mxu0 %v261
      %v360 = vpop.f32.mrb[0].mxu0
      %v361 = vadd.f32 0.0, %v360
      %v362 = vpop.f32.mrb[0].mxu0
      %v363 = vpop.f32.mrb[0].mxu0
      %v364 = vpop.f32.mrb[0].mxu0
      %365 = vdwg.mxu0
      %v366 = vadd.f32 %v260, %v361
      %367 = vst [vmem:[#allocation2] sm:$0xff] %v366
      %p368 = scmp.eq.s32.totalorder %s21, 4
      // Predicated region
      $region37: #{resnet34fc_forward.71} parent=31 // pred_check
        %p369 = pneg %p368
      $region38: #{resnet34fc_forward.71} parent=31 // pred_check_branch
        %371 = sbr.rel (%p369) target = $region40
      $region39: #{resnet34fc_forward.71} parent=31 // pred_region
        %v372 = vld [vmem:[#allocation2] sm:$0xff]
        %v373 = vld [vmem:[%s246] sm:$0x1]
        %v375 = vlaneseq
        %v376 = vshrl.u32 %v375, 7
        %v377 = vsub.s32 0, %v376
        %v378 = vrot.slane %v373, %v377
        %v380 = vadd.f32 %v372, %v378
        %v381 = vmax.f32 %v380, 0.0
        %v382 = vpack.c.bf16 %v381, %v381
        %383 = vst [vmem:[%s253] sm:$0xf] %v382
      $region40: #{resnet34fc_forward.71} parent=31 // pred_fallthru
        _
      %p384 = scmp.lt.s32.totalorder %s19, 0
      %s385 = scalar_select %p384, %s19, 0
      %p386 = scmp.lt.s32.totalorder %s20, 0
      %s387 = scalar_select %p386, %s20, 0
      %s388 = sadd.s32 %s387, %s385
      %s389 = smul.addr %s388, 4
      %s390 = scalar_lea.vmem %s3, %s389
      // Predicated region
      $region41: #{resnet34fc_forward.71} parent=31 // pred_check
        %p391 = pneg %p135
      $region42: #{resnet34fc_forward.71} parent=31 // pred_check_branch
        %393 = sbr.rel (%p391) target = $region44
      $region43: #{resnet34fc_forward.71} parent=31 // pred_region
        _
      $region44: #{resnet34fc_forward.71} parent=31 // pred_fallthru
        _
      // Predicated region
      $region45: #{resnet34fc_forward.71} parent=31 // pred_check
        %p394 = pneg %p135
      $region46: #{resnet34fc_forward.71} parent=31 // pred_check_branch
        %396 = sbr.rel (%p394) target = $region48
      $region47: #{resnet34fc_forward.71} parent=31 // pred_region
        %p397 = scmp.lt.s32.totalorder %s19, 0
        %s398 = scalar_select %p397, %s19, 0
        %p399 = scmp.lt.s32.totalorder %s20, 0
        %s400 = scalar_select %p399, %s20, 0
        %s401 = sadd.s32 %s400, %s398
        %s402 = smul.addr %s401, 4
        %s403 = scalar_lea.vmem %s3, %s402
      $region48: #{resnet34fc_forward.71} parent=31 // pred_fallthru
        _
    $region32: #{resnet34fc_forward.71} parent=5 // pred_fallthru
      _
    %p404 = scmp.le.s32.totalorder 2, %s9
    // Predicated region
    $region49: #{resnet34fc_forward.71} parent=5 // pred_check
      %p405 = pneg %p404
    $region50: #{resnet34fc_forward.71} parent=5 // pred_check_branch
      %407 = sbr.rel (%p405) target = $region52
    $region51: #{resnet34fc_forward.71} parent=5 // pred_region
      %s408 = ssub.s32 %s9, 2
    $region52: #{resnet34fc_forward.71} parent=5 // pred_fallthru
      _
  $region6: #{resnet34fc_forward.71} parent=0 // loop_footer
    %s13 = sadd.s32 1, %s9
  $region7: #{resnet34fc_forward.71} parent=0 // loop_footer_branch
    %8 = sbr.rel target = $region3
  $region8: #{resnet34fc_forward.71} parent=0 // loop_exit
    _

// kernel: resnet34fc_forward.70
$region0: #{resnet34fc_forward.70}
  #allocation0 [shape = 'u32[]', space=smem, size = 0x4, offset = 0x4, fixed_abs, tag = 'smem constant byte address 0x4 - core index']
  #allocation1 [shape = 'u32[144,128]{1,0:T(1,128)}', space=vmem, size = 0x12000, scoped, tag = 'internal scratch']
  #allocation2 [shape = 'f32[8,128]{1,0:T(8,128)}', space=vmem, size = 0x1000, scoped, tag = 'scratch operand']
  %s0 = inlined_call_operand.vmem [shape: bf16[8,640], index: 0, kind: input, shape index: {}]
  %s1 = inlined_call_operand.vmem [shape: bf16[640,128], index: 1, kind: input, shape index: {}]
  %s2 = inlined_call_operand.vmem [shape: f32[1,128], index: 2, kind: input, shape index: {}]
  %s3 = inlined_call_operand.vmem [shape: bf16[8,128], index: 3, kind: input, shape index: {}]
  %s4 = inlined_call_operand.vmem [shape: bf16[8,128], index: 4, kind: output, shape index: {}]
  %s5 = sld [smem:[#allocation0]]
  $region57: #{resnet34fc_forward.70} parent=0
    _
  %s7 = ssub.s32 1, %s5
  %s8 = scalar_select 0, %s7, %s5
  loop: start=0, step=1, limit=7
  $region2: #{resnet34fc_forward.70} parent=0 // loop_pre_header
    _
  $region3: #{resnet34fc_forward.70} parent=0 // loop_header
    %s10 = sphi 0, %s14
    %p11 = scmp.ge.s32.totalorder %s10, 7
    %s17 = sphi 0, %s36
    %s18 = sphi 0, %s32
    %s19 = sphi 0, %s28
    %s20 = sphi 0, %s17
    %s21 = sphi 0, %s18
    %s22 = sphi 0, %s19
    %s23 = sphi 0, %s20
    %s24 = sphi 0, %s21
    %s25 = sphi 0, %s22
    %s41 = sphi 0, %s43
    %s44 = sphi 0, %s41
    %s45 = sphi 0, %s44
    %s61 = sphi 0, %s45
    %s69 = sphi 0, %s71
    %s72 = sphi 0, %s69
    %s73 = sphi 0, %s72
    %s89 = sphi 0, %s73
    %s95 = sphi 0, %s97
    %s98 = sphi 0, %s95
    %s99 = sphi 0, %s98
    %s115 = sphi 0, %s99
    %s123 = sphi 0, %s125
    %s126 = sphi 0, %s123
    %s127 = sphi 0, %s126
    %s143 = sphi 0, %s127
    %s151 = sphi 0, %s153
    %s154 = sphi 0, %s151
    %s155 = sphi 0, %s154
    %s171 = sphi 0, %s155
  $region4: #{resnet34fc_forward.70} parent=0 // loop_header_branch
    %13 = sbr.rel (%p11) target = $region8
  $region5: #{resnet34fc_forward.70} parent=0 // loop_body
    %s15 = ssub.s32 %s10, 1
    %s16 = ssub.s32 %s10, 2
    %s26 = sadd.s32 1, %s19
    %p27 = scmp.ge.s32.totalorder %s26, 5
    %s28 = scalar_select %p27, 0, %s26
    %s29 = sadd.s32 1, %s18
    %s30 = scalar_select %p27, %s29, %s18
    %p31 = scmp.ge.s32.totalorder %s30, 1
    %s32 = scalar_select %p31, 0, %s30
    %s33 = sadd.s32 1, %s17
    %s34 = scalar_select %p31, %s33, %s17
    %p35 = scmp.ge.s32.totalorder %s34, 1
    %s36 = scalar_select %p35, 0, %s34
    %s37 = ssub.s32 %s17, %s36
    %s38 = ssub.s32 %s19, %s28
    %s39 = sor.u32 %s37, %s38
    %p40 = scmp.eq.s32.totalorder %s39, 0
    %s42 = sadd.s32 %s41, 1
    %s43 = scalar_select %p40, %s41, %s42
    %p46 = pneg %p40
    %p47 = scmp.eq.s32.totalorder %s10, 4
    %p48 = por %p46, %p47
    %p49 = scmp.ne.s32.totalorder %s41, %s44
    %p50 = scmp.eq.s32.totalorder %s10, 0
    %p51 = por %p49, %p50
    %p52 = scmp.ne.s32.totalorder %s41, %s44
    %p53 = scmp.eq.s32.totalorder %s15, 4
    %p54 = por %p52, %p53
    %p55 = scmp.ne.s32.totalorder %s44, %s45
    %p56 = scmp.eq.s32.totalorder %s15, 0
    %p57 = por %p55, %p56
    %p58 = scmp.ne.s32.totalorder %s44, %s45
    %p59 = scmp.eq.s32.totalorder %s16, 4
    %p60 = por %p58, %p59
    %p62 = scmp.ne.s32.totalorder %s45, %s61
    %p63 = scmp.eq.s32.totalorder %s16, 0
    %p64 = por %p62, %p63
    %s65 = ssub.s32 %s19, %s28
    %s66 = ssub.s32 %s18, %s32
    %s67 = sor.u32 %s65, %s66
    %p68 = scmp.eq.s32.totalorder %s67, 0
    %s70 = sadd.s32 %s69, 1
    %s71 = scalar_select %p68, %s69, %s70
    %p74 = pneg %p68
    %p75 = scmp.eq.s32.totalorder %s10, 4
    %p76 = por %p74, %p75
    %p77 = scmp.ne.s32.totalorder %s69, %s72
    %p78 = scmp.eq.s32.totalorder %s10, 0
    %p79 = por %p77, %p78
    %p80 = scmp.ne.s32.totalorder %s69, %s72
    %p81 = scmp.eq.s32.totalorder %s15, 4
    %p82 = por %p80, %p81
    %p83 = scmp.ne.s32.totalorder %s72, %s73
    %p84 = scmp.eq.s32.totalorder %s15, 0
    %p85 = por %p83, %p84
    %p86 = scmp.ne.s32.totalorder %s72, %s73
    %p87 = scmp.eq.s32.totalorder %s16, 4
    %p88 = por %p86, %p87
    %p90 = scmp.ne.s32.totalorder %s73, %s89
    %p91 = scmp.eq.s32.totalorder %s16, 0
    %p92 = por %p90, %p91
    %s93 = ssub.s32 %s18, %s32
    %p94 = scmp.eq.s32.totalorder %s93, 0
    %s96 = sadd.s32 %s95, 1
    %s97 = scalar_select %p94, %s95, %s96
    %p100 = pneg %p94
    %p101 = scmp.eq.s32.totalorder %s10, 4
    %p102 = por %p100, %p101
    %p103 = scmp.ne.s32.totalorder %s95, %s98
    %p104 = scmp.eq.s32.totalorder %s10, 0
    %p105 = por %p103, %p104
    %p106 = scmp.ne.s32.totalorder %s95, %s98
    %p107 = scmp.eq.s32.totalorder %s15, 4
    %p108 = por %p106, %p107
    %p109 = scmp.ne.s32.totalorder %s98, %s99
    %p110 = scmp.eq.s32.totalorder %s15, 0
    %p111 = por %p109, %p110
    %p112 = scmp.ne.s32.totalorder %s98, %s99
    %p113 = scmp.eq.s32.totalorder %s16, 4
    %p114 = por %p112, %p113
    %p116 = scmp.ne.s32.totalorder %s99, %s115
    %p117 = scmp.eq.s32.totalorder %s16, 0
    %p118 = por %p116, %p117
    %s119 = ssub.s32 %s17, %s36
    %s120 = ssub.s32 %s18, %s32
    %s121 = sor.u32 %s119, %s120
    %p122 = scmp.eq.s32.totalorder %s121, 0
    %s124 = sadd.s32 %s123, 1
    %s125 = scalar_select %p122, %s123, %s124
    %p128 = pneg %p122
    %p129 = scmp.eq.s32.totalorder %s10, 4
    %p130 = por %p128, %p129
    %p131 = scmp.ne.s32.totalorder %s123, %s126
    %p132 = scmp.eq.s32.totalorder %s10, 0
    %p133 = por %p131, %p132
    %p134 = scmp.ne.s32.totalorder %s123, %s126
    %p135 = scmp.eq.s32.totalorder %s15, 4
    %p136 = por %p134, %p135
    %p137 = scmp.ne.s32.totalorder %s126, %s127
    %p138 = scmp.eq.s32.totalorder %s15, 0
    %p139 = por %p137, %p138
    %p140 = scmp.ne.s32.totalorder %s126, %s127
    %p141 = scmp.eq.s32.totalorder %s16, 4
    %p142 = por %p140, %p141
    %p144 = scmp.ne.s32.totalorder %s127, %s143
    %p145 = scmp.eq.s32.totalorder %s16, 0
    %p146 = por %p144, %p145
    %s147 = ssub.s32 %s17, %s36
    %s148 = ssub.s32 %s18, %s32
    %s149 = sor.u32 %s147, %s148
    %p150 = scmp.eq.s32.totalorder %s149, 0
    %s152 = sadd.s32 %s151, 1
    %s153 = scalar_select %p150, %s151, %s152
    %p156 = pneg %p150
    %p157 = scmp.eq.s32.totalorder %s10, 4
    %p158 = por %p156, %p157
    %p159 = scmp.ne.s32.totalorder %s151, %s154
    %p160 = scmp.eq.s32.totalorder %s10, 0
    %p161 = por %p159, %p160
    %p162 = scmp.ne.s32.totalorder %s151, %s154
    %p163 = scmp.eq.s32.totalorder %s15, 4
    %p164 = por %p162, %p163
    %p165 = scmp.ne.s32.totalorder %s154, %s155
    %p166 = scmp.eq.s32.totalorder %s15, 0
    %p167 = por %p165, %p166
    %p168 = scmp.ne.s32.totalorder %s154, %s155
    %p169 = scmp.eq.s32.totalorder %s16, 4
    %p170 = por %p168, %p169
    %p172 = scmp.ne.s32.totalorder %s155, %s171
    %p173 = scmp.eq.s32.totalorder %s16, 0
    %p174 = por %p172, %p173
    %p175 = scmp.le.s32.totalorder 1, %s10
    %p176 = scmp.lt.s32.totalorder %s10, 6
    %p177 = pnand %p175, %p176
    %p178 = pneg %p177
    // Predicated region
    $region9: #{resnet34fc_forward.70} parent=5 // pred_check
      _
    $region10: #{resnet34fc_forward.70} parent=5 // pred_check_branch
      %180 = sbr.rel (%p177) target = $region12
    $region11: #{resnet34fc_forward.70} parent=5 // pred_region
      %s181 = ssub.s32 %s10, 1
      // Predicated region
      $region13: #{resnet34fc_forward.70} parent=11 // pred_check
        %p182 = pneg %p111
      $region14: #{resnet34fc_forward.70} parent=11 // pred_check_branch
        %184 = sbr.rel (%p182) target = $region16
      $region15: #{resnet34fc_forward.70} parent=11 // pred_region
        %p185 = scmp.lt.s32.totalorder %s21, 0
        %s186 = scalar_select %p185, %s21, 0
        %s187 = scalar_lea.vmem %s2, %s186
      $region16: #{resnet34fc_forward.70} parent=11 // pred_fallthru
        _
      // Predicated region
      $region17: #{resnet34fc_forward.70} parent=11 // pred_check
        %p188 = pneg %p139
      $region18: #{resnet34fc_forward.70} parent=11 // pred_check_branch
        %190 = sbr.rel (%p188) target = $region20
      $region19: #{resnet34fc_forward.70} parent=11 // pred_region
        %p191 = scmp.lt.s32.totalorder %s20, 0
        %s192 = scalar_select %p191, %s20, 0
        %p193 = scmp.lt.s32.totalorder %s21, 0
        %s194 = scalar_select %p193, %s21, 0
        %s195 = sadd.s32 %s194, %s192
        %s196 = smul.addr %s195, 4
        %s197 = scalar_lea.vmem %s3, %s196
      $region20: #{resnet34fc_forward.70} parent=11 // pred_fallthru
        _
    $region12: #{resnet34fc_forward.70} parent=5 // pred_fallthru
      _
    %p198 = scmp.lt.s32.totalorder %s10, 5
    // Predicated region
    $region21: #{resnet34fc_forward.70} parent=5 // pred_check
      %p199 = pneg %p198
    $region22: #{resnet34fc_forward.70} parent=5 // pred_check_branch
      %201 = sbr.rel (%p199) target = $region24
    $region23: #{resnet34fc_forward.70} parent=5 // pred_region
      // Predicated region
      $region25: #{resnet34fc_forward.70} parent=23 // pred_check
        %p202 = pneg %p51
      $region26: #{resnet34fc_forward.70} parent=23 // pred_check_branch
        %204 = sbr.rel (%p202) target = $region28
      $region27: #{resnet34fc_forward.70} parent=23 // pred_region
        %p205 = scmp.lt.s32.totalorder %s17, 0
        %s206 = scalar_select %p205, %s17, 0
        %p207 = scmp.lt.s32.totalorder %s19, 4
        %s208 = scalar_select %p207, %s19, 4
        %s209 = smul.addr %s206, 5
        %s210 = sadd.s32 %s208, %s209
        %s211 = smul.addr %s210, 4
        %s212 = scalar_lea.vmem %s0, %s211
      $region28: #{resnet34fc_forward.70} parent=23 // pred_fallthru
        _
      // Predicated region
      $region29: #{resnet34fc_forward.70} parent=23 // pred_check
        %p213 = pneg %p79
      $region30: #{resnet34fc_forward.70} parent=23 // pred_check_branch
        %215 = sbr.rel (%p213) target = $region32
      $region31: #{resnet34fc_forward.70} parent=23 // pred_region
        %s216 = smul.u32 16, %s19
        %p217 = scmp.lt.s32.totalorder %s216, 79
        %s218 = scalar_select %p217, %s216, 79
        %p219 = scmp.lt.s32.totalorder %s18, 0
        %s220 = scalar_select %p219, %s18, 0
        %s221 = sadd.s32 %s220, %s218
        %s222 = smul.addr %s221, 4
        %s223 = scalar_lea.vmem %s1, %s222
        %s224 = smul.u32 16, %s19
      $region32: #{resnet34fc_forward.70} parent=23 // pred_fallthru
        _
    $region24: #{resnet34fc_forward.70} parent=5 // pred_fallthru
      _
    %p225 = scmp.le.s32.totalorder 1, %s10
    %p226 = scmp.lt.s32.totalorder %s10, 6
    %p227 = pnand %p225, %p226
    %p228 = pneg %p227
    // Predicated region
    $region33: #{resnet34fc_forward.70} parent=5 // pred_check
      _
    $region34: #{resnet34fc_forward.70} parent=5 // pred_check_branch
      %230 = sbr.rel (%p227) target = $region36
    $region35: #{resnet34fc_forward.70} parent=5 // pred_region
      %s231 = ssub.s32 %s10, 1
      %p232 = scmp.lt.s32.totalorder %s20, 0
      %s233 = scalar_select %p232, %s20, 0
      %p234 = scmp.lt.s32.totalorder %s22, 4
      %s235 = scalar_select %p234, %s22, 4
      %s236 = smul.addr %s233, 5
      %s237 = sadd.s32 %s235, %s236
      %s238 = smul.addr %s237, 4
      %s239 = scalar_lea.vmem %s0, %s238
      %p240 = pneg %p57
      %p241 = pneg %p54
      %s242 = smul.u32 16, %s22
      %p243 = scmp.lt.s32.totalorder %s242, 79
      %s244 = scalar_select %p243, %s242, 79
      %p245 = scmp.lt.s32.totalorder %s21, 0
      %s246 = scalar_select %p245, %s21, 0
      %s247 = sadd.s32 %s246, %s244
      %s248 = smul.addr %s247, 4
      %s249 = scalar_lea.vmem %s1, %s248
      %p250 = pneg %p85
      %p251 = pneg %p82
      %p252 = scmp.lt.s32.totalorder %s21, 0
      %s253 = scalar_select %p252, %s21, 0
      %s254 = scalar_lea.vmem %s2, %s253
      %p255 = pneg %p111
      %p256 = pneg %p108
      %p257 = scmp.lt.s32.totalorder %s20, 0
      %s258 = scalar_select %p257, %s20, 0
      %p259 = scmp.lt.s32.totalorder %s21, 0
      %s260 = scalar_select %p259, %s21, 0
      %s261 = sadd.s32 %s260, %s258
      %s262 = smul.addr %s261, 4
      %s263 = scalar_lea.vmem %s3, %s262
      %p264 = pneg %p139
      %p265 = pneg %p136
      %p266 = pneg %p167
      %p267 = pneg %p164
      %p268 = scmp.lt.s32.totalorder %s20, 0
      %s269 = scalar_select %p268, %s20, 0
      %p270 = scmp.lt.s32.totalorder %s21, 0
      %s271 = scalar_select %p270, %s21, 0
      %s272 = sadd.s32 %s271, %s269
      %s273 = smul.addr %s272, 4
      %s274 = scalar_lea.vmem %s4, %s273
      %p275 = scmp.lt.s32.totalorder %s20, 0
      %s276 = scalar_select %p275, %s20, 0
      %p277 = scmp.lt.s32.totalorder %s22, 4
      %s278 = scalar_select %p277, %s22, 4
      %s279 = smul.addr %s276, 5
      %s280 = sadd.s32 %s278, %s279
      %s281 = smul.addr %s280, 4
      %s282 = scalar_lea.vmem %s0, %s281
      %s283 = smul.u32 16, %s22
      %p284 = scmp.lt.s32.totalorder %s283, 79
      %s285 = scalar_select %p284, %s283, 79
      %p286 = scmp.lt.s32.totalorder %s21, 0
      %s287 = scalar_select %p286, %s21, 0
      %s288 = sadd.s32 %s287, %s285
      %s289 = smul.addr %s288, 4
      %s290 = scalar_lea.vmem %s1, %s289
      %s291 = smul.u32 16, %s22
      %p292 = scmp.lt.s32.totalorder %s21, 0
      %s293 = scalar_select %p292, %s21, 0
      %s294 = scalar_lea.vmem %s2, %s293
      %p295 = scmp.lt.s32.totalorder %s20, 0
      %s296 = scalar_select %p295, %s20, 0
      %p297 = scmp.lt.s32.totalorder %s21, 0
      %s298 = scalar_select %p297, %s21, 0
      %s299 = sadd.s32 %s298, %s296
      %s300 = smul.addr %s299, 4
      %s301 = scalar_lea.vmem %s3, %s300
      %p302 = scmp.lt.s32.totalorder %s20, 0
      %s303 = scalar_select %p302, %s20, 0
      %p304 = scmp.lt.s32.totalorder %s21, 0
      %s305 = scalar_select %p304, %s21, 0
      %s306 = sadd.s32 %s305, %s303
      %s307 = smul.addr %s306, 4
      %s308 = scalar_lea.vmem %s4, %s307
      %p310 = scmp.eq.s32.totalorder %s22, 0
      // Predicated region
      $region37: #{resnet34fc_forward.70} parent=35 // pred_check
        %p311 = pneg %p310
      $region38: #{resnet34fc_forward.70} parent=35 // pred_check_branch
        %313 = sbr.rel (%p311) target = $region40
      $region39: #{resnet34fc_forward.70} parent=35 // pred_region
        %314 = vst [vmem:[#allocation2] sm:$0xff] 0.0
      $region40: #{resnet34fc_forward.70} parent=35 // pred_fallthru
        _
      %v315 = vld [vmem:[#allocation2] sm:$0xff]
      %v316 = vld [vmem:[%s282] sm:$0xf]
      %v317 = vld [vmem:[%s290] sm:$0xf]
      %v318 = vld [vmem:[%s290 + $0x4] sm:$0xf]
      %v319 = vld [vmem:[%s290 + $0x8] sm:$0xf]
      %v320 = vld [vmem:[%s290 + $0xc] sm:$0xf]
      %v321 = vld [vmem:[%s290 + $0x10] sm:$0xf]
      %v322 = vld [vmem:[%s290 + $0x14] sm:$0xf]
      %v323 = vld [vmem:[%s290 + $0x18] sm:$0xf]
      %v324 = vld [vmem:[%s290 + $0x1c] sm:$0xf]
      %v325 = vld [vmem:[%s290 + $0x20] sm:$0xf]
      %v326 = vld [vmem:[%s290 + $0x24] sm:$0xf]
      %v327 = vld [vmem:[%s290 + $0x28] sm:$0xf]
      %v328 = vld [vmem:[%s290 + $0x2c] sm:$0xf]
      %v329 = vld [vmem:[%s290 + $0x30] sm:$0xf]
      %v330 = vld [vmem:[%s290 + $0x34] sm:$0xf]
      %v331 = vld [vmem:[%s290 + $0x38] sm:$0xf]
      %v332 = vld [vmem:[%s290 + $0x3c] sm:$0xf]
      %v349 = vunpack.c.l.b16 %v317
      %v350 = vunpack.c.l.b16 %v318
      %v351 = vunpack.c.l.b16 %v319
      %v352 = vunpack.c.l.b16 %v320
      %v353 = vunpack.c.l.b16 %v321
      %v354 = vunpack.c.l.b16 %v322
      %v355 = vunpack.c.l.b16 %v323
      %v356 = vunpack.c.l.b16 %v324
      %v357 = vunpack.c.l.b16 %v325
      %v358 = vunpack.c.l.b16 %v326
      %v359 = vunpack.c.l.b16 %v327
      %v360 = vunpack.c.l.b16 %v328
      %v361 = vunpack.c.l.b16 %v329
      %v362 = vunpack.c.l.b16 %v330
      %v363 = vunpack.c.l.b16 %v331
      %v364 = vunpack.c.l.b16 %v332
      %v365 = vpack.c.b16 %v350, %v349
      %v366 = vpack.c.b16 %v352, %v351
      %v367 = vpack.c.b16 %v354, %v353
      %v368 = vpack.c.b16 %v356, %v355
      %v369 = vpack.c.b16 %v358, %v357
      %v370 = vpack.c.b16 %v360, %v359
      %v371 = vpack.c.b16 %v362, %v361
      %v372 = vpack.c.b16 %v364, %v363
      %381 = vmatprep.subr.bf16.mxu0 0
      %382 = vmatpush1.bf16.msra.mxu0 %v365
      %383 = vmatprep.subr.bf16.mxu0 0
      %384 = vmatpush1.bf16.msra.mxu0 %v366
      %385 = vmatprep.subr.bf16.mxu0 0
      %386 = vmatpush1.bf16.msra.mxu0 %v367
      %387 = vmatprep.subr.bf16.mxu0 0
      %388 = vmatpush1.bf16.msra.mxu0 %v368
      %389 = vmatprep.subr.bf16.mxu0 0
      %390 = vmatpush1.bf16.msra.mxu0 %v369
      %391 = vmatprep.subr.bf16.mxu0 0
      %392 = vmatpush1.bf16.msra.mxu0 %v370
      %393 = vmatprep.subr.bf16.mxu0 0
      %394 = vmatpush1.bf16.msra.mxu0 %v371
      %395 = vmatprep.subr.bf16.mxu0 0
      %396 = vmatpush1.bf16.msra.mxu0 %v372
      %397 = vmatprep.subr.bf16.mxu0 0
      %398 = vmatpush1.bf16.msra.mxu0 0
      %399 = vmatprep.subr.bf16.mxu0 0
      %400 = vmatpush1.bf16.msra.mxu0 0
      %401 = vmatprep.subr.bf16.mxu0 0
      %402 = vmatpush1.bf16.msra.mxu0 0
      %403 = vmatprep.subr.bf16.mxu0 0
      %404 = vmatpush1.bf16.msra.mxu0 0
      %405 = vmatprep.subr.bf16.mxu0 0
      %406 = vmatpush1.bf16.msra.mxu0 0
      %407 = vmatprep.subr.bf16.mxu0 0
      %408 = vmatpush1.bf16.msra.mxu0 0
      %409 = vmatprep.subr.bf16.mxu0 0
      %410 = vmatpush1.bf16.msra.mxu0 0
      %411 = vmatprep.subr.bf16.mxu0 0
      %412 = vmatpush1.bf16.msra.mxu0 0
      %413 = vmatprep.mubr.bf16.mxu0 0
      %414 = vmatmul.mubr.bf16.gmra.mrb[0].mxu0 %v316
      %v415 = vpop.f32.mrb[0].mxu0
      %v416 = vadd.f32 0.0, %v415
      %v417 = vpop.f32.mrb[0].mxu0
      %v418 = vpop.f32.mrb[0].mxu0
      %v419 = vpop.f32.mrb[0].mxu0
      %420 = vdwg.mxu0
      %v421 = vadd.f32 %v315, %v416
      %422 = vst [vmem:[#allocation2] sm:$0xff] %v421
      %p423 = scmp.eq.s32.totalorder %s22, 4
      // Predicated region
      $region41: #{resnet34fc_forward.70} parent=35 // pred_check
        %p424 = pneg %p423
      $region42: #{resnet34fc_forward.70} parent=35 // pred_check_branch
        %426 = sbr.rel (%p424) target = $region44
      $region43: #{resnet34fc_forward.70} parent=35 // pred_region
        %v427 = vld [vmem:[#allocation2] sm:$0xff]
        %v428 = vld [vmem:[%s294] sm:$0x1]
        %v430 = vlaneseq
        %v431 = vshrl.u32 %v430, 7
        %v432 = vsub.s32 0, %v431
        %v433 = vrot.slane %v428, %v432
        %v435 = vadd.f32 %v427, %v433
        %v436 = vld [vmem:[%s301] sm:$0xf]
        %v437 = vunpack.c.l.bf16 %v436
        %v438 = vadd.f32 %v435, %v437
        %v439 = vmax.f32 %v438, 0.0
        %v440 = vpack.c.bf16 %v439, %v439
        %441 = vst [vmem:[%s308] sm:$0xf] %v440
      $region44: #{resnet34fc_forward.70} parent=35 // pred_fallthru
        _
      %p442 = scmp.lt.s32.totalorder %s20, 0
      %s443 = scalar_select %p442, %s20, 0
      %p444 = scmp.lt.s32.totalorder %s21, 0
      %s445 = scalar_select %p444, %s21, 0
      %s446 = sadd.s32 %s445, %s443
      %s447 = smul.addr %s446, 4
      %s448 = scalar_lea.vmem %s4, %s447
      // Predicated region
      $region45: #{resnet34fc_forward.70} parent=35 // pred_check
        %p449 = pneg %p164
      $region46: #{resnet34fc_forward.70} parent=35 // pred_check_branch
        %451 = sbr.rel (%p449) target = $region48
      $region47: #{resnet34fc_forward.70} parent=35 // pred_region
        _
      $region48: #{resnet34fc_forward.70} parent=35 // pred_fallthru
        _
      // Predicated region
      $region49: #{resnet34fc_forward.70} parent=35 // pred_check
        %p452 = pneg %p164
      $region50: #{resnet34fc_forward.70} parent=35 // pred_check_branch
        %454 = sbr.rel (%p452) target = $region52
      $region51: #{resnet34fc_forward.70} parent=35 // pred_region
        %p455 = scmp.lt.s32.totalorder %s20, 0
        %s456 = scalar_select %p455, %s20, 0
        %p457 = scmp.lt.s32.totalorder %s21, 0
        %s458 = scalar_select %p457, %s21, 0
        %s459 = sadd.s32 %s458, %s456
        %s460 = smul.addr %s459, 4
        %s461 = scalar_lea.vmem %s4, %s460
      $region52: #{resnet34fc_forward.70} parent=35 // pred_fallthru
        _
    $region36: #{resnet34fc_forward.70} parent=5 // pred_fallthru
      _
    %p462 = scmp.le.s32.totalorder 2, %s10
    // Predicated region
    $region53: #{resnet34fc_forward.70} parent=5 // pred_check
      %p463 = pneg %p462
    $region54: #{resnet34fc_forward.70} parent=5 // pred_check_branch
      %465 = sbr.rel (%p463) target = $region56
    $region55: #{resnet34fc_forward.70} parent=5 // pred_region
      %s466 = ssub.s32 %s10, 2
    $region56: #{resnet34fc_forward.70} parent=5 // pred_fallthru
      _
  $region6: #{resnet34fc_forward.70} parent=0 // loop_footer
    %s14 = sadd.s32 1, %s10
  $region7: #{resnet34fc_forward.70} parent=0 // loop_footer_branch
    %9 = sbr.rel target = $region3
  $region8: #{resnet34fc_forward.70} parent=0 // loop_exit
    _

</llo_original>
